<compile_context>
chip_gen: v7x
topology: tpu7x:2x2x1
jax: 0.10.0
libtpu: 0.0.40
codegen_flags: <defaults>
</compile_context>

<pallas_src>
import jax
import jax.numpy as jnp
from jax.experimental import pallas as pl
from jax.experimental.pallas import tpu as pltpu

D_MODEL = 672          # encoder feature dim (n_heads=1 -> d_k = d_v = 672)
D_PAD = 768            # 672 zero-padded to a multiple of 128 (lane-dense loads / MXU K)
H1, H2 = 1024, 512
OUT = 65
OUT_PAD = 128          # lane-dense output width; sliced back to 65 in the wrapper
BN_EPS = 1e-5

_TILE_M_MAX = 256      # decoder pair-batch tile
_TILE_N_MAX = 256      # encoder drug tile

_COMPILER_PARAMS = pltpu.CompilerParams(
    vmem_limit_bytes=32 * 1024 * 1024,          # ~22 MiB actually needed at tile 256
    dimension_semantics=("parallel",),          # independent batch tiles
)


def _round_up(x, m):
    return ((x + m - 1) // m) * m


# ----------------------------------------------------------------------------
# Encoder kernel: per-drug single-token self attention degenerates to X @ Wv.
# ----------------------------------------------------------------------------
def _encoder_kernel(x_ref, wv_ref, o_ref):
    # softmax over a single logit == 1.0, so attention output == X @ Wv exactly.
    # (the torch module's unused `fc` is faithfully NOT applied)
    o_ref[...] = jnp.dot(x_ref[...], wv_ref[...], preferred_element_type=jnp.float32)


def encoder_forward(emb_pad, wv_pad):
    n = emb_pad.shape[0]
    tile_n = min(_TILE_N_MAX, _round_up(n, 8))
    n_pad = _round_up(n, tile_n)
    if n_pad != n:
        emb_pad = jnp.pad(emb_pad, ((0, n_pad - n), (0, 0)))
    out = pl.pallas_call(
        _encoder_kernel,
        out_shape=jax.ShapeDtypeStruct((n_pad, D_PAD), jnp.float32),
        grid=(n_pad // tile_n,),
        in_specs=[
            pl.BlockSpec((tile_n, D_PAD), lambda i: (i, 0)),
            pl.BlockSpec((D_PAD, D_PAD), lambda i: (0, 0)),   # weight stays resident
        ],
        out_specs=pl.BlockSpec((tile_n, D_PAD), lambda i: (i, 0)),
        compiler_params=_COMPILER_PARAMS,
    )(emb_pad, wv_pad)
    return out[:n]


# ----------------------------------------------------------------------------
# Decoder kernel: (Linear+BN) -> ReLU -> (Linear+BN) -> ReLU -> Linear -> Sigmoid
# BN already folded into the linears wrapper-side; W1 split over the two drugs.
# ----------------------------------------------------------------------------
def _decoder_kernel(d1_ref, d2_ref,
                    w1a_ref, w1b_ref, b1_ref,
                    w2_ref, b2_ref,
                    w3_ref, b3_ref,
                    o_ref):
    # split-K layer 1 == concat([d1, d2]) @ W1 of the torch code, without the concat
    h = jnp.dot(d1_ref[...], w1a_ref[...], preferred_element_type=jnp.float32)
    h = h + jnp.dot(d2_ref[...], w1b_ref[...], preferred_element_type=jnp.float32)
    h = h + b1_ref[...]
    h = jnp.maximum(h, 0.0)                                                 # ReLU
    h = jnp.dot(h, w2_ref[...], preferred_element_type=jnp.float32) + b2_ref[...]
    h = jnp.maximum(h, 0.0)                                                 # ReLU
    h = jnp.dot(h, w3_ref[...], preferred_element_type=jnp.float32) + b3_ref[...]
    o_ref[...] = 1.0 / (1.0 + jnp.exp(-h))                                  # Sigmoid (exp on EUP)


def decoder_forward(d1, d2, fp):
    p = d1.shape[0]
    tile_m = min(_TILE_M_MAX, _round_up(p, 8))
    p_pad = _round_up(p, tile_m)
    if p_pad != p:
        d1 = jnp.pad(d1, ((0, p_pad - p), (0, 0)))
        d2 = jnp.pad(d2, ((0, p_pad - p), (0, 0)))

    batch_spec = pl.BlockSpec((tile_m, D_PAD), lambda i: (i, 0))

    def resident(shape):
        return pl.BlockSpec(shape, lambda i: (0, 0))

    out = pl.pallas_call(
        _decoder_kernel,
        out_shape=jax.ShapeDtypeStruct((p_pad, OUT_PAD), jnp.float32),
        grid=(p_pad // tile_m,),
        in_specs=[
            batch_spec, batch_spec,
            resident((D_PAD, H1)), resident((D_PAD, H1)), resident((1, H1)),
            resident((H1, H2)), resident((1, H2)),
            resident((H2, OUT_PAD)), resident((1, OUT_PAD)),
        ],
        out_specs=pl.BlockSpec((tile_m, OUT_PAD), lambda i: (i, 0)),
        compiler_params=_COMPILER_PARAMS,
    )(d1, d2, fp["w1a"], fp["w1b"], fp["b1"], fp["w2"], fp["b2"], fp["w3"], fp["b3"])
    return out[:p]


# ----------------------------------------------------------------------------
# Full Encoder_decoder forward.
# ----------------------------------------------------------------------------
def encoder_decoder_forward(embedding, index, fp):
    emb_pad = jnp.pad(embedding, ((0, 0), (0, D_PAD - D_MODEL)))
    enc_pad = encoder_forward(emb_pad, fp["wv"])          # (N, 768); padded cols are 0
    enc = enc_pad[:, :D_MODEL]                            # module's second output
    # TODO(synk): pair-row gather kept as XLA glue; full in-kernel gather would need
    #             per-row scalar-prefetch / manual-DMA (not a rectangular BlockSpec).
    d1 = jnp.take(enc_pad, index[:, 0], axis=0)
    d2 = jnp.take(enc_pad, index[:, 1], axis=0)
    score = decoder_forward(d1, d2, fp)[:, :OUT]          # drop the lane padding
    return score, enc


# ----------------------------------------------------------------------------
# Deterministic parameter init (shapes from the torch __init__), plus one-time
# wrapper-side prep: fold eval-mode BN into the linears, split W1, zero-pad to
# lane-dense shapes.  Linear weights stored pre-transposed as (in, out).
# ----------------------------------------------------------------------------
def init_params(key):
    ks = jax.random.split(key, 9)

    def lin_w(k, fan_in, fan_out):
        bound = 1.0 / (fan_in ** 0.5)
        return jax.random.uniform(k, (fan_in, fan_out), jnp.float32, -bound, bound)

    def lin_b(k, fan_in, fan_out):
        bound = 1.0 / (fan_in ** 0.5)
        return jax.random.uniform(k, (1, fan_out), jnp.float32, -bound, bound)

    return {
        # MultiHeadAttention (bias=False): W_Q/W_K cancel (length-1 softmax == 1)
        # and `fc` is never used in the torch forward -> only W_V matters.
        "wv_t": lin_w(ks[2], D_MODEL, D_MODEL),
        # DenseDecoder
        "w1_t": lin_w(ks[3], 2 * D_MODEL, H1), "b1": lin_b(ks[4], 2 * D_MODEL, H1),
        "w2_t": lin_w(ks[5], H1, H2),          "b2": lin_b(ks[6], H1, H2),
        "w3_t": lin_w(ks[7], H2, OUT),         "b3": lin_b(ks[8], H2, OUT),
        # BatchNorm1d params / running stats at torch __init__ values (eval mode).
        "g1": jnp.ones((1, H1), jnp.float32),  "be1": jnp.zeros((1, H1), jnp.float32),
        "m1": jnp.zeros((1, H1), jnp.float32), "v1":  jnp.ones((1, H1), jnp.float32),
        "g2": jnp.ones((1, H2), jnp.float32),  "be2": jnp.zeros((1, H2), jnp.float32),
        "m2": jnp.zeros((1, H2), jnp.float32), "v2":  jnp.ones((1, H2), jnp.float32),
    }


def fold_and_pad_params(p):
    s1 = p["g1"] * jax.lax.rsqrt(p["v1"] + BN_EPS)
    s2 = p["g2"] * jax.lax.rsqrt(p["v2"] + BN_EPS)
    w1f = p["w1_t"] * s1                                    # (1344, 1024) BN-folded
    b1f = (p["b1"] - p["m1"]) * s1 + p["be1"]
    w2f = p["w2_t"] * s2
    b2f = (p["b2"] - p["m2"]) * s2 + p["be2"]

    pad_k = D_PAD - D_MODEL
    return {
        "wv":  jnp.pad(p["wv_t"], ((0, pad_k), (0, pad_k))),          # (768, 768)
        "w1a": jnp.pad(w1f[:D_MODEL], ((0, pad_k), (0, 0))),          # (768, 1024)
        "w1b": jnp.pad(w1f[D_MODEL:], ((0, pad_k), (0, 0))),          # (768, 1024)
        "b1":  b1f,
        "w2":  w2f, "b2": b2f,
        "w3":  jnp.pad(p["w3_t"], ((0, 0), (0, OUT_PAD - OUT))),      # (512, 128)
        "b3":  jnp.pad(p["b3"], ((0, 0), (0, OUT_PAD - OUT))),        # (1, 128)
    }


if __name__ == "__main__":
    n_drugs, n_pairs = 8, 8

    key = jax.random.PRNGKey(0)
    k_emb, k_i1, k_i2 = jax.random.split(key, 3)
    embedding = jax.random.normal(k_emb, (n_drugs, D_MODEL), jnp.float32)
    index = jnp.stack(
        [jax.random.randint(k_i1, (n_pairs,), 0, n_drugs),
         jax.random.randint(k_i2, (n_pairs,), 0, n_drugs)],
        axis=1).astype(jnp.int32)

    params = init_params(jax.random.PRNGKey(1))
    fused = fold_and_pad_params(params)

    score, enc = jax.jit(encoder_decoder_forward)(embedding, index, fused)
    jax.block_until_ready((score, enc))

    # shape / sanity checks
    assert score.shape == (n_pairs, OUT) and score.dtype == jnp.float32
    assert enc.shape == (n_drugs, D_MODEL) and enc.dtype == jnp.float32
    assert bool(jnp.all(jnp.isfinite(score))) and bool(jnp.all(jnp.isfinite(enc)))
    assert bool(jnp.all(score >= 0.0)) and bool(jnp.all(score <= 1.0))

    # plain-XLA eval-mode reference (un-fused BN, explicit concat) for correctness
    hp = jax.lax.Precision.HIGHEST
    enc_ref = jnp.dot(embedding, params["wv_t"], precision=hp)
    pair = jnp.concatenate([enc_ref[index[:, 0]], enc_ref[index[:, 1]]], axis=1)

    def bn(x, g, be, m, v):
        return (x - m) * jax.lax.rsqrt(v + BN_EPS) * g + be

    h_ref = jnp.maximum(bn(jnp.dot(pair, params["w1_t"], precision=hp) + params["b1"],
                           params["g1"], params["be1"], params["m1"], params["v1"]), 0.0)
    h_ref = jnp.maximum(bn(jnp.dot(h_ref, params["w2_t"], precision=hp) + params["b2"],
                           params["g2"], params["be2"], params["m2"], params["v2"]), 0.0)
    score_ref = jax.nn.sigmoid(jnp.dot(h_ref, params["w3_t"], precision=hp) + params["b3"])

    assert bool(jnp.allclose(enc, enc_ref, atol=2e-2)), "encoder mismatch"
    assert bool(jnp.allclose(score, score_ref, atol=2e-2)), "decoder mismatch"

    print("KERNEL_OK")
</pallas_src>

<mosaic_0001>
module attributes {stable_mosaic.version = 11 : i64} {
  func.func @_encoder_kernel(%arg0: i32, %arg1: memref<8x768xf32, #tpu.memory_space<vmem>>, %arg2: memref<768x768xf32, #tpu.memory_space<vmem>>, %arg3: memref<8x768xf32, #tpu.memory_space<vmem>>) attributes {dimension_semantics = [#tpu.dimension_semantics<parallel>], iteration_bounds = array<i64: 1>, scalar_prefetch = 0 : i64, scratch_operands = 0 : i64, tpu.core_type = #tpu.core_type<tc>, window_params = [{transform_indices = @transform_0, window_bounds = array<i64: 8, 768>}, {pipeline_mode = #tpu.pipeline_mode<synchronous>, transform_indices = @transform_1, window_bounds = array<i64: 768, 768>}, {transform_indices = @transform_2, window_bounds = array<i64: 8, 768>}]} {
    %c0 = arith.constant 0 : index
    %c0_0 = arith.constant 0 : index
    %0 = vector.load %arg1[%c0, %c0_0] : memref<8x768xf32, #tpu.memory_space<vmem>>, vector<8x768xf32>
    %c0_1 = arith.constant 0 : index
    %c0_2 = arith.constant 0 : index
    %1 = vector.load %arg2[%c0_1, %c0_2] : memref<768x768xf32, #tpu.memory_space<vmem>>, vector<768x768xf32>
    %cst = arith.constant dense<0.000000e+00> : vector<8x768xf32>
    %2 = tpu.matmul %0, %1, %cst {dimension_numbers = #tpu.dot_dimension_numbers<[1], [0], [0], [1], [0, 0, 1, 1], [], []>} : vector<8x768xf32>, vector<768x768xf32>, vector<8x768xf32> -> vector<8x768xf32>
    %c0_3 = arith.constant 0 : index
    %c0_4 = arith.constant 0 : index
    %3 = vector.load %arg3[%c0_3, %c0_4] : memref<8x768xf32, #tpu.memory_space<vmem>>, vector<8x768xf32>
    tpu.vector_store %arg3[%c0_3, %c0_4], %2 {strides = array<i32>} : memref<8x768xf32, #tpu.memory_space<vmem>>, vector<8x768xf32>,
    return
  }
  func.func @transform_0(%arg0: i32) -> (i32, i32) {
    %c0_i32 = arith.constant 0 : i32
    %c0_i32_0 = arith.constant 0 : i32
    return %arg0, %c0_i32 : i32, i32
  }
  func.func @transform_1(%arg0: i32) -> (i32, i32) {
    %c0_i32 = arith.constant 0 : i32
    %c0_i32_0 = arith.constant 0 : i32
    %c0_i32_1 = arith.constant 0 : i32
    return %c0_i32, %c0_i32_0 : i32, i32
  }
  func.func @transform_2(%arg0: i32) -> (i32, i32) {
    %c0_i32 = arith.constant 0 : i32
    %c0_i32_0 = arith.constant 0 : i32
    return %arg0, %c0_i32 : i32, i32
  }
}

module attributes {stable_mosaic.version = 11 : i64} {
  func.func @_decoder_kernel(%arg0: i32, %arg1: memref<8x768xf32, #tpu.memory_space<vmem>>, %arg2: memref<8x768xf32, #tpu.memory_space<vmem>>, %arg3: memref<768x1024xf32, #tpu.memory_space<vmem>>, %arg4: memref<768x1024xf32, #tpu.memory_space<vmem>>, %arg5: memref<1x1024xf32, #tpu.memory_space<vmem>>, %arg6: memref<1024x512xf32, #tpu.memory_space<vmem>>, %arg7: memref<1x512xf32, #tpu.memory_space<vmem>>, %arg8: memref<512x128xf32, #tpu.memory_space<vmem>>, %arg9: memref<1x128xf32, #tpu.memory_space<vmem>>, %arg10: memref<8x128xf32, #tpu.memory_space<vmem>>) attributes {dimension_semantics = [#tpu.dimension_semantics<parallel>], iteration_bounds = array<i64: 1>, scalar_prefetch = 0 : i64, scratch_operands = 0 : i64, tpu.core_type = #tpu.core_type<tc>, window_params = [{transform_indices = @transform_0, window_bounds = array<i64: 8, 768>}, {transform_indices = @transform_1, window_bounds = array<i64: 8, 768>}, {pipeline_mode = #tpu.pipeline_mode<synchronous>, transform_indices = @transform_2, window_bounds = array<i64: 768, 1024>}, {pipeline_mode = #tpu.pipeline_mode<synchronous>, transform_indices = @transform_3, window_bounds = array<i64: 768, 1024>}, {pipeline_mode = #tpu.pipeline_mode<synchronous>, transform_indices = @transform_4, window_bounds = array<i64: 1, 1024>}, {pipeline_mode = #tpu.pipeline_mode<synchronous>, transform_indices = @transform_5, window_bounds = array<i64: 1024, 512>}, {pipeline_mode = #tpu.pipeline_mode<synchronous>, transform_indices = @transform_6, window_bounds = array<i64: 1, 512>}, {pipeline_mode = #tpu.pipeline_mode<synchronous>, transform_indices = @transform_7, window_bounds = array<i64: 512, 128>}, {pipeline_mode = #tpu.pipeline_mode<synchronous>, transform_indices = @transform_8, window_bounds = array<i64: 1, 128>}, {transform_indices = @transform_9, window_bounds = array<i64: 8, 128>}]} {
    %c0 = arith.constant 0 : index
    %c0_0 = arith.constant 0 : index
    %0 = vector.load %arg1[%c0, %c0_0] : memref<8x768xf32, #tpu.memory_space<vmem>>, vector<8x768xf32>
    %c0_1 = arith.constant 0 : index
    %c0_2 = arith.constant 0 : index
    %1 = vector.load %arg3[%c0_1, %c0_2] : memref<768x1024xf32, #tpu.memory_space<vmem>>, vector<768x1024xf32>
    %cst = arith.constant dense<0.000000e+00> : vector<8x1024xf32>
    %2 = tpu.matmul %0, %1, %cst {dimension_numbers = #tpu.dot_dimension_numbers<[1], [0], [0], [1], [0, 0, 1, 1], [], []>} : vector<8x768xf32>, vector<768x1024xf32>, vector<8x1024xf32> -> vector<8x1024xf32>
    %c0_3 = arith.constant 0 : index
    %c0_4 = arith.constant 0 : index
    %3 = vector.load %arg2[%c0_3, %c0_4] : memref<8x768xf32, #tpu.memory_space<vmem>>, vector<8x768xf32>
    %c0_5 = arith.constant 0 : index
    %c0_6 = arith.constant 0 : index
    %4 = vector.load %arg4[%c0_5, %c0_6] : memref<768x1024xf32, #tpu.memory_space<vmem>>, vector<768x1024xf32>
    %cst_7 = arith.constant dense<0.000000e+00> : vector<8x1024xf32>
    %5 = tpu.matmul %3, %4, %cst_7 {dimension_numbers = #tpu.dot_dimension_numbers<[1], [0], [0], [1], [0, 0, 1, 1], [], []>} : vector<8x768xf32>, vector<768x1024xf32>, vector<8x1024xf32> -> vector<8x1024xf32>
    %6 = arith.addf %2, %5 : vector<8x1024xf32>
    %c0_8 = arith.constant 0 : index
    %c0_9 = arith.constant 0 : index
    %7 = vector.load %arg5[%c0_8, %c0_9] : memref<1x1024xf32, #tpu.memory_space<vmem>>, vector<1x1024xf32>
    %8 = vector.broadcast %7 : vector<1x1024xf32> to vector<8x1024xf32>
    %9 = arith.addf %6, %8 : vector<8x1024xf32>
    %cst_10 = arith.constant 0.000000e+00 : f32
    %10 = vector.broadcast %cst_10 : f32 to vector<8x1024xf32>
    %11 = arith.maximumf %9, %10 : vector<8x1024xf32>
    %c0_11 = arith.constant 0 : index
    %c0_12 = arith.constant 0 : index
    %12 = vector.load %arg6[%c0_11, %c0_12] : memref<1024x512xf32, #tpu.memory_space<vmem>>, vector<1024x512xf32>
    %cst_13 = arith.constant dense<0.000000e+00> : vector<8x512xf32>
    %13 = tpu.matmul %11, %12, %cst_13 {dimension_numbers = #tpu.dot_dimension_numbers<[1], [0], [0], [1], [0, 0, 1, 1], [], []>} : vector<8x1024xf32>, vector<1024x512xf32>, vector<8x512xf32> -> vector<8x512xf32>
    %c0_14 = arith.constant 0 : index
    %c0_15 = arith.constant 0 : index
    %14 = vector.load %arg7[%c0_14, %c0_15] : memref<1x512xf32, #tpu.memory_space<vmem>>, vector<1x512xf32>
    %15 = vector.broadcast %14 : vector<1x512xf32> to vector<8x512xf32>
    %16 = arith.addf %13, %15 : vector<8x512xf32>
    %cst_16 = arith.constant 0.000000e+00 : f32
    %17 = vector.broadcast %cst_16 : f32 to vector<8x512xf32>
    %18 = arith.maximumf %16, %17 : vector<8x512xf32>
    %c0_17 = arith.constant 0 : index
    %c0_18 = arith.constant 0 : index
    %19 = vector.load %arg8[%c0_17, %c0_18] : memref<512x128xf32, #tpu.memory_space<vmem>>, vector<512x128xf32>
    %cst_19 = arith.constant dense<0.000000e+00> : vector<8x128xf32>
    %20 = tpu.matmul %18, %19, %cst_19 {dimension_numbers = #tpu.dot_dimension_numbers<[1], [0], [0], [1], [0, 0, 1, 1], [], []>} : vector<8x512xf32>, vector<512x128xf32>, vector<8x128xf32> -> vector<8x128xf32>
    %c0_20 = arith.constant 0 : index
    %c0_21 = arith.constant 0 : index
    %21 = vector.load %arg9[%c0_20, %c0_21] : memref<1x128xf32, #tpu.memory_space<vmem>>, vector<1x128xf32>
    %22 = vector.broadcast %21 : vector<1x128xf32> to vector<8x128xf32>
    %23 = arith.addf %20, %22 : vector<8x128xf32>
    %cst_22 = arith.constant 0.000000e+00 : f32
    %24 = vector.broadcast %cst_22 : f32 to vector<8x128xf32>
    %25 = arith.subf %24, %23 : vector<8x128xf32>
    %26 = math.exp %25 : vector<8x128xf32>
    %cst_23 = arith.constant 1.000000e+00 : f32
    %27 = vector.broadcast %cst_23 : f32 to vector<8x128xf32>
    %28 = arith.addf %27, %26 : vector<8x128xf32>
    %cst_24 = arith.constant 1.000000e+00 : f32
    %29 = vector.broadcast %cst_24 : f32 to vector<8x128xf32>
    %30 = arith.divf %29, %28 : vector<8x128xf32>
    %c0_25 = arith.constant 0 : index
    %c0_26 = arith.constant 0 : index
    %31 = vector.load %arg10[%c0_25, %c0_26] : memref<8x128xf32, #tpu.memory_space<vmem>>, vector<8x128xf32>
    tpu.vector_store %arg10[%c0_25, %c0_26], %30 {strides = array<i32>} : memref<8x128xf32, #tpu.memory_space<vmem>>, vector<8x128xf32>,
    return
  }
  func.func @transform_0(%arg0: i32) -> (i32, i32) {
    %c0_i32 = arith.constant 0 : i32
    %c0_i32_0 = arith.constant 0 : i32
    return %arg0, %c0_i32 : i32, i32
  }
  func.func @transform_1(%arg0: i32) -> (i32, i32) {
    %c0_i32 = arith.constant 0 : i32
    %c0_i32_0 = arith.constant 0 : i32
    return %arg0, %c0_i32 : i32, i32
  }
  func.func @transform_2(%arg0: i32) -> (i32, i32) {
    %c0_i32 = arith.constant 0 : i32
    %c0_i32_0 = arith.constant 0 : i32
    %c0_i32_1 = arith.constant 0 : i32
    return %c0_i32, %c0_i32_0 : i32, i32
  }
  func.func @transform_3(%arg0: i32) -> (i32, i32) {
    %c0_i32 = arith.constant 0 : i32
    %c0_i32_0 = arith.constant 0 : i32
    %c0_i32_1 = arith.constant 0 : i32
    return %c0_i32, %c0_i32_0 : i32, i32
  }
  func.func @transform_4(%arg0: i32) -> (i32, i32) {
    %c0_i32 = arith.constant 0 : i32
    %c0_i32_0 = arith.constant 0 : i32
    %c0_i32_1 = arith.constant 0 : i32
    return %c0_i32, %c0_i32_0 : i32, i32
  }
  func.func @transform_5(%arg0: i32) -> (i32, i32) {
    %c0_i32 = arith.constant 0 : i32
    %c0_i32_0 = arith.constant 0 : i32
    %c0_i32_1 = arith.constant 0 : i32
    return %c0_i32, %c0_i32_0 : i32, i32
  }
  func.func @transform_6(%arg0: i32) -> (i32, i32) {
    %c0_i32 = arith.constant 0 : i32
    %c0_i32_0 = arith.constant 0 : i32
    %c0_i32_1 = arith.constant 0 : i32
    return %c0_i32, %c0_i32_0 : i32, i32
  }
  func.func @transform_7(%arg0: i32) -> (i32, i32) {
    %c0_i32 = arith.constant 0 : i32
    %c0_i32_0 = arith.constant 0 : i32
    %c0_i32_1 = arith.constant 0 : i32
    return %c0_i32, %c0_i32_0 : i32, i32
  }
  func.func @transform_8(%arg0: i32) -> (i32, i32) {
    %c0_i32 = arith.constant 0 : i32
    %c0_i32_0 = arith.constant 0 : i32
    %c0_i32_1 = arith.constant 0 : i32
    return %c0_i32, %c0_i32_0 : i32, i32
  }
  func.func @transform_9(%arg0: i32) -> (i32, i32) {
    %c0_i32 = arith.constant 0 : i32
    %c0_i32_0 = arith.constant 0 : i32
    return %arg0, %c0_i32 : i32, i32
  }
}

</mosaic_0001>

<llo_original>
// kernel: encoder_decoder_forward.2
$region0: #{encoder_decoder_forward.2}
  #allocation0 [shape = 'u32[]', space=smem, size = 0x4, offset = 0x4, fixed_abs, tag = 'smem constant byte address 0x4 - core index']
  #allocation1 [shape = 'u32[144,128]{1,0:T(1,128)}', space=vmem, size = 0x12000, scoped, tag = 'internal scratch']
  %s0 = inlined_call_operand.vmem [shape: f32[8,768], index: 0, kind: input, shape index: {}]
  %s1 = inlined_call_operand.hbm [shape: f32[768,768], index: 1, kind: input, shape index: {}]
  %s2 = inlined_call_operand.vmem [shape: f32[8,768], index: 2, kind: output, shape index: {}]
  %s3 = sld [smem:[#allocation0]]
  $region22: #{encoder_decoder_forward.2} parent=0
    _
  %s5 = ssub.s32 1, %s3
  %s6 = scalar_select 0, %s5, %s3
  $region1: #{encoder_decoder_forward.2} parent=0
    #allocation2 [shape = 'u8[2359296]{0}', space=vmem, size = 0x240000, scoped, tag = 'input window, operand 1, single buffered']
    #allocation3 [shape = 's32[1]{0}', space=sflag, size = 0x4, scoped, tag = 'scoped memory for encoder_decoder_forward.2']
    %7 = vsyncpa [#allocation3], 0
    // Predicated region
    $region2: #{encoder_decoder_forward.2} parent=1 // pred_check
      _
    $region3: #{encoder_decoder_forward.2} parent=1 // pred_check_branch
      %9 = sbr.rel (0) target = $region5
    $region4: #{encoder_decoder_forward.2} parent=1 // pred_region
      _
    $region5: #{encoder_decoder_forward.2} parent=1 // pred_fallthru
      _
    // Predicated region
    $region6: #{encoder_decoder_forward.2} parent=1 // pred_check
      _
    $region7: #{encoder_decoder_forward.2} parent=1 // pred_check_branch
      %11 = sbr.rel (0) target = $region9
    $region8: #{encoder_decoder_forward.2} parent=1 // pred_region
      %s13 = ssub.s32 73728, 73728
      %14 = vsyncadd [#allocation3], %s13
      %s15 = sshll.u32 [#allocation2], 4
      %s16 = int_to_ptr.vmem [resolvable:$true] %s15
      %21 = dma.hbm_to_vmem [thread:$0]  %s1, 73728, %s16, [#allocation3], 768, 768, 48
    $region9: #{encoder_decoder_forward.2} parent=1 // pred_fallthru
      _
    // Predicated region
    $region10: #{encoder_decoder_forward.2} parent=1 // pred_check
      _
    $region11: #{encoder_decoder_forward.2} parent=1 // pred_check_branch
      %23 = sbr.rel (0) target = $region13
    $region12: #{encoder_decoder_forward.2} parent=1 // pred_region
      %24 = dma.done [#allocation3], 73728
    $region13: #{encoder_decoder_forward.2} parent=1 // pred_fallthru
      _
    %v25 = vld [vmem:[%s0] sm:$0xff]
    %v26 = vld [vmem:[%s0 + $0x8] sm:$0xff]
    %v27 = vld [vmem:[%s0 + $0x10] sm:$0xff]
    %v28 = vld [vmem:[%s0 + $0x18] sm:$0xff]
    %v29 = vld [vmem:[%s0 + $0x20] sm:$0xff]
    %v30 = vld [vmem:[%s0 + $0x28] sm:$0xff]
    %v31 = vld [vmem:[#allocation2] sm:$0xff]
    %v32 = vld [vmem:[#allocation2 + $0x8] sm:$0xff]
    %v33 = vld [vmem:[#allocation2 + $0x10] sm:$0xff]
    %v34 = vld [vmem:[#allocation2 + $0x18] sm:$0xff]
    %v35 = vld [vmem:[#allocation2 + $0x20] sm:$0xff]
    %v36 = vld [vmem:[#allocation2 + $0x28] sm:$0xff]
    %v37 = vld [vmem:[#allocation2 + $0x30] sm:$0xff]
    %v38 = vld [vmem:[#allocation2 + $0x38] sm:$0xff]
    %v39 = vld [vmem:[#allocation2 + $0x40] sm:$0xff]
    %v40 = vld [vmem:[#allocation2 + $0x48] sm:$0xff]
    %v41 = vld [vmem:[#allocation2 + $0x50] sm:$0xff]
    %v42 = vld [vmem:[#allocation2 + $0x58] sm:$0xff]
    %v43 = vld [vmem:[#allocation2 + $0x60] sm:$0xff]
    %v44 = vld [vmem:[#allocation2 + $0x68] sm:$0xff]
    %v45 = vld [vmem:[#allocation2 + $0x70] sm:$0xff]
    %v46 = vld [vmem:[#allocation2 + $0x78] sm:$0xff]
    %v47 = vld [vmem:[#allocation2 + $0x80] sm:$0xff]
    %v48 = vld [vmem:[#allocation2 + $0x88] sm:$0xff]
    %v49 = vld [vmem:[#allocation2 + $0x90] sm:$0xff]
    %v50 = vld [vmem:[#allocation2 + $0x98] sm:$0xff]
    %v51 = vld [vmem:[#allocation2 + $0xa0] sm:$0xff]
    %v52 = vld [vmem:[#allocation2 + $0xa8] sm:$0xff]
    %v53 = vld [vmem:[#allocation2 + $0xb0] sm:$0xff]
    %v54 = vld [vmem:[#allocation2 + $0xb8] sm:$0xff]
    %v55 = vld [vmem:[#allocation2 + $0xc0] sm:$0xff]
    %v56 = vld [vmem:[#allocation2 + $0xc8] sm:$0xff]
    %v57 = vld [vmem:[#allocation2 + $0xd0] sm:$0xff]
    %v58 = vld [vmem:[#allocation2 + $0xd8] sm:$0xff]
    %v59 = vld [vmem:[#allocation2 + $0xe0] sm:$0xff]
    %v60 = vld [vmem:[#allocation2 + $0xe8] sm:$0xff]
    %v61 = vld [vmem:[#allocation2 + $0xf0] sm:$0xff]
    %v62 = vld [vmem:[#allocation2 + $0xf8] sm:$0xff]
    %v63 = vld [vmem:[#allocation2 + $0x100] sm:$0xff]
    %v64 = vld [vmem:[#allocation2 + $0x108] sm:$0xff]
    %v65 = vld [vmem:[#allocation2 + $0x110] sm:$0xff]
    %v66 = vld [vmem:[#allocation2 + $0x118] sm:$0xff]
    %v67 = vld [vmem:[#allocation2 + $0x120] sm:$0xff]
    %v68 = vld [vmem:[#allocation2 + $0x128] sm:$0xff]
    %v69 = vld [vmem:[#allocation2 + $0x130] sm:$0xff]
    %v70 = vld [vmem:[#allocation2 + $0x138] sm:$0xff]
    %v71 = vld [vmem:[#allocation2 + $0x140] sm:$0xff]
    %v72 = vld [vmem:[#allocation2 + $0x148] sm:$0xff]
    %v73 = vld [vmem:[#allocation2 + $0x150] sm:$0xff]
    %v74 = vld [vmem:[#allocation2 + $0x158] sm:$0xff]
    %v75 = vld [vmem:[#allocation2 + $0x160] sm:$0xff]
    %v76 = vld [vmem:[#allocation2 + $0x168] sm:$0xff]
    %v77 = vld [vmem:[#allocation2 + $0x170] sm:$0xff]
    %v78 = vld [vmem:[#allocation2 + $0x178] sm:$0xff]
    %v79 = vld [vmem:[#allocation2 + $0x180] sm:$0xff]
    %v80 = vld [vmem:[#allocation2 + $0x188] sm:$0xff]
    %v81 = vld [vmem:[#allocation2 + $0x190] sm:$0xff]
    %v82 = vld [vmem:[#allocation2 + $0x198] sm:$0xff]
    %v83 = vld [vmem:[#allocation2 + $0x1a0] sm:$0xff]
    %v84 = vld [vmem:[#allocation2 + $0x1a8] sm:$0xff]
    %v85 = vld [vmem:[#allocation2 + $0x1b0] sm:$0xff]
    %v86 = vld [vmem:[#allocation2 + $0x1b8] sm:$0xff]
    %v87 = vld [vmem:[#allocation2 + $0x1c0] sm:$0xff]
    %v88 = vld [vmem:[#allocation2 + $0x1c8] sm:$0xff]
    %v89 = vld [vmem:[#allocation2 + $0x1d0] sm:$0xff]
    %v90 = vld [vmem:[#allocation2 + $0x1d8] sm:$0xff]
    %v91 = vld [vmem:[#allocation2 + $0x1e0] sm:$0xff]
    %v92 = vld [vmem:[#allocation2 + $0x1e8] sm:$0xff]
    %v93 = vld [vmem:[#allocation2 + $0x1f0] sm:$0xff]
    %v94 = vld [vmem:[#allocation2 + $0x1f8] sm:$0xff]
    %v95 = vld [vmem:[#allocation2 + $0x200] sm:$0xff]
    %v96 = vld [vmem:[#allocation2 + $0x208] sm:$0xff]
    %v97 = vld [vmem:[#allocation2 + $0x210] sm:$0xff]
    %v98 = vld [vmem:[#allocation2 + $0x218] sm:$0xff]
    %v99 = vld [vmem:[#allocation2 + $0x220] sm:$0xff]
    %v100 = vld [vmem:[#allocation2 + $0x228] sm:$0xff]
    %v101 = vld [vmem:[#allocation2 + $0x230] sm:$0xff]
    %v102 = vld [vmem:[#allocation2 + $0x238] sm:$0xff]
    %v103 = vld [vmem:[#allocation2 + $0x240] sm:$0xff]
    %v104 = vld [vmem:[#allocation2 + $0x248] sm:$0xff]
    %v105 = vld [vmem:[#allocation2 + $0x250] sm:$0xff]
    %v106 = vld [vmem:[#allocation2 + $0x258] sm:$0xff]
    %v107 = vld [vmem:[#allocation2 + $0x260] sm:$0xff]
    %v108 = vld [vmem:[#allocation2 + $0x268] sm:$0xff]
    %v109 = vld [vmem:[#allocation2 + $0x270] sm:$0xff]
    %v110 = vld [vmem:[#allocation2 + $0x278] sm:$0xff]
    %v111 = vld [vmem:[#allocation2 + $0x280] sm:$0xff]
    %v112 = vld [vmem:[#allocation2 + $0x288] sm:$0xff]
    %v113 = vld [vmem:[#allocation2 + $0x290] sm:$0xff]
    %v114 = vld [vmem:[#allocation2 + $0x298] sm:$0xff]
    %v115 = vld [vmem:[#allocation2 + $0x2a0] sm:$0xff]
    %v116 = vld [vmem:[#allocation2 + $0x2a8] sm:$0xff]
    %v117 = vld [vmem:[#allocation2 + $0x2b0] sm:$0xff]
    %v118 = vld [vmem:[#allocation2 + $0x2b8] sm:$0xff]
    %v119 = vld [vmem:[#allocation2 + $0x2c0] sm:$0xff]
    %v120 = vld [vmem:[#allocation2 + $0x2c8] sm:$0xff]
    %v121 = vld [vmem:[#allocation2 + $0x2d0] sm:$0xff]
    %v122 = vld [vmem:[#allocation2 + $0x2d8] sm:$0xff]
    %v123 = vld [vmem:[#allocation2 + $0x2e0] sm:$0xff]
    %v124 = vld [vmem:[#allocation2 + $0x2e8] sm:$0xff]
    %v125 = vld [vmem:[#allocation2 + $0x2f0] sm:$0xff]
    %v126 = vld [vmem:[#allocation2 + $0x2f8] sm:$0xff]
    %v127 = vld [vmem:[#allocation2 + $0x300] sm:$0xff]
    %v128 = vld [vmem:[#allocation2 + $0x308] sm:$0xff]
    %v129 = vld [vmem:[#allocation2 + $0x310] sm:$0xff]
    %v130 = vld [vmem:[#allocation2 + $0x318] sm:$0xff]
    %v131 = vld [vmem:[#allocation2 + $0x320] sm:$0xff]
    %v132 = vld [vmem:[#allocation2 + $0x328] sm:$0xff]
    %v133 = vld [vmem:[#allocation2 + $0x330] sm:$0xff]
    %v134 = vld [vmem:[#allocation2 + $0x338] sm:$0xff]
    %v135 = vld [vmem:[#allocation2 + $0x340] sm:$0xff]
    %v136 = vld [vmem:[#allocation2 + $0x348] sm:$0xff]
    %v137 = vld [vmem:[#allocation2 + $0x350] sm:$0xff]
    %v138 = vld [vmem:[#allocation2 + $0x358] sm:$0xff]
    %v139 = vld [vmem:[#allocation2 + $0x360] sm:$0xff]
    %v140 = vld [vmem:[#allocation2 + $0x368] sm:$0xff]
    %v141 = vld [vmem:[#allocation2 + $0x370] sm:$0xff]
    %v142 = vld [vmem:[#allocation2 + $0x378] sm:$0xff]
    %v143 = vld [vmem:[#allocation2 + $0x380] sm:$0xff]
    %v144 = vld [vmem:[#allocation2 + $0x388] sm:$0xff]
    %v145 = vld [vmem:[#allocation2 + $0x390] sm:$0xff]
    %v146 = vld [vmem:[#allocation2 + $0x398] sm:$0xff]
    %v147 = vld [vmem:[#allocation2 + $0x3a0] sm:$0xff]
    %v148 = vld [vmem:[#allocation2 + $0x3a8] sm:$0xff]
    %v149 = vld [vmem:[#allocation2 + $0x3b0] sm:$0xff]
    %v150 = vld [vmem:[#allocation2 + $0x3b8] sm:$0xff]
    %v151 = vld [vmem:[#allocation2 + $0x3c0] sm:$0xff]
    %v152 = vld [vmem:[#allocation2 + $0x3c8] sm:$0xff]
    %v153 = vld [vmem:[#allocation2 + $0x3d0] sm:$0xff]
    %v154 = vld [vmem:[#allocation2 + $0x3d8] sm:$0xff]
    %v155 = vld [vmem:[#allocation2 + $0x3e0] sm:$0xff]
    %v156 = vld [vmem:[#allocation2 + $0x3e8] sm:$0xff]
    %v157 = vld [vmem:[#allocation2 + $0x3f0] sm:$0xff]
    %v158 = vld [vmem:[#allocation2 + $0x3f8] sm:$0xff]
    %v159 = vld [vmem:[#allocation2 + $0x400] sm:$0xff]
    %v160 = vld [vmem:[#allocation2 + $0x408] sm:$0xff]
    %v161 = vld [vmem:[#allocation2 + $0x410] sm:$0xff]
    %v162 = vld [vmem:[#allocation2 + $0x418] sm:$0xff]
    %v163 = vld [vmem:[#allocation2 + $0x420] sm:$0xff]
    %v164 = vld [vmem:[#allocation2 + $0x428] sm:$0xff]
    %v165 = vld [vmem:[#allocation2 + $0x430] sm:$0xff]
    %v166 = vld [vmem:[#allocation2 + $0x438] sm:$0xff]
    %v167 = vld [vmem:[#allocation2 + $0x440] sm:$0xff]
    %v168 = vld [vmem:[#allocation2 + $0x448] sm:$0xff]
    %v169 = vld [vmem:[#allocation2 + $0x450] sm:$0xff]
    %v170 = vld [vmem:[#allocation2 + $0x458] sm:$0xff]
    %v171 = vld [vmem:[#allocation2 + $0x460] sm:$0xff]
    %v172 = vld [vmem:[#allocation2 + $0x468] sm:$0xff]
    %v173 = vld [vmem:[#allocation2 + $0x470] sm:$0xff]
    %v174 = vld [vmem:[#allocation2 + $0x478] sm:$0xff]
    %v175 = vld [vmem:[#allocation2 + $0x480] sm:$0xff]
    %v176 = vld [vmem:[#allocation2 + $0x488] sm:$0xff]
    %v177 = vld [vmem:[#allocation2 + $0x490] sm:$0xff]
    %v178 = vld [vmem:[#allocation2 + $0x498] sm:$0xff]
    %v179 = vld [vmem:[#allocation2 + $0x4a0] sm:$0xff]
    %v180 = vld [vmem:[#allocation2 + $0x4a8] sm:$0xff]
    %v181 = vld [vmem:[#allocation2 + $0x4b0] sm:$0xff]
    %v182 = vld [vmem:[#allocation2 + $0x4b8] sm:$0xff]
    %v183 = vld [vmem:[#allocation2 + $0x4c0] sm:$0xff]
    %v184 = vld [vmem:[#allocation2 + $0x4c8] sm:$0xff]
    %v185 = vld [vmem:[#allocation2 + $0x4d0] sm:$0xff]
    %v186 = vld [vmem:[#allocation2 + $0x4d8] sm:$0xff]
    %v187 = vld [vmem:[#allocation2 + $0x4e0] sm:$0xff]
    %v188 = vld [vmem:[#allocation2 + $0x4e8] sm:$0xff]
    %v189 = vld [vmem:[#allocation2 + $0x4f0] sm:$0xff]
    %v190 = vld [vmem:[#allocation2 + $0x4f8] sm:$0xff]
    %v191 = vld [vmem:[#allocation2 + $0x500] sm:$0xff]
    %v192 = vld [vmem:[#allocation2 + $0x508] sm:$0xff]
    %v193 = vld [vmem:[#allocation2 + $0x510] sm:$0xff]
    %v194 = vld [vmem:[#allocation2 + $0x518] sm:$0xff]
    %v195 = vld [vmem:[#allocation2 + $0x520] sm:$0xff]
    %v196 = vld [vmem:[#allocation2 + $0x528] sm:$0xff]
    %v197 = vld [vmem:[#allocation2 + $0x530] sm:$0xff]
    %v198 = vld [vmem:[#allocation2 + $0x538] sm:$0xff]
    %v199 = vld [vmem:[#allocation2 + $0x540] sm:$0xff]
    %v200 = vld [vmem:[#allocation2 + $0x548] sm:$0xff]
    %v201 = vld [vmem:[#allocation2 + $0x550] sm:$0xff]
    %v202 = vld [vmem:[#allocation2 + $0x558] sm:$0xff]
    %v203 = vld [vmem:[#allocation2 + $0x560] sm:$0xff]
    %v204 = vld [vmem:[#allocation2 + $0x568] sm:$0xff]
    %v205 = vld [vmem:[#allocation2 + $0x570] sm:$0xff]
    %v206 = vld [vmem:[#allocation2 + $0x578] sm:$0xff]
    %v207 = vld [vmem:[#allocation2 + $0x580] sm:$0xff]
    %v208 = vld [vmem:[#allocation2 + $0x588] sm:$0xff]
    %v209 = vld [vmem:[#allocation2 + $0x590] sm:$0xff]
    %v210 = vld [vmem:[#allocation2 + $0x598] sm:$0xff]
    %v211 = vld [vmem:[#allocation2 + $0x5a0] sm:$0xff]
    %v212 = vld [vmem:[#allocation2 + $0x5a8] sm:$0xff]
    %v213 = vld [vmem:[#allocation2 + $0x5b0] sm:$0xff]
    %v214 = vld [vmem:[#allocation2 + $0x5b8] sm:$0xff]
    %v215 = vld [vmem:[#allocation2 + $0x5c0] sm:$0xff]
    %v216 = vld [vmem:[#allocation2 + $0x5c8] sm:$0xff]
    %v217 = vld [vmem:[#allocation2 + $0x5d0] sm:$0xff]
    %v218 = vld [vmem:[#allocation2 + $0x5d8] sm:$0xff]
    %v219 = vld [vmem:[#allocation2 + $0x5e0] sm:$0xff]
    %v220 = vld [vmem:[#allocation2 + $0x5e8] sm:$0xff]
    %v221 = vld [vmem:[#allocation2 + $0x5f0] sm:$0xff]
    %v222 = vld [vmem:[#allocation2 + $0x5f8] sm:$0xff]
    %v223 = vld [vmem:[#allocation2 + $0x600] sm:$0xff]
    %v224 = vld [vmem:[#allocation2 + $0x608] sm:$0xff]
    %v225 = vld [vmem:[#allocation2 + $0x610] sm:$0xff]
    %v226 = vld [vmem:[#allocation2 + $0x618] sm:$0xff]
    %v227 = vld [vmem:[#allocation2 + $0x620] sm:$0xff]
    %v228 = vld [vmem:[#allocation2 + $0x628] sm:$0xff]
    %v229 = vld [vmem:[#allocation2 + $0x630] sm:$0xff]
    %v230 = vld [vmem:[#allocation2 + $0x638] sm:$0xff]
    %v231 = vld [vmem:[#allocation2 + $0x640] sm:$0xff]
    %v232 = vld [vmem:[#allocation2 + $0x648] sm:$0xff]
    %v233 = vld [vmem:[#allocation2 + $0x650] sm:$0xff]
    %v234 = vld [vmem:[#allocation2 + $0x658] sm:$0xff]
    %v235 = vld [vmem:[#allocation2 + $0x660] sm:$0xff]
    %v236 = vld [vmem:[#allocation2 + $0x668] sm:$0xff]
    %v237 = vld [vmem:[#allocation2 + $0x670] sm:$0xff]
    %v238 = vld [vmem:[#allocation2 + $0x678] sm:$0xff]
    %v239 = vld [vmem:[#allocation2 + $0x680] sm:$0xff]
    %v240 = vld [vmem:[#allocation2 + $0x688] sm:$0xff]
    %v241 = vld [vmem:[#allocation2 + $0x690] sm:$0xff]
    %v242 = vld [vmem:[#allocation2 + $0x698] sm:$0xff]
    %v243 = vld [vmem:[#allocation2 + $0x6a0] sm:$0xff]
    %v244 = vld [vmem:[#allocation2 + $0x6a8] sm:$0xff]
    %v245 = vld [vmem:[#allocation2 + $0x6b0] sm:$0xff]
    %v246 = vld [vmem:[#allocation2 + $0x6b8] sm:$0xff]
    %v247 = vld [vmem:[#allocation2 + $0x6c0] sm:$0xff]
    %v248 = vld [vmem:[#allocation2 + $0x6c8] sm:$0xff]
    %v249 = vld [vmem:[#allocation2 + $0x6d0] sm:$0xff]
    %v250 = vld [vmem:[#allocation2 + $0x6d8] sm:$0xff]
    %v251 = vld [vmem:[#allocation2 + $0x6e0] sm:$0xff]
    %v252 = vld [vmem:[#allocation2 + $0x6e8] sm:$0xff]
    %v253 = vld [vmem:[#allocation2 + $0x6f0] sm:$0xff]
    %v254 = vld [vmem:[#allocation2 + $0x6f8] sm:$0xff]
    %v255 = vld [vmem:[#allocation2 + $0x700] sm:$0xff]
    %v256 = vld [vmem:[#allocation2 + $0x708] sm:$0xff]
    %v257 = vld [vmem:[#allocation2 + $0x710] sm:$0xff]
    %v258 = vld [vmem:[#allocation2 + $0x718] sm:$0xff]
    %v259 = vld [vmem:[#allocation2 + $0x720] sm:$0xff]
    %v260 = vld [vmem:[#allocation2 + $0x728] sm:$0xff]
    %v261 = vld [vmem:[#allocation2 + $0x730] sm:$0xff]
    %v262 = vld [vmem:[#allocation2 + $0x738] sm:$0xff]
    %v263 = vld [vmem:[#allocation2 + $0x740] sm:$0xff]
    %v264 = vld [vmem:[#allocation2 + $0x748] sm:$0xff]
    %v265 = vld [vmem:[#allocation2 + $0x750] sm:$0xff]
    %v266 = vld [vmem:[#allocation2 + $0x758] sm:$0xff]
    %v267 = vld [vmem:[#allocation2 + $0x760] sm:$0xff]
    %v268 = vld [vmem:[#allocation2 + $0x768] sm:$0xff]
    %v269 = vld [vmem:[#allocation2 + $0x770] sm:$0xff]
    %v270 = vld [vmem:[#allocation2 + $0x778] sm:$0xff]
    %v271 = vld [vmem:[#allocation2 + $0x780] sm:$0xff]
    %v272 = vld [vmem:[#allocation2 + $0x788] sm:$0xff]
    %v273 = vld [vmem:[#allocation2 + $0x790] sm:$0xff]
    %v274 = vld [vmem:[#allocation2 + $0x798] sm:$0xff]
    %v275 = vld [vmem:[#allocation2 + $0x7a0] sm:$0xff]
    %v276 = vld [vmem:[#allocation2 + $0x7a8] sm:$0xff]
    %v277 = vld [vmem:[#allocation2 + $0x7b0] sm:$0xff]
    %v278 = vld [vmem:[#allocation2 + $0x7b8] sm:$0xff]
    %v279 = vld [vmem:[#allocation2 + $0x7c0] sm:$0xff]
    %v280 = vld [vmem:[#allocation2 + $0x7c8] sm:$0xff]
    %v281 = vld [vmem:[#allocation2 + $0x7d0] sm:$0xff]
    %v282 = vld [vmem:[#allocation2 + $0x7d8] sm:$0xff]
    %v283 = vld [vmem:[#allocation2 + $0x7e0] sm:$0xff]
    %v284 = vld [vmem:[#allocation2 + $0x7e8] sm:$0xff]
    %v285 = vld [vmem:[#allocation2 + $0x7f0] sm:$0xff]
    %v286 = vld [vmem:[#allocation2 + $0x7f8] sm:$0xff]
    %v287 = vld [vmem:[#allocation2 + $0x800] sm:$0xff]
    %v288 = vld [vmem:[#allocation2 + $0x808] sm:$0xff]
    %v289 = vld [vmem:[#allocation2 + $0x810] sm:$0xff]
    %v290 = vld [vmem:[#allocation2 + $0x818] sm:$0xff]
    %v291 = vld [vmem:[#allocation2 + $0x820] sm:$0xff]
    %v292 = vld [vmem:[#allocation2 + $0x828] sm:$0xff]
    %v293 = vld [vmem:[#allocation2 + $0x830] sm:$0xff]
    %v294 = vld [vmem:[#allocation2 + $0x838] sm:$0xff]
    %v295 = vld [vmem:[#allocation2 + $0x840] sm:$0xff]
    %v296 = vld [vmem:[#allocation2 + $0x848] sm:$0xff]
    %v297 = vld [vmem:[#allocation2 + $0x850] sm:$0xff]
    %v298 = vld [vmem:[#allocation2 + $0x858] sm:$0xff]
    %v299 = vld [vmem:[#allocation2 + $0x860] sm:$0xff]
    %v300 = vld [vmem:[#allocation2 + $0x868] sm:$0xff]
    %v301 = vld [vmem:[#allocation2 + $0x870] sm:$0xff]
    %v302 = vld [vmem:[#allocation2 + $0x878] sm:$0xff]
    %v303 = vld [vmem:[#allocation2 + $0x880] sm:$0xff]
    %v304 = vld [vmem:[#allocation2 + $0x888] sm:$0xff]
    %v305 = vld [vmem:[#allocation2 + $0x890] sm:$0xff]
    %v306 = vld [vmem:[#allocation2 + $0x898] sm:$0xff]
    %v307 = vld [vmem:[#allocation2 + $0x8a0] sm:$0xff]
    %v308 = vld [vmem:[#allocation2 + $0x8a8] sm:$0xff]
    %v309 = vld [vmem:[#allocation2 + $0x8b0] sm:$0xff]
    %v310 = vld [vmem:[#allocation2 + $0x8b8] sm:$0xff]
    %v311 = vld [vmem:[#allocation2 + $0x8c0] sm:$0xff]
    %v312 = vld [vmem:[#allocation2 + $0x8c8] sm:$0xff]
    %v313 = vld [vmem:[#allocation2 + $0x8d0] sm:$0xff]
    %v314 = vld [vmem:[#allocation2 + $0x8d8] sm:$0xff]
    %v315 = vld [vmem:[#allocation2 + $0x8e0] sm:$0xff]
    %v316 = vld [vmem:[#allocation2 + $0x8e8] sm:$0xff]
    %v317 = vld [vmem:[#allocation2 + $0x8f0] sm:$0xff]
    %v318 = vld [vmem:[#allocation2 + $0x8f8] sm:$0xff]
    %v319 = vld [vmem:[#allocation2 + $0x900] sm:$0xff]
    %v320 = vld [vmem:[#allocation2 + $0x908] sm:$0xff]
    %v321 = vld [vmem:[#allocation2 + $0x910] sm:$0xff]
    %v322 = vld [vmem:[#allocation2 + $0x918] sm:$0xff]
    %v323 = vld [vmem:[#allocation2 + $0x920] sm:$0xff]
    %v324 = vld [vmem:[#allocation2 + $0x928] sm:$0xff]
    %v325 = vld [vmem:[#allocation2 + $0x930] sm:$0xff]
    %v326 = vld [vmem:[#allocation2 + $0x938] sm:$0xff]
    %v327 = vld [vmem:[#allocation2 + $0x940] sm:$0xff]
    %v328 = vld [vmem:[#allocation2 + $0x948] sm:$0xff]
    %v329 = vld [vmem:[#allocation2 + $0x950] sm:$0xff]
    %v330 = vld [vmem:[#allocation2 + $0x958] sm:$0xff]
    %v331 = vld [vmem:[#allocation2 + $0x960] sm:$0xff]
    %v332 = vld [vmem:[#allocation2 + $0x968] sm:$0xff]
    %v333 = vld [vmem:[#allocation2 + $0x970] sm:$0xff]
    %v334 = vld [vmem:[#allocation2 + $0x978] sm:$0xff]
    %v335 = vld [vmem:[#allocation2 + $0x980] sm:$0xff]
    %v336 = vld [vmem:[#allocation2 + $0x988] sm:$0xff]
    %v337 = vld [vmem:[#allocation2 + $0x990] sm:$0xff]
    %v338 = vld [vmem:[#allocation2 + $0x998] sm:$0xff]
    %v339 = vld [vmem:[#allocation2 + $0x9a0] sm:$0xff]
    %v340 = vld [vmem:[#allocation2 + $0x9a8] sm:$0xff]
    %v341 = vld [vmem:[#allocation2 + $0x9b0] sm:$0xff]
    %v342 = vld [vmem:[#allocation2 + $0x9b8] sm:$0xff]
    %v343 = vld [vmem:[#allocation2 + $0x9c0] sm:$0xff]
    %v344 = vld [vmem:[#allocation2 + $0x9c8] sm:$0xff]
    %v345 = vld [vmem:[#allocation2 + $0x9d0] sm:$0xff]
    %v346 = vld [vmem:[#allocation2 + $0x9d8] sm:$0xff]
    %v347 = vld [vmem:[#allocation2 + $0x9e0] sm:$0xff]
    %v348 = vld [vmem:[#allocation2 + $0x9e8] sm:$0xff]
    %v349 = vld [vmem:[#allocation2 + $0x9f0] sm:$0xff]
    %v350 = vld [vmem:[#allocation2 + $0x9f8] sm:$0xff]
    %v351 = vld [vmem:[#allocation2 + $0xa00] sm:$0xff]
    %v352 = vld [vmem:[#allocation2 + $0xa08] sm:$0xff]
    %v353 = vld [vmem:[#allocation2 + $0xa10] sm:$0xff]
    %v354 = vld [vmem:[#allocation2 + $0xa18] sm:$0xff]
    %v355 = vld [vmem:[#allocation2 + $0xa20] sm:$0xff]
    %v356 = vld [vmem:[#allocation2 + $0xa28] sm:$0xff]
    %v357 = vld [vmem:[#allocation2 + $0xa30] sm:$0xff]
    %v358 = vld [vmem:[#allocation2 + $0xa38] sm:$0xff]
    %v359 = vld [vmem:[#allocation2 + $0xa40] sm:$0xff]
    %v360 = vld [vmem:[#allocation2 + $0xa48] sm:$0xff]
    %v361 = vld [vmem:[#allocation2 + $0xa50] sm:$0xff]
    %v362 = vld [vmem:[#allocation2 + $0xa58] sm:$0xff]
    %v363 = vld [vmem:[#allocation2 + $0xa60] sm:$0xff]
    %v364 = vld [vmem:[#allocation2 + $0xa68] sm:$0xff]
    %v365 = vld [vmem:[#allocation2 + $0xa70] sm:$0xff]
    %v366 = vld [vmem:[#allocation2 + $0xa78] sm:$0xff]
    %v367 = vld [vmem:[#allocation2 + $0xa80] sm:$0xff]
    %v368 = vld [vmem:[#allocation2 + $0xa88] sm:$0xff]
    %v369 = vld [vmem:[#allocation2 + $0xa90] sm:$0xff]
    %v370 = vld [vmem:[#allocation2 + $0xa98] sm:$0xff]
    %v371 = vld [vmem:[#allocation2 + $0xaa0] sm:$0xff]
    %v372 = vld [vmem:[#allocation2 + $0xaa8] sm:$0xff]
    %v373 = vld [vmem:[#allocation2 + $0xab0] sm:$0xff]
    %v374 = vld [vmem:[#allocation2 + $0xab8] sm:$0xff]
    %v375 = vld [vmem:[#allocation2 + $0xac0] sm:$0xff]
    %v376 = vld [vmem:[#allocation2 + $0xac8] sm:$0xff]
    %v377 = vld [vmem:[#allocation2 + $0xad0] sm:$0xff]
    %v378 = vld [vmem:[#allocation2 + $0xad8] sm:$0xff]
    %v379 = vld [vmem:[#allocation2 + $0xae0] sm:$0xff]
    %v380 = vld [vmem:[#allocation2 + $0xae8] sm:$0xff]
    %v381 = vld [vmem:[#allocation2 + $0xaf0] sm:$0xff]
    %v382 = vld [vmem:[#allocation2 + $0xaf8] sm:$0xff]
    %v383 = vld [vmem:[#allocation2 + $0xb00] sm:$0xff]
    %v384 = vld [vmem:[#allocation2 + $0xb08] sm:$0xff]
    %v385 = vld [vmem:[#allocation2 + $0xb10] sm:$0xff]
    %v386 = vld [vmem:[#allocation2 + $0xb18] sm:$0xff]
    %v387 = vld [vmem:[#allocation2 + $0xb20] sm:$0xff]
    %v388 = vld [vmem:[#allocation2 + $0xb28] sm:$0xff]
    %v389 = vld [vmem:[#allocation2 + $0xb30] sm:$0xff]
    %v390 = vld [vmem:[#allocation2 + $0xb38] sm:$0xff]
    %v391 = vld [vmem:[#allocation2 + $0xb40] sm:$0xff]
    %v392 = vld [vmem:[#allocation2 + $0xb48] sm:$0xff]
    %v393 = vld [vmem:[#allocation2 + $0xb50] sm:$0xff]
    %v394 = vld [vmem:[#allocation2 + $0xb58] sm:$0xff]
    %v395 = vld [vmem:[#allocation2 + $0xb60] sm:$0xff]
    %v396 = vld [vmem:[#allocation2 + $0xb68] sm:$0xff]
    %v397 = vld [vmem:[#allocation2 + $0xb70] sm:$0xff]
    %v398 = vld [vmem:[#allocation2 + $0xb78] sm:$0xff]
    %v399 = vld [vmem:[#allocation2 + $0xb80] sm:$0xff]
    %v400 = vld [vmem:[#allocation2 + $0xb88] sm:$0xff]
    %v401 = vld [vmem:[#allocation2 + $0xb90] sm:$0xff]
    %v402 = vld [vmem:[#allocation2 + $0xb98] sm:$0xff]
    %v403 = vld [vmem:[#allocation2 + $0xba0] sm:$0xff]
    %v404 = vld [vmem:[#allocation2 + $0xba8] sm:$0xff]
    %v405 = vld [vmem:[#allocation2 + $0xbb0] sm:$0xff]
    %v406 = vld [vmem:[#allocation2 + $0xbb8] sm:$0xff]
    %v407 = vld [vmem:[#allocation2 + $0xbc0] sm:$0xff]
    %v408 = vld [vmem:[#allocation2 + $0xbc8] sm:$0xff]
    %v409 = vld [vmem:[#allocation2 + $0xbd0] sm:$0xff]
    %v410 = vld [vmem:[#allocation2 + $0xbd8] sm:$0xff]
    %v411 = vld [vmem:[#allocation2 + $0xbe0] sm:$0xff]
    %v412 = vld [vmem:[#allocation2 + $0xbe8] sm:$0xff]
    %v413 = vld [vmem:[#allocation2 + $0xbf0] sm:$0xff]
    %v414 = vld [vmem:[#allocation2 + $0xbf8] sm:$0xff]
    %v415 = vld [vmem:[#allocation2 + $0xc00] sm:$0xff]
    %v416 = vld [vmem:[#allocation2 + $0xc08] sm:$0xff]
    %v417 = vld [vmem:[#allocation2 + $0xc10] sm:$0xff]
    %v418 = vld [vmem:[#allocation2 + $0xc18] sm:$0xff]
    %v419 = vld [vmem:[#allocation2 + $0xc20] sm:$0xff]
    %v420 = vld [vmem:[#allocation2 + $0xc28] sm:$0xff]
    %v421 = vld [vmem:[#allocation2 + $0xc30] sm:$0xff]
    %v422 = vld [vmem:[#allocation2 + $0xc38] sm:$0xff]
    %v423 = vld [vmem:[#allocation2 + $0xc40] sm:$0xff]
    %v424 = vld [vmem:[#allocation2 + $0xc48] sm:$0xff]
    %v425 = vld [vmem:[#allocation2 + $0xc50] sm:$0xff]
    %v426 = vld [vmem:[#allocation2 + $0xc58] sm:$0xff]
    %v427 = vld [vmem:[#allocation2 + $0xc60] sm:$0xff]
    %v428 = vld [vmem:[#allocation2 + $0xc68] sm:$0xff]
    %v429 = vld [vmem:[#allocation2 + $0xc70] sm:$0xff]
    %v430 = vld [vmem:[#allocation2 + $0xc78] sm:$0xff]
    %v431 = vld [vmem:[#allocation2 + $0xc80] sm:$0xff]
    %v432 = vld [vmem:[#allocation2 + $0xc88] sm:$0xff]
    %v433 = vld [vmem:[#allocation2 + $0xc90] sm:$0xff]
    %v434 = vld [vmem:[#allocation2 + $0xc98] sm:$0xff]
    %v435 = vld [vmem:[#allocation2 + $0xca0] sm:$0xff]
    %v436 = vld [vmem:[#allocation2 + $0xca8] sm:$0xff]
    %v437 = vld [vmem:[#allocation2 + $0xcb0] sm:$0xff]
    %v438 = vld [vmem:[#allocation2 + $0xcb8] sm:$0xff]
    %v439 = vld [vmem:[#allocation2 + $0xcc0] sm:$0xff]
    %v440 = vld [vmem:[#allocation2 + $0xcc8] sm:$0xff]
    %v441 = vld [vmem:[#allocation2 + $0xcd0] sm:$0xff]
    %v442 = vld [vmem:[#allocation2 + $0xcd8] sm:$0xff]
    %v443 = vld [vmem:[#allocation2 + $0xce0] sm:$0xff]
    %v444 = vld [vmem:[#allocation2 + $0xce8] sm:$0xff]
    %v445 = vld [vmem:[#allocation2 + $0xcf0] sm:$0xff]
    %v446 = vld [vmem:[#allocation2 + $0xcf8] sm:$0xff]
    %v447 = vld [vmem:[#allocation2 + $0xd00] sm:$0xff]
    %v448 = vld [vmem:[#allocation2 + $0xd08] sm:$0xff]
    %v449 = vld [vmem:[#allocation2 + $0xd10] sm:$0xff]
    %v450 = vld [vmem:[#allocation2 + $0xd18] sm:$0xff]
    %v451 = vld [vmem:[#allocation2 + $0xd20] sm:$0xff]
    %v452 = vld [vmem:[#allocation2 + $0xd28] sm:$0xff]
    %v453 = vld [vmem:[#allocation2 + $0xd30] sm:$0xff]
    %v454 = vld [vmem:[#allocation2 + $0xd38] sm:$0xff]
    %v455 = vld [vmem:[#allocation2 + $0xd40] sm:$0xff]
    %v456 = vld [vmem:[#allocation2 + $0xd48] sm:$0xff]
    %v457 = vld [vmem:[#allocation2 + $0xd50] sm:$0xff]
    %v458 = vld [vmem:[#allocation2 + $0xd58] sm:$0xff]
    %v459 = vld [vmem:[#allocation2 + $0xd60] sm:$0xff]
    %v460 = vld [vmem:[#allocation2 + $0xd68] sm:$0xff]
    %v461 = vld [vmem:[#allocation2 + $0xd70] sm:$0xff]
    %v462 = vld [vmem:[#allocation2 + $0xd78] sm:$0xff]
    %v463 = vld [vmem:[#allocation2 + $0xd80] sm:$0xff]
    %v464 = vld [vmem:[#allocation2 + $0xd88] sm:$0xff]
    %v465 = vld [vmem:[#allocation2 + $0xd90] sm:$0xff]
    %v466 = vld [vmem:[#allocation2 + $0xd98] sm:$0xff]
    %v467 = vld [vmem:[#allocation2 + $0xda0] sm:$0xff]
    %v468 = vld [vmem:[#allocation2 + $0xda8] sm:$0xff]
    %v469 = vld [vmem:[#allocation2 + $0xdb0] sm:$0xff]
    %v470 = vld [vmem:[#allocation2 + $0xdb8] sm:$0xff]
    %v471 = vld [vmem:[#allocation2 + $0xdc0] sm:$0xff]
    %v472 = vld [vmem:[#allocation2 + $0xdc8] sm:$0xff]
    %v473 = vld [vmem:[#allocation2 + $0xdd0] sm:$0xff]
    %v474 = vld [vmem:[#allocation2 + $0xdd8] sm:$0xff]
    %v475 = vld [vmem:[#allocation2 + $0xde0] sm:$0xff]
    %v476 = vld [vmem:[#allocation2 + $0xde8] sm:$0xff]
    %v477 = vld [vmem:[#allocation2 + $0xdf0] sm:$0xff]
    %v478 = vld [vmem:[#allocation2 + $0xdf8] sm:$0xff]
    %v479 = vld [vmem:[#allocation2 + $0xe00] sm:$0xff]
    %v480 = vld [vmem:[#allocation2 + $0xe08] sm:$0xff]
    %v481 = vld [vmem:[#allocation2 + $0xe10] sm:$0xff]
    %v482 = vld [vmem:[#allocation2 + $0xe18] sm:$0xff]
    %v483 = vld [vmem:[#allocation2 + $0xe20] sm:$0xff]
    %v484 = vld [vmem:[#allocation2 + $0xe28] sm:$0xff]
    %v485 = vld [vmem:[#allocation2 + $0xe30] sm:$0xff]
    %v486 = vld [vmem:[#allocation2 + $0xe38] sm:$0xff]
    %v487 = vld [vmem:[#allocation2 + $0xe40] sm:$0xff]
    %v488 = vld [vmem:[#allocation2 + $0xe48] sm:$0xff]
    %v489 = vld [vmem:[#allocation2 + $0xe50] sm:$0xff]
    %v490 = vld [vmem:[#allocation2 + $0xe58] sm:$0xff]
    %v491 = vld [vmem:[#allocation2 + $0xe60] sm:$0xff]
    %v492 = vld [vmem:[#allocation2 + $0xe68] sm:$0xff]
    %v493 = vld [vmem:[#allocation2 + $0xe70] sm:$0xff]
    %v494 = vld [vmem:[#allocation2 + $0xe78] sm:$0xff]
    %v495 = vld [vmem:[#allocation2 + $0xe80] sm:$0xff]
    %v496 = vld [vmem:[#allocation2 + $0xe88] sm:$0xff]
    %v497 = vld [vmem:[#allocation2 + $0xe90] sm:$0xff]
    %v498 = vld [vmem:[#allocation2 + $0xe98] sm:$0xff]
    %v499 = vld [vmem:[#allocation2 + $0xea0] sm:$0xff]
    %v500 = vld [vmem:[#allocation2 + $0xea8] sm:$0xff]
    %v501 = vld [vmem:[#allocation2 + $0xeb0] sm:$0xff]
    %v502 = vld [vmem:[#allocation2 + $0xeb8] sm:$0xff]
    %v503 = vld [vmem:[#allocation2 + $0xec0] sm:$0xff]
    %v504 = vld [vmem:[#allocation2 + $0xec8] sm:$0xff]
    %v505 = vld [vmem:[#allocation2 + $0xed0] sm:$0xff]
    %v506 = vld [vmem:[#allocation2 + $0xed8] sm:$0xff]
    %v507 = vld [vmem:[#allocation2 + $0xee0] sm:$0xff]
    %v508 = vld [vmem:[#allocation2 + $0xee8] sm:$0xff]
    %v509 = vld [vmem:[#allocation2 + $0xef0] sm:$0xff]
    %v510 = vld [vmem:[#allocation2 + $0xef8] sm:$0xff]
    %v511 = vld [vmem:[#allocation2 + $0xf00] sm:$0xff]
    %v512 = vld [vmem:[#allocation2 + $0xf08] sm:$0xff]
    %v513 = vld [vmem:[#allocation2 + $0xf10] sm:$0xff]
    %v514 = vld [vmem:[#allocation2 + $0xf18] sm:$0xff]
    %v515 = vld [vmem:[#allocation2 + $0xf20] sm:$0xff]
    %v516 = vld [vmem:[#allocation2 + $0xf28] sm:$0xff]
    %v517 = vld [vmem:[#allocation2 + $0xf30] sm:$0xff]
    %v518 = vld [vmem:[#allocation2 + $0xf38] sm:$0xff]
    %v519 = vld [vmem:[#allocation2 + $0xf40] sm:$0xff]
    %v520 = vld [vmem:[#allocation2 + $0xf48] sm:$0xff]
    %v521 = vld [vmem:[#allocation2 + $0xf50] sm:$0xff]
    %v522 = vld [vmem:[#allocation2 + $0xf58] sm:$0xff]
    %v523 = vld [vmem:[#allocation2 + $0xf60] sm:$0xff]
    %v524 = vld [vmem:[#allocation2 + $0xf68] sm:$0xff]
    %v525 = vld [vmem:[#allocation2 + $0xf70] sm:$0xff]
    %v526 = vld [vmem:[#allocation2 + $0xf78] sm:$0xff]
    %v527 = vld [vmem:[#allocation2 + $0xf80] sm:$0xff]
    %v528 = vld [vmem:[#allocation2 + $0xf88] sm:$0xff]
    %v529 = vld [vmem:[#allocation2 + $0xf90] sm:$0xff]
    %v530 = vld [vmem:[#allocation2 + $0xf98] sm:$0xff]
    %v531 = vld [vmem:[#allocation2 + $0xfa0] sm:$0xff]
    %v532 = vld [vmem:[#allocation2 + $0xfa8] sm:$0xff]
    %v533 = vld [vmem:[#allocation2 + $0xfb0] sm:$0xff]
    %v534 = vld [vmem:[#allocation2 + $0xfb8] sm:$0xff]
    %v535 = vld [vmem:[#allocation2 + $0xfc0] sm:$0xff]
    %v536 = vld [vmem:[#allocation2 + $0xfc8] sm:$0xff]
    %v537 = vld [vmem:[#allocation2 + $0xfd0] sm:$0xff]
    %v538 = vld [vmem:[#allocation2 + $0xfd8] sm:$0xff]
    %v539 = vld [vmem:[#allocation2 + $0xfe0] sm:$0xff]
    %v540 = vld [vmem:[#allocation2 + $0xfe8] sm:$0xff]
    %v541 = vld [vmem:[#allocation2 + $0xff0] sm:$0xff]
    %v542 = vld [vmem:[#allocation2 + $0xff8] sm:$0xff]
    %v543 = vld [vmem:[#allocation2 + $0x1000] sm:$0xff]
    %v544 = vld [vmem:[#allocation2 + $0x1008] sm:$0xff]
    %v545 = vld [vmem:[#allocation2 + $0x1010] sm:$0xff]
    %v546 = vld [vmem:[#allocation2 + $0x1018] sm:$0xff]
    %v547 = vld [vmem:[#allocation2 + $0x1020] sm:$0xff]
    %v548 = vld [vmem:[#allocation2 + $0x1028] sm:$0xff]
    %v549 = vld [vmem:[#allocation2 + $0x1030] sm:$0xff]
    %v550 = vld [vmem:[#allocation2 + $0x1038] sm:$0xff]
    %v551 = vld [vmem:[#allocation2 + $0x1040] sm:$0xff]
    %v552 = vld [vmem:[#allocation2 + $0x1048] sm:$0xff]
    %v553 = vld [vmem:[#allocation2 + $0x1050] sm:$0xff]
    %v554 = vld [vmem:[#allocation2 + $0x1058] sm:$0xff]
    %v555 = vld [vmem:[#allocation2 + $0x1060] sm:$0xff]
    %v556 = vld [vmem:[#allocation2 + $0x1068] sm:$0xff]
    %v557 = vld [vmem:[#allocation2 + $0x1070] sm:$0xff]
    %v558 = vld [vmem:[#allocation2 + $0x1078] sm:$0xff]
    %v559 = vld [vmem:[#allocation2 + $0x1080] sm:$0xff]
    %v560 = vld [vmem:[#allocation2 + $0x1088] sm:$0xff]
    %v561 = vld [vmem:[#allocation2 + $0x1090] sm:$0xff]
    %v562 = vld [vmem:[#allocation2 + $0x1098] sm:$0xff]
    %v563 = vld [vmem:[#allocation2 + $0x10a0] sm:$0xff]
    %v564 = vld [vmem:[#allocation2 + $0x10a8] sm:$0xff]
    %v565 = vld [vmem:[#allocation2 + $0x10b0] sm:$0xff]
    %v566 = vld [vmem:[#allocation2 + $0x10b8] sm:$0xff]
    %v567 = vld [vmem:[#allocation2 + $0x10c0] sm:$0xff]
    %v568 = vld [vmem:[#allocation2 + $0x10c8] sm:$0xff]
    %v569 = vld [vmem:[#allocation2 + $0x10d0] sm:$0xff]
    %v570 = vld [vmem:[#allocation2 + $0x10d8] sm:$0xff]
    %v571 = vld [vmem:[#allocation2 + $0x10e0] sm:$0xff]
    %v572 = vld [vmem:[#allocation2 + $0x10e8] sm:$0xff]
    %v573 = vld [vmem:[#allocation2 + $0x10f0] sm:$0xff]
    %v574 = vld [vmem:[#allocation2 + $0x10f8] sm:$0xff]
    %v575 = vld [vmem:[#allocation2 + $0x1100] sm:$0xff]
    %v576 = vld [vmem:[#allocation2 + $0x1108] sm:$0xff]
    %v577 = vld [vmem:[#allocation2 + $0x1110] sm:$0xff]
    %v578 = vld [vmem:[#allocation2 + $0x1118] sm:$0xff]
    %v579 = vld [vmem:[#allocation2 + $0x1120] sm:$0xff]
    %v580 = vld [vmem:[#allocation2 + $0x1128] sm:$0xff]
    %v581 = vld [vmem:[#allocation2 + $0x1130] sm:$0xff]
    %v582 = vld [vmem:[#allocation2 + $0x1138] sm:$0xff]
    %v583 = vld [vmem:[#allocation2 + $0x1140] sm:$0xff]
    %v584 = vld [vmem:[#allocation2 + $0x1148] sm:$0xff]
    %v585 = vld [vmem:[#allocation2 + $0x1150] sm:$0xff]
    %v586 = vld [vmem:[#allocation2 + $0x1158] sm:$0xff]
    %v587 = vld [vmem:[#allocation2 + $0x1160] sm:$0xff]
    %v588 = vld [vmem:[#allocation2 + $0x1168] sm:$0xff]
    %v589 = vld [vmem:[#allocation2 + $0x1170] sm:$0xff]
    %v590 = vld [vmem:[#allocation2 + $0x1178] sm:$0xff]
    %v591 = vld [vmem:[#allocation2 + $0x1180] sm:$0xff]
    %v592 = vld [vmem:[#allocation2 + $0x1188] sm:$0xff]
    %v593 = vld [vmem:[#allocation2 + $0x1190] sm:$0xff]
    %v594 = vld [vmem:[#allocation2 + $0x1198] sm:$0xff]
    %v595 = vld [vmem:[#allocation2 + $0x11a0] sm:$0xff]
    %v596 = vld [vmem:[#allocation2 + $0x11a8] sm:$0xff]
    %v597 = vld [vmem:[#allocation2 + $0x11b0] sm:$0xff]
    %v598 = vld [vmem:[#allocation2 + $0x11b8] sm:$0xff]
    %v599 = vld [vmem:[#allocation2 + $0x11c0] sm:$0xff]
    %v600 = vld [vmem:[#allocation2 + $0x11c8] sm:$0xff]
    %v601 = vld [vmem:[#allocation2 + $0x11d0] sm:$0xff]
    %v602 = vld [vmem:[#allocation2 + $0x11d8] sm:$0xff]
    %v603 = vld [vmem:[#allocation2 + $0x11e0] sm:$0xff]
    %v604 = vld [vmem:[#allocation2 + $0x11e8] sm:$0xff]
    %v605 = vld [vmem:[#allocation2 + $0x11f0] sm:$0xff]
    %v606 = vld [vmem:[#allocation2 + $0x11f8] sm:$0xff]
    %607 = vmatprep.subr.mxu0 %v32
    %608 = vmatpush1.msra.mxu0 %v31
    %609 = vmatprep.subr.mxu0 %v38
    %610 = vmatpush1.msra.mxu0 %v37
    %611 = vmatprep.subr.mxu0 %v44
    %612 = vmatpush1.msra.mxu0 %v43
    %613 = vmatprep.subr.mxu0 %v50
    %614 = vmatpush1.msra.mxu0 %v49
    %615 = vmatprep.subr.mxu0 %v56
    %616 = vmatpush1.msra.mxu0 %v55
    %617 = vmatprep.subr.mxu0 %v62
    %618 = vmatpush1.msra.mxu0 %v61
    %619 = vmatprep.subr.mxu0 %v68
    %620 = vmatpush1.msra.mxu0 %v67
    %621 = vmatprep.subr.mxu0 %v74
    %622 = vmatpush1.msra.mxu0 %v73
    %623 = vmatprep.subr.mxu0 %v80
    %624 = vmatpush1.msra.mxu0 %v79
    %625 = vmatprep.subr.mxu0 %v86
    %626 = vmatpush1.msra.mxu0 %v85
    %627 = vmatprep.subr.mxu0 %v92
    %628 = vmatpush1.msra.mxu0 %v91
    %629 = vmatprep.subr.mxu0 %v98
    %630 = vmatpush1.msra.mxu0 %v97
    %631 = vmatprep.subr.mxu0 %v104
    %632 = vmatpush1.msra.mxu0 %v103
    %633 = vmatprep.subr.mxu0 %v110
    %634 = vmatpush1.msra.mxu0 %v109
    %635 = vmatprep.subr.mxu0 %v116
    %636 = vmatpush1.msra.mxu0 %v115
    %637 = vmatprep.subr.mxu0 %v122
    %638 = vmatpush1.msra.mxu0 %v121
    %639 = vmatprep.subr.mxu0 %v128
    %640 = vmatpush1.msra.mxu0 %v127
    %641 = vmatprep.subr.mxu0 %v134
    %642 = vmatpush1.msra.mxu0 %v133
    %643 = vmatprep.subr.mxu0 %v140
    %644 = vmatpush1.msra.mxu0 %v139
    %645 = vmatprep.subr.mxu0 %v146
    %646 = vmatpush1.msra.mxu0 %v145
    %647 = vmatprep.subr.mxu0 %v152
    %648 = vmatpush1.msra.mxu0 %v151
    %649 = vmatprep.subr.mxu0 %v158
    %650 = vmatpush1.msra.mxu0 %v157
    %651 = vmatprep.subr.mxu0 %v164
    %652 = vmatpush1.msra.mxu0 %v163
    %653 = vmatprep.subr.mxu0 %v170
    %654 = vmatpush1.msra.mxu0 %v169
    %655 = vmatprep.subr.mxu0 %v176
    %656 = vmatpush1.msra.mxu0 %v175
    %657 = vmatprep.subr.mxu0 %v182
    %658 = vmatpush1.msra.mxu0 %v181
    %659 = vmatprep.subr.mxu0 %v188
    %660 = vmatpush1.msra.mxu0 %v187
    %661 = vmatprep.subr.mxu0 %v194
    %662 = vmatpush1.msra.mxu0 %v193
    %663 = vmatprep.subr.mxu0 %v200
    %664 = vmatpush1.msra.mxu0 %v199
    %665 = vmatprep.subr.mxu0 %v206
    %666 = vmatpush1.msra.mxu0 %v205
    %667 = vmatprep.subr.mxu0 %v212
    %668 = vmatpush1.msra.mxu0 %v211
    %669 = vmatprep.subr.mxu0 %v218
    %670 = vmatpush1.msra.mxu0 %v217
    %671 = vmatprep.mubr.f32.mxu0 %v26
    %672 = vmatmul.mubr.f32.gmra.mrb[0].mxu0 %v25
    %v673 = vpop.f32.mrb[0].mxu0
    %v674 = vadd.f32 0.0, %v673
    %v675 = vpop.f32.mrb[0].mxu0
    %v676 = vadd.f32 0.0, %v675
    %677 = vdwg.mxu0
    %678 = vmatprep.subr.mxu0 %v224
    %679 = vmatpush1.msra.mxu0 %v223
    %680 = vmatprep.subr.mxu0 %v230
    %681 = vmatpush1.msra.mxu0 %v229
    %682 = vmatprep.subr.mxu0 %v236
    %683 = vmatpush1.msra.mxu0 %v235
    %684 = vmatprep.subr.mxu0 %v242
    %685 = vmatpush1.msra.mxu0 %v241
    %686 = vmatprep.subr.mxu0 %v248
    %687 = vmatpush1.msra.mxu0 %v247
    %688 = vmatprep.subr.mxu0 %v254
    %689 = vmatpush1.msra.mxu0 %v253
    %690 = vmatprep.subr.mxu0 %v260
    %691 = vmatpush1.msra.mxu0 %v259
    %692 = vmatprep.subr.mxu0 %v266
    %693 = vmatpush1.msra.mxu0 %v265
    %694 = vmatprep.subr.mxu0 %v272
    %695 = vmatpush1.msra.mxu0 %v271
    %696 = vmatprep.subr.mxu0 %v278
    %697 = vmatpush1.msra.mxu0 %v277
    %698 = vmatprep.subr.mxu0 %v284
    %699 = vmatpush1.msra.mxu0 %v283
    %700 = vmatprep.subr.mxu0 %v290
    %701 = vmatpush1.msra.mxu0 %v289
    %702 = vmatprep.subr.mxu0 %v296
    %703 = vmatpush1.msra.mxu0 %v295
    %704 = vmatprep.subr.mxu0 %v302
    %705 = vmatpush1.msra.mxu0 %v301
    %706 = vmatprep.subr.mxu0 %v308
    %707 = vmatpush1.msra.mxu0 %v307
    %708 = vmatprep.subr.mxu0 %v314
    %709 = vmatpush1.msra.mxu0 %v313
    %710 = vmatprep.subr.mxu0 %v320
    %711 = vmatpush1.msra.mxu0 %v319
    %712 = vmatprep.subr.mxu0 %v326
    %713 = vmatpush1.msra.mxu0 %v325
    %714 = vmatprep.subr.mxu0 %v332
    %715 = vmatpush1.msra.mxu0 %v331
    %716 = vmatprep.subr.mxu0 %v338
    %717 = vmatpush1.msra.mxu0 %v337
    %718 = vmatprep.subr.mxu0 %v344
    %719 = vmatpush1.msra.mxu0 %v343
    %720 = vmatprep.subr.mxu0 %v350
    %721 = vmatpush1.msra.mxu0 %v349
    %722 = vmatprep.subr.mxu0 %v356
    %723 = vmatpush1.msra.mxu0 %v355
    %724 = vmatprep.subr.mxu0 %v362
    %725 = vmatpush1.msra.mxu0 %v361
    %726 = vmatprep.subr.mxu0 %v368
    %727 = vmatpush1.msra.mxu0 %v367
    %728 = vmatprep.subr.mxu0 %v374
    %729 = vmatpush1.msra.mxu0 %v373
    %730 = vmatprep.subr.mxu0 %v380
    %731 = vmatpush1.msra.mxu0 %v379
    %732 = vmatprep.subr.mxu0 %v386
    %733 = vmatpush1.msra.mxu0 %v385
    %734 = vmatprep.subr.mxu0 %v392
    %735 = vmatpush1.msra.mxu0 %v391
    %736 = vmatprep.subr.mxu0 %v398
    %737 = vmatpush1.msra.mxu0 %v397
    %738 = vmatprep.subr.mxu0 %v404
    %739 = vmatpush1.msra.mxu0 %v403
    %740 = vmatprep.subr.mxu0 %v410
    %741 = vmatpush1.msra.mxu0 %v409
    %742 = vmatprep.mubr.f32.mxu0 %v28
    %743 = vmatmul.mubr.f32.gmra.mrb[0].mxu0 %v27
    %v744 = vpop.f32.mrb[0].mxu0
    %v745 = vadd.f32 %v674, %v744
    %v746 = vpop.f32.mrb[0].mxu0
    %v747 = vadd.f32 %v676, %v746
    %748 = vdwg.mxu0
    %749 = vmatprep.subr.mxu0 %v416
    %750 = vmatpush1.msra.mxu0 %v415
    %751 = vmatprep.subr.mxu0 %v422
    %752 = vmatpush1.msra.mxu0 %v421
    %753 = vmatprep.subr.mxu0 %v428
    %754 = vmatpush1.msra.mxu0 %v427
    %755 = vmatprep.subr.mxu0 %v434
    %756 = vmatpush1.msra.mxu0 %v433
    %757 = vmatprep.subr.mxu0 %v440
    %758 = vmatpush1.msra.mxu0 %v439
    %759 = vmatprep.subr.mxu0 %v446
    %760 = vmatpush1.msra.mxu0 %v445
    %761 = vmatprep.subr.mxu0 %v452
    %762 = vmatpush1.msra.mxu0 %v451
    %763 = vmatprep.subr.mxu0 %v458
    %764 = vmatpush1.msra.mxu0 %v457
    %765 = vmatprep.subr.mxu0 %v464
    %766 = vmatpush1.msra.mxu0 %v463
    %767 = vmatprep.subr.mxu0 %v470
    %768 = vmatpush1.msra.mxu0 %v469
    %769 = vmatprep.subr.mxu0 %v476
    %770 = vmatpush1.msra.mxu0 %v475
    %771 = vmatprep.subr.mxu0 %v482
    %772 = vmatpush1.msra.mxu0 %v481
    %773 = vmatprep.subr.mxu0 %v488
    %774 = vmatpush1.msra.mxu0 %v487
    %775 = vmatprep.subr.mxu0 %v494
    %776 = vmatpush1.msra.mxu0 %v493
    %777 = vmatprep.subr.mxu0 %v500
    %778 = vmatpush1.msra.mxu0 %v499
    %779 = vmatprep.subr.mxu0 %v506
    %780 = vmatpush1.msra.mxu0 %v505
    %781 = vmatprep.subr.mxu0 %v512
    %782 = vmatpush1.msra.mxu0 %v511
    %783 = vmatprep.subr.mxu0 %v518
    %784 = vmatpush1.msra.mxu0 %v517
    %785 = vmatprep.subr.mxu0 %v524
    %786 = vmatpush1.msra.mxu0 %v523
    %787 = vmatprep.subr.mxu0 %v530
    %788 = vmatpush1.msra.mxu0 %v529
    %789 = vmatprep.subr.mxu0 %v536
    %790 = vmatpush1.msra.mxu0 %v535
    %791 = vmatprep.subr.mxu0 %v542
    %792 = vmatpush1.msra.mxu0 %v541
    %793 = vmatprep.subr.mxu0 %v548
    %794 = vmatpush1.msra.mxu0 %v547
    %795 = vmatprep.subr.mxu0 %v554
    %796 = vmatpush1.msra.mxu0 %v553
    %797 = vmatprep.subr.mxu0 %v560
    %798 = vmatpush1.msra.mxu0 %v559
    %799 = vmatprep.subr.mxu0 %v566
    %800 = vmatpush1.msra.mxu0 %v565
    %801 = vmatprep.subr.mxu0 %v572
    %802 = vmatpush1.msra.mxu0 %v571
    %803 = vmatprep.subr.mxu0 %v578
    %804 = vmatpush1.msra.mxu0 %v577
    %805 = vmatprep.subr.mxu0 %v584
    %806 = vmatpush1.msra.mxu0 %v583
    %807 = vmatprep.subr.mxu0 %v590
    %808 = vmatpush1.msra.mxu0 %v589
    %809 = vmatprep.subr.mxu0 %v596
    %810 = vmatpush1.msra.mxu0 %v595
    %811 = vmatprep.subr.mxu0 %v602
    %812 = vmatpush1.msra.mxu0 %v601
    %813 = vmatprep.mubr.f32.mxu0 %v30
    %814 = vmatmul.mubr.f32.gmra.mrb[0].mxu0 %v29
    %v815 = vpop.f32.mrb[0].mxu0
    %v816 = vadd.f32 %v745, %v815
    %v817 = vpop.f32.mrb[0].mxu0
    %v818 = vadd.f32 %v747, %v817
    %819 = vdwg.mxu0
    %820 = vmatprep.subr.mxu0 %v34
    %821 = vmatpush1.msra.mxu0 %v33
    %822 = vmatprep.subr.mxu0 %v40
    %823 = vmatpush1.msra.mxu0 %v39
    %824 = vmatprep.subr.mxu0 %v46
    %825 = vmatpush1.msra.mxu0 %v45
    %826 = vmatprep.subr.mxu0 %v52
    %827 = vmatpush1.msra.mxu0 %v51
    %828 = vmatprep.subr.mxu0 %v58
    %829 = vmatpush1.msra.mxu0 %v57
    %830 = vmatprep.subr.mxu0 %v64
    %831 = vmatpush1.msra.mxu0 %v63
    %832 = vmatprep.subr.mxu0 %v70
    %833 = vmatpush1.msra.mxu0 %v69
    %834 = vmatprep.subr.mxu0 %v76
    %835 = vmatpush1.msra.mxu0 %v75
    %836 = vmatprep.subr.mxu0 %v82
    %837 = vmatpush1.msra.mxu0 %v81
    %838 = vmatprep.subr.mxu0 %v88
    %839 = vmatpush1.msra.mxu0 %v87
    %840 = vmatprep.subr.mxu0 %v94
    %841 = vmatpush1.msra.mxu0 %v93
    %842 = vmatprep.subr.mxu0 %v100
    %843 = vmatpush1.msra.mxu0 %v99
    %844 = vmatprep.subr.mxu0 %v106
    %845 = vmatpush1.msra.mxu0 %v105
    %846 = vmatprep.subr.mxu0 %v112
    %847 = vmatpush1.msra.mxu0 %v111
    %848 = vmatprep.subr.mxu0 %v118
    %849 = vmatpush1.msra.mxu0 %v117
    %850 = vmatprep.subr.mxu0 %v124
    %851 = vmatpush1.msra.mxu0 %v123
    %852 = vmatprep.subr.mxu0 %v130
    %853 = vmatpush1.msra.mxu0 %v129
    %854 = vmatprep.subr.mxu0 %v136
    %855 = vmatpush1.msra.mxu0 %v135
    %856 = vmatprep.subr.mxu0 %v142
    %857 = vmatpush1.msra.mxu0 %v141
    %858 = vmatprep.subr.mxu0 %v148
    %859 = vmatpush1.msra.mxu0 %v147
    %860 = vmatprep.subr.mxu0 %v154
    %861 = vmatpush1.msra.mxu0 %v153
    %862 = vmatprep.subr.mxu0 %v160
    %863 = vmatpush1.msra.mxu0 %v159
    %864 = vmatprep.subr.mxu0 %v166
    %865 = vmatpush1.msra.mxu0 %v165
    %866 = vmatprep.subr.mxu0 %v172
    %867 = vmatpush1.msra.mxu0 %v171
    %868 = vmatprep.subr.mxu0 %v178
    %869 = vmatpush1.msra.mxu0 %v177
    %870 = vmatprep.subr.mxu0 %v184
    %871 = vmatpush1.msra.mxu0 %v183
    %872 = vmatprep.subr.mxu0 %v190
    %873 = vmatpush1.msra.mxu0 %v189
    %874 = vmatprep.subr.mxu0 %v196
    %875 = vmatpush1.msra.mxu0 %v195
    %876 = vmatprep.subr.mxu0 %v202
    %877 = vmatpush1.msra.mxu0 %v201
    %878 = vmatprep.subr.mxu0 %v208
    %879 = vmatpush1.msra.mxu0 %v207
    %880 = vmatprep.subr.mxu0 %v214
    %881 = vmatpush1.msra.mxu0 %v213
    %882 = vmatprep.subr.mxu0 %v220
    %883 = vmatpush1.msra.mxu0 %v219
    %884 = vmatprep.mubr.f32.mxu0 %v26
    %885 = vmatmul.mubr.f32.gmra.mrb[0].mxu0 %v25
    %v886 = vpop.f32.mrb[0].mxu0
    %v887 = vadd.f32 0.0, %v886
    %v888 = vpop.f32.mrb[0].mxu0
    %v889 = vadd.f32 0.0, %v888
    %890 = vdwg.mxu0
    %891 = vmatprep.subr.mxu0 %v226
    %892 = vmatpush1.msra.mxu0 %v225
    %893 = vmatprep.subr.mxu0 %v232
    %894 = vmatpush1.msra.mxu0 %v231
    %895 = vmatprep.subr.mxu0 %v238
    %896 = vmatpush1.msra.mxu0 %v237
    %897 = vmatprep.subr.mxu0 %v244
    %898 = vmatpush1.msra.mxu0 %v243
    %899 = vmatprep.subr.mxu0 %v250
    %900 = vmatpush1.msra.mxu0 %v249
    %901 = vmatprep.subr.mxu0 %v256
    %902 = vmatpush1.msra.mxu0 %v255
    %903 = vmatprep.subr.mxu0 %v262
    %904 = vmatpush1.msra.mxu0 %v261
    %905 = vmatprep.subr.mxu0 %v268
    %906 = vmatpush1.msra.mxu0 %v267
    %907 = vmatprep.subr.mxu0 %v274
    %908 = vmatpush1.msra.mxu0 %v273
    %909 = vmatprep.subr.mxu0 %v280
    %910 = vmatpush1.msra.mxu0 %v279
    %911 = vmatprep.subr.mxu0 %v286
    %912 = vmatpush1.msra.mxu0 %v285
    %913 = vmatprep.subr.mxu0 %v292
    %914 = vmatpush1.msra.mxu0 %v291
    %915 = vmatprep.subr.mxu0 %v298
    %916 = vmatpush1.msra.mxu0 %v297
    %917 = vmatprep.subr.mxu0 %v304
    %918 = vmatpush1.msra.mxu0 %v303
    %919 = vmatprep.subr.mxu0 %v310
    %920 = vmatpush1.msra.mxu0 %v309
    %921 = vmatprep.subr.mxu0 %v316
    %922 = vmatpush1.msra.mxu0 %v315
    %923 = vmatprep.subr.mxu0 %v322
    %924 = vmatpush1.msra.mxu0 %v321
    %925 = vmatprep.subr.mxu0 %v328
    %926 = vmatpush1.msra.mxu0 %v327
    %927 = vmatprep.subr.mxu0 %v334
    %928 = vmatpush1.msra.mxu0 %v333
    %929 = vmatprep.subr.mxu0 %v340
    %930 = vmatpush1.msra.mxu0 %v339
    %931 = vmatprep.subr.mxu0 %v346
    %932 = vmatpush1.msra.mxu0 %v345
    %933 = vmatprep.subr.mxu0 %v352
    %934 = vmatpush1.msra.mxu0 %v351
    %935 = vmatprep.subr.mxu0 %v358
    %936 = vmatpush1.msra.mxu0 %v357
    %937 = vmatprep.subr.mxu0 %v364
    %938 = vmatpush1.msra.mxu0 %v363
    %939 = vmatprep.subr.mxu0 %v370
    %940 = vmatpush1.msra.mxu0 %v369
    %941 = vmatprep.subr.mxu0 %v376
    %942 = vmatpush1.msra.mxu0 %v375
    %943 = vmatprep.subr.mxu0 %v382
    %944 = vmatpush1.msra.mxu0 %v381
    %945 = vmatprep.subr.mxu0 %v388
    %946 = vmatpush1.msra.mxu0 %v387
    %947 = vmatprep.subr.mxu0 %v394
    %948 = vmatpush1.msra.mxu0 %v393
    %949 = vmatprep.subr.mxu0 %v400
    %950 = vmatpush1.msra.mxu0 %v399
    %951 = vmatprep.subr.mxu0 %v406
    %952 = vmatpush1.msra.mxu0 %v405
    %953 = vmatprep.subr.mxu0 %v412
    %954 = vmatpush1.msra.mxu0 %v411
    %955 = vmatprep.mubr.f32.mxu0 %v28
    %956 = vmatmul.mubr.f32.gmra.mrb[0].mxu0 %v27
    %v957 = vpop.f32.mrb[0].mxu0
    %v958 = vadd.f32 %v887, %v957
    %v959 = vpop.f32.mrb[0].mxu0
    %v960 = vadd.f32 %v889, %v959
    %961 = vdwg.mxu0
    %962 = vmatprep.subr.mxu0 %v418
    %963 = vmatpush1.msra.mxu0 %v417
    %964 = vmatprep.subr.mxu0 %v424
    %965 = vmatpush1.msra.mxu0 %v423
    %966 = vmatprep.subr.mxu0 %v430
    %967 = vmatpush1.msra.mxu0 %v429
    %968 = vmatprep.subr.mxu0 %v436
    %969 = vmatpush1.msra.mxu0 %v435
    %970 = vmatprep.subr.mxu0 %v442
    %971 = vmatpush1.msra.mxu0 %v441
    %972 = vmatprep.subr.mxu0 %v448
    %973 = vmatpush1.msra.mxu0 %v447
    %974 = vmatprep.subr.mxu0 %v454
    %975 = vmatpush1.msra.mxu0 %v453
    %976 = vmatprep.subr.mxu0 %v460
    %977 = vmatpush1.msra.mxu0 %v459
    %978 = vmatprep.subr.mxu0 %v466
    %979 = vmatpush1.msra.mxu0 %v465
    %980 = vmatprep.subr.mxu0 %v472
    %981 = vmatpush1.msra.mxu0 %v471
    %982 = vmatprep.subr.mxu0 %v478
    %983 = vmatpush1.msra.mxu0 %v477
    %984 = vmatprep.subr.mxu0 %v484
    %985 = vmatpush1.msra.mxu0 %v483
    %986 = vmatprep.subr.mxu0 %v490
    %987 = vmatpush1.msra.mxu0 %v489
    %988 = vmatprep.subr.mxu0 %v496
    %989 = vmatpush1.msra.mxu0 %v495
    %990 = vmatprep.subr.mxu0 %v502
    %991 = vmatpush1.msra.mxu0 %v501
    %992 = vmatprep.subr.mxu0 %v508
    %993 = vmatpush1.msra.mxu0 %v507
    %994 = vmatprep.subr.mxu0 %v514
    %995 = vmatpush1.msra.mxu0 %v513
    %996 = vmatprep.subr.mxu0 %v520
    %997 = vmatpush1.msra.mxu0 %v519
    %998 = vmatprep.subr.mxu0 %v526
    %999 = vmatpush1.msra.mxu0 %v525
    %1000 = vmatprep.subr.mxu0 %v532
    %1001 = vmatpush1.msra.mxu0 %v531
    %1002 = vmatprep.subr.mxu0 %v538
    %1003 = vmatpush1.msra.mxu0 %v537
    %1004 = vmatprep.subr.mxu0 %v544
    %1005 = vmatpush1.msra.mxu0 %v543
    %1006 = vmatprep.subr.mxu0 %v550
    %1007 = vmatpush1.msra.mxu0 %v549
    %1008 = vmatprep.subr.mxu0 %v556
    %1009 = vmatpush1.msra.mxu0 %v555
    %1010 = vmatprep.subr.mxu0 %v562
    %1011 = vmatpush1.msra.mxu0 %v561
    %1012 = vmatprep.subr.mxu0 %v568
    %1013 = vmatpush1.msra.mxu0 %v567
    %1014 = vmatprep.subr.mxu0 %v574
    %1015 = vmatpush1.msra.mxu0 %v573
    %1016 = vmatprep.subr.mxu0 %v580
    %1017 = vmatpush1.msra.mxu0 %v579
    %1018 = vmatprep.subr.mxu0 %v586
    %1019 = vmatpush1.msra.mxu0 %v585
    %1020 = vmatprep.subr.mxu0 %v592
    %1021 = vmatpush1.msra.mxu0 %v591
    %1022 = vmatprep.subr.mxu0 %v598
    %1023 = vmatpush1.msra.mxu0 %v597
    %1024 = vmatprep.subr.mxu0 %v604
    %1025 = vmatpush1.msra.mxu0 %v603
    %1026 = vmatprep.mubr.f32.mxu0 %v30
    %1027 = vmatmul.mubr.f32.gmra.mrb[0].mxu0 %v29
    %v1028 = vpop.f32.mrb[0].mxu0
    %v1029 = vadd.f32 %v958, %v1028
    %v1030 = vpop.f32.mrb[0].mxu0
    %v1031 = vadd.f32 %v960, %v1030
    %1032 = vdwg.mxu0
    %1033 = vmatprep.subr.mxu0 %v36
    %1034 = vmatpush1.msra.mxu0 %v35
    %1035 = vmatprep.subr.mxu0 %v42
    %1036 = vmatpush1.msra.mxu0 %v41
    %1037 = vmatprep.subr.mxu0 %v48
    %1038 = vmatpush1.msra.mxu0 %v47
    %1039 = vmatprep.subr.mxu0 %v54
    %1040 = vmatpush1.msra.mxu0 %v53
    %1041 = vmatprep.subr.mxu0 %v60
    %1042 = vmatpush1.msra.mxu0 %v59
    %1043 = vmatprep.subr.mxu0 %v66
    %1044 = vmatpush1.msra.mxu0 %v65
    %1045 = vmatprep.subr.mxu0 %v72
    %1046 = vmatpush1.msra.mxu0 %v71
    %1047 = vmatprep.subr.mxu0 %v78
    %1048 = vmatpush1.msra.mxu0 %v77
    %1049 = vmatprep.subr.mxu0 %v84
    %1050 = vmatpush1.msra.mxu0 %v83
    %1051 = vmatprep.subr.mxu0 %v90
    %1052 = vmatpush1.msra.mxu0 %v89
    %1053 = vmatprep.subr.mxu0 %v96
    %1054 = vmatpush1.msra.mxu0 %v95
    %1055 = vmatprep.subr.mxu0 %v102
    %1056 = vmatpush1.msra.mxu0 %v101
    %1057 = vmatprep.subr.mxu0 %v108
    %1058 = vmatpush1.msra.mxu0 %v107
    %1059 = vmatprep.subr.mxu0 %v114
    %1060 = vmatpush1.msra.mxu0 %v113
    %1061 = vmatprep.subr.mxu0 %v120
    %1062 = vmatpush1.msra.mxu0 %v119
    %1063 = vmatprep.subr.mxu0 %v126
    %1064 = vmatpush1.msra.mxu0 %v125
    %1065 = vmatprep.subr.mxu0 %v132
    %1066 = vmatpush1.msra.mxu0 %v131
    %1067 = vmatprep.subr.mxu0 %v138
    %1068 = vmatpush1.msra.mxu0 %v137
    %1069 = vmatprep.subr.mxu0 %v144
    %1070 = vmatpush1.msra.mxu0 %v143
    %1071 = vmatprep.subr.mxu0 %v150
    %1072 = vmatpush1.msra.mxu0 %v149
    %1073 = vmatprep.subr.mxu0 %v156
    %1074 = vmatpush1.msra.mxu0 %v155
    %1075 = vmatprep.subr.mxu0 %v162
    %1076 = vmatpush1.msra.mxu0 %v161
    %1077 = vmatprep.subr.mxu0 %v168
    %1078 = vmatpush1.msra.mxu0 %v167
    %1079 = vmatprep.subr.mxu0 %v174
    %1080 = vmatpush1.msra.mxu0 %v173
    %1081 = vmatprep.subr.mxu0 %v180
    %1082 = vmatpush1.msra.mxu0 %v179
    %1083 = vmatprep.subr.mxu0 %v186
    %1084 = vmatpush1.msra.mxu0 %v185
    %1085 = vmatprep.subr.mxu0 %v192
    %1086 = vmatpush1.msra.mxu0 %v191
    %1087 = vmatprep.subr.mxu0 %v198
    %1088 = vmatpush1.msra.mxu0 %v197
    %1089 = vmatprep.subr.mxu0 %v204
    %1090 = vmatpush1.msra.mxu0 %v203
    %1091 = vmatprep.subr.mxu0 %v210
    %1092 = vmatpush1.msra.mxu0 %v209
    %1093 = vmatprep.subr.mxu0 %v216
    %1094 = vmatpush1.msra.mxu0 %v215
    %1095 = vmatprep.subr.mxu0 %v222
    %1096 = vmatpush1.msra.mxu0 %v221
    %1097 = vmatprep.mubr.f32.mxu0 %v26
    %1098 = vmatmul.mubr.f32.gmra.mrb[0].mxu0 %v25
    %v1099 = vpop.f32.mrb[0].mxu0
    %v1100 = vadd.f32 0.0, %v1099
    %v1101 = vpop.f32.mrb[0].mxu0
    %v1102 = vadd.f32 0.0, %v1101
    %1103 = vdwg.mxu0
    %1104 = vmatprep.subr.mxu0 %v228
    %1105 = vmatpush1.msra.mxu0 %v227
    %1106 = vmatprep.subr.mxu0 %v234
    %1107 = vmatpush1.msra.mxu0 %v233
    %1108 = vmatprep.subr.mxu0 %v240
    %1109 = vmatpush1.msra.mxu0 %v239
    %1110 = vmatprep.subr.mxu0 %v246
    %1111 = vmatpush1.msra.mxu0 %v245
    %1112 = vmatprep.subr.mxu0 %v252
    %1113 = vmatpush1.msra.mxu0 %v251
    %1114 = vmatprep.subr.mxu0 %v258
    %1115 = vmatpush1.msra.mxu0 %v257
    %1116 = vmatprep.subr.mxu0 %v264
    %1117 = vmatpush1.msra.mxu0 %v263
    %1118 = vmatprep.subr.mxu0 %v270
    %1119 = vmatpush1.msra.mxu0 %v269
    %1120 = vmatprep.subr.mxu0 %v276
    %1121 = vmatpush1.msra.mxu0 %v275
    %1122 = vmatprep.subr.mxu0 %v282
    %1123 = vmatpush1.msra.mxu0 %v281
    %1124 = vmatprep.subr.mxu0 %v288
    %1125 = vmatpush1.msra.mxu0 %v287
    %1126 = vmatprep.subr.mxu0 %v294
    %1127 = vmatpush1.msra.mxu0 %v293
    %1128 = vmatprep.subr.mxu0 %v300
    %1129 = vmatpush1.msra.mxu0 %v299
    %1130 = vmatprep.subr.mxu0 %v306
    %1131 = vmatpush1.msra.mxu0 %v305
    %1132 = vmatprep.subr.mxu0 %v312
    %1133 = vmatpush1.msra.mxu0 %v311
    %1134 = vmatprep.subr.mxu0 %v318
    %1135 = vmatpush1.msra.mxu0 %v317
    %1136 = vmatprep.subr.mxu0 %v324
    %1137 = vmatpush1.msra.mxu0 %v323
    %1138 = vmatprep.subr.mxu0 %v330
    %1139 = vmatpush1.msra.mxu0 %v329
    %1140 = vmatprep.subr.mxu0 %v336
    %1141 = vmatpush1.msra.mxu0 %v335
    %1142 = vmatprep.subr.mxu0 %v342
    %1143 = vmatpush1.msra.mxu0 %v341
    %1144 = vmatprep.subr.mxu0 %v348
    %1145 = vmatpush1.msra.mxu0 %v347
    %1146 = vmatprep.subr.mxu0 %v354
    %1147 = vmatpush1.msra.mxu0 %v353
    %1148 = vmatprep.subr.mxu0 %v360
    %1149 = vmatpush1.msra.mxu0 %v359
    %1150 = vmatprep.subr.mxu0 %v366
    %1151 = vmatpush1.msra.mxu0 %v365
    %1152 = vmatprep.subr.mxu0 %v372
    %1153 = vmatpush1.msra.mxu0 %v371
    %1154 = vmatprep.subr.mxu0 %v378
    %1155 = vmatpush1.msra.mxu0 %v377
    %1156 = vmatprep.subr.mxu0 %v384
    %1157 = vmatpush1.msra.mxu0 %v383
    %1158 = vmatprep.subr.mxu0 %v390
    %1159 = vmatpush1.msra.mxu0 %v389
    %1160 = vmatprep.subr.mxu0 %v396
    %1161 = vmatpush1.msra.mxu0 %v395
    %1162 = vmatprep.subr.mxu0 %v402
    %1163 = vmatpush1.msra.mxu0 %v401
    %1164 = vmatprep.subr.mxu0 %v408
    %1165 = vmatpush1.msra.mxu0 %v407
    %1166 = vmatprep.subr.mxu0 %v414
    %1167 = vmatpush1.msra.mxu0 %v413
    %1168 = vmatprep.mubr.f32.mxu0 %v28
    %1169 = vmatmul.mubr.f32.gmra.mrb[0].mxu0 %v27
    %v1170 = vpop.f32.mrb[0].mxu0
    %v1171 = vadd.f32 %v1100, %v1170
    %v1172 = vpop.f32.mrb[0].mxu0
    %v1173 = vadd.f32 %v1102, %v1172
    %1174 = vdwg.mxu0
    %1175 = vmatprep.subr.mxu0 %v420
    %1176 = vmatpush1.msra.mxu0 %v419
    %1177 = vmatprep.subr.mxu0 %v426
    %1178 = vmatpush1.msra.mxu0 %v425
    %1179 = vmatprep.subr.mxu0 %v432
    %1180 = vmatpush1.msra.mxu0 %v431
    %1181 = vmatprep.subr.mxu0 %v438
    %1182 = vmatpush1.msra.mxu0 %v437
    %1183 = vmatprep.subr.mxu0 %v444
    %1184 = vmatpush1.msra.mxu0 %v443
    %1185 = vmatprep.subr.mxu0 %v450
    %1186 = vmatpush1.msra.mxu0 %v449
    %1187 = vmatprep.subr.mxu0 %v456
    %1188 = vmatpush1.msra.mxu0 %v455
    %1189 = vmatprep.subr.mxu0 %v462
    %1190 = vmatpush1.msra.mxu0 %v461
    %1191 = vmatprep.subr.mxu0 %v468
    %1192 = vmatpush1.msra.mxu0 %v467
    %1193 = vmatprep.subr.mxu0 %v474
    %1194 = vmatpush1.msra.mxu0 %v473
    %1195 = vmatprep.subr.mxu0 %v480
    %1196 = vmatpush1.msra.mxu0 %v479
    %1197 = vmatprep.subr.mxu0 %v486
    %1198 = vmatpush1.msra.mxu0 %v485
    %1199 = vmatprep.subr.mxu0 %v492
    %1200 = vmatpush1.msra.mxu0 %v491
    %1201 = vmatprep.subr.mxu0 %v498
    %1202 = vmatpush1.msra.mxu0 %v497
    %1203 = vmatprep.subr.mxu0 %v504
    %1204 = vmatpush1.msra.mxu0 %v503
    %1205 = vmatprep.subr.mxu0 %v510
    %1206 = vmatpush1.msra.mxu0 %v509
    %1207 = vmatprep.subr.mxu0 %v516
    %1208 = vmatpush1.msra.mxu0 %v515
    %1209 = vmatprep.subr.mxu0 %v522
    %1210 = vmatpush1.msra.mxu0 %v521
    %1211 = vmatprep.subr.mxu0 %v528
    %1212 = vmatpush1.msra.mxu0 %v527
    %1213 = vmatprep.subr.mxu0 %v534
    %1214 = vmatpush1.msra.mxu0 %v533
    %1215 = vmatprep.subr.mxu0 %v540
    %1216 = vmatpush1.msra.mxu0 %v539
    %1217 = vmatprep.subr.mxu0 %v546
    %1218 = vmatpush1.msra.mxu0 %v545
    %1219 = vmatprep.subr.mxu0 %v552
    %1220 = vmatpush1.msra.mxu0 %v551
    %1221 = vmatprep.subr.mxu0 %v558
    %1222 = vmatpush1.msra.mxu0 %v557
    %1223 = vmatprep.subr.mxu0 %v564
    %1224 = vmatpush1.msra.mxu0 %v563
    %1225 = vmatprep.subr.mxu0 %v570
    %1226 = vmatpush1.msra.mxu0 %v569
    %1227 = vmatprep.subr.mxu0 %v576
    %1228 = vmatpush1.msra.mxu0 %v575
    %1229 = vmatprep.subr.mxu0 %v582
    %1230 = vmatpush1.msra.mxu0 %v581
    %1231 = vmatprep.subr.mxu0 %v588
    %1232 = vmatpush1.msra.mxu0 %v587
    %1233 = vmatprep.subr.mxu0 %v594
    %1234 = vmatpush1.msra.mxu0 %v593
    %1235 = vmatprep.subr.mxu0 %v600
    %1236 = vmatpush1.msra.mxu0 %v599
    %1237 = vmatprep.subr.mxu0 %v606
    %1238 = vmatpush1.msra.mxu0 %v605
    %1239 = vmatprep.mubr.f32.mxu0 %v30
    %1240 = vmatmul.mubr.f32.gmra.mrb[0].mxu0 %v29
    %v1241 = vpop.f32.mrb[0].mxu0
    %v1242 = vadd.f32 %v1171, %v1241
    %v1243 = vpop.f32.mrb[0].mxu0
    %v1244 = vadd.f32 %v1173, %v1243
    %1245 = vdwg.mxu0
    %1246 = vst [vmem:[%s2] sm:$0xff] %v816
    %1247 = vst [vmem:[%s2 + $0x8] sm:$0xff] %v818
    %1248 = vst [vmem:[%s2 + $0x10] sm:$0xff] %v1029
    %1249 = vst [vmem:[%s2 + $0x18] sm:$0xff] %v1031
    %1250 = vst [vmem:[%s2 + $0x20] sm:$0xff] %v1242
    %1251 = vst [vmem:[%s2 + $0x28] sm:$0xff] %v1244
    // Predicated region
    $region14: #{encoder_decoder_forward.2} parent=1 // pred_check
      _
    $region15: #{encoder_decoder_forward.2} parent=1 // pred_check_branch
      %1253 = sbr.rel (0) target = $region17
    $region16: #{encoder_decoder_forward.2} parent=1 // pred_region
      _
    $region17: #{encoder_decoder_forward.2} parent=1 // pred_fallthru
      _
    // Predicated region
    $region18: #{encoder_decoder_forward.2} parent=1 // pred_check
      _
    $region19: #{encoder_decoder_forward.2} parent=1 // pred_check_branch
      %1255 = sbr.rel (0) target = $region21
    $region20: #{encoder_decoder_forward.2} parent=1 // pred_region
      _
    $region21: #{encoder_decoder_forward.2} parent=1 // pred_fallthru
      _
    %1256 = vsyncpa [#allocation3], 1

// kernel: encoder_decoder_forward.3
$region0: #{encoder_decoder_forward.3}
  #allocation0 [shape = 'u32[]', space=smem, size = 0x4, offset = 0x4, fixed_abs, tag = 'smem constant byte address 0x4 - core index']
  #allocation1 [shape = 'u32[144,128]{1,0:T(1,128)}', space=vmem, size = 0x12000, scoped, tag = 'internal scratch']
  %s0 = inlined_call_operand.vmem [shape: f32[8,768], index: 0, kind: input, shape index: {}]
  %s1 = inlined_call_operand.vmem [shape: f32[8,768], index: 1, kind: input, shape index: {}]
  %s2 = inlined_call_operand.hbm [shape: f32[768,1024], index: 2, kind: input, shape index: {}]
  %s3 = inlined_call_operand.hbm [shape: f32[768,1024], index: 3, kind: input, shape index: {}]
  %s4 = inlined_call_operand.hbm [shape: f32[1,1024], index: 4, kind: input, shape index: {}]
  %s5 = inlined_call_operand.vmem [shape: f32[1024,512], index: 5, kind: input, shape index: {}]
  %s6 = inlined_call_operand.hbm [shape: f32[1,512], index: 6, kind: input, shape index: {}]
  %s7 = inlined_call_operand.vmem [shape: f32[512,128], index: 7, kind: input, shape index: {}]
  %s8 = inlined_call_operand.hbm [shape: f32[1,128], index: 8, kind: input, shape index: {}]
  %s9 = inlined_call_operand.hbm [shape: f32[8,128], index: 9, kind: output, shape index: {}]
  %s10 = sld [smem:[#allocation0]]
  $region66: #{encoder_decoder_forward.3} parent=0
    _
  %s12 = ssub.s32 1, %s10
  %s13 = scalar_select 0, %s12, %s10
  $region1: #{encoder_decoder_forward.3} parent=0
    #allocation2 [shape = 'u8[3145728]{0}', space=vmem, size = 0x300000, scoped, tag = 'input window, operand 2, single buffered']
    #allocation3 [shape = 's32[1]{0}', space=sflag, size = 0x4, scoped, tag = 'scoped memory for encoder_decoder_forward.3']
    #allocation4 [shape = 's32[1]{0}', space=sflag, size = 0x4, scoped, tag = 'scoped memory for encoder_decoder_forward.3']
    #allocation5 [shape = 'u8[3145728]{0}', space=vmem, size = 0x300000, scoped, tag = 'input window, operand 3, single buffered']
    #allocation6 [shape = 's32[1]{0}', space=sflag, size = 0x4, scoped, tag = 'scoped memory for encoder_decoder_forward.3']
    #allocation7 [shape = 'u8[4096]{0}', space=vmem, size = 0x1000, scoped, tag = 'input window, operand 4, single buffered']
    #allocation8 [shape = 'u8[2048]{0}', space=vmem, size = 0x800, scoped, tag = 'input window, operand 6, single buffered']
    #allocation9 [shape = 's32[1]{0}', space=sflag, size = 0x4, scoped, tag = 'scoped memory for encoder_decoder_forward.3']
    #allocation10 [shape = 'u8[512]{0}', space=vmem, size = 0x400, scoped, tag = 'input window, operand 8, single buffered']
    #allocation11 [shape = 'u8[4096]{0}', space=vmem, size = 0x1000, scoped, tag = 'output window, operand 0, single buffered']
    %14 = vsyncpa [#allocation3], 0
    %15 = vsyncpa [#allocation6], 0
    %16 = vsyncpa [#allocation9], 0
    %17 = vsyncpa [#allocation4], 0
    // Predicated region
    $region2: #{encoder_decoder_forward.3} parent=1 // pred_check
      _
    $region3: #{encoder_decoder_forward.3} parent=1 // pred_check_branch
      %19 = sbr.rel (0) target = $region5
    $region4: #{encoder_decoder_forward.3} parent=1 // pred_region
      _
    $region5: #{encoder_decoder_forward.3} parent=1 // pred_fallthru
      _
    // Predicated region
    $region6: #{encoder_decoder_forward.3} parent=1 // pred_check
      _
    $region7: #{encoder_decoder_forward.3} parent=1 // pred_check_branch
      %21 = sbr.rel (0) target = $region9
    $region8: #{encoder_decoder_forward.3} parent=1 // pred_region
      _
    $region9: #{encoder_decoder_forward.3} parent=1 // pred_fallthru
      _
    // Predicated region
    $region10: #{encoder_decoder_forward.3} parent=1 // pred_check
      _
    $region11: #{encoder_decoder_forward.3} parent=1 // pred_check_branch
      %23 = sbr.rel (0) target = $region13
    $region12: #{encoder_decoder_forward.3} parent=1 // pred_region
      %s25 = ssub.s32 98304, 98304
      %26 = vsyncadd [#allocation3], %s25
      %s27 = sshll.u32 [#allocation2], 4
      %s28 = int_to_ptr.vmem [resolvable:$true] %s27
      %33 = dma.hbm_to_vmem [thread:$0]  %s2, 98304, %s28, [#allocation3], 1024, 1024, 64
    $region13: #{encoder_decoder_forward.3} parent=1 // pred_fallthru
      _
    // Predicated region
    $region14: #{encoder_decoder_forward.3} parent=1 // pred_check
      _
    $region15: #{encoder_decoder_forward.3} parent=1 // pred_check_branch
      %35 = sbr.rel (0) target = $region17
    $region16: #{encoder_decoder_forward.3} parent=1 // pred_region
      %s37 = ssub.s32 98304, 98304
      %38 = vsyncadd [#allocation6], %s37
      %s39 = sshll.u32 [#allocation5], 4
      %s40 = int_to_ptr.vmem [resolvable:$true] %s39
      %45 = dma.hbm_to_vmem [thread:$0]  %s3, 98304, %s40, [#allocation6], 1024, 1024, 64
    $region17: #{encoder_decoder_forward.3} parent=1 // pred_fallthru
      _
    // Predicated region
    $region18: #{encoder_decoder_forward.3} parent=1 // pred_check
      _
    $region19: #{encoder_decoder_forward.3} parent=1 // pred_check_branch
      %47 = sbr.rel (0) target = $region21
    $region20: #{encoder_decoder_forward.3} parent=1 // pred_region
      %s49 = ssub.s32 128, 128
      %50 = vsyncadd [#allocation6], %s49
      %s52 = sshll.u32 [#allocation7], 4
      %s53 = int_to_ptr.vmem [resolvable:$true] %s52
      %55 = dma.hbm_to_vmem [thread:$0]  %s4, 128, %s53, [#allocation6]
    $region21: #{encoder_decoder_forward.3} parent=1 // pred_fallthru
      _
    // Predicated region
    $region22: #{encoder_decoder_forward.3} parent=1 // pred_check
      _
    $region23: #{encoder_decoder_forward.3} parent=1 // pred_check_branch
      %57 = sbr.rel (0) target = $region25
    $region24: #{encoder_decoder_forward.3} parent=1 // pred_region
      _
    $region25: #{encoder_decoder_forward.3} parent=1 // pred_fallthru
      _
    // Predicated region
    $region26: #{encoder_decoder_forward.3} parent=1 // pred_check
      _
    $region27: #{encoder_decoder_forward.3} parent=1 // pred_check_branch
      %59 = sbr.rel (0) target = $region29
    $region28: #{encoder_decoder_forward.3} parent=1 // pred_region
      %s61 = ssub.s32 64, 64
      %62 = vsyncadd [#allocation9], %s61
      %s64 = sshll.u32 [#allocation8], 4
      %s65 = int_to_ptr.vmem [resolvable:$true] %s64
      %67 = dma.hbm_to_vmem [thread:$0]  %s6, 64, %s65, [#allocation9]
    $region29: #{encoder_decoder_forward.3} parent=1 // pred_fallthru
      _
    // Predicated region
    $region30: #{encoder_decoder_forward.3} parent=1 // pred_check
      _
    $region31: #{encoder_decoder_forward.3} parent=1 // pred_check_branch
      %69 = sbr.rel (0) target = $region33
    $region32: #{encoder_decoder_forward.3} parent=1 // pred_region
      _
    $region33: #{encoder_decoder_forward.3} parent=1 // pred_fallthru
      _
    // Predicated region
    $region34: #{encoder_decoder_forward.3} parent=1 // pred_check
      _
    $region35: #{encoder_decoder_forward.3} parent=1 // pred_check_branch
      %71 = sbr.rel (0) target = $region37
    $region36: #{encoder_decoder_forward.3} parent=1 // pred_region
      %s73 = ssub.s32 16, 16
      %74 = vsyncadd [#allocation9], %s73
      %s76 = sshll.u32 [#allocation10], 4
      %s77 = int_to_ptr.vmem [resolvable:$true] %s76
      %79 = dma.hbm_to_vmem [thread:$0]  %s8, 16, %s77, [#allocation9]
    $region37: #{encoder_decoder_forward.3} parent=1 // pred_fallthru
      _
    // Predicated region
    $region38: #{encoder_decoder_forward.3} parent=1 // pred_check
      _
    $region39: #{encoder_decoder_forward.3} parent=1 // pred_check_branch
      %81 = sbr.rel (0) target = $region41
    $region40: #{encoder_decoder_forward.3} parent=1 // pred_region
      %82 = dma.done [#allocation3], 98304
    $region41: #{encoder_decoder_forward.3} parent=1 // pred_fallthru
      _
    // Predicated region
    $region42: #{encoder_decoder_forward.3} parent=1 // pred_check
      _
    $region43: #{encoder_decoder_forward.3} parent=1 // pred_check_branch
      %84 = sbr.rel (0) target = $region45
    $region44: #{encoder_decoder_forward.3} parent=1 // pred_region
      %85 = dma.done [#allocation6], 98304
    $region45: #{encoder_decoder_forward.3} parent=1 // pred_fallthru
      _
    // Predicated region
    $region46: #{encoder_decoder_forward.3} parent=1 // pred_check
      _
    $region47: #{encoder_decoder_forward.3} parent=1 // pred_check_branch
      %87 = sbr.rel (0) target = $region49
    $region48: #{encoder_decoder_forward.3} parent=1 // pred_region
      %88 = dma.done [#allocation6], 128
    $region49: #{encoder_decoder_forward.3} parent=1 // pred_fallthru
      _
    // Predicated region
    $region50: #{encoder_decoder_forward.3} parent=1 // pred_check
      _
    $region51: #{encoder_decoder_forward.3} parent=1 // pred_check_branch
      %90 = sbr.rel (0) target = $region53
    $region52: #{encoder_decoder_forward.3} parent=1 // pred_region
      %91 = dma.done [#allocation9], 64
    $region53: #{encoder_decoder_forward.3} parent=1 // pred_fallthru
      _
    // Predicated region
    $region54: #{encoder_decoder_forward.3} parent=1 // pred_check
      _
    $region55: #{encoder_decoder_forward.3} parent=1 // pred_check_branch
      %93 = sbr.rel (0) target = $region57
    $region56: #{encoder_decoder_forward.3} parent=1 // pred_region
      %94 = dma.done [#allocation9], 16
    $region57: #{encoder_decoder_forward.3} parent=1 // pred_fallthru
      _
    %v95 = vld [vmem:[%s0] sm:$0xff]
    %v96 = vld [vmem:[%s0 + $0x8] sm:$0xff]
    %v97 = vld [vmem:[%s0 + $0x10] sm:$0xff]
    %v98 = vld [vmem:[%s0 + $0x18] sm:$0xff]
    %v99 = vld [vmem:[%s0 + $0x20] sm:$0xff]
    %v100 = vld [vmem:[%s0 + $0x28] sm:$0xff]
    %v101 = vld [vmem:[#allocation2] sm:$0xff]
    %v102 = vld [vmem:[#allocation2 + $0x8] sm:$0xff]
    %v103 = vld [vmem:[#allocation2 + $0x10] sm:$0xff]
    %v104 = vld [vmem:[#allocation2 + $0x18] sm:$0xff]
    %v105 = vld [vmem:[#allocation2 + $0x20] sm:$0xff]
    %v106 = vld [vmem:[#allocation2 + $0x28] sm:$0xff]
    %v107 = vld [vmem:[#allocation2 + $0x30] sm:$0xff]
    %v108 = vld [vmem:[#allocation2 + $0x38] sm:$0xff]
    %v109 = vld [vmem:[#allocation2 + $0x40] sm:$0xff]
    %v110 = vld [vmem:[#allocation2 + $0x48] sm:$0xff]
    %v111 = vld [vmem:[#allocation2 + $0x50] sm:$0xff]
    %v112 = vld [vmem:[#allocation2 + $0x58] sm:$0xff]
    %v113 = vld [vmem:[#allocation2 + $0x60] sm:$0xff]
    %v114 = vld [vmem:[#allocation2 + $0x68] sm:$0xff]
    %v115 = vld [vmem:[#allocation2 + $0x70] sm:$0xff]
    %v116 = vld [vmem:[#allocation2 + $0x78] sm:$0xff]
    %v117 = vld [vmem:[#allocation2 + $0x80] sm:$0xff]
    %v118 = vld [vmem:[#allocation2 + $0x88] sm:$0xff]
    %v119 = vld [vmem:[#allocation2 + $0x90] sm:$0xff]
    %v120 = vld [vmem:[#allocation2 + $0x98] sm:$0xff]
    %v121 = vld [vmem:[#allocation2 + $0xa0] sm:$0xff]
    %v122 = vld [vmem:[#allocation2 + $0xa8] sm:$0xff]
    %v123 = vld [vmem:[#allocation2 + $0xb0] sm:$0xff]
    %v124 = vld [vmem:[#allocation2 + $0xb8] sm:$0xff]
    %v125 = vld [vmem:[#allocation2 + $0xc0] sm:$0xff]
    %v126 = vld [vmem:[#allocation2 + $0xc8] sm:$0xff]
    %v127 = vld [vmem:[#allocation2 + $0xd0] sm:$0xff]
    %v128 = vld [vmem:[#allocation2 + $0xd8] sm:$0xff]
    %v129 = vld [vmem:[#allocation2 + $0xe0] sm:$0xff]
    %v130 = vld [vmem:[#allocation2 + $0xe8] sm:$0xff]
    %v131 = vld [vmem:[#allocation2 + $0xf0] sm:$0xff]
    %v132 = vld [vmem:[#allocation2 + $0xf8] sm:$0xff]
    %v133 = vld [vmem:[#allocation2 + $0x100] sm:$0xff]
    %v134 = vld [vmem:[#allocation2 + $0x108] sm:$0xff]
    %v135 = vld [vmem:[#allocation2 + $0x110] sm:$0xff]
    %v136 = vld [vmem:[#allocation2 + $0x118] sm:$0xff]
    %v137 = vld [vmem:[#allocation2 + $0x120] sm:$0xff]
    %v138 = vld [vmem:[#allocation2 + $0x128] sm:$0xff]
    %v139 = vld [vmem:[#allocation2 + $0x130] sm:$0xff]
    %v140 = vld [vmem:[#allocation2 + $0x138] sm:$0xff]
    %v141 = vld [vmem:[#allocation2 + $0x140] sm:$0xff]
    %v142 = vld [vmem:[#allocation2 + $0x148] sm:$0xff]
    %v143 = vld [vmem:[#allocation2 + $0x150] sm:$0xff]
    %v144 = vld [vmem:[#allocation2 + $0x158] sm:$0xff]
    %v145 = vld [vmem:[#allocation2 + $0x160] sm:$0xff]
    %v146 = vld [vmem:[#allocation2 + $0x168] sm:$0xff]
    %v147 = vld [vmem:[#allocation2 + $0x170] sm:$0xff]
    %v148 = vld [vmem:[#allocation2 + $0x178] sm:$0xff]
    %v149 = vld [vmem:[#allocation2 + $0x180] sm:$0xff]
    %v150 = vld [vmem:[#allocation2 + $0x188] sm:$0xff]
    %v151 = vld [vmem:[#allocation2 + $0x190] sm:$0xff]
    %v152 = vld [vmem:[#allocation2 + $0x198] sm:$0xff]
    %v153 = vld [vmem:[#allocation2 + $0x1a0] sm:$0xff]
    %v154 = vld [vmem:[#allocation2 + $0x1a8] sm:$0xff]
    %v155 = vld [vmem:[#allocation2 + $0x1b0] sm:$0xff]
    %v156 = vld [vmem:[#allocation2 + $0x1b8] sm:$0xff]
    %v157 = vld [vmem:[#allocation2 + $0x1c0] sm:$0xff]
    %v158 = vld [vmem:[#allocation2 + $0x1c8] sm:$0xff]
    %v159 = vld [vmem:[#allocation2 + $0x1d0] sm:$0xff]
    %v160 = vld [vmem:[#allocation2 + $0x1d8] sm:$0xff]
    %v161 = vld [vmem:[#allocation2 + $0x1e0] sm:$0xff]
    %v162 = vld [vmem:[#allocation2 + $0x1e8] sm:$0xff]
    %v163 = vld [vmem:[#allocation2 + $0x1f0] sm:$0xff]
    %v164 = vld [vmem:[#allocation2 + $0x1f8] sm:$0xff]
    %v165 = vld [vmem:[#allocation2 + $0x200] sm:$0xff]
    %v166 = vld [vmem:[#allocation2 + $0x208] sm:$0xff]
    %v167 = vld [vmem:[#allocation2 + $0x210] sm:$0xff]
    %v168 = vld [vmem:[#allocation2 + $0x218] sm:$0xff]
    %v169 = vld [vmem:[#allocation2 + $0x220] sm:$0xff]
    %v170 = vld [vmem:[#allocation2 + $0x228] sm:$0xff]
    %v171 = vld [vmem:[#allocation2 + $0x230] sm:$0xff]
    %v172 = vld [vmem:[#allocation2 + $0x238] sm:$0xff]
    %v173 = vld [vmem:[#allocation2 + $0x240] sm:$0xff]
    %v174 = vld [vmem:[#allocation2 + $0x248] sm:$0xff]
    %v175 = vld [vmem:[#allocation2 + $0x250] sm:$0xff]
    %v176 = vld [vmem:[#allocation2 + $0x258] sm:$0xff]
    %v177 = vld [vmem:[#allocation2 + $0x260] sm:$0xff]
    %v178 = vld [vmem:[#allocation2 + $0x268] sm:$0xff]
    %v179 = vld [vmem:[#allocation2 + $0x270] sm:$0xff]
    %v180 = vld [vmem:[#allocation2 + $0x278] sm:$0xff]
    %v181 = vld [vmem:[#allocation2 + $0x280] sm:$0xff]
    %v182 = vld [vmem:[#allocation2 + $0x288] sm:$0xff]
    %v183 = vld [vmem:[#allocation2 + $0x290] sm:$0xff]
    %v184 = vld [vmem:[#allocation2 + $0x298] sm:$0xff]
    %v185 = vld [vmem:[#allocation2 + $0x2a0] sm:$0xff]
    %v186 = vld [vmem:[#allocation2 + $0x2a8] sm:$0xff]
    %v187 = vld [vmem:[#allocation2 + $0x2b0] sm:$0xff]
    %v188 = vld [vmem:[#allocation2 + $0x2b8] sm:$0xff]
    %v189 = vld [vmem:[#allocation2 + $0x2c0] sm:$0xff]
    %v190 = vld [vmem:[#allocation2 + $0x2c8] sm:$0xff]
    %v191 = vld [vmem:[#allocation2 + $0x2d0] sm:$0xff]
    %v192 = vld [vmem:[#allocation2 + $0x2d8] sm:$0xff]
    %v193 = vld [vmem:[#allocation2 + $0x2e0] sm:$0xff]
    %v194 = vld [vmem:[#allocation2 + $0x2e8] sm:$0xff]
    %v195 = vld [vmem:[#allocation2 + $0x2f0] sm:$0xff]
    %v196 = vld [vmem:[#allocation2 + $0x2f8] sm:$0xff]
    %v197 = vld [vmem:[#allocation2 + $0x300] sm:$0xff]
    %v198 = vld [vmem:[#allocation2 + $0x308] sm:$0xff]
    %v199 = vld [vmem:[#allocation2 + $0x310] sm:$0xff]
    %v200 = vld [vmem:[#allocation2 + $0x318] sm:$0xff]
    %v201 = vld [vmem:[#allocation2 + $0x320] sm:$0xff]
    %v202 = vld [vmem:[#allocation2 + $0x328] sm:$0xff]
    %v203 = vld [vmem:[#allocation2 + $0x330] sm:$0xff]
    %v204 = vld [vmem:[#allocation2 + $0x338] sm:$0xff]
    %v205 = vld [vmem:[#allocation2 + $0x340] sm:$0xff]
    %v206 = vld [vmem:[#allocation2 + $0x348] sm:$0xff]
    %v207 = vld [vmem:[#allocation2 + $0x350] sm:$0xff]
    %v208 = vld [vmem:[#allocation2 + $0x358] sm:$0xff]
    %v209 = vld [vmem:[#allocation2 + $0x360] sm:$0xff]
    %v210 = vld [vmem:[#allocation2 + $0x368] sm:$0xff]
    %v211 = vld [vmem:[#allocation2 + $0x370] sm:$0xff]
    %v212 = vld [vmem:[#allocation2 + $0x378] sm:$0xff]
    %v213 = vld [vmem:[#allocation2 + $0x380] sm:$0xff]
    %v214 = vld [vmem:[#allocation2 + $0x388] sm:$0xff]
    %v215 = vld [vmem:[#allocation2 + $0x390] sm:$0xff]
    %v216 = vld [vmem:[#allocation2 + $0x398] sm:$0xff]
    %v217 = vld [vmem:[#allocation2 + $0x3a0] sm:$0xff]
    %v218 = vld [vmem:[#allocation2 + $0x3a8] sm:$0xff]
    %v219 = vld [vmem:[#allocation2 + $0x3b0] sm:$0xff]
    %v220 = vld [vmem:[#allocation2 + $0x3b8] sm:$0xff]
    %v221 = vld [vmem:[#allocation2 + $0x3c0] sm:$0xff]
    %v222 = vld [vmem:[#allocation2 + $0x3c8] sm:$0xff]
    %v223 = vld [vmem:[#allocation2 + $0x3d0] sm:$0xff]
    %v224 = vld [vmem:[#allocation2 + $0x3d8] sm:$0xff]
    %v225 = vld [vmem:[#allocation2 + $0x3e0] sm:$0xff]
    %v226 = vld [vmem:[#allocation2 + $0x3e8] sm:$0xff]
    %v227 = vld [vmem:[#allocation2 + $0x3f0] sm:$0xff]
    %v228 = vld [vmem:[#allocation2 + $0x3f8] sm:$0xff]
    %v229 = vld [vmem:[#allocation2 + $0x400] sm:$0xff]
    %v230 = vld [vmem:[#allocation2 + $0x408] sm:$0xff]
    %v231 = vld [vmem:[#allocation2 + $0x410] sm:$0xff]
    %v232 = vld [vmem:[#allocation2 + $0x418] sm:$0xff]
    %v233 = vld [vmem:[#allocation2 + $0x420] sm:$0xff]
    %v234 = vld [vmem:[#allocation2 + $0x428] sm:$0xff]
    %v235 = vld [vmem:[#allocation2 + $0x430] sm:$0xff]
    %v236 = vld [vmem:[#allocation2 + $0x438] sm:$0xff]
    %v237 = vld [vmem:[#allocation2 + $0x440] sm:$0xff]
    %v238 = vld [vmem:[#allocation2 + $0x448] sm:$0xff]
    %v239 = vld [vmem:[#allocation2 + $0x450] sm:$0xff]
    %v240 = vld [vmem:[#allocation2 + $0x458] sm:$0xff]
    %v241 = vld [vmem:[#allocation2 + $0x460] sm:$0xff]
    %v242 = vld [vmem:[#allocation2 + $0x468] sm:$0xff]
    %v243 = vld [vmem:[#allocation2 + $0x470] sm:$0xff]
    %v244 = vld [vmem:[#allocation2 + $0x478] sm:$0xff]
    %v245 = vld [vmem:[#allocation2 + $0x480] sm:$0xff]
    %v246 = vld [vmem:[#allocation2 + $0x488] sm:$0xff]
    %v247 = vld [vmem:[#allocation2 + $0x490] sm:$0xff]
    %v248 = vld [vmem:[#allocation2 + $0x498] sm:$0xff]
    %v249 = vld [vmem:[#allocation2 + $0x4a0] sm:$0xff]
    %v250 = vld [vmem:[#allocation2 + $0x4a8] sm:$0xff]
    %v251 = vld [vmem:[#allocation2 + $0x4b0] sm:$0xff]
    %v252 = vld [vmem:[#allocation2 + $0x4b8] sm:$0xff]
    %v253 = vld [vmem:[#allocation2 + $0x4c0] sm:$0xff]
    %v254 = vld [vmem:[#allocation2 + $0x4c8] sm:$0xff]
    %v255 = vld [vmem:[#allocation2 + $0x4d0] sm:$0xff]
    %v256 = vld [vmem:[#allocation2 + $0x4d8] sm:$0xff]
    %v257 = vld [vmem:[#allocation2 + $0x4e0] sm:$0xff]
    %v258 = vld [vmem:[#allocation2 + $0x4e8] sm:$0xff]
    %v259 = vld [vmem:[#allocation2 + $0x4f0] sm:$0xff]
    %v260 = vld [vmem:[#allocation2 + $0x4f8] sm:$0xff]
    %v261 = vld [vmem:[#allocation2 + $0x500] sm:$0xff]
    %v262 = vld [vmem:[#allocation2 + $0x508] sm:$0xff]
    %v263 = vld [vmem:[#allocation2 + $0x510] sm:$0xff]
    %v264 = vld [vmem:[#allocation2 + $0x518] sm:$0xff]
    %v265 = vld [vmem:[#allocation2 + $0x520] sm:$0xff]
    %v266 = vld [vmem:[#allocation2 + $0x528] sm:$0xff]
    %v267 = vld [vmem:[#allocation2 + $0x530] sm:$0xff]
    %v268 = vld [vmem:[#allocation2 + $0x538] sm:$0xff]
    %v269 = vld [vmem:[#allocation2 + $0x540] sm:$0xff]
    %v270 = vld [vmem:[#allocation2 + $0x548] sm:$0xff]
    %v271 = vld [vmem:[#allocation2 + $0x550] sm:$0xff]
    %v272 = vld [vmem:[#allocation2 + $0x558] sm:$0xff]
    %v273 = vld [vmem:[#allocation2 + $0x560] sm:$0xff]
    %v274 = vld [vmem:[#allocation2 + $0x568] sm:$0xff]
    %v275 = vld [vmem:[#allocation2 + $0x570] sm:$0xff]
    %v276 = vld [vmem:[#allocation2 + $0x578] sm:$0xff]
    %v277 = vld [vmem:[#allocation2 + $0x580] sm:$0xff]
    %v278 = vld [vmem:[#allocation2 + $0x588] sm:$0xff]
    %v279 = vld [vmem:[#allocation2 + $0x590] sm:$0xff]
    %v280 = vld [vmem:[#allocation2 + $0x598] sm:$0xff]
    %v281 = vld [vmem:[#allocation2 + $0x5a0] sm:$0xff]
    %v282 = vld [vmem:[#allocation2 + $0x5a8] sm:$0xff]
    %v283 = vld [vmem:[#allocation2 + $0x5b0] sm:$0xff]
    %v284 = vld [vmem:[#allocation2 + $0x5b8] sm:$0xff]
    %v285 = vld [vmem:[#allocation2 + $0x5c0] sm:$0xff]
    %v286 = vld [vmem:[#allocation2 + $0x5c8] sm:$0xff]
    %v287 = vld [vmem:[#allocation2 + $0x5d0] sm:$0xff]
    %v288 = vld [vmem:[#allocation2 + $0x5d8] sm:$0xff]
    %v289 = vld [vmem:[#allocation2 + $0x5e0] sm:$0xff]
    %v290 = vld [vmem:[#allocation2 + $0x5e8] sm:$0xff]
    %v291 = vld [vmem:[#allocation2 + $0x5f0] sm:$0xff]
    %v292 = vld [vmem:[#allocation2 + $0x5f8] sm:$0xff]
    %v293 = vld [vmem:[#allocation2 + $0x600] sm:$0xff]
    %v294 = vld [vmem:[#allocation2 + $0x608] sm:$0xff]
    %v295 = vld [vmem:[#allocation2 + $0x610] sm:$0xff]
    %v296 = vld [vmem:[#allocation2 + $0x618] sm:$0xff]
    %v297 = vld [vmem:[#allocation2 + $0x620] sm:$0xff]
    %v298 = vld [vmem:[#allocation2 + $0x628] sm:$0xff]
    %v299 = vld [vmem:[#allocation2 + $0x630] sm:$0xff]
    %v300 = vld [vmem:[#allocation2 + $0x638] sm:$0xff]
    %v301 = vld [vmem:[#allocation2 + $0x640] sm:$0xff]
    %v302 = vld [vmem:[#allocation2 + $0x648] sm:$0xff]
    %v303 = vld [vmem:[#allocation2 + $0x650] sm:$0xff]
    %v304 = vld [vmem:[#allocation2 + $0x658] sm:$0xff]
    %v305 = vld [vmem:[#allocation2 + $0x660] sm:$0xff]
    %v306 = vld [vmem:[#allocation2 + $0x668] sm:$0xff]
    %v307 = vld [vmem:[#allocation2 + $0x670] sm:$0xff]
    %v308 = vld [vmem:[#allocation2 + $0x678] sm:$0xff]
    %v309 = vld [vmem:[#allocation2 + $0x680] sm:$0xff]
    %v310 = vld [vmem:[#allocation2 + $0x688] sm:$0xff]
    %v311 = vld [vmem:[#allocation2 + $0x690] sm:$0xff]
    %v312 = vld [vmem:[#allocation2 + $0x698] sm:$0xff]
    %v313 = vld [vmem:[#allocation2 + $0x6a0] sm:$0xff]
    %v314 = vld [vmem:[#allocation2 + $0x6a8] sm:$0xff]
    %v315 = vld [vmem:[#allocation2 + $0x6b0] sm:$0xff]
    %v316 = vld [vmem:[#allocation2 + $0x6b8] sm:$0xff]
    %v317 = vld [vmem:[#allocation2 + $0x6c0] sm:$0xff]
    %v318 = vld [vmem:[#allocation2 + $0x6c8] sm:$0xff]
    %v319 = vld [vmem:[#allocation2 + $0x6d0] sm:$0xff]
    %v320 = vld [vmem:[#allocation2 + $0x6d8] sm:$0xff]
    %v321 = vld [vmem:[#allocation2 + $0x6e0] sm:$0xff]
    %v322 = vld [vmem:[#allocation2 + $0x6e8] sm:$0xff]
    %v323 = vld [vmem:[#allocation2 + $0x6f0] sm:$0xff]
    %v324 = vld [vmem:[#allocation2 + $0x6f8] sm:$0xff]
    %v325 = vld [vmem:[#allocation2 + $0x700] sm:$0xff]
    %v326 = vld [vmem:[#allocation2 + $0x708] sm:$0xff]
    %v327 = vld [vmem:[#allocation2 + $0x710] sm:$0xff]
    %v328 = vld [vmem:[#allocation2 + $0x718] sm:$0xff]
    %v329 = vld [vmem:[#allocation2 + $0x720] sm:$0xff]
    %v330 = vld [vmem:[#allocation2 + $0x728] sm:$0xff]
    %v331 = vld [vmem:[#allocation2 + $0x730] sm:$0xff]
    %v332 = vld [vmem:[#allocation2 + $0x738] sm:$0xff]
    %v333 = vld [vmem:[#allocation2 + $0x740] sm:$0xff]
    %v334 = vld [vmem:[#allocation2 + $0x748] sm:$0xff]
    %v335 = vld [vmem:[#allocation2 + $0x750] sm:$0xff]
    %v336 = vld [vmem:[#allocation2 + $0x758] sm:$0xff]
    %v337 = vld [vmem:[#allocation2 + $0x760] sm:$0xff]
    %v338 = vld [vmem:[#allocation2 + $0x768] sm:$0xff]
    %v339 = vld [vmem:[#allocation2 + $0x770] sm:$0xff]
    %v340 = vld [vmem:[#allocation2 + $0x778] sm:$0xff]
    %v341 = vld [vmem:[#allocation2 + $0x780] sm:$0xff]
    %v342 = vld [vmem:[#allocation2 + $0x788] sm:$0xff]
    %v343 = vld [vmem:[#allocation2 + $0x790] sm:$0xff]
    %v344 = vld [vmem:[#allocation2 + $0x798] sm:$0xff]
    %v345 = vld [vmem:[#allocation2 + $0x7a0] sm:$0xff]
    %v346 = vld [vmem:[#allocation2 + $0x7a8] sm:$0xff]
    %v347 = vld [vmem:[#allocation2 + $0x7b0] sm:$0xff]
    %v348 = vld [vmem:[#allocation2 + $0x7b8] sm:$0xff]
    %v349 = vld [vmem:[#allocation2 + $0x7c0] sm:$0xff]
    %v350 = vld [vmem:[#allocation2 + $0x7c8] sm:$0xff]
    %v351 = vld [vmem:[#allocation2 + $0x7d0] sm:$0xff]
    %v352 = vld [vmem:[#allocation2 + $0x7d8] sm:$0xff]
    %v353 = vld [vmem:[#allocation2 + $0x7e0] sm:$0xff]
    %v354 = vld [vmem:[#allocation2 + $0x7e8] sm:$0xff]
    %v355 = vld [vmem:[#allocation2 + $0x7f0] sm:$0xff]
    %v356 = vld [vmem:[#allocation2 + $0x7f8] sm:$0xff]
    %v357 = vld [vmem:[#allocation2 + $0x800] sm:$0xff]
    %v358 = vld [vmem:[#allocation2 + $0x808] sm:$0xff]
    %v359 = vld [vmem:[#allocation2 + $0x810] sm:$0xff]
    %v360 = vld [vmem:[#allocation2 + $0x818] sm:$0xff]
    %v361 = vld [vmem:[#allocation2 + $0x820] sm:$0xff]
    %v362 = vld [vmem:[#allocation2 + $0x828] sm:$0xff]
    %v363 = vld [vmem:[#allocation2 + $0x830] sm:$0xff]
    %v364 = vld [vmem:[#allocation2 + $0x838] sm:$0xff]
    %v365 = vld [vmem:[#allocation2 + $0x840] sm:$0xff]
    %v366 = vld [vmem:[#allocation2 + $0x848] sm:$0xff]
    %v367 = vld [vmem:[#allocation2 + $0x850] sm:$0xff]
    %v368 = vld [vmem:[#allocation2 + $0x858] sm:$0xff]
    %v369 = vld [vmem:[#allocation2 + $0x860] sm:$0xff]
    %v370 = vld [vmem:[#allocation2 + $0x868] sm:$0xff]
    %v371 = vld [vmem:[#allocation2 + $0x870] sm:$0xff]
    %v372 = vld [vmem:[#allocation2 + $0x878] sm:$0xff]
    %v373 = vld [vmem:[#allocation2 + $0x880] sm:$0xff]
    %v374 = vld [vmem:[#allocation2 + $0x888] sm:$0xff]
    %v375 = vld [vmem:[#allocation2 + $0x890] sm:$0xff]
    %v376 = vld [vmem:[#allocation2 + $0x898] sm:$0xff]
    %v377 = vld [vmem:[#allocation2 + $0x8a0] sm:$0xff]
    %v378 = vld [vmem:[#allocation2 + $0x8a8] sm:$0xff]
    %v379 = vld [vmem:[#allocation2 + $0x8b0] sm:$0xff]
    %v380 = vld [vmem:[#allocation2 + $0x8b8] sm:$0xff]
    %v381 = vld [vmem:[#allocation2 + $0x8c0] sm:$0xff]
    %v382 = vld [vmem:[#allocation2 + $0x8c8] sm:$0xff]
    %v383 = vld [vmem:[#allocation2 + $0x8d0] sm:$0xff]
    %v384 = vld [vmem:[#allocation2 + $0x8d8] sm:$0xff]
    %v385 = vld [vmem:[#allocation2 + $0x8e0] sm:$0xff]
    %v386 = vld [vmem:[#allocation2 + $0x8e8] sm:$0xff]
    %v387 = vld [vmem:[#allocation2 + $0x8f0] sm:$0xff]
    %v388 = vld [vmem:[#allocation2 + $0x8f8] sm:$0xff]
    %v389 = vld [vmem:[#allocation2 + $0x900] sm:$0xff]
    %v390 = vld [vmem:[#allocation2 + $0x908] sm:$0xff]
    %v391 = vld [vmem:[#allocation2 + $0x910] sm:$0xff]
    %v392 = vld [vmem:[#allocation2 + $0x918] sm:$0xff]
    %v393 = vld [vmem:[#allocation2 + $0x920] sm:$0xff]
    %v394 = vld [vmem:[#allocation2 + $0x928] sm:$0xff]
    %v395 = vld [vmem:[#allocation2 + $0x930] sm:$0xff]
    %v396 = vld [vmem:[#allocation2 + $0x938] sm:$0xff]
    %v397 = vld [vmem:[#allocation2 + $0x940] sm:$0xff]
    %v398 = vld [vmem:[#allocation2 + $0x948] sm:$0xff]
    %v399 = vld [vmem:[#allocation2 + $0x950] sm:$0xff]
    %v400 = vld [vmem:[#allocation2 + $0x958] sm:$0xff]
    %v401 = vld [vmem:[#allocation2 + $0x960] sm:$0xff]
    %v402 = vld [vmem:[#allocation2 + $0x968] sm:$0xff]
    %v403 = vld [vmem:[#allocation2 + $0x970] sm:$0xff]
    %v404 = vld [vmem:[#allocation2 + $0x978] sm:$0xff]
    %v405 = vld [vmem:[#allocation2 + $0x980] sm:$0xff]
    %v406 = vld [vmem:[#allocation2 + $0x988] sm:$0xff]
    %v407 = vld [vmem:[#allocation2 + $0x990] sm:$0xff]
    %v408 = vld [vmem:[#allocation2 + $0x998] sm:$0xff]
    %v409 = vld [vmem:[#allocation2 + $0x9a0] sm:$0xff]
    %v410 = vld [vmem:[#allocation2 + $0x9a8] sm:$0xff]
    %v411 = vld [vmem:[#allocation2 + $0x9b0] sm:$0xff]
    %v412 = vld [vmem:[#allocation2 + $0x9b8] sm:$0xff]
    %v413 = vld [vmem:[#allocation2 + $0x9c0] sm:$0xff]
    %v414 = vld [vmem:[#allocation2 + $0x9c8] sm:$0xff]
    %v415 = vld [vmem:[#allocation2 + $0x9d0] sm:$0xff]
    %v416 = vld [vmem:[#allocation2 + $0x9d8] sm:$0xff]
    %v417 = vld [vmem:[#allocation2 + $0x9e0] sm:$0xff]
    %v418 = vld [vmem:[#allocation2 + $0x9e8] sm:$0xff]
    %v419 = vld [vmem:[#allocation2 + $0x9f0] sm:$0xff]
    %v420 = vld [vmem:[#allocation2 + $0x9f8] sm:$0xff]
    %v421 = vld [vmem:[#allocation2 + $0xa00] sm:$0xff]
    %v422 = vld [vmem:[#allocation2 + $0xa08] sm:$0xff]
    %v423 = vld [vmem:[#allocation2 + $0xa10] sm:$0xff]
    %v424 = vld [vmem:[#allocation2 + $0xa18] sm:$0xff]
    %v425 = vld [vmem:[#allocation2 + $0xa20] sm:$0xff]
    %v426 = vld [vmem:[#allocation2 + $0xa28] sm:$0xff]
    %v427 = vld [vmem:[#allocation2 + $0xa30] sm:$0xff]
    %v428 = vld [vmem:[#allocation2 + $0xa38] sm:$0xff]
    %v429 = vld [vmem:[#allocation2 + $0xa40] sm:$0xff]
    %v430 = vld [vmem:[#allocation2 + $0xa48] sm:$0xff]
    %v431 = vld [vmem:[#allocation2 + $0xa50] sm:$0xff]
    %v432 = vld [vmem:[#allocation2 + $0xa58] sm:$0xff]
    %v433 = vld [vmem:[#allocation2 + $0xa60] sm:$0xff]
    %v434 = vld [vmem:[#allocation2 + $0xa68] sm:$0xff]
    %v435 = vld [vmem:[#allocation2 + $0xa70] sm:$0xff]
    %v436 = vld [vmem:[#allocation2 + $0xa78] sm:$0xff]
    %v437 = vld [vmem:[#allocation2 + $0xa80] sm:$0xff]
    %v438 = vld [vmem:[#allocation2 + $0xa88] sm:$0xff]
    %v439 = vld [vmem:[#allocation2 + $0xa90] sm:$0xff]
    %v440 = vld [vmem:[#allocation2 + $0xa98] sm:$0xff]
    %v441 = vld [vmem:[#allocation2 + $0xaa0] sm:$0xff]
    %v442 = vld [vmem:[#allocation2 + $0xaa8] sm:$0xff]
    %v443 = vld [vmem:[#allocation2 + $0xab0] sm:$0xff]
    %v444 = vld [vmem:[#allocation2 + $0xab8] sm:$0xff]
    %v445 = vld [vmem:[#allocation2 + $0xac0] sm:$0xff]
    %v446 = vld [vmem:[#allocation2 + $0xac8] sm:$0xff]
    %v447 = vld [vmem:[#allocation2 + $0xad0] sm:$0xff]
    %v448 = vld [vmem:[#allocation2 + $0xad8] sm:$0xff]
    %v449 = vld [vmem:[#allocation2 + $0xae0] sm:$0xff]
    %v450 = vld [vmem:[#allocation2 + $0xae8] sm:$0xff]
    %v451 = vld [vmem:[#allocation2 + $0xaf0] sm:$0xff]
    %v452 = vld [vmem:[#allocation2 + $0xaf8] sm:$0xff]
    %v453 = vld [vmem:[#allocation2 + $0xb00] sm:$0xff]
    %v454 = vld [vmem:[#allocation2 + $0xb08] sm:$0xff]
    %v455 = vld [vmem:[#allocation2 + $0xb10] sm:$0xff]
    %v456 = vld [vmem:[#allocation2 + $0xb18] sm:$0xff]
    %v457 = vld [vmem:[#allocation2 + $0xb20] sm:$0xff]
    %v458 = vld [vmem:[#allocation2 + $0xb28] sm:$0xff]
    %v459 = vld [vmem:[#allocation2 + $0xb30] sm:$0xff]
    %v460 = vld [vmem:[#allocation2 + $0xb38] sm:$0xff]
    %v461 = vld [vmem:[#allocation2 + $0xb40] sm:$0xff]
    %v462 = vld [vmem:[#allocation2 + $0xb48] sm:$0xff]
    %v463 = vld [vmem:[#allocation2 + $0xb50] sm:$0xff]
    %v464 = vld [vmem:[#allocation2 + $0xb58] sm:$0xff]
    %v465 = vld [vmem:[#allocation2 + $0xb60] sm:$0xff]
    %v466 = vld [vmem:[#allocation2 + $0xb68] sm:$0xff]
    %v467 = vld [vmem:[#allocation2 + $0xb70] sm:$0xff]
    %v468 = vld [vmem:[#allocation2 + $0xb78] sm:$0xff]
    %v469 = vld [vmem:[#allocation2 + $0xb80] sm:$0xff]
    %v470 = vld [vmem:[#allocation2 + $0xb88] sm:$0xff]
    %v471 = vld [vmem:[#allocation2 + $0xb90] sm:$0xff]
    %v472 = vld [vmem:[#allocation2 + $0xb98] sm:$0xff]
    %v473 = vld [vmem:[#allocation2 + $0xba0] sm:$0xff]
    %v474 = vld [vmem:[#allocation2 + $0xba8] sm:$0xff]
    %v475 = vld [vmem:[#allocation2 + $0xbb0] sm:$0xff]
    %v476 = vld [vmem:[#allocation2 + $0xbb8] sm:$0xff]
    %v477 = vld [vmem:[#allocation2 + $0xbc0] sm:$0xff]
    %v478 = vld [vmem:[#allocation2 + $0xbc8] sm:$0xff]
    %v479 = vld [vmem:[#allocation2 + $0xbd0] sm:$0xff]
    %v480 = vld [vmem:[#allocation2 + $0xbd8] sm:$0xff]
    %v481 = vld [vmem:[#allocation2 + $0xbe0] sm:$0xff]
    %v482 = vld [vmem:[#allocation2 + $0xbe8] sm:$0xff]
    %v483 = vld [vmem:[#allocation2 + $0xbf0] sm:$0xff]
    %v484 = vld [vmem:[#allocation2 + $0xbf8] sm:$0xff]
    %v485 = vld [vmem:[#allocation2 + $0xc00] sm:$0xff]
    %v486 = vld [vmem:[#allocation2 + $0xc08] sm:$0xff]
    %v487 = vld [vmem:[#allocation2 + $0xc10] sm:$0xff]
    %v488 = vld [vmem:[#allocation2 + $0xc18] sm:$0xff]
    %v489 = vld [vmem:[#allocation2 + $0xc20] sm:$0xff]
    %v490 = vld [vmem:[#allocation2 + $0xc28] sm:$0xff]
    %v491 = vld [vmem:[#allocation2 + $0xc30] sm:$0xff]
    %v492 = vld [vmem:[#allocation2 + $0xc38] sm:$0xff]
    %v493 = vld [vmem:[#allocation2 + $0xc40] sm:$0xff]
    %v494 = vld [vmem:[#allocation2 + $0xc48] sm:$0xff]
    %v495 = vld [vmem:[#allocation2 + $0xc50] sm:$0xff]
    %v496 = vld [vmem:[#allocation2 + $0xc58] sm:$0xff]
    %v497 = vld [vmem:[#allocation2 + $0xc60] sm:$0xff]
    %v498 = vld [vmem:[#allocation2 + $0xc68] sm:$0xff]
    %v499 = vld [vmem:[#allocation2 + $0xc70] sm:$0xff]
    %v500 = vld [vmem:[#allocation2 + $0xc78] sm:$0xff]
    %v501 = vld [vmem:[#allocation2 + $0xc80] sm:$0xff]
    %v502 = vld [vmem:[#allocation2 + $0xc88] sm:$0xff]
    %v503 = vld [vmem:[#allocation2 + $0xc90] sm:$0xff]
    %v504 = vld [vmem:[#allocation2 + $0xc98] sm:$0xff]
    %v505 = vld [vmem:[#allocation2 + $0xca0] sm:$0xff]
    %v506 = vld [vmem:[#allocation2 + $0xca8] sm:$0xff]
    %v507 = vld [vmem:[#allocation2 + $0xcb0] sm:$0xff]
    %v508 = vld [vmem:[#allocation2 + $0xcb8] sm:$0xff]
    %v509 = vld [vmem:[#allocation2 + $0xcc0] sm:$0xff]
    %v510 = vld [vmem:[#allocation2 + $0xcc8] sm:$0xff]
    %v511 = vld [vmem:[#allocation2 + $0xcd0] sm:$0xff]
    %v512 = vld [vmem:[#allocation2 + $0xcd8] sm:$0xff]
    %v513 = vld [vmem:[#allocation2 + $0xce0] sm:$0xff]
    %v514 = vld [vmem:[#allocation2 + $0xce8] sm:$0xff]
    %v515 = vld [vmem:[#allocation2 + $0xcf0] sm:$0xff]
    %v516 = vld [vmem:[#allocation2 + $0xcf8] sm:$0xff]
    %v517 = vld [vmem:[#allocation2 + $0xd00] sm:$0xff]
    %v518 = vld [vmem:[#allocation2 + $0xd08] sm:$0xff]
    %v519 = vld [vmem:[#allocation2 + $0xd10] sm:$0xff]
    %v520 = vld [vmem:[#allocation2 + $0xd18] sm:$0xff]
    %v521 = vld [vmem:[#allocation2 + $0xd20] sm:$0xff]
    %v522 = vld [vmem:[#allocation2 + $0xd28] sm:$0xff]
    %v523 = vld [vmem:[#allocation2 + $0xd30] sm:$0xff]
    %v524 = vld [vmem:[#allocation2 + $0xd38] sm:$0xff]
    %v525 = vld [vmem:[#allocation2 + $0xd40] sm:$0xff]
    %v526 = vld [vmem:[#allocation2 + $0xd48] sm:$0xff]
    %v527 = vld [vmem:[#allocation2 + $0xd50] sm:$0xff]
    %v528 = vld [vmem:[#allocation2 + $0xd58] sm:$0xff]
    %v529 = vld [vmem:[#allocation2 + $0xd60] sm:$0xff]
    %v530 = vld [vmem:[#allocation2 + $0xd68] sm:$0xff]
    %v531 = vld [vmem:[#allocation2 + $0xd70] sm:$0xff]
    %v532 = vld [vmem:[#allocation2 + $0xd78] sm:$0xff]
    %v533 = vld [vmem:[#allocation2 + $0xd80] sm:$0xff]
    %v534 = vld [vmem:[#allocation2 + $0xd88] sm:$0xff]
    %v535 = vld [vmem:[#allocation2 + $0xd90] sm:$0xff]
    %v536 = vld [vmem:[#allocation2 + $0xd98] sm:$0xff]
    %v537 = vld [vmem:[#allocation2 + $0xda0] sm:$0xff]
    %v538 = vld [vmem:[#allocation2 + $0xda8] sm:$0xff]
    %v539 = vld [vmem:[#allocation2 + $0xdb0] sm:$0xff]
    %v540 = vld [vmem:[#allocation2 + $0xdb8] sm:$0xff]
    %v541 = vld [vmem:[#allocation2 + $0xdc0] sm:$0xff]
    %v542 = vld [vmem:[#allocation2 + $0xdc8] sm:$0xff]
    %v543 = vld [vmem:[#allocation2 + $0xdd0] sm:$0xff]
    %v544 = vld [vmem:[#allocation2 + $0xdd8] sm:$0xff]
    %v545 = vld [vmem:[#allocation2 + $0xde0] sm:$0xff]
    %v546 = vld [vmem:[#allocation2 + $0xde8] sm:$0xff]
    %v547 = vld [vmem:[#allocation2 + $0xdf0] sm:$0xff]
    %v548 = vld [vmem:[#allocation2 + $0xdf8] sm:$0xff]
    %v549 = vld [vmem:[#allocation2 + $0xe00] sm:$0xff]
    %v550 = vld [vmem:[#allocation2 + $0xe08] sm:$0xff]
    %v551 = vld [vmem:[#allocation2 + $0xe10] sm:$0xff]
    %v552 = vld [vmem:[#allocation2 + $0xe18] sm:$0xff]
    %v553 = vld [vmem:[#allocation2 + $0xe20] sm:$0xff]
    %v554 = vld [vmem:[#allocation2 + $0xe28] sm:$0xff]
    %v555 = vld [vmem:[#allocation2 + $0xe30] sm:$0xff]
    %v556 = vld [vmem:[#allocation2 + $0xe38] sm:$0xff]
    %v557 = vld [vmem:[#allocation2 + $0xe40] sm:$0xff]
    %v558 = vld [vmem:[#allocation2 + $0xe48] sm:$0xff]
    %v559 = vld [vmem:[#allocation2 + $0xe50] sm:$0xff]
    %v560 = vld [vmem:[#allocation2 + $0xe58] sm:$0xff]
    %v561 = vld [vmem:[#allocation2 + $0xe60] sm:$0xff]
    %v562 = vld [vmem:[#allocation2 + $0xe68] sm:$0xff]
    %v563 = vld [vmem:[#allocation2 + $0xe70] sm:$0xff]
    %v564 = vld [vmem:[#allocation2 + $0xe78] sm:$0xff]
    %v565 = vld [vmem:[#allocation2 + $0xe80] sm:$0xff]
    %v566 = vld [vmem:[#allocation2 + $0xe88] sm:$0xff]
    %v567 = vld [vmem:[#allocation2 + $0xe90] sm:$0xff]
    %v568 = vld [vmem:[#allocation2 + $0xe98] sm:$0xff]
    %v569 = vld [vmem:[#allocation2 + $0xea0] sm:$0xff]
    %v570 = vld [vmem:[#allocation2 + $0xea8] sm:$0xff]
    %v571 = vld [vmem:[#allocation2 + $0xeb0] sm:$0xff]
    %v572 = vld [vmem:[#allocation2 + $0xeb8] sm:$0xff]
    %v573 = vld [vmem:[#allocation2 + $0xec0] sm:$0xff]
    %v574 = vld [vmem:[#allocation2 + $0xec8] sm:$0xff]
    %v575 = vld [vmem:[#allocation2 + $0xed0] sm:$0xff]
    %v576 = vld [vmem:[#allocation2 + $0xed8] sm:$0xff]
    %v577 = vld [vmem:[#allocation2 + $0xee0] sm:$0xff]
    %v578 = vld [vmem:[#allocation2 + $0xee8] sm:$0xff]
    %v579 = vld [vmem:[#allocation2 + $0xef0] sm:$0xff]
    %v580 = vld [vmem:[#allocation2 + $0xef8] sm:$0xff]
    %v581 = vld [vmem:[#allocation2 + $0xf00] sm:$0xff]
    %v582 = vld [vmem:[#allocation2 + $0xf08] sm:$0xff]
    %v583 = vld [vmem:[#allocation2 + $0xf10] sm:$0xff]
    %v584 = vld [vmem:[#allocation2 + $0xf18] sm:$0xff]
    %v585 = vld [vmem:[#allocation2 + $0xf20] sm:$0xff]
    %v586 = vld [vmem:[#allocation2 + $0xf28] sm:$0xff]
    %v587 = vld [vmem:[#allocation2 + $0xf30] sm:$0xff]
    %v588 = vld [vmem:[#allocation2 + $0xf38] sm:$0xff]
    %v589 = vld [vmem:[#allocation2 + $0xf40] sm:$0xff]
    %v590 = vld [vmem:[#allocation2 + $0xf48] sm:$0xff]
    %v591 = vld [vmem:[#allocation2 + $0xf50] sm:$0xff]
    %v592 = vld [vmem:[#allocation2 + $0xf58] sm:$0xff]
    %v593 = vld [vmem:[#allocation2 + $0xf60] sm:$0xff]
    %v594 = vld [vmem:[#allocation2 + $0xf68] sm:$0xff]
    %v595 = vld [vmem:[#allocation2 + $0xf70] sm:$0xff]
    %v596 = vld [vmem:[#allocation2 + $0xf78] sm:$0xff]
    %v597 = vld [vmem:[#allocation2 + $0xf80] sm:$0xff]
    %v598 = vld [vmem:[#allocation2 + $0xf88] sm:$0xff]
    %v599 = vld [vmem:[#allocation2 + $0xf90] sm:$0xff]
    %v600 = vld [vmem:[#allocation2 + $0xf98] sm:$0xff]
    %v601 = vld [vmem:[#allocation2 + $0xfa0] sm:$0xff]
    %v602 = vld [vmem:[#allocation2 + $0xfa8] sm:$0xff]
    %v603 = vld [vmem:[#allocation2 + $0xfb0] sm:$0xff]
    %v604 = vld [vmem:[#allocation2 + $0xfb8] sm:$0xff]
    %v605 = vld [vmem:[#allocation2 + $0xfc0] sm:$0xff]
    %v606 = vld [vmem:[#allocation2 + $0xfc8] sm:$0xff]
    %v607 = vld [vmem:[#allocation2 + $0xfd0] sm:$0xff]
    %v608 = vld [vmem:[#allocation2 + $0xfd8] sm:$0xff]
    %v609 = vld [vmem:[#allocation2 + $0xfe0] sm:$0xff]
    %v610 = vld [vmem:[#allocation2 + $0xfe8] sm:$0xff]
    %v611 = vld [vmem:[#allocation2 + $0xff0] sm:$0xff]
    %v612 = vld [vmem:[#allocation2 + $0xff8] sm:$0xff]
    %v613 = vld [vmem:[#allocation2 + $0x1000] sm:$0xff]
    %v614 = vld [vmem:[#allocation2 + $0x1008] sm:$0xff]
    %v615 = vld [vmem:[#allocation2 + $0x1010] sm:$0xff]
    %v616 = vld [vmem:[#allocation2 + $0x1018] sm:$0xff]
    %v617 = vld [vmem:[#allocation2 + $0x1020] sm:$0xff]
    %v618 = vld [vmem:[#allocation2 + $0x1028] sm:$0xff]
    %v619 = vld [vmem:[#allocation2 + $0x1030] sm:$0xff]
    %v620 = vld [vmem:[#allocation2 + $0x1038] sm:$0xff]
    %v621 = vld [vmem:[#allocation2 + $0x1040] sm:$0xff]
    %v622 = vld [vmem:[#allocation2 + $0x1048] sm:$0xff]
    %v623 = vld [vmem:[#allocation2 + $0x1050] sm:$0xff]
    %v624 = vld [vmem:[#allocation2 + $0x1058] sm:$0xff]
    %v625 = vld [vmem:[#allocation2 + $0x1060] sm:$0xff]
    %v626 = vld [vmem:[#allocation2 + $0x1068] sm:$0xff]
    %v627 = vld [vmem:[#allocation2 + $0x1070] sm:$0xff]
    %v628 = vld [vmem:[#allocation2 + $0x1078] sm:$0xff]
    %v629 = vld [vmem:[#allocation2 + $0x1080] sm:$0xff]
    %v630 = vld [vmem:[#allocation2 + $0x1088] sm:$0xff]
    %v631 = vld [vmem:[#allocation2 + $0x1090] sm:$0xff]
    %v632 = vld [vmem:[#allocation2 + $0x1098] sm:$0xff]
    %v633 = vld [vmem:[#allocation2 + $0x10a0] sm:$0xff]
    %v634 = vld [vmem:[#allocation2 + $0x10a8] sm:$0xff]
    %v635 = vld [vmem:[#allocation2 + $0x10b0] sm:$0xff]
    %v636 = vld [vmem:[#allocation2 + $0x10b8] sm:$0xff]
    %v637 = vld [vmem:[#allocation2 + $0x10c0] sm:$0xff]
    %v638 = vld [vmem:[#allocation2 + $0x10c8] sm:$0xff]
    %v639 = vld [vmem:[#allocation2 + $0x10d0] sm:$0xff]
    %v640 = vld [vmem:[#allocation2 + $0x10d8] sm:$0xff]
    %v641 = vld [vmem:[#allocation2 + $0x10e0] sm:$0xff]
    %v642 = vld [vmem:[#allocation2 + $0x10e8] sm:$0xff]
    %v643 = vld [vmem:[#allocation2 + $0x10f0] sm:$0xff]
    %v644 = vld [vmem:[#allocation2 + $0x10f8] sm:$0xff]
    %v645 = vld [vmem:[#allocation2 + $0x1100] sm:$0xff]
    %v646 = vld [vmem:[#allocation2 + $0x1108] sm:$0xff]
    %v647 = vld [vmem:[#allocation2 + $0x1110] sm:$0xff]
    %v648 = vld [vmem:[#allocation2 + $0x1118] sm:$0xff]
    %v649 = vld [vmem:[#allocation2 + $0x1120] sm:$0xff]
    %v650 = vld [vmem:[#allocation2 + $0x1128] sm:$0xff]
    %v651 = vld [vmem:[#allocation2 + $0x1130] sm:$0xff]
    %v652 = vld [vmem:[#allocation2 + $0x1138] sm:$0xff]
    %v653 = vld [vmem:[#allocation2 + $0x1140] sm:$0xff]
    %v654 = vld [vmem:[#allocation2 + $0x1148] sm:$0xff]
    %v655 = vld [vmem:[#allocation2 + $0x1150] sm:$0xff]
    %v656 = vld [vmem:[#allocation2 + $0x1158] sm:$0xff]
    %v657 = vld [vmem:[#allocation2 + $0x1160] sm:$0xff]
    %v658 = vld [vmem:[#allocation2 + $0x1168] sm:$0xff]
    %v659 = vld [vmem:[#allocation2 + $0x1170] sm:$0xff]
    %v660 = vld [vmem:[#allocation2 + $0x1178] sm:$0xff]
    %v661 = vld [vmem:[#allocation2 + $0x1180] sm:$0xff]
    %v662 = vld [vmem:[#allocation2 + $0x1188] sm:$0xff]
    %v663 = vld [vmem:[#allocation2 + $0x1190] sm:$0xff]
    %v664 = vld [vmem:[#allocation2 + $0x1198] sm:$0xff]
    %v665 = vld [vmem:[#allocation2 + $0x11a0] sm:$0xff]
    %v666 = vld [vmem:[#allocation2 + $0x11a8] sm:$0xff]
    %v667 = vld [vmem:[#allocation2 + $0x11b0] sm:$0xff]
    %v668 = vld [vmem:[#allocation2 + $0x11b8] sm:$0xff]
    %v669 = vld [vmem:[#allocation2 + $0x11c0] sm:$0xff]
    %v670 = vld [vmem:[#allocation2 + $0x11c8] sm:$0xff]
    %v671 = vld [vmem:[#allocation2 + $0x11d0] sm:$0xff]
    %v672 = vld [vmem:[#allocation2 + $0x11d8] sm:$0xff]
    %v673 = vld [vmem:[#allocation2 + $0x11e0] sm:$0xff]
    %v674 = vld [vmem:[#allocation2 + $0x11e8] sm:$0xff]
    %v675 = vld [vmem:[#allocation2 + $0x11f0] sm:$0xff]
    %v676 = vld [vmem:[#allocation2 + $0x11f8] sm:$0xff]
    %v677 = vld [vmem:[#allocation2 + $0x1200] sm:$0xff]
    %v678 = vld [vmem:[#allocation2 + $0x1208] sm:$0xff]
    %v679 = vld [vmem:[#allocation2 + $0x1210] sm:$0xff]
    %v680 = vld [vmem:[#allocation2 + $0x1218] sm:$0xff]
    %v681 = vld [vmem:[#allocation2 + $0x1220] sm:$0xff]
    %v682 = vld [vmem:[#allocation2 + $0x1228] sm:$0xff]
    %v683 = vld [vmem:[#allocation2 + $0x1230] sm:$0xff]
    %v684 = vld [vmem:[#allocation2 + $0x1238] sm:$0xff]
    %v685 = vld [vmem:[#allocation2 + $0x1240] sm:$0xff]
    %v686 = vld [vmem:[#allocation2 + $0x1248] sm:$0xff]
    %v687 = vld [vmem:[#allocation2 + $0x1250] sm:$0xff]
    %v688 = vld [vmem:[#allocation2 + $0x1258] sm:$0xff]
    %v689 = vld [vmem:[#allocation2 + $0x1260] sm:$0xff]
    %v690 = vld [vmem:[#allocation2 + $0x1268] sm:$0xff]
    %v691 = vld [vmem:[#allocation2 + $0x1270] sm:$0xff]
    %v692 = vld [vmem:[#allocation2 + $0x1278] sm:$0xff]
    %v693 = vld [vmem:[#allocation2 + $0x1280] sm:$0xff]
    %v694 = vld [vmem:[#allocation2 + $0x1288] sm:$0xff]
    %v695 = vld [vmem:[#allocation2 + $0x1290] sm:$0xff]
    %v696 = vld [vmem:[#allocation2 + $0x1298] sm:$0xff]
    %v697 = vld [vmem:[#allocation2 + $0x12a0] sm:$0xff]
    %v698 = vld [vmem:[#allocation2 + $0x12a8] sm:$0xff]
    %v699 = vld [vmem:[#allocation2 + $0x12b0] sm:$0xff]
    %v700 = vld [vmem:[#allocation2 + $0x12b8] sm:$0xff]
    %v701 = vld [vmem:[#allocation2 + $0x12c0] sm:$0xff]
    %v702 = vld [vmem:[#allocation2 + $0x12c8] sm:$0xff]
    %v703 = vld [vmem:[#allocation2 + $0x12d0] sm:$0xff]
    %v704 = vld [vmem:[#allocation2 + $0x12d8] sm:$0xff]
    %v705 = vld [vmem:[#allocation2 + $0x12e0] sm:$0xff]
    %v706 = vld [vmem:[#allocation2 + $0x12e8] sm:$0xff]
    %v707 = vld [vmem:[#allocation2 + $0x12f0] sm:$0xff]
    %v708 = vld [vmem:[#allocation2 + $0x12f8] sm:$0xff]
    %v709 = vld [vmem:[#allocation2 + $0x1300] sm:$0xff]
    %v710 = vld [vmem:[#allocation2 + $0x1308] sm:$0xff]
    %v711 = vld [vmem:[#allocation2 + $0x1310] sm:$0xff]
    %v712 = vld [vmem:[#allocation2 + $0x1318] sm:$0xff]
    %v713 = vld [vmem:[#allocation2 + $0x1320] sm:$0xff]
    %v714 = vld [vmem:[#allocation2 + $0x1328] sm:$0xff]
    %v715 = vld [vmem:[#allocation2 + $0x1330] sm:$0xff]
    %v716 = vld [vmem:[#allocation2 + $0x1338] sm:$0xff]
    %v717 = vld [vmem:[#allocation2 + $0x1340] sm:$0xff]
    %v718 = vld [vmem:[#allocation2 + $0x1348] sm:$0xff]
    %v719 = vld [vmem:[#allocation2 + $0x1350] sm:$0xff]
    %v720 = vld [vmem:[#allocation2 + $0x1358] sm:$0xff]
    %v721 = vld [vmem:[#allocation2 + $0x1360] sm:$0xff]
    %v722 = vld [vmem:[#allocation2 + $0x1368] sm:$0xff]
    %v723 = vld [vmem:[#allocation2 + $0x1370] sm:$0xff]
    %v724 = vld [vmem:[#allocation2 + $0x1378] sm:$0xff]
    %v725 = vld [vmem:[#allocation2 + $0x1380] sm:$0xff]
    %v726 = vld [vmem:[#allocation2 + $0x1388] sm:$0xff]
    %v727 = vld [vmem:[#allocation2 + $0x1390] sm:$0xff]
    %v728 = vld [vmem:[#allocation2 + $0x1398] sm:$0xff]
    %v729 = vld [vmem:[#allocation2 + $0x13a0] sm:$0xff]
    %v730 = vld [vmem:[#allocation2 + $0x13a8] sm:$0xff]
    %v731 = vld [vmem:[#allocation2 + $0x13b0] sm:$0xff]
    %v732 = vld [vmem:[#allocation2 + $0x13b8] sm:$0xff]
    %v733 = vld [vmem:[#allocation2 + $0x13c0] sm:$0xff]
    %v734 = vld [vmem:[#allocation2 + $0x13c8] sm:$0xff]
    %v735 = vld [vmem:[#allocation2 + $0x13d0] sm:$0xff]
    %v736 = vld [vmem:[#allocation2 + $0x13d8] sm:$0xff]
    %v737 = vld [vmem:[#allocation2 + $0x13e0] sm:$0xff]
    %v738 = vld [vmem:[#allocation2 + $0x13e8] sm:$0xff]
    %v739 = vld [vmem:[#allocation2 + $0x13f0] sm:$0xff]
    %v740 = vld [vmem:[#allocation2 + $0x13f8] sm:$0xff]
    %v741 = vld [vmem:[#allocation2 + $0x1400] sm:$0xff]
    %v742 = vld [vmem:[#allocation2 + $0x1408] sm:$0xff]
    %v743 = vld [vmem:[#allocation2 + $0x1410] sm:$0xff]
    %v744 = vld [vmem:[#allocation2 + $0x1418] sm:$0xff]
    %v745 = vld [vmem:[#allocation2 + $0x1420] sm:$0xff]
    %v746 = vld [vmem:[#allocation2 + $0x1428] sm:$0xff]
    %v747 = vld [vmem:[#allocation2 + $0x1430] sm:$0xff]
    %v748 = vld [vmem:[#allocation2 + $0x1438] sm:$0xff]
    %v749 = vld [vmem:[#allocation2 + $0x1440] sm:$0xff]
    %v750 = vld [vmem:[#allocation2 + $0x1448] sm:$0xff]
    %v751 = vld [vmem:[#allocation2 + $0x1450] sm:$0xff]
    %v752 = vld [vmem:[#allocation2 + $0x1458] sm:$0xff]
    %v753 = vld [vmem:[#allocation2 + $0x1460] sm:$0xff]
    %v754 = vld [vmem:[#allocation2 + $0x1468] sm:$0xff]
    %v755 = vld [vmem:[#allocation2 + $0x1470] sm:$0xff]
    %v756 = vld [vmem:[#allocation2 + $0x1478] sm:$0xff]
    %v757 = vld [vmem:[#allocation2 + $0x1480] sm:$0xff]
    %v758 = vld [vmem:[#allocation2 + $0x1488] sm:$0xff]
    %v759 = vld [vmem:[#allocation2 + $0x1490] sm:$0xff]
    %v760 = vld [vmem:[#allocation2 + $0x1498] sm:$0xff]
    %v761 = vld [vmem:[#allocation2 + $0x14a0] sm:$0xff]
    %v762 = vld [vmem:[#allocation2 + $0x14a8] sm:$0xff]
    %v763 = vld [vmem:[#allocation2 + $0x14b0] sm:$0xff]
    %v764 = vld [vmem:[#allocation2 + $0x14b8] sm:$0xff]
    %v765 = vld [vmem:[#allocation2 + $0x14c0] sm:$0xff]
    %v766 = vld [vmem:[#allocation2 + $0x14c8] sm:$0xff]
    %v767 = vld [vmem:[#allocation2 + $0x14d0] sm:$0xff]
    %v768 = vld [vmem:[#allocation2 + $0x14d8] sm:$0xff]
    %v769 = vld [vmem:[#allocation2 + $0x14e0] sm:$0xff]
    %v770 = vld [vmem:[#allocation2 + $0x14e8] sm:$0xff]
    %v771 = vld [vmem:[#allocation2 + $0x14f0] sm:$0xff]
    %v772 = vld [vmem:[#allocation2 + $0x14f8] sm:$0xff]
    %v773 = vld [vmem:[#allocation2 + $0x1500] sm:$0xff]
    %v774 = vld [vmem:[#allocation2 + $0x1508] sm:$0xff]
    %v775 = vld [vmem:[#allocation2 + $0x1510] sm:$0xff]
    %v776 = vld [vmem:[#allocation2 + $0x1518] sm:$0xff]
    %v777 = vld [vmem:[#allocation2 + $0x1520] sm:$0xff]
    %v778 = vld [vmem:[#allocation2 + $0x1528] sm:$0xff]
    %v779 = vld [vmem:[#allocation2 + $0x1530] sm:$0xff]
    %v780 = vld [vmem:[#allocation2 + $0x1538] sm:$0xff]
    %v781 = vld [vmem:[#allocation2 + $0x1540] sm:$0xff]
    %v782 = vld [vmem:[#allocation2 + $0x1548] sm:$0xff]
    %v783 = vld [vmem:[#allocation2 + $0x1550] sm:$0xff]
    %v784 = vld [vmem:[#allocation2 + $0x1558] sm:$0xff]
    %v785 = vld [vmem:[#allocation2 + $0x1560] sm:$0xff]
    %v786 = vld [vmem:[#allocation2 + $0x1568] sm:$0xff]
    %v787 = vld [vmem:[#allocation2 + $0x1570] sm:$0xff]
    %v788 = vld [vmem:[#allocation2 + $0x1578] sm:$0xff]
    %v789 = vld [vmem:[#allocation2 + $0x1580] sm:$0xff]
    %v790 = vld [vmem:[#allocation2 + $0x1588] sm:$0xff]
    %v791 = vld [vmem:[#allocation2 + $0x1590] sm:$0xff]
    %v792 = vld [vmem:[#allocation2 + $0x1598] sm:$0xff]
    %v793 = vld [vmem:[#allocation2 + $0x15a0] sm:$0xff]
    %v794 = vld [vmem:[#allocation2 + $0x15a8] sm:$0xff]
    %v795 = vld [vmem:[#allocation2 + $0x15b0] sm:$0xff]
    %v796 = vld [vmem:[#allocation2 + $0x15b8] sm:$0xff]
    %v797 = vld [vmem:[#allocation2 + $0x15c0] sm:$0xff]
    %v798 = vld [vmem:[#allocation2 + $0x15c8] sm:$0xff]
    %v799 = vld [vmem:[#allocation2 + $0x15d0] sm:$0xff]
    %v800 = vld [vmem:[#allocation2 + $0x15d8] sm:$0xff]
    %v801 = vld [vmem:[#allocation2 + $0x15e0] sm:$0xff]
    %v802 = vld [vmem:[#allocation2 + $0x15e8] sm:$0xff]
    %v803 = vld [vmem:[#allocation2 + $0x15f0] sm:$0xff]
    %v804 = vld [vmem:[#allocation2 + $0x15f8] sm:$0xff]
    %v805 = vld [vmem:[#allocation2 + $0x1600] sm:$0xff]
    %v806 = vld [vmem:[#allocation2 + $0x1608] sm:$0xff]
    %v807 = vld [vmem:[#allocation2 + $0x1610] sm:$0xff]
    %v808 = vld [vmem:[#allocation2 + $0x1618] sm:$0xff]
    %v809 = vld [vmem:[#allocation2 + $0x1620] sm:$0xff]
    %v810 = vld [vmem:[#allocation2 + $0x1628] sm:$0xff]
    %v811 = vld [vmem:[#allocation2 + $0x1630] sm:$0xff]
    %v812 = vld [vmem:[#allocation2 + $0x1638] sm:$0xff]
    %v813 = vld [vmem:[#allocation2 + $0x1640] sm:$0xff]
    %v814 = vld [vmem:[#allocation2 + $0x1648] sm:$0xff]
    %v815 = vld [vmem:[#allocation2 + $0x1650] sm:$0xff]
    %v816 = vld [vmem:[#allocation2 + $0x1658] sm:$0xff]
    %v817 = vld [vmem:[#allocation2 + $0x1660] sm:$0xff]
    %v818 = vld [vmem:[#allocation2 + $0x1668] sm:$0xff]
    %v819 = vld [vmem:[#allocation2 + $0x1670] sm:$0xff]
    %v820 = vld [vmem:[#allocation2 + $0x1678] sm:$0xff]
    %v821 = vld [vmem:[#allocation2 + $0x1680] sm:$0xff]
    %v822 = vld [vmem:[#allocation2 + $0x1688] sm:$0xff]
    %v823 = vld [vmem:[#allocation2 + $0x1690] sm:$0xff]
    %v824 = vld [vmem:[#allocation2 + $0x1698] sm:$0xff]
    %v825 = vld [vmem:[#allocation2 + $0x16a0] sm:$0xff]
    %v826 = vld [vmem:[#allocation2 + $0x16a8] sm:$0xff]
    %v827 = vld [vmem:[#allocation2 + $0x16b0] sm:$0xff]
    %v828 = vld [vmem:[#allocation2 + $0x16b8] sm:$0xff]
    %v829 = vld [vmem:[#allocation2 + $0x16c0] sm:$0xff]
    %v830 = vld [vmem:[#allocation2 + $0x16c8] sm:$0xff]
    %v831 = vld [vmem:[#allocation2 + $0x16d0] sm:$0xff]
    %v832 = vld [vmem:[#allocation2 + $0x16d8] sm:$0xff]
    %v833 = vld [vmem:[#allocation2 + $0x16e0] sm:$0xff]
    %v834 = vld [vmem:[#allocation2 + $0x16e8] sm:$0xff]
    %v835 = vld [vmem:[#allocation2 + $0x16f0] sm:$0xff]
    %v836 = vld [vmem:[#allocation2 + $0x16f8] sm:$0xff]
    %v837 = vld [vmem:[#allocation2 + $0x1700] sm:$0xff]
    %v838 = vld [vmem:[#allocation2 + $0x1708] sm:$0xff]
    %v839 = vld [vmem:[#allocation2 + $0x1710] sm:$0xff]
    %v840 = vld [vmem:[#allocation2 + $0x1718] sm:$0xff]
    %v841 = vld [vmem:[#allocation2 + $0x1720] sm:$0xff]
    %v842 = vld [vmem:[#allocation2 + $0x1728] sm:$0xff]
    %v843 = vld [vmem:[#allocation2 + $0x1730] sm:$0xff]
    %v844 = vld [vmem:[#allocation2 + $0x1738] sm:$0xff]
    %v845 = vld [vmem:[#allocation2 + $0x1740] sm:$0xff]
    %v846 = vld [vmem:[#allocation2 + $0x1748] sm:$0xff]
    %v847 = vld [vmem:[#allocation2 + $0x1750] sm:$0xff]
    %v848 = vld [vmem:[#allocation2 + $0x1758] sm:$0xff]
    %v849 = vld [vmem:[#allocation2 + $0x1760] sm:$0xff]
    %v850 = vld [vmem:[#allocation2 + $0x1768] sm:$0xff]
    %v851 = vld [vmem:[#allocation2 + $0x1770] sm:$0xff]
    %v852 = vld [vmem:[#allocation2 + $0x1778] sm:$0xff]
    %v853 = vld [vmem:[#allocation2 + $0x1780] sm:$0xff]
    %v854 = vld [vmem:[#allocation2 + $0x1788] sm:$0xff]
    %v855 = vld [vmem:[#allocation2 + $0x1790] sm:$0xff]
    %v856 = vld [vmem:[#allocation2 + $0x1798] sm:$0xff]
    %v857 = vld [vmem:[#allocation2 + $0x17a0] sm:$0xff]
    %v858 = vld [vmem:[#allocation2 + $0x17a8] sm:$0xff]
    %v859 = vld [vmem:[#allocation2 + $0x17b0] sm:$0xff]
    %v860 = vld [vmem:[#allocation2 + $0x17b8] sm:$0xff]
    %v861 = vld [vmem:[#allocation2 + $0x17c0] sm:$0xff]
    %v862 = vld [vmem:[#allocation2 + $0x17c8] sm:$0xff]
    %v863 = vld [vmem:[#allocation2 + $0x17d0] sm:$0xff]
    %v864 = vld [vmem:[#allocation2 + $0x17d8] sm:$0xff]
    %v865 = vld [vmem:[#allocation2 + $0x17e0] sm:$0xff]
    %v866 = vld [vmem:[#allocation2 + $0x17e8] sm:$0xff]
    %v867 = vld [vmem:[#allocation2 + $0x17f0] sm:$0xff]
    %v868 = vld [vmem:[#allocation2 + $0x17f8] sm:$0xff]
    %v869 = vld [vmem:[%s1] sm:$0xff]
    %v870 = vld [vmem:[%s1 + $0x8] sm:$0xff]
    %v871 = vld [vmem:[%s1 + $0x10] sm:$0xff]
    %v872 = vld [vmem:[%s1 + $0x18] sm:$0xff]
    %v873 = vld [vmem:[%s1 + $0x20] sm:$0xff]
    %v874 = vld [vmem:[%s1 + $0x28] sm:$0xff]
    %v875 = vld [vmem:[#allocation5] sm:$0xff]
    %v876 = vld [vmem:[#allocation5 + $0x8] sm:$0xff]
    %v877 = vld [vmem:[#allocation5 + $0x10] sm:$0xff]
    %v878 = vld [vmem:[#allocation5 + $0x18] sm:$0xff]
    %v879 = vld [vmem:[#allocation5 + $0x20] sm:$0xff]
    %v880 = vld [vmem:[#allocation5 + $0x28] sm:$0xff]
    %v881 = vld [vmem:[#allocation5 + $0x30] sm:$0xff]
    %v882 = vld [vmem:[#allocation5 + $0x38] sm:$0xff]
    %v883 = vld [vmem:[#allocation5 + $0x40] sm:$0xff]
    %v884 = vld [vmem:[#allocation5 + $0x48] sm:$0xff]
    %v885 = vld [vmem:[#allocation5 + $0x50] sm:$0xff]
    %v886 = vld [vmem:[#allocation5 + $0x58] sm:$0xff]
    %v887 = vld [vmem:[#allocation5 + $0x60] sm:$0xff]
    %v888 = vld [vmem:[#allocation5 + $0x68] sm:$0xff]
    %v889 = vld [vmem:[#allocation5 + $0x70] sm:$0xff]
    %v890 = vld [vmem:[#allocation5 + $0x78] sm:$0xff]
    %v891 = vld [vmem:[#allocation5 + $0x80] sm:$0xff]
    %v892 = vld [vmem:[#allocation5 + $0x88] sm:$0xff]
    %v893 = vld [vmem:[#allocation5 + $0x90] sm:$0xff]
    %v894 = vld [vmem:[#allocation5 + $0x98] sm:$0xff]
    %v895 = vld [vmem:[#allocation5 + $0xa0] sm:$0xff]
    %v896 = vld [vmem:[#allocation5 + $0xa8] sm:$0xff]
    %v897 = vld [vmem:[#allocation5 + $0xb0] sm:$0xff]
    %v898 = vld [vmem:[#allocation5 + $0xb8] sm:$0xff]
    %v899 = vld [vmem:[#allocation5 + $0xc0] sm:$0xff]
    %v900 = vld [vmem:[#allocation5 + $0xc8] sm:$0xff]
    %v901 = vld [vmem:[#allocation5 + $0xd0] sm:$0xff]
    %v902 = vld [vmem:[#allocation5 + $0xd8] sm:$0xff]
    %v903 = vld [vmem:[#allocation5 + $0xe0] sm:$0xff]
    %v904 = vld [vmem:[#allocation5 + $0xe8] sm:$0xff]
    %v905 = vld [vmem:[#allocation5 + $0xf0] sm:$0xff]
    %v906 = vld [vmem:[#allocation5 + $0xf8] sm:$0xff]
    %v907 = vld [vmem:[#allocation5 + $0x100] sm:$0xff]
    %v908 = vld [vmem:[#allocation5 + $0x108] sm:$0xff]
    %v909 = vld [vmem:[#allocation5 + $0x110] sm:$0xff]
    %v910 = vld [vmem:[#allocation5 + $0x118] sm:$0xff]
    %v911 = vld [vmem:[#allocation5 + $0x120] sm:$0xff]
    %v912 = vld [vmem:[#allocation5 + $0x128] sm:$0xff]
    %v913 = vld [vmem:[#allocation5 + $0x130] sm:$0xff]
    %v914 = vld [vmem:[#allocation5 + $0x138] sm:$0xff]
    %v915 = vld [vmem:[#allocation5 + $0x140] sm:$0xff]
    %v916 = vld [vmem:[#allocation5 + $0x148] sm:$0xff]
    %v917 = vld [vmem:[#allocation5 + $0x150] sm:$0xff]
    %v918 = vld [vmem:[#allocation5 + $0x158] sm:$0xff]
    %v919 = vld [vmem:[#allocation5 + $0x160] sm:$0xff]
    %v920 = vld [vmem:[#allocation5 + $0x168] sm:$0xff]
    %v921 = vld [vmem:[#allocation5 + $0x170] sm:$0xff]
    %v922 = vld [vmem:[#allocation5 + $0x178] sm:$0xff]
    %v923 = vld [vmem:[#allocation5 + $0x180] sm:$0xff]
    %v924 = vld [vmem:[#allocation5 + $0x188] sm:$0xff]
    %v925 = vld [vmem:[#allocation5 + $0x190] sm:$0xff]
    %v926 = vld [vmem:[#allocation5 + $0x198] sm:$0xff]
    %v927 = vld [vmem:[#allocation5 + $0x1a0] sm:$0xff]
    %v928 = vld [vmem:[#allocation5 + $0x1a8] sm:$0xff]
    %v929 = vld [vmem:[#allocation5 + $0x1b0] sm:$0xff]
    %v930 = vld [vmem:[#allocation5 + $0x1b8] sm:$0xff]
    %v931 = vld [vmem:[#allocation5 + $0x1c0] sm:$0xff]
    %v932 = vld [vmem:[#allocation5 + $0x1c8] sm:$0xff]
    %v933 = vld [vmem:[#allocation5 + $0x1d0] sm:$0xff]
    %v934 = vld [vmem:[#allocation5 + $0x1d8] sm:$0xff]
    %v935 = vld [vmem:[#allocation5 + $0x1e0] sm:$0xff]
    %v936 = vld [vmem:[#allocation5 + $0x1e8] sm:$0xff]
    %v937 = vld [vmem:[#allocation5 + $0x1f0] sm:$0xff]
    %v938 = vld [vmem:[#allocation5 + $0x1f8] sm:$0xff]
    %v939 = vld [vmem:[#allocation5 + $0x200] sm:$0xff]
    %v940 = vld [vmem:[#allocation5 + $0x208] sm:$0xff]
    %v941 = vld [vmem:[#allocation5 + $0x210] sm:$0xff]
    %v942 = vld [vmem:[#allocation5 + $0x218] sm:$0xff]
    %v943 = vld [vmem:[#allocation5 + $0x220] sm:$0xff]
    %v944 = vld [vmem:[#allocation5 + $0x228] sm:$0xff]
    %v945 = vld [vmem:[#allocation5 + $0x230] sm:$0xff]
    %v946 = vld [vmem:[#allocation5 + $0x238] sm:$0xff]
    %v947 = vld [vmem:[#allocation5 + $0x240] sm:$0xff]
    %v948 = vld [vmem:[#allocation5 + $0x248] sm:$0xff]
    %v949 = vld [vmem:[#allocation5 + $0x250] sm:$0xff]
    %v950 = vld [vmem:[#allocation5 + $0x258] sm:$0xff]
    %v951 = vld [vmem:[#allocation5 + $0x260] sm:$0xff]
    %v952 = vld [vmem:[#allocation5 + $0x268] sm:$0xff]
    %v953 = vld [vmem:[#allocation5 + $0x270] sm:$0xff]
    %v954 = vld [vmem:[#allocation5 + $0x278] sm:$0xff]
    %v955 = vld [vmem:[#allocation5 + $0x280] sm:$0xff]
    %v956 = vld [vmem:[#allocation5 + $0x288] sm:$0xff]
    %v957 = vld [vmem:[#allocation5 + $0x290] sm:$0xff]
    %v958 = vld [vmem:[#allocation5 + $0x298] sm:$0xff]
    %v959 = vld [vmem:[#allocation5 + $0x2a0] sm:$0xff]
    %v960 = vld [vmem:[#allocation5 + $0x2a8] sm:$0xff]
    %v961 = vld [vmem:[#allocation5 + $0x2b0] sm:$0xff]
    %v962 = vld [vmem:[#allocation5 + $0x2b8] sm:$0xff]
    %v963 = vld [vmem:[#allocation5 + $0x2c0] sm:$0xff]
    %v964 = vld [vmem:[#allocation5 + $0x2c8] sm:$0xff]
    %v965 = vld [vmem:[#allocation5 + $0x2d0] sm:$0xff]
    %v966 = vld [vmem:[#allocation5 + $0x2d8] sm:$0xff]
    %v967 = vld [vmem:[#allocation5 + $0x2e0] sm:$0xff]
    %v968 = vld [vmem:[#allocation5 + $0x2e8] sm:$0xff]
    %v969 = vld [vmem:[#allocation5 + $0x2f0] sm:$0xff]
    %v970 = vld [vmem:[#allocation5 + $0x2f8] sm:$0xff]
    %v971 = vld [vmem:[#allocation5 + $0x300] sm:$0xff]
    %v972 = vld [vmem:[#allocation5 + $0x308] sm:$0xff]
    %v973 = vld [vmem:[#allocation5 + $0x310] sm:$0xff]
    %v974 = vld [vmem:[#allocation5 + $0x318] sm:$0xff]
    %v975 = vld [vmem:[#allocation5 + $0x320] sm:$0xff]
    %v976 = vld [vmem:[#allocation5 + $0x328] sm:$0xff]
    %v977 = vld [vmem:[#allocation5 + $0x330] sm:$0xff]
    %v978 = vld [vmem:[#allocation5 + $0x338] sm:$0xff]
    %v979 = vld [vmem:[#allocation5 + $0x340] sm:$0xff]
    %v980 = vld [vmem:[#allocation5 + $0x348] sm:$0xff]
    %v981 = vld [vmem:[#allocation5 + $0x350] sm:$0xff]
    %v982 = vld [vmem:[#allocation5 + $0x358] sm:$0xff]
    %v983 = vld [vmem:[#allocation5 + $0x360] sm:$0xff]
    %v984 = vld [vmem:[#allocation5 + $0x368] sm:$0xff]
    %v985 = vld [vmem:[#allocation5 + $0x370] sm:$0xff]
    %v986 = vld [vmem:[#allocation5 + $0x378] sm:$0xff]
    %v987 = vld [vmem:[#allocation5 + $0x380] sm:$0xff]
    %v988 = vld [vmem:[#allocation5 + $0x388] sm:$0xff]
    %v989 = vld [vmem:[#allocation5 + $0x390] sm:$0xff]
    %v990 = vld [vmem:[#allocation5 + $0x398] sm:$0xff]
    %v991 = vld [vmem:[#allocation5 + $0x3a0] sm:$0xff]
    %v992 = vld [vmem:[#allocation5 + $0x3a8] sm:$0xff]
    %v993 = vld [vmem:[#allocation5 + $0x3b0] sm:$0xff]
    %v994 = vld [vmem:[#allocation5 + $0x3b8] sm:$0xff]
    %v995 = vld [vmem:[#allocation5 + $0x3c0] sm:$0xff]
    %v996 = vld [vmem:[#allocation5 + $0x3c8] sm:$0xff]
    %v997 = vld [vmem:[#allocation5 + $0x3d0] sm:$0xff]
    %v998 = vld [vmem:[#allocation5 + $0x3d8] sm:$0xff]
    %v999 = vld [vmem:[#allocation5 + $0x3e0] sm:$0xff]
    %v1000 = vld [vmem:[#allocation5 + $0x3e8] sm:$0xff]
    %v1001 = vld [vmem:[#allocation5 + $0x3f0] sm:$0xff]
    %v1002 = vld [vmem:[#allocation5 + $0x3f8] sm:$0xff]
    %v1003 = vld [vmem:[#allocation5 + $0x400] sm:$0xff]
    %v1004 = vld [vmem:[#allocation5 + $0x408] sm:$0xff]
    %v1005 = vld [vmem:[#allocation5 + $0x410] sm:$0xff]
    %v1006 = vld [vmem:[#allocation5 + $0x418] sm:$0xff]
    %v1007 = vld [vmem:[#allocation5 + $0x420] sm:$0xff]
    %v1008 = vld [vmem:[#allocation5 + $0x428] sm:$0xff]
    %v1009 = vld [vmem:[#allocation5 + $0x430] sm:$0xff]
    %v1010 = vld [vmem:[#allocation5 + $0x438] sm:$0xff]
    %v1011 = vld [vmem:[#allocation5 + $0x440] sm:$0xff]
    %v1012 = vld [vmem:[#allocation5 + $0x448] sm:$0xff]
    %v1013 = vld [vmem:[#allocation5 + $0x450] sm:$0xff]
    %v1014 = vld [vmem:[#allocation5 + $0x458] sm:$0xff]
    %v1015 = vld [vmem:[#allocation5 + $0x460] sm:$0xff]
    %v1016 = vld [vmem:[#allocation5 + $0x468] sm:$0xff]
    %v1017 = vld [vmem:[#allocation5 + $0x470] sm:$0xff]
    %v1018 = vld [vmem:[#allocation5 + $0x478] sm:$0xff]
    %v1019 = vld [vmem:[#allocation5 + $0x480] sm:$0xff]
    %v1020 = vld [vmem:[#allocation5 + $0x488] sm:$0xff]
    %v1021 = vld [vmem:[#allocation5 + $0x490] sm:$0xff]
    %v1022 = vld [vmem:[#allocation5 + $0x498] sm:$0xff]
    %v1023 = vld [vmem:[#allocation5 + $0x4a0] sm:$0xff]
    %v1024 = vld [vmem:[#allocation5 + $0x4a8] sm:$0xff]
    %v1025 = vld [vmem:[#allocation5 + $0x4b0] sm:$0xff]
    %v1026 = vld [vmem:[#allocation5 + $0x4b8] sm:$0xff]
    %v1027 = vld [vmem:[#allocation5 + $0x4c0] sm:$0xff]
    %v1028 = vld [vmem:[#allocation5 + $0x4c8] sm:$0xff]
    %v1029 = vld [vmem:[#allocation5 + $0x4d0] sm:$0xff]
    %v1030 = vld [vmem:[#allocation5 + $0x4d8] sm:$0xff]
    %v1031 = vld [vmem:[#allocation5 + $0x4e0] sm:$0xff]
    %v1032 = vld [vmem:[#allocation5 + $0x4e8] sm:$0xff]
    %v1033 = vld [vmem:[#allocation5 + $0x4f0] sm:$0xff]
    %v1034 = vld [vmem:[#allocation5 + $0x4f8] sm:$0xff]
    %v1035 = vld [vmem:[#allocation5 + $0x500] sm:$0xff]
    %v1036 = vld [vmem:[#allocation5 + $0x508] sm:$0xff]
    %v1037 = vld [vmem:[#allocation5 + $0x510] sm:$0xff]
    %v1038 = vld [vmem:[#allocation5 + $0x518] sm:$0xff]
    %v1039 = vld [vmem:[#allocation5 + $0x520] sm:$0xff]
    %v1040 = vld [vmem:[#allocation5 + $0x528] sm:$0xff]
    %v1041 = vld [vmem:[#allocation5 + $0x530] sm:$0xff]
    %v1042 = vld [vmem:[#allocation5 + $0x538] sm:$0xff]
    %v1043 = vld [vmem:[#allocation5 + $0x540] sm:$0xff]
    %v1044 = vld [vmem:[#allocation5 + $0x548] sm:$0xff]
    %v1045 = vld [vmem:[#allocation5 + $0x550] sm:$0xff]
    %v1046 = vld [vmem:[#allocation5 + $0x558] sm:$0xff]
    %v1047 = vld [vmem:[#allocation5 + $0x560] sm:$0xff]
    %v1048 = vld [vmem:[#allocation5 + $0x568] sm:$0xff]
    %v1049 = vld [vmem:[#allocation5 + $0x570] sm:$0xff]
    %v1050 = vld [vmem:[#allocation5 + $0x578] sm:$0xff]
    %v1051 = vld [vmem:[#allocation5 + $0x580] sm:$0xff]
    %v1052 = vld [vmem:[#allocation5 + $0x588] sm:$0xff]
    %v1053 = vld [vmem:[#allocation5 + $0x590] sm:$0xff]
    %v1054 = vld [vmem:[#allocation5 + $0x598] sm:$0xff]
    %v1055 = vld [vmem:[#allocation5 + $0x5a0] sm:$0xff]
    %v1056 = vld [vmem:[#allocation5 + $0x5a8] sm:$0xff]
    %v1057 = vld [vmem:[#allocation5 + $0x5b0] sm:$0xff]
    %v1058 = vld [vmem:[#allocation5 + $0x5b8] sm:$0xff]
    %v1059 = vld [vmem:[#allocation5 + $0x5c0] sm:$0xff]
    %v1060 = vld [vmem:[#allocation5 + $0x5c8] sm:$0xff]
    %v1061 = vld [vmem:[#allocation5 + $0x5d0] sm:$0xff]
    %v1062 = vld [vmem:[#allocation5 + $0x5d8] sm:$0xff]
    %v1063 = vld [vmem:[#allocation5 + $0x5e0] sm:$0xff]
    %v1064 = vld [vmem:[#allocation5 + $0x5e8] sm:$0xff]
    %v1065 = vld [vmem:[#allocation5 + $0x5f0] sm:$0xff]
    %v1066 = vld [vmem:[#allocation5 + $0x5f8] sm:$0xff]
    %v1067 = vld [vmem:[#allocation5 + $0x600] sm:$0xff]
    %v1068 = vld [vmem:[#allocation5 + $0x608] sm:$0xff]
    %v1069 = vld [vmem:[#allocation5 + $0x610] sm:$0xff]
    %v1070 = vld [vmem:[#allocation5 + $0x618] sm:$0xff]
    %v1071 = vld [vmem:[#allocation5 + $0x620] sm:$0xff]
    %v1072 = vld [vmem:[#allocation5 + $0x628] sm:$0xff]
    %v1073 = vld [vmem:[#allocation5 + $0x630] sm:$0xff]
    %v1074 = vld [vmem:[#allocation5 + $0x638] sm:$0xff]
    %v1075 = vld [vmem:[#allocation5 + $0x640] sm:$0xff]
    %v1076 = vld [vmem:[#allocation5 + $0x648] sm:$0xff]
    %v1077 = vld [vmem:[#allocation5 + $0x650] sm:$0xff]
    %v1078 = vld [vmem:[#allocation5 + $0x658] sm:$0xff]
    %v1079 = vld [vmem:[#allocation5 + $0x660] sm:$0xff]
    %v1080 = vld [vmem:[#allocation5 + $0x668] sm:$0xff]
    %v1081 = vld [vmem:[#allocation5 + $0x670] sm:$0xff]
    %v1082 = vld [vmem:[#allocation5 + $0x678] sm:$0xff]
    %v1083 = vld [vmem:[#allocation5 + $0x680] sm:$0xff]
    %v1084 = vld [vmem:[#allocation5 + $0x688] sm:$0xff]
    %v1085 = vld [vmem:[#allocation5 + $0x690] sm:$0xff]
    %v1086 = vld [vmem:[#allocation5 + $0x698] sm:$0xff]
    %v1087 = vld [vmem:[#allocation5 + $0x6a0] sm:$0xff]
    %v1088 = vld [vmem:[#allocation5 + $0x6a8] sm:$0xff]
    %v1089 = vld [vmem:[#allocation5 + $0x6b0] sm:$0xff]
    %v1090 = vld [vmem:[#allocation5 + $0x6b8] sm:$0xff]
    %v1091 = vld [vmem:[#allocation5 + $0x6c0] sm:$0xff]
    %v1092 = vld [vmem:[#allocation5 + $0x6c8] sm:$0xff]
    %v1093 = vld [vmem:[#allocation5 + $0x6d0] sm:$0xff]
    %v1094 = vld [vmem:[#allocation5 + $0x6d8] sm:$0xff]
    %v1095 = vld [vmem:[#allocation5 + $0x6e0] sm:$0xff]
    %v1096 = vld [vmem:[#allocation5 + $0x6e8] sm:$0xff]
    %v1097 = vld [vmem:[#allocation5 + $0x6f0] sm:$0xff]
    %v1098 = vld [vmem:[#allocation5 + $0x6f8] sm:$0xff]
    %v1099 = vld [vmem:[#allocation5 + $0x700] sm:$0xff]
    %v1100 = vld [vmem:[#allocation5 + $0x708] sm:$0xff]
    %v1101 = vld [vmem:[#allocation5 + $0x710] sm:$0xff]
    %v1102 = vld [vmem:[#allocation5 + $0x718] sm:$0xff]
    %v1103 = vld [vmem:[#allocation5 + $0x720] sm:$0xff]
    %v1104 = vld [vmem:[#allocation5 + $0x728] sm:$0xff]
    %v1105 = vld [vmem:[#allocation5 + $0x730] sm:$0xff]
    %v1106 = vld [vmem:[#allocation5 + $0x738] sm:$0xff]
    %v1107 = vld [vmem:[#allocation5 + $0x740] sm:$0xff]
    %v1108 = vld [vmem:[#allocation5 + $0x748] sm:$0xff]
    %v1109 = vld [vmem:[#allocation5 + $0x750] sm:$0xff]
    %v1110 = vld [vmem:[#allocation5 + $0x758] sm:$0xff]
    %v1111 = vld [vmem:[#allocation5 + $0x760] sm:$0xff]
    %v1112 = vld [vmem:[#allocation5 + $0x768] sm:$0xff]
    %v1113 = vld [vmem:[#allocation5 + $0x770] sm:$0xff]
    %v1114 = vld [vmem:[#allocation5 + $0x778] sm:$0xff]
    %v1115 = vld [vmem:[#allocation5 + $0x780] sm:$0xff]
    %v1116 = vld [vmem:[#allocation5 + $0x788] sm:$0xff]
    %v1117 = vld [vmem:[#allocation5 + $0x790] sm:$0xff]
    %v1118 = vld [vmem:[#allocation5 + $0x798] sm:$0xff]
    %v1119 = vld [vmem:[#allocation5 + $0x7a0] sm:$0xff]
    %v1120 = vld [vmem:[#allocation5 + $0x7a8] sm:$0xff]
    %v1121 = vld [vmem:[#allocation5 + $0x7b0] sm:$0xff]
    %v1122 = vld [vmem:[#allocation5 + $0x7b8] sm:$0xff]
    %v1123 = vld [vmem:[#allocation5 + $0x7c0] sm:$0xff]
    %v1124 = vld [vmem:[#allocation5 + $0x7c8] sm:$0xff]
    %v1125 = vld [vmem:[#allocation5 + $0x7d0] sm:$0xff]
    %v1126 = vld [vmem:[#allocation5 + $0x7d8] sm:$0xff]
    %v1127 = vld [vmem:[#allocation5 + $0x7e0] sm:$0xff]
    %v1128 = vld [vmem:[#allocation5 + $0x7e8] sm:$0xff]
    %v1129 = vld [vmem:[#allocation5 + $0x7f0] sm:$0xff]
    %v1130 = vld [vmem:[#allocation5 + $0x7f8] sm:$0xff]
    %v1131 = vld [vmem:[#allocation5 + $0x800] sm:$0xff]
    %v1132 = vld [vmem:[#allocation5 + $0x808] sm:$0xff]
    %v1133 = vld [vmem:[#allocation5 + $0x810] sm:$0xff]
    %v1134 = vld [vmem:[#allocation5 + $0x818] sm:$0xff]
    %v1135 = vld [vmem:[#allocation5 + $0x820] sm:$0xff]
    %v1136 = vld [vmem:[#allocation5 + $0x828] sm:$0xff]
    %v1137 = vld [vmem:[#allocation5 + $0x830] sm:$0xff]
    %v1138 = vld [vmem:[#allocation5 + $0x838] sm:$0xff]
    %v1139 = vld [vmem:[#allocation5 + $0x840] sm:$0xff]
    %v1140 = vld [vmem:[#allocation5 + $0x848] sm:$0xff]
    %v1141 = vld [vmem:[#allocation5 + $0x850] sm:$0xff]
    %v1142 = vld [vmem:[#allocation5 + $0x858] sm:$0xff]
    %v1143 = vld [vmem:[#allocation5 + $0x860] sm:$0xff]
    %v1144 = vld [vmem:[#allocation5 + $0x868] sm:$0xff]
    %v1145 = vld [vmem:[#allocation5 + $0x870] sm:$0xff]
    %v1146 = vld [vmem:[#allocation5 + $0x878] sm:$0xff]
    %v1147 = vld [vmem:[#allocation5 + $0x880] sm:$0xff]
    %v1148 = vld [vmem:[#allocation5 + $0x888] sm:$0xff]
    %v1149 = vld [vmem:[#allocation5 + $0x890] sm:$0xff]
    %v1150 = vld [vmem:[#allocation5 + $0x898] sm:$0xff]
    %v1151 = vld [vmem:[#allocation5 + $0x8a0] sm:$0xff]
    %v1152 = vld [vmem:[#allocation5 + $0x8a8] sm:$0xff]
    %v1153 = vld [vmem:[#allocation5 + $0x8b0] sm:$0xff]
    %v1154 = vld [vmem:[#allocation5 + $0x8b8] sm:$0xff]
    %v1155 = vld [vmem:[#allocation5 + $0x8c0] sm:$0xff]
    %v1156 = vld [vmem:[#allocation5 + $0x8c8] sm:$0xff]
    %v1157 = vld [vmem:[#allocation5 + $0x8d0] sm:$0xff]
    %v1158 = vld [vmem:[#allocation5 + $0x8d8] sm:$0xff]
    %v1159 = vld [vmem:[#allocation5 + $0x8e0] sm:$0xff]
    %v1160 = vld [vmem:[#allocation5 + $0x8e8] sm:$0xff]
    %v1161 = vld [vmem:[#allocation5 + $0x8f0] sm:$0xff]
    %v1162 = vld [vmem:[#allocation5 + $0x8f8] sm:$0xff]
    %v1163 = vld [vmem:[#allocation5 + $0x900] sm:$0xff]
    %v1164 = vld [vmem:[#allocation5 + $0x908] sm:$0xff]
    %v1165 = vld [vmem:[#allocation5 + $0x910] sm:$0xff]
    %v1166 = vld [vmem:[#allocation5 + $0x918] sm:$0xff]
    %v1167 = vld [vmem:[#allocation5 + $0x920] sm:$0xff]
    %v1168 = vld [vmem:[#allocation5 + $0x928] sm:$0xff]
    %v1169 = vld [vmem:[#allocation5 + $0x930] sm:$0xff]
    %v1170 = vld [vmem:[#allocation5 + $0x938] sm:$0xff]
    %v1171 = vld [vmem:[#allocation5 + $0x940] sm:$0xff]
    %v1172 = vld [vmem:[#allocation5 + $0x948] sm:$0xff]
    %v1173 = vld [vmem:[#allocation5 + $0x950] sm:$0xff]
    %v1174 = vld [vmem:[#allocation5 + $0x958] sm:$0xff]
    %v1175 = vld [vmem:[#allocation5 + $0x960] sm:$0xff]
    %v1176 = vld [vmem:[#allocation5 + $0x968] sm:$0xff]
    %v1177 = vld [vmem:[#allocation5 + $0x970] sm:$0xff]
    %v1178 = vld [vmem:[#allocation5 + $0x978] sm:$0xff]
    %v1179 = vld [vmem:[#allocation5 + $0x980] sm:$0xff]
    %v1180 = vld [vmem:[#allocation5 + $0x988] sm:$0xff]
    %v1181 = vld [vmem:[#allocation5 + $0x990] sm:$0xff]
    %v1182 = vld [vmem:[#allocation5 + $0x998] sm:$0xff]
    %v1183 = vld [vmem:[#allocation5 + $0x9a0] sm:$0xff]
    %v1184 = vld [vmem:[#allocation5 + $0x9a8] sm:$0xff]
    %v1185 = vld [vmem:[#allocation5 + $0x9b0] sm:$0xff]
    %v1186 = vld [vmem:[#allocation5 + $0x9b8] sm:$0xff]
    %v1187 = vld [vmem:[#allocation5 + $0x9c0] sm:$0xff]
    %v1188 = vld [vmem:[#allocation5 + $0x9c8] sm:$0xff]
    %v1189 = vld [vmem:[#allocation5 + $0x9d0] sm:$0xff]
    %v1190 = vld [vmem:[#allocation5 + $0x9d8] sm:$0xff]
    %v1191 = vld [vmem:[#allocation5 + $0x9e0] sm:$0xff]
    %v1192 = vld [vmem:[#allocation5 + $0x9e8] sm:$0xff]
    %v1193 = vld [vmem:[#allocation5 + $0x9f0] sm:$0xff]
    %v1194 = vld [vmem:[#allocation5 + $0x9f8] sm:$0xff]
    %v1195 = vld [vmem:[#allocation5 + $0xa00] sm:$0xff]
    %v1196 = vld [vmem:[#allocation5 + $0xa08] sm:$0xff]
    %v1197 = vld [vmem:[#allocation5 + $0xa10] sm:$0xff]
    %v1198 = vld [vmem:[#allocation5 + $0xa18] sm:$0xff]
    %v1199 = vld [vmem:[#allocation5 + $0xa20] sm:$0xff]
    %v1200 = vld [vmem:[#allocation5 + $0xa28] sm:$0xff]
    %v1201 = vld [vmem:[#allocation5 + $0xa30] sm:$0xff]
    %v1202 = vld [vmem:[#allocation5 + $0xa38] sm:$0xff]
    %v1203 = vld [vmem:[#allocation5 + $0xa40] sm:$0xff]
    %v1204 = vld [vmem:[#allocation5 + $0xa48] sm:$0xff]
    %v1205 = vld [vmem:[#allocation5 + $0xa50] sm:$0xff]
    %v1206 = vld [vmem:[#allocation5 + $0xa58] sm:$0xff]
    %v1207 = vld [vmem:[#allocation5 + $0xa60] sm:$0xff]
    %v1208 = vld [vmem:[#allocation5 + $0xa68] sm:$0xff]
    %v1209 = vld [vmem:[#allocation5 + $0xa70] sm:$0xff]
    %v1210 = vld [vmem:[#allocation5 + $0xa78] sm:$0xff]
    %v1211 = vld [vmem:[#allocation5 + $0xa80] sm:$0xff]
    %v1212 = vld [vmem:[#allocation5 + $0xa88] sm:$0xff]
    %v1213 = vld [vmem:[#allocation5 + $0xa90] sm:$0xff]
    %v1214 = vld [vmem:[#allocation5 + $0xa98] sm:$0xff]
    %v1215 = vld [vmem:[#allocation5 + $0xaa0] sm:$0xff]
    %v1216 = vld [vmem:[#allocation5 + $0xaa8] sm:$0xff]
    %v1217 = vld [vmem:[#allocation5 + $0xab0] sm:$0xff]
    %v1218 = vld [vmem:[#allocation5 + $0xab8] sm:$0xff]
    %v1219 = vld [vmem:[#allocation5 + $0xac0] sm:$0xff]
    %v1220 = vld [vmem:[#allocation5 + $0xac8] sm:$0xff]
    %v1221 = vld [vmem:[#allocation5 + $0xad0] sm:$0xff]
    %v1222 = vld [vmem:[#allocation5 + $0xad8] sm:$0xff]
    %v1223 = vld [vmem:[#allocation5 + $0xae0] sm:$0xff]
    %v1224 = vld [vmem:[#allocation5 + $0xae8] sm:$0xff]
    %v1225 = vld [vmem:[#allocation5 + $0xaf0] sm:$0xff]
    %v1226 = vld [vmem:[#allocation5 + $0xaf8] sm:$0xff]
    %v1227 = vld [vmem:[#allocation5 + $0xb00] sm:$0xff]
    %v1228 = vld [vmem:[#allocation5 + $0xb08] sm:$0xff]
    %v1229 = vld [vmem:[#allocation5 + $0xb10] sm:$0xff]
    %v1230 = vld [vmem:[#allocation5 + $0xb18] sm:$0xff]
    %v1231 = vld [vmem:[#allocation5 + $0xb20] sm:$0xff]
    %v1232 = vld [vmem:[#allocation5 + $0xb28] sm:$0xff]
    %v1233 = vld [vmem:[#allocation5 + $0xb30] sm:$0xff]
    %v1234 = vld [vmem:[#allocation5 + $0xb38] sm:$0xff]
    %v1235 = vld [vmem:[#allocation5 + $0xb40] sm:$0xff]
    %v1236 = vld [vmem:[#allocation5 + $0xb48] sm:$0xff]
    %v1237 = vld [vmem:[#allocation5 + $0xb50] sm:$0xff]
    %v1238 = vld [vmem:[#allocation5 + $0xb58] sm:$0xff]
    %v1239 = vld [vmem:[#allocation5 + $0xb60] sm:$0xff]
    %v1240 = vld [vmem:[#allocation5 + $0xb68] sm:$0xff]
    %v1241 = vld [vmem:[#allocation5 + $0xb70] sm:$0xff]
    %v1242 = vld [vmem:[#allocation5 + $0xb78] sm:$0xff]
    %v1243 = vld [vmem:[#allocation5 + $0xb80] sm:$0xff]
    %v1244 = vld [vmem:[#allocation5 + $0xb88] sm:$0xff]
    %v1245 = vld [vmem:[#allocation5 + $0xb90] sm:$0xff]
    %v1246 = vld [vmem:[#allocation5 + $0xb98] sm:$0xff]
    %v1247 = vld [vmem:[#allocation5 + $0xba0] sm:$0xff]
    %v1248 = vld [vmem:[#allocation5 + $0xba8] sm:$0xff]
    %v1249 = vld [vmem:[#allocation5 + $0xbb0] sm:$0xff]
    %v1250 = vld [vmem:[#allocation5 + $0xbb8] sm:$0xff]
    %v1251 = vld [vmem:[#allocation5 + $0xbc0] sm:$0xff]
    %v1252 = vld [vmem:[#allocation5 + $0xbc8] sm:$0xff]
    %v1253 = vld [vmem:[#allocation5 + $0xbd0] sm:$0xff]
    %v1254 = vld [vmem:[#allocation5 + $0xbd8] sm:$0xff]
    %v1255 = vld [vmem:[#allocation5 + $0xbe0] sm:$0xff]
    %v1256 = vld [vmem:[#allocation5 + $0xbe8] sm:$0xff]
    %v1257 = vld [vmem:[#allocation5 + $0xbf0] sm:$0xff]
    %v1258 = vld [vmem:[#allocation5 + $0xbf8] sm:$0xff]
    %v1259 = vld [vmem:[#allocation5 + $0xc00] sm:$0xff]
    %v1260 = vld [vmem:[#allocation5 + $0xc08] sm:$0xff]
    %v1261 = vld [vmem:[#allocation5 + $0xc10] sm:$0xff]
    %v1262 = vld [vmem:[#allocation5 + $0xc18] sm:$0xff]
    %v1263 = vld [vmem:[#allocation5 + $0xc20] sm:$0xff]
    %v1264 = vld [vmem:[#allocation5 + $0xc28] sm:$0xff]
    %v1265 = vld [vmem:[#allocation5 + $0xc30] sm:$0xff]
    %v1266 = vld [vmem:[#allocation5 + $0xc38] sm:$0xff]
    %v1267 = vld [vmem:[#allocation5 + $0xc40] sm:$0xff]
    %v1268 = vld [vmem:[#allocation5 + $0xc48] sm:$0xff]
    %v1269 = vld [vmem:[#allocation5 + $0xc50] sm:$0xff]
    %v1270 = vld [vmem:[#allocation5 + $0xc58] sm:$0xff]
    %v1271 = vld [vmem:[#allocation5 + $0xc60] sm:$0xff]
    %v1272 = vld [vmem:[#allocation5 + $0xc68] sm:$0xff]
    %v1273 = vld [vmem:[#allocation5 + $0xc70] sm:$0xff]
    %v1274 = vld [vmem:[#allocation5 + $0xc78] sm:$0xff]
    %v1275 = vld [vmem:[#allocation5 + $0xc80] sm:$0xff]
    %v1276 = vld [vmem:[#allocation5 + $0xc88] sm:$0xff]
    %v1277 = vld [vmem:[#allocation5 + $0xc90] sm:$0xff]
    %v1278 = vld [vmem:[#allocation5 + $0xc98] sm:$0xff]
    %v1279 = vld [vmem:[#allocation5 + $0xca0] sm:$0xff]
    %v1280 = vld [vmem:[#allocation5 + $0xca8] sm:$0xff]
    %v1281 = vld [vmem:[#allocation5 + $0xcb0] sm:$0xff]
    %v1282 = vld [vmem:[#allocation5 + $0xcb8] sm:$0xff]
    %v1283 = vld [vmem:[#allocation5 + $0xcc0] sm:$0xff]
    %v1284 = vld [vmem:[#allocation5 + $0xcc8] sm:$0xff]
    %v1285 = vld [vmem:[#allocation5 + $0xcd0] sm:$0xff]
    %v1286 = vld [vmem:[#allocation5 + $0xcd8] sm:$0xff]
    %v1287 = vld [vmem:[#allocation5 + $0xce0] sm:$0xff]
    %v1288 = vld [vmem:[#allocation5 + $0xce8] sm:$0xff]
    %v1289 = vld [vmem:[#allocation5 + $0xcf0] sm:$0xff]
    %v1290 = vld [vmem:[#allocation5 + $0xcf8] sm:$0xff]
    %v1291 = vld [vmem:[#allocation5 + $0xd00] sm:$0xff]
    %v1292 = vld [vmem:[#allocation5 + $0xd08] sm:$0xff]
    %v1293 = vld [vmem:[#allocation5 + $0xd10] sm:$0xff]
    %v1294 = vld [vmem:[#allocation5 + $0xd18] sm:$0xff]
    %v1295 = vld [vmem:[#allocation5 + $0xd20] sm:$0xff]
    %v1296 = vld [vmem:[#allocation5 + $0xd28] sm:$0xff]
    %v1297 = vld [vmem:[#allocation5 + $0xd30] sm:$0xff]
    %v1298 = vld [vmem:[#allocation5 + $0xd38] sm:$0xff]
    %v1299 = vld [vmem:[#allocation5 + $0xd40] sm:$0xff]
    %v1300 = vld [vmem:[#allocation5 + $0xd48] sm:$0xff]
    %v1301 = vld [vmem:[#allocation5 + $0xd50] sm:$0xff]
    %v1302 = vld [vmem:[#allocation5 + $0xd58] sm:$0xff]
    %v1303 = vld [vmem:[#allocation5 + $0xd60] sm:$0xff]
    %v1304 = vld [vmem:[#allocation5 + $0xd68] sm:$0xff]
    %v1305 = vld [vmem:[#allocation5 + $0xd70] sm:$0xff]
    %v1306 = vld [vmem:[#allocation5 + $0xd78] sm:$0xff]
    %v1307 = vld [vmem:[#allocation5 + $0xd80] sm:$0xff]
    %v1308 = vld [vmem:[#allocation5 + $0xd88] sm:$0xff]
    %v1309 = vld [vmem:[#allocation5 + $0xd90] sm:$0xff]
    %v1310 = vld [vmem:[#allocation5 + $0xd98] sm:$0xff]
    %v1311 = vld [vmem:[#allocation5 + $0xda0] sm:$0xff]
    %v1312 = vld [vmem:[#allocation5 + $0xda8] sm:$0xff]
    %v1313 = vld [vmem:[#allocation5 + $0xdb0] sm:$0xff]
    %v1314 = vld [vmem:[#allocation5 + $0xdb8] sm:$0xff]
    %v1315 = vld [vmem:[#allocation5 + $0xdc0] sm:$0xff]
    %v1316 = vld [vmem:[#allocation5 + $0xdc8] sm:$0xff]
    %v1317 = vld [vmem:[#allocation5 + $0xdd0] sm:$0xff]
    %v1318 = vld [vmem:[#allocation5 + $0xdd8] sm:$0xff]
    %v1319 = vld [vmem:[#allocation5 + $0xde0] sm:$0xff]
    %v1320 = vld [vmem:[#allocation5 + $0xde8] sm:$0xff]
    %v1321 = vld [vmem:[#allocation5 + $0xdf0] sm:$0xff]
    %v1322 = vld [vmem:[#allocation5 + $0xdf8] sm:$0xff]
    %v1323 = vld [vmem:[#allocation5 + $0xe00] sm:$0xff]
    %v1324 = vld [vmem:[#allocation5 + $0xe08] sm:$0xff]
    %v1325 = vld [vmem:[#allocation5 + $0xe10] sm:$0xff]
    %v1326 = vld [vmem:[#allocation5 + $0xe18] sm:$0xff]
    %v1327 = vld [vmem:[#allocation5 + $0xe20] sm:$0xff]
    %v1328 = vld [vmem:[#allocation5 + $0xe28] sm:$0xff]
    %v1329 = vld [vmem:[#allocation5 + $0xe30] sm:$0xff]
    %v1330 = vld [vmem:[#allocation5 + $0xe38] sm:$0xff]
    %v1331 = vld [vmem:[#allocation5 + $0xe40] sm:$0xff]
    %v1332 = vld [vmem:[#allocation5 + $0xe48] sm:$0xff]
    %v1333 = vld [vmem:[#allocation5 + $0xe50] sm:$0xff]
    %v1334 = vld [vmem:[#allocation5 + $0xe58] sm:$0xff]
    %v1335 = vld [vmem:[#allocation5 + $0xe60] sm:$0xff]
    %v1336 = vld [vmem:[#allocation5 + $0xe68] sm:$0xff]
    %v1337 = vld [vmem:[#allocation5 + $0xe70] sm:$0xff]
    %v1338 = vld [vmem:[#allocation5 + $0xe78] sm:$0xff]
    %v1339 = vld [vmem:[#allocation5 + $0xe80] sm:$0xff]
    %v1340 = vld [vmem:[#allocation5 + $0xe88] sm:$0xff]
    %v1341 = vld [vmem:[#allocation5 + $0xe90] sm:$0xff]
    %v1342 = vld [vmem:[#allocation5 + $0xe98] sm:$0xff]
    %v1343 = vld [vmem:[#allocation5 + $0xea0] sm:$0xff]
    %v1344 = vld [vmem:[#allocation5 + $0xea8] sm:$0xff]
    %v1345 = vld [vmem:[#allocation5 + $0xeb0] sm:$0xff]
    %v1346 = vld [vmem:[#allocation5 + $0xeb8] sm:$0xff]
    %v1347 = vld [vmem:[#allocation5 + $0xec0] sm:$0xff]
    %v1348 = vld [vmem:[#allocation5 + $0xec8] sm:$0xff]
    %v1349 = vld [vmem:[#allocation5 + $0xed0] sm:$0xff]
    %v1350 = vld [vmem:[#allocation5 + $0xed8] sm:$0xff]
    %v1351 = vld [vmem:[#allocation5 + $0xee0] sm:$0xff]
    %v1352 = vld [vmem:[#allocation5 + $0xee8] sm:$0xff]
    %v1353 = vld [vmem:[#allocation5 + $0xef0] sm:$0xff]
    %v1354 = vld [vmem:[#allocation5 + $0xef8] sm:$0xff]
    %v1355 = vld [vmem:[#allocation5 + $0xf00] sm:$0xff]
    %v1356 = vld [vmem:[#allocation5 + $0xf08] sm:$0xff]
    %v1357 = vld [vmem:[#allocation5 + $0xf10] sm:$0xff]
    %v1358 = vld [vmem:[#allocation5 + $0xf18] sm:$0xff]
    %v1359 = vld [vmem:[#allocation5 + $0xf20] sm:$0xff]
    %v1360 = vld [vmem:[#allocation5 + $0xf28] sm:$0xff]
    %v1361 = vld [vmem:[#allocation5 + $0xf30] sm:$0xff]
    %v1362 = vld [vmem:[#allocation5 + $0xf38] sm:$0xff]
    %v1363 = vld [vmem:[#allocation5 + $0xf40] sm:$0xff]
    %v1364 = vld [vmem:[#allocation5 + $0xf48] sm:$0xff]
    %v1365 = vld [vmem:[#allocation5 + $0xf50] sm:$0xff]
    %v1366 = vld [vmem:[#allocation5 + $0xf58] sm:$0xff]
    %v1367 = vld [vmem:[#allocation5 + $0xf60] sm:$0xff]
    %v1368 = vld [vmem:[#allocation5 + $0xf68] sm:$0xff]
    %v1369 = vld [vmem:[#allocation5 + $0xf70] sm:$0xff]
    %v1370 = vld [vmem:[#allocation5 + $0xf78] sm:$0xff]
    %v1371 = vld [vmem:[#allocation5 + $0xf80] sm:$0xff]
    %v1372 = vld [vmem:[#allocation5 + $0xf88] sm:$0xff]
    %v1373 = vld [vmem:[#allocation5 + $0xf90] sm:$0xff]
    %v1374 = vld [vmem:[#allocation5 + $0xf98] sm:$0xff]
    %v1375 = vld [vmem:[#allocation5 + $0xfa0] sm:$0xff]
    %v1376 = vld [vmem:[#allocation5 + $0xfa8] sm:$0xff]
    %v1377 = vld [vmem:[#allocation5 + $0xfb0] sm:$0xff]
    %v1378 = vld [vmem:[#allocation5 + $0xfb8] sm:$0xff]
    %v1379 = vld [vmem:[#allocation5 + $0xfc0] sm:$0xff]
    %v1380 = vld [vmem:[#allocation5 + $0xfc8] sm:$0xff]
    %v1381 = vld [vmem:[#allocation5 + $0xfd0] sm:$0xff]
    %v1382 = vld [vmem:[#allocation5 + $0xfd8] sm:$0xff]
    %v1383 = vld [vmem:[#allocation5 + $0xfe0] sm:$0xff]
    %v1384 = vld [vmem:[#allocation5 + $0xfe8] sm:$0xff]
    %v1385 = vld [vmem:[#allocation5 + $0xff0] sm:$0xff]
    %v1386 = vld [vmem:[#allocation5 + $0xff8] sm:$0xff]
    %v1387 = vld [vmem:[#allocation5 + $0x1000] sm:$0xff]
    %v1388 = vld [vmem:[#allocation5 + $0x1008] sm:$0xff]
    %v1389 = vld [vmem:[#allocation5 + $0x1010] sm:$0xff]
    %v1390 = vld [vmem:[#allocation5 + $0x1018] sm:$0xff]
    %v1391 = vld [vmem:[#allocation5 + $0x1020] sm:$0xff]
    %v1392 = vld [vmem:[#allocation5 + $0x1028] sm:$0xff]
    %v1393 = vld [vmem:[#allocation5 + $0x1030] sm:$0xff]
    %v1394 = vld [vmem:[#allocation5 + $0x1038] sm:$0xff]
    %v1395 = vld [vmem:[#allocation5 + $0x1040] sm:$0xff]
    %v1396 = vld [vmem:[#allocation5 + $0x1048] sm:$0xff]
    %v1397 = vld [vmem:[#allocation5 + $0x1050] sm:$0xff]
    %v1398 = vld [vmem:[#allocation5 + $0x1058] sm:$0xff]
    %v1399 = vld [vmem:[#allocation5 + $0x1060] sm:$0xff]
    %v1400 = vld [vmem:[#allocation5 + $0x1068] sm:$0xff]
    %v1401 = vld [vmem:[#allocation5 + $0x1070] sm:$0xff]
    %v1402 = vld [vmem:[#allocation5 + $0x1078] sm:$0xff]
    %v1403 = vld [vmem:[#allocation5 + $0x1080] sm:$0xff]
    %v1404 = vld [vmem:[#allocation5 + $0x1088] sm:$0xff]
    %v1405 = vld [vmem:[#allocation5 + $0x1090] sm:$0xff]
    %v1406 = vld [vmem:[#allocation5 + $0x1098] sm:$0xff]
    %v1407 = vld [vmem:[#allocation5 + $0x10a0] sm:$0xff]
    %v1408 = vld [vmem:[#allocation5 + $0x10a8] sm:$0xff]
    %v1409 = vld [vmem:[#allocation5 + $0x10b0] sm:$0xff]
    %v1410 = vld [vmem:[#allocation5 + $0x10b8] sm:$0xff]
    %v1411 = vld [vmem:[#allocation5 + $0x10c0] sm:$0xff]
    %v1412 = vld [vmem:[#allocation5 + $0x10c8] sm:$0xff]
    %v1413 = vld [vmem:[#allocation5 + $0x10d0] sm:$0xff]
    %v1414 = vld [vmem:[#allocation5 + $0x10d8] sm:$0xff]
    %v1415 = vld [vmem:[#allocation5 + $0x10e0] sm:$0xff]
    %v1416 = vld [vmem:[#allocation5 + $0x10e8] sm:$0xff]
    %v1417 = vld [vmem:[#allocation5 + $0x10f0] sm:$0xff]
    %v1418 = vld [vmem:[#allocation5 + $0x10f8] sm:$0xff]
    %v1419 = vld [vmem:[#allocation5 + $0x1100] sm:$0xff]
    %v1420 = vld [vmem:[#allocation5 + $0x1108] sm:$0xff]
    %v1421 = vld [vmem:[#allocation5 + $0x1110] sm:$0xff]
    %v1422 = vld [vmem:[#allocation5 + $0x1118] sm:$0xff]
    %v1423 = vld [vmem:[#allocation5 + $0x1120] sm:$0xff]
    %v1424 = vld [vmem:[#allocation5 + $0x1128] sm:$0xff]
    %v1425 = vld [vmem:[#allocation5 + $0x1130] sm:$0xff]
    %v1426 = vld [vmem:[#allocation5 + $0x1138] sm:$0xff]
    %v1427 = vld [vmem:[#allocation5 + $0x1140] sm:$0xff]
    %v1428 = vld [vmem:[#allocation5 + $0x1148] sm:$0xff]
    %v1429 = vld [vmem:[#allocation5 + $0x1150] sm:$0xff]
    %v1430 = vld [vmem:[#allocation5 + $0x1158] sm:$0xff]
    %v1431 = vld [vmem:[#allocation5 + $0x1160] sm:$0xff]
    %v1432 = vld [vmem:[#allocation5 + $0x1168] sm:$0xff]
    %v1433 = vld [vmem:[#allocation5 + $0x1170] sm:$0xff]
    %v1434 = vld [vmem:[#allocation5 + $0x1178] sm:$0xff]
    %v1435 = vld [vmem:[#allocation5 + $0x1180] sm:$0xff]
    %v1436 = vld [vmem:[#allocation5 + $0x1188] sm:$0xff]
    %v1437 = vld [vmem:[#allocation5 + $0x1190] sm:$0xff]
    %v1438 = vld [vmem:[#allocation5 + $0x1198] sm:$0xff]
    %v1439 = vld [vmem:[#allocation5 + $0x11a0] sm:$0xff]
    %v1440 = vld [vmem:[#allocation5 + $0x11a8] sm:$0xff]
    %v1441 = vld [vmem:[#allocation5 + $0x11b0] sm:$0xff]
    %v1442 = vld [vmem:[#allocation5 + $0x11b8] sm:$0xff]
    %v1443 = vld [vmem:[#allocation5 + $0x11c0] sm:$0xff]
    %v1444 = vld [vmem:[#allocation5 + $0x11c8] sm:$0xff]
    %v1445 = vld [vmem:[#allocation5 + $0x11d0] sm:$0xff]
    %v1446 = vld [vmem:[#allocation5 + $0x11d8] sm:$0xff]
    %v1447 = vld [vmem:[#allocation5 + $0x11e0] sm:$0xff]
    %v1448 = vld [vmem:[#allocation5 + $0x11e8] sm:$0xff]
    %v1449 = vld [vmem:[#allocation5 + $0x11f0] sm:$0xff]
    %v1450 = vld [vmem:[#allocation5 + $0x11f8] sm:$0xff]
    %v1451 = vld [vmem:[#allocation5 + $0x1200] sm:$0xff]
    %v1452 = vld [vmem:[#allocation5 + $0x1208] sm:$0xff]
    %v1453 = vld [vmem:[#allocation5 + $0x1210] sm:$0xff]
    %v1454 = vld [vmem:[#allocation5 + $0x1218] sm:$0xff]
    %v1455 = vld [vmem:[#allocation5 + $0x1220] sm:$0xff]
    %v1456 = vld [vmem:[#allocation5 + $0x1228] sm:$0xff]
    %v1457 = vld [vmem:[#allocation5 + $0x1230] sm:$0xff]
    %v1458 = vld [vmem:[#allocation5 + $0x1238] sm:$0xff]
    %v1459 = vld [vmem:[#allocation5 + $0x1240] sm:$0xff]
    %v1460 = vld [vmem:[#allocation5 + $0x1248] sm:$0xff]
    %v1461 = vld [vmem:[#allocation5 + $0x1250] sm:$0xff]
    %v1462 = vld [vmem:[#allocation5 + $0x1258] sm:$0xff]
    %v1463 = vld [vmem:[#allocation5 + $0x1260] sm:$0xff]
    %v1464 = vld [vmem:[#allocation5 + $0x1268] sm:$0xff]
    %v1465 = vld [vmem:[#allocation5 + $0x1270] sm:$0xff]
    %v1466 = vld [vmem:[#allocation5 + $0x1278] sm:$0xff]
    %v1467 = vld [vmem:[#allocation5 + $0x1280] sm:$0xff]
    %v1468 = vld [vmem:[#allocation5 + $0x1288] sm:$0xff]
    %v1469 = vld [vmem:[#allocation5 + $0x1290] sm:$0xff]
    %v1470 = vld [vmem:[#allocation5 + $0x1298] sm:$0xff]
    %v1471 = vld [vmem:[#allocation5 + $0x12a0] sm:$0xff]
    %v1472 = vld [vmem:[#allocation5 + $0x12a8] sm:$0xff]
    %v1473 = vld [vmem:[#allocation5 + $0x12b0] sm:$0xff]
    %v1474 = vld [vmem:[#allocation5 + $0x12b8] sm:$0xff]
    %v1475 = vld [vmem:[#allocation5 + $0x12c0] sm:$0xff]
    %v1476 = vld [vmem:[#allocation5 + $0x12c8] sm:$0xff]
    %v1477 = vld [vmem:[#allocation5 + $0x12d0] sm:$0xff]
    %v1478 = vld [vmem:[#allocation5 + $0x12d8] sm:$0xff]
    %v1479 = vld [vmem:[#allocation5 + $0x12e0] sm:$0xff]
    %v1480 = vld [vmem:[#allocation5 + $0x12e8] sm:$0xff]
    %v1481 = vld [vmem:[#allocation5 + $0x12f0] sm:$0xff]
    %v1482 = vld [vmem:[#allocation5 + $0x12f8] sm:$0xff]
    %v1483 = vld [vmem:[#allocation5 + $0x1300] sm:$0xff]
    %v1484 = vld [vmem:[#allocation5 + $0x1308] sm:$0xff]
    %v1485 = vld [vmem:[#allocation5 + $0x1310] sm:$0xff]
    %v1486 = vld [vmem:[#allocation5 + $0x1318] sm:$0xff]
    %v1487 = vld [vmem:[#allocation5 + $0x1320] sm:$0xff]
    %v1488 = vld [vmem:[#allocation5 + $0x1328] sm:$0xff]
    %v1489 = vld [vmem:[#allocation5 + $0x1330] sm:$0xff]
    %v1490 = vld [vmem:[#allocation5 + $0x1338] sm:$0xff]
    %v1491 = vld [vmem:[#allocation5 + $0x1340] sm:$0xff]
    %v1492 = vld [vmem:[#allocation5 + $0x1348] sm:$0xff]
    %v1493 = vld [vmem:[#allocation5 + $0x1350] sm:$0xff]
    %v1494 = vld [vmem:[#allocation5 + $0x1358] sm:$0xff]
    %v1495 = vld [vmem:[#allocation5 + $0x1360] sm:$0xff]
    %v1496 = vld [vmem:[#allocation5 + $0x1368] sm:$0xff]
    %v1497 = vld [vmem:[#allocation5 + $0x1370] sm:$0xff]
    %v1498 = vld [vmem:[#allocation5 + $0x1378] sm:$0xff]
    %v1499 = vld [vmem:[#allocation5 + $0x1380] sm:$0xff]
    %v1500 = vld [vmem:[#allocation5 + $0x1388] sm:$0xff]
    %v1501 = vld [vmem:[#allocation5 + $0x1390] sm:$0xff]
    %v1502 = vld [vmem:[#allocation5 + $0x1398] sm:$0xff]
    %v1503 = vld [vmem:[#allocation5 + $0x13a0] sm:$0xff]
    %v1504 = vld [vmem:[#allocation5 + $0x13a8] sm:$0xff]
    %v1505 = vld [vmem:[#allocation5 + $0x13b0] sm:$0xff]
    %v1506 = vld [vmem:[#allocation5 + $0x13b8] sm:$0xff]
    %v1507 = vld [vmem:[#allocation5 + $0x13c0] sm:$0xff]
    %v1508 = vld [vmem:[#allocation5 + $0x13c8] sm:$0xff]
    %v1509 = vld [vmem:[#allocation5 + $0x13d0] sm:$0xff]
    %v1510 = vld [vmem:[#allocation5 + $0x13d8] sm:$0xff]
    %v1511 = vld [vmem:[#allocation5 + $0x13e0] sm:$0xff]
    %v1512 = vld [vmem:[#allocation5 + $0x13e8] sm:$0xff]
    %v1513 = vld [vmem:[#allocation5 + $0x13f0] sm:$0xff]
    %v1514 = vld [vmem:[#allocation5 + $0x13f8] sm:$0xff]
    %v1515 = vld [vmem:[#allocation5 + $0x1400] sm:$0xff]
    %v1516 = vld [vmem:[#allocation5 + $0x1408] sm:$0xff]
    %v1517 = vld [vmem:[#allocation5 + $0x1410] sm:$0xff]
    %v1518 = vld [vmem:[#allocation5 + $0x1418] sm:$0xff]
    %v1519 = vld [vmem:[#allocation5 + $0x1420] sm:$0xff]
    %v1520 = vld [vmem:[#allocation5 + $0x1428] sm:$0xff]
    %v1521 = vld [vmem:[#allocation5 + $0x1430] sm:$0xff]
    %v1522 = vld [vmem:[#allocation5 + $0x1438] sm:$0xff]
    %v1523 = vld [vmem:[#allocation5 + $0x1440] sm:$0xff]
    %v1524 = vld [vmem:[#allocation5 + $0x1448] sm:$0xff]
    %v1525 = vld [vmem:[#allocation5 + $0x1450] sm:$0xff]
    %v1526 = vld [vmem:[#allocation5 + $0x1458] sm:$0xff]
    %v1527 = vld [vmem:[#allocation5 + $0x1460] sm:$0xff]
    %v1528 = vld [vmem:[#allocation5 + $0x1468] sm:$0xff]
    %v1529 = vld [vmem:[#allocation5 + $0x1470] sm:$0xff]
    %v1530 = vld [vmem:[#allocation5 + $0x1478] sm:$0xff]
    %v1531 = vld [vmem:[#allocation5 + $0x1480] sm:$0xff]
    %v1532 = vld [vmem:[#allocation5 + $0x1488] sm:$0xff]
    %v1533 = vld [vmem:[#allocation5 + $0x1490] sm:$0xff]
    %v1534 = vld [vmem:[#allocation5 + $0x1498] sm:$0xff]
    %v1535 = vld [vmem:[#allocation5 + $0x14a0] sm:$0xff]
    %v1536 = vld [vmem:[#allocation5 + $0x14a8] sm:$0xff]
    %v1537 = vld [vmem:[#allocation5 + $0x14b0] sm:$0xff]
    %v1538 = vld [vmem:[#allocation5 + $0x14b8] sm:$0xff]
    %v1539 = vld [vmem:[#allocation5 + $0x14c0] sm:$0xff]
    %v1540 = vld [vmem:[#allocation5 + $0x14c8] sm:$0xff]
    %v1541 = vld [vmem:[#allocation5 + $0x14d0] sm:$0xff]
    %v1542 = vld [vmem:[#allocation5 + $0x14d8] sm:$0xff]
    %v1543 = vld [vmem:[#allocation5 + $0x14e0] sm:$0xff]
    %v1544 = vld [vmem:[#allocation5 + $0x14e8] sm:$0xff]
    %v1545 = vld [vmem:[#allocation5 + $0x14f0] sm:$0xff]
    %v1546 = vld [vmem:[#allocation5 + $0x14f8] sm:$0xff]
    %v1547 = vld [vmem:[#allocation5 + $0x1500] sm:$0xff]
    %v1548 = vld [vmem:[#allocation5 + $0x1508] sm:$0xff]
    %v1549 = vld [vmem:[#allocation5 + $0x1510] sm:$0xff]
    %v1550 = vld [vmem:[#allocation5 + $0x1518] sm:$0xff]
    %v1551 = vld [vmem:[#allocation5 + $0x1520] sm:$0xff]
    %v1552 = vld [vmem:[#allocation5 + $0x1528] sm:$0xff]
    %v1553 = vld [vmem:[#allocation5 + $0x1530] sm:$0xff]
    %v1554 = vld [vmem:[#allocation5 + $0x1538] sm:$0xff]
    %v1555 = vld [vmem:[#allocation5 + $0x1540] sm:$0xff]
    %v1556 = vld [vmem:[#allocation5 + $0x1548] sm:$0xff]
    %v1557 = vld [vmem:[#allocation5 + $0x1550] sm:$0xff]
    %v1558 = vld [vmem:[#allocation5 + $0x1558] sm:$0xff]
    %v1559 = vld [vmem:[#allocation5 + $0x1560] sm:$0xff]
    %v1560 = vld [vmem:[#allocation5 + $0x1568] sm:$0xff]
    %v1561 = vld [vmem:[#allocation5 + $0x1570] sm:$0xff]
    %v1562 = vld [vmem:[#allocation5 + $0x1578] sm:$0xff]
    %v1563 = vld [vmem:[#allocation5 + $0x1580] sm:$0xff]
    %v1564 = vld [vmem:[#allocation5 + $0x1588] sm:$0xff]
    %v1565 = vld [vmem:[#allocation5 + $0x1590] sm:$0xff]
    %v1566 = vld [vmem:[#allocation5 + $0x1598] sm:$0xff]
    %v1567 = vld [vmem:[#allocation5 + $0x15a0] sm:$0xff]
    %v1568 = vld [vmem:[#allocation5 + $0x15a8] sm:$0xff]
    %v1569 = vld [vmem:[#allocation5 + $0x15b0] sm:$0xff]
    %v1570 = vld [vmem:[#allocation5 + $0x15b8] sm:$0xff]
    %v1571 = vld [vmem:[#allocation5 + $0x15c0] sm:$0xff]
    %v1572 = vld [vmem:[#allocation5 + $0x15c8] sm:$0xff]
    %v1573 = vld [vmem:[#allocation5 + $0x15d0] sm:$0xff]
    %v1574 = vld [vmem:[#allocation5 + $0x15d8] sm:$0xff]
    %v1575 = vld [vmem:[#allocation5 + $0x15e0] sm:$0xff]
    %v1576 = vld [vmem:[#allocation5 + $0x15e8] sm:$0xff]
    %v1577 = vld [vmem:[#allocation5 + $0x15f0] sm:$0xff]
    %v1578 = vld [vmem:[#allocation5 + $0x15f8] sm:$0xff]
    %v1579 = vld [vmem:[#allocation5 + $0x1600] sm:$0xff]
    %v1580 = vld [vmem:[#allocation5 + $0x1608] sm:$0xff]
    %v1581 = vld [vmem:[#allocation5 + $0x1610] sm:$0xff]
    %v1582 = vld [vmem:[#allocation5 + $0x1618] sm:$0xff]
    %v1583 = vld [vmem:[#allocation5 + $0x1620] sm:$0xff]
    %v1584 = vld [vmem:[#allocation5 + $0x1628] sm:$0xff]
    %v1585 = vld [vmem:[#allocation5 + $0x1630] sm:$0xff]
    %v1586 = vld [vmem:[#allocation5 + $0x1638] sm:$0xff]
    %v1587 = vld [vmem:[#allocation5 + $0x1640] sm:$0xff]
    %v1588 = vld [vmem:[#allocation5 + $0x1648] sm:$0xff]
    %v1589 = vld [vmem:[#allocation5 + $0x1650] sm:$0xff]
    %v1590 = vld [vmem:[#allocation5 + $0x1658] sm:$0xff]
    %v1591 = vld [vmem:[#allocation5 + $0x1660] sm:$0xff]
    %v1592 = vld [vmem:[#allocation5 + $0x1668] sm:$0xff]
    %v1593 = vld [vmem:[#allocation5 + $0x1670] sm:$0xff]
    %v1594 = vld [vmem:[#allocation5 + $0x1678] sm:$0xff]
    %v1595 = vld [vmem:[#allocation5 + $0x1680] sm:$0xff]
    %v1596 = vld [vmem:[#allocation5 + $0x1688] sm:$0xff]
    %v1597 = vld [vmem:[#allocation5 + $0x1690] sm:$0xff]
    %v1598 = vld [vmem:[#allocation5 + $0x1698] sm:$0xff]
    %v1599 = vld [vmem:[#allocation5 + $0x16a0] sm:$0xff]
    %v1600 = vld [vmem:[#allocation5 + $0x16a8] sm:$0xff]
    %v1601 = vld [vmem:[#allocation5 + $0x16b0] sm:$0xff]
    %v1602 = vld [vmem:[#allocation5 + $0x16b8] sm:$0xff]
    %v1603 = vld [vmem:[#allocation5 + $0x16c0] sm:$0xff]
    %v1604 = vld [vmem:[#allocation5 + $0x16c8] sm:$0xff]
    %v1605 = vld [vmem:[#allocation5 + $0x16d0] sm:$0xff]
    %v1606 = vld [vmem:[#allocation5 + $0x16d8] sm:$0xff]
    %v1607 = vld [vmem:[#allocation5 + $0x16e0] sm:$0xff]
    %v1608 = vld [vmem:[#allocation5 + $0x16e8] sm:$0xff]
    %v1609 = vld [vmem:[#allocation5 + $0x16f0] sm:$0xff]
    %v1610 = vld [vmem:[#allocation5 + $0x16f8] sm:$0xff]
    %v1611 = vld [vmem:[#allocation5 + $0x1700] sm:$0xff]
    %v1612 = vld [vmem:[#allocation5 + $0x1708] sm:$0xff]
    %v1613 = vld [vmem:[#allocation5 + $0x1710] sm:$0xff]
    %v1614 = vld [vmem:[#allocation5 + $0x1718] sm:$0xff]
    %v1615 = vld [vmem:[#allocation5 + $0x1720] sm:$0xff]
    %v1616 = vld [vmem:[#allocation5 + $0x1728] sm:$0xff]
    %v1617 = vld [vmem:[#allocation5 + $0x1730] sm:$0xff]
    %v1618 = vld [vmem:[#allocation5 + $0x1738] sm:$0xff]
    %v1619 = vld [vmem:[#allocation5 + $0x1740] sm:$0xff]
    %v1620 = vld [vmem:[#allocation5 + $0x1748] sm:$0xff]
    %v1621 = vld [vmem:[#allocation5 + $0x1750] sm:$0xff]
    %v1622 = vld [vmem:[#allocation5 + $0x1758] sm:$0xff]
    %v1623 = vld [vmem:[#allocation5 + $0x1760] sm:$0xff]
    %v1624 = vld [vmem:[#allocation5 + $0x1768] sm:$0xff]
    %v1625 = vld [vmem:[#allocation5 + $0x1770] sm:$0xff]
    %v1626 = vld [vmem:[#allocation5 + $0x1778] sm:$0xff]
    %v1627 = vld [vmem:[#allocation5 + $0x1780] sm:$0xff]
    %v1628 = vld [vmem:[#allocation5 + $0x1788] sm:$0xff]
    %v1629 = vld [vmem:[#allocation5 + $0x1790] sm:$0xff]
    %v1630 = vld [vmem:[#allocation5 + $0x1798] sm:$0xff]
    %v1631 = vld [vmem:[#allocation5 + $0x17a0] sm:$0xff]
    %v1632 = vld [vmem:[#allocation5 + $0x17a8] sm:$0xff]
    %v1633 = vld [vmem:[#allocation5 + $0x17b0] sm:$0xff]
    %v1634 = vld [vmem:[#allocation5 + $0x17b8] sm:$0xff]
    %v1635 = vld [vmem:[#allocation5 + $0x17c0] sm:$0xff]
    %v1636 = vld [vmem:[#allocation5 + $0x17c8] sm:$0xff]
    %v1637 = vld [vmem:[#allocation5 + $0x17d0] sm:$0xff]
    %v1638 = vld [vmem:[#allocation5 + $0x17d8] sm:$0xff]
    %v1639 = vld [vmem:[#allocation5 + $0x17e0] sm:$0xff]
    %v1640 = vld [vmem:[#allocation5 + $0x17e8] sm:$0xff]
    %v1641 = vld [vmem:[#allocation5 + $0x17f0] sm:$0xff]
    %v1642 = vld [vmem:[#allocation5 + $0x17f8] sm:$0xff]
    %1643 = vmatprep.subr.mxu0 %v876
    %1644 = vmatpush1.msra.mxu0 %v875
    %1645 = vmatprep.subr.mxu0 %v884
    %1646 = vmatpush1.msra.mxu0 %v883
    %1647 = vmatprep.subr.mxu0 %v892
    %1648 = vmatpush1.msra.mxu0 %v891
    %1649 = vmatprep.subr.mxu0 %v900
    %1650 = vmatpush1.msra.mxu0 %v899
    %1651 = vmatprep.subr.mxu0 %v908
    %1652 = vmatpush1.msra.mxu0 %v907
    %1653 = vmatprep.subr.mxu0 %v916
    %1654 = vmatpush1.msra.mxu0 %v915
    %1655 = vmatprep.subr.mxu0 %v924
    %1656 = vmatpush1.msra.mxu0 %v923
    %1657 = vmatprep.subr.mxu0 %v932
    %1658 = vmatpush1.msra.mxu0 %v931
    %1659 = vmatprep.subr.mxu0 %v940
    %1660 = vmatpush1.msra.mxu0 %v939
    %1661 = vmatprep.subr.mxu0 %v948
    %1662 = vmatpush1.msra.mxu0 %v947
    %1663 = vmatprep.subr.mxu0 %v956
    %1664 = vmatpush1.msra.mxu0 %v955
    %1665 = vmatprep.subr.mxu0 %v964
    %1666 = vmatpush1.msra.mxu0 %v963
    %1667 = vmatprep.subr.mxu0 %v972
    %1668 = vmatpush1.msra.mxu0 %v971
    %1669 = vmatprep.subr.mxu0 %v980
    %1670 = vmatpush1.msra.mxu0 %v979
    %1671 = vmatprep.subr.mxu0 %v988
    %1672 = vmatpush1.msra.mxu0 %v987
    %1673 = vmatprep.subr.mxu0 %v996
    %1674 = vmatpush1.msra.mxu0 %v995
    %1675 = vmatprep.subr.mxu0 %v1004
    %1676 = vmatpush1.msra.mxu0 %v1003
    %1677 = vmatprep.subr.mxu0 %v1012
    %1678 = vmatpush1.msra.mxu0 %v1011
    %1679 = vmatprep.subr.mxu0 %v1020
    %1680 = vmatpush1.msra.mxu0 %v1019
    %1681 = vmatprep.subr.mxu0 %v1028
    %1682 = vmatpush1.msra.mxu0 %v1027
    %1683 = vmatprep.subr.mxu0 %v1036
    %1684 = vmatpush1.msra.mxu0 %v1035
    %1685 = vmatprep.subr.mxu0 %v1044
    %1686 = vmatpush1.msra.mxu0 %v1043
    %1687 = vmatprep.subr.mxu0 %v1052
    %1688 = vmatpush1.msra.mxu0 %v1051
    %1689 = vmatprep.subr.mxu0 %v1060
    %1690 = vmatpush1.msra.mxu0 %v1059
    %1691 = vmatprep.subr.mxu0 %v1068
    %1692 = vmatpush1.msra.mxu0 %v1067
    %1693 = vmatprep.subr.mxu0 %v1076
    %1694 = vmatpush1.msra.mxu0 %v1075
    %1695 = vmatprep.subr.mxu0 %v1084
    %1696 = vmatpush1.msra.mxu0 %v1083
    %1697 = vmatprep.subr.mxu0 %v1092
    %1698 = vmatpush1.msra.mxu0 %v1091
    %1699 = vmatprep.subr.mxu0 %v1100
    %1700 = vmatpush1.msra.mxu0 %v1099
    %1701 = vmatprep.subr.mxu0 %v1108
    %1702 = vmatpush1.msra.mxu0 %v1107
    %1703 = vmatprep.subr.mxu0 %v1116
    %1704 = vmatpush1.msra.mxu0 %v1115
    %1705 = vmatprep.subr.mxu0 %v1124
    %1706 = vmatpush1.msra.mxu0 %v1123
    %1707 = vmatprep.mubr.f32.mxu0 %v870
    %1708 = vmatmul.mubr.f32.gmra.mrb[0].mxu0 %v869
    %v1709 = vpop.f32.mrb[0].mxu0
    %v1710 = vadd.f32 0.0, %v1709
    %v1711 = vpop.f32.mrb[0].mxu0
    %v1712 = vadd.f32 0.0, %v1711
    %1713 = vdwg.mxu0
    %1714 = vmatprep.subr.mxu0 %v1132
    %1715 = vmatpush1.msra.mxu0 %v1131
    %1716 = vmatprep.subr.mxu0 %v1140
    %1717 = vmatpush1.msra.mxu0 %v1139
    %1718 = vmatprep.subr.mxu0 %v1148
    %1719 = vmatpush1.msra.mxu0 %v1147
    %1720 = vmatprep.subr.mxu0 %v1156
    %1721 = vmatpush1.msra.mxu0 %v1155
    %1722 = vmatprep.subr.mxu0 %v1164
    %1723 = vmatpush1.msra.mxu0 %v1163
    %1724 = vmatprep.subr.mxu0 %v1172
    %1725 = vmatpush1.msra.mxu0 %v1171
    %1726 = vmatprep.subr.mxu0 %v1180
    %1727 = vmatpush1.msra.mxu0 %v1179
    %1728 = vmatprep.subr.mxu0 %v1188
    %1729 = vmatpush1.msra.mxu0 %v1187
    %1730 = vmatprep.subr.mxu0 %v1196
    %1731 = vmatpush1.msra.mxu0 %v1195
    %1732 = vmatprep.subr.mxu0 %v1204
    %1733 = vmatpush1.msra.mxu0 %v1203
    %1734 = vmatprep.subr.mxu0 %v1212
    %1735 = vmatpush1.msra.mxu0 %v1211
    %1736 = vmatprep.subr.mxu0 %v1220
    %1737 = vmatpush1.msra.mxu0 %v1219
    %1738 = vmatprep.subr.mxu0 %v1228
    %1739 = vmatpush1.msra.mxu0 %v1227
    %1740 = vmatprep.subr.mxu0 %v1236
    %1741 = vmatpush1.msra.mxu0 %v1235
    %1742 = vmatprep.subr.mxu0 %v1244
    %1743 = vmatpush1.msra.mxu0 %v1243
    %1744 = vmatprep.subr.mxu0 %v1252
    %1745 = vmatpush1.msra.mxu0 %v1251
    %1746 = vmatprep.subr.mxu0 %v1260
    %1747 = vmatpush1.msra.mxu0 %v1259
    %1748 = vmatprep.subr.mxu0 %v1268
    %1749 = vmatpush1.msra.mxu0 %v1267
    %1750 = vmatprep.subr.mxu0 %v1276
    %1751 = vmatpush1.msra.mxu0 %v1275
    %1752 = vmatprep.subr.mxu0 %v1284
    %1753 = vmatpush1.msra.mxu0 %v1283
    %1754 = vmatprep.subr.mxu0 %v1292
    %1755 = vmatpush1.msra.mxu0 %v1291
    %1756 = vmatprep.subr.mxu0 %v1300
    %1757 = vmatpush1.msra.mxu0 %v1299
    %1758 = vmatprep.subr.mxu0 %v1308
    %1759 = vmatpush1.msra.mxu0 %v1307
    %1760 = vmatprep.subr.mxu0 %v1316
    %1761 = vmatpush1.msra.mxu0 %v1315
    %1762 = vmatprep.subr.mxu0 %v1324
    %1763 = vmatpush1.msra.mxu0 %v1323
    %1764 = vmatprep.subr.mxu0 %v1332
    %1765 = vmatpush1.msra.mxu0 %v1331
    %1766 = vmatprep.subr.mxu0 %v1340
    %1767 = vmatpush1.msra.mxu0 %v1339
    %1768 = vmatprep.subr.mxu0 %v1348
    %1769 = vmatpush1.msra.mxu0 %v1347
    %1770 = vmatprep.subr.mxu0 %v1356
    %1771 = vmatpush1.msra.mxu0 %v1355
    %1772 = vmatprep.subr.mxu0 %v1364
    %1773 = vmatpush1.msra.mxu0 %v1363
    %1774 = vmatprep.subr.mxu0 %v1372
    %1775 = vmatpush1.msra.mxu0 %v1371
    %1776 = vmatprep.subr.mxu0 %v1380
    %1777 = vmatpush1.msra.mxu0 %v1379
    %1778 = vmatprep.mubr.f32.mxu0 %v872
    %1779 = vmatmul.mubr.f32.gmra.mrb[0].mxu0 %v871
    %v1780 = vpop.f32.mrb[0].mxu0
    %v1781 = vadd.f32 %v1710, %v1780
    %v1782 = vpop.f32.mrb[0].mxu0
    %v1783 = vadd.f32 %v1712, %v1782
    %1784 = vdwg.mxu0
    %1785 = vmatprep.subr.mxu0 %v1388
    %1786 = vmatpush1.msra.mxu0 %v1387
    %1787 = vmatprep.subr.mxu0 %v1396
    %1788 = vmatpush1.msra.mxu0 %v1395
    %1789 = vmatprep.subr.mxu0 %v1404
    %1790 = vmatpush1.msra.mxu0 %v1403
    %1791 = vmatprep.subr.mxu0 %v1412
    %1792 = vmatpush1.msra.mxu0 %v1411
    %1793 = vmatprep.subr.mxu0 %v1420
    %1794 = vmatpush1.msra.mxu0 %v1419
    %1795 = vmatprep.subr.mxu0 %v1428
    %1796 = vmatpush1.msra.mxu0 %v1427
    %1797 = vmatprep.subr.mxu0 %v1436
    %1798 = vmatpush1.msra.mxu0 %v1435
    %1799 = vmatprep.subr.mxu0 %v1444
    %1800 = vmatpush1.msra.mxu0 %v1443
    %1801 = vmatprep.subr.mxu0 %v1452
    %1802 = vmatpush1.msra.mxu0 %v1451
    %1803 = vmatprep.subr.mxu0 %v1460
    %1804 = vmatpush1.msra.mxu0 %v1459
    %1805 = vmatprep.subr.mxu0 %v1468
    %1806 = vmatpush1.msra.mxu0 %v1467
    %1807 = vmatprep.subr.mxu0 %v1476
    %1808 = vmatpush1.msra.mxu0 %v1475
    %1809 = vmatprep.subr.mxu0 %v1484
    %1810 = vmatpush1.msra.mxu0 %v1483
    %1811 = vmatprep.subr.mxu0 %v1492
    %1812 = vmatpush1.msra.mxu0 %v1491
    %1813 = vmatprep.subr.mxu0 %v1500
    %1814 = vmatpush1.msra.mxu0 %v1499
    %1815 = vmatprep.subr.mxu0 %v1508
    %1816 = vmatpush1.msra.mxu0 %v1507
    %1817 = vmatprep.subr.mxu0 %v1516
    %1818 = vmatpush1.msra.mxu0 %v1515
    %1819 = vmatprep.subr.mxu0 %v1524
    %1820 = vmatpush1.msra.mxu0 %v1523
    %1821 = vmatprep.subr.mxu0 %v1532
    %1822 = vmatpush1.msra.mxu0 %v1531
    %1823 = vmatprep.subr.mxu0 %v1540
    %1824 = vmatpush1.msra.mxu0 %v1539
    %1825 = vmatprep.subr.mxu0 %v1548
    %1826 = vmatpush1.msra.mxu0 %v1547
    %1827 = vmatprep.subr.mxu0 %v1556
    %1828 = vmatpush1.msra.mxu0 %v1555
    %1829 = vmatprep.subr.mxu0 %v1564
    %1830 = vmatpush1.msra.mxu0 %v1563
    %1831 = vmatprep.subr.mxu0 %v1572
    %1832 = vmatpush1.msra.mxu0 %v1571
    %1833 = vmatprep.subr.mxu0 %v1580
    %1834 = vmatpush1.msra.mxu0 %v1579
    %1835 = vmatprep.subr.mxu0 %v1588
    %1836 = vmatpush1.msra.mxu0 %v1587
    %1837 = vmatprep.subr.mxu0 %v1596
    %1838 = vmatpush1.msra.mxu0 %v1595
    %1839 = vmatprep.subr.mxu0 %v1604
    %1840 = vmatpush1.msra.mxu0 %v1603
    %1841 = vmatprep.subr.mxu0 %v1612
    %1842 = vmatpush1.msra.mxu0 %v1611
    %1843 = vmatprep.subr.mxu0 %v1620
    %1844 = vmatpush1.msra.mxu0 %v1619
    %1845 = vmatprep.subr.mxu0 %v1628
    %1846 = vmatpush1.msra.mxu0 %v1627
    %1847 = vmatprep.subr.mxu0 %v1636
    %1848 = vmatpush1.msra.mxu0 %v1635
    %1849 = vmatprep.mubr.f32.mxu0 %v874
    %1850 = vmatmul.mubr.f32.gmra.mrb[0].mxu0 %v873
    %v1851 = vpop.f32.mrb[0].mxu0
    %v1852 = vadd.f32 %v1781, %v1851
    %v1853 = vpop.f32.mrb[0].mxu0
    %v1854 = vadd.f32 %v1783, %v1853
    %1855 = vdwg.mxu0
    %1856 = vmatprep.subr.mxu0 %v878
    %1857 = vmatpush1.msra.mxu0 %v877
    %1858 = vmatprep.subr.mxu0 %v886
    %1859 = vmatpush1.msra.mxu0 %v885
    %1860 = vmatprep.subr.mxu0 %v894
    %1861 = vmatpush1.msra.mxu0 %v893
    %1862 = vmatprep.subr.mxu0 %v902
    %1863 = vmatpush1.msra.mxu0 %v901
    %1864 = vmatprep.subr.mxu0 %v910
    %1865 = vmatpush1.msra.mxu0 %v909
    %1866 = vmatprep.subr.mxu0 %v918
    %1867 = vmatpush1.msra.mxu0 %v917
    %1868 = vmatprep.subr.mxu0 %v926
    %1869 = vmatpush1.msra.mxu0 %v925
    %1870 = vmatprep.subr.mxu0 %v934
    %1871 = vmatpush1.msra.mxu0 %v933
    %1872 = vmatprep.subr.mxu0 %v942
    %1873 = vmatpush1.msra.mxu0 %v941
    %1874 = vmatprep.subr.mxu0 %v950
    %1875 = vmatpush1.msra.mxu0 %v949
    %1876 = vmatprep.subr.mxu0 %v958
    %1877 = vmatpush1.msra.mxu0 %v957
    %1878 = vmatprep.subr.mxu0 %v966
    %1879 = vmatpush1.msra.mxu0 %v965
    %1880 = vmatprep.subr.mxu0 %v974
    %1881 = vmatpush1.msra.mxu0 %v973
    %1882 = vmatprep.subr.mxu0 %v982
    %1883 = vmatpush1.msra.mxu0 %v981
    %1884 = vmatprep.subr.mxu0 %v990
    %1885 = vmatpush1.msra.mxu0 %v989
    %1886 = vmatprep.subr.mxu0 %v998
    %1887 = vmatpush1.msra.mxu0 %v997
    %1888 = vmatprep.subr.mxu0 %v1006
    %1889 = vmatpush1.msra.mxu0 %v1005
    %1890 = vmatprep.subr.mxu0 %v1014
    %1891 = vmatpush1.msra.mxu0 %v1013
    %1892 = vmatprep.subr.mxu0 %v1022
    %1893 = vmatpush1.msra.mxu0 %v1021
    %1894 = vmatprep.subr.mxu0 %v1030
    %1895 = vmatpush1.msra.mxu0 %v1029
    %1896 = vmatprep.subr.mxu0 %v1038
    %1897 = vmatpush1.msra.mxu0 %v1037
    %1898 = vmatprep.subr.mxu0 %v1046
    %1899 = vmatpush1.msra.mxu0 %v1045
    %1900 = vmatprep.subr.mxu0 %v1054
    %1901 = vmatpush1.msra.mxu0 %v1053
    %1902 = vmatprep.subr.mxu0 %v1062
    %1903 = vmatpush1.msra.mxu0 %v1061
    %1904 = vmatprep.subr.mxu0 %v1070
    %1905 = vmatpush1.msra.mxu0 %v1069
    %1906 = vmatprep.subr.mxu0 %v1078
    %1907 = vmatpush1.msra.mxu0 %v1077
    %1908 = vmatprep.subr.mxu0 %v1086
    %1909 = vmatpush1.msra.mxu0 %v1085
    %1910 = vmatprep.subr.mxu0 %v1094
    %1911 = vmatpush1.msra.mxu0 %v1093
    %1912 = vmatprep.subr.mxu0 %v1102
    %1913 = vmatpush1.msra.mxu0 %v1101
    %1914 = vmatprep.subr.mxu0 %v1110
    %1915 = vmatpush1.msra.mxu0 %v1109
    %1916 = vmatprep.subr.mxu0 %v1118
    %1917 = vmatpush1.msra.mxu0 %v1117
    %1918 = vmatprep.subr.mxu0 %v1126
    %1919 = vmatpush1.msra.mxu0 %v1125
    %1920 = vmatprep.mubr.f32.mxu0 %v870
    %1921 = vmatmul.mubr.f32.gmra.mrb[0].mxu0 %v869
    %v1922 = vpop.f32.mrb[0].mxu0
    %v1923 = vadd.f32 0.0, %v1922
    %v1924 = vpop.f32.mrb[0].mxu0
    %v1925 = vadd.f32 0.0, %v1924
    %1926 = vdwg.mxu0
    %1927 = vmatprep.subr.mxu0 %v1134
    %1928 = vmatpush1.msra.mxu0 %v1133
    %1929 = vmatprep.subr.mxu0 %v1142
    %1930 = vmatpush1.msra.mxu0 %v1141
    %1931 = vmatprep.subr.mxu0 %v1150
    %1932 = vmatpush1.msra.mxu0 %v1149
    %1933 = vmatprep.subr.mxu0 %v1158
    %1934 = vmatpush1.msra.mxu0 %v1157
    %1935 = vmatprep.subr.mxu0 %v1166
    %1936 = vmatpush1.msra.mxu0 %v1165
    %1937 = vmatprep.subr.mxu0 %v1174
    %1938 = vmatpush1.msra.mxu0 %v1173
    %1939 = vmatprep.subr.mxu0 %v1182
    %1940 = vmatpush1.msra.mxu0 %v1181
    %1941 = vmatprep.subr.mxu0 %v1190
    %1942 = vmatpush1.msra.mxu0 %v1189
    %1943 = vmatprep.subr.mxu0 %v1198
    %1944 = vmatpush1.msra.mxu0 %v1197
    %1945 = vmatprep.subr.mxu0 %v1206
    %1946 = vmatpush1.msra.mxu0 %v1205
    %1947 = vmatprep.subr.mxu0 %v1214
    %1948 = vmatpush1.msra.mxu0 %v1213
    %1949 = vmatprep.subr.mxu0 %v1222
    %1950 = vmatpush1.msra.mxu0 %v1221
    %1951 = vmatprep.subr.mxu0 %v1230
    %1952 = vmatpush1.msra.mxu0 %v1229
    %1953 = vmatprep.subr.mxu0 %v1238
    %1954 = vmatpush1.msra.mxu0 %v1237
    %1955 = vmatprep.subr.mxu0 %v1246
    %1956 = vmatpush1.msra.mxu0 %v1245
    %1957 = vmatprep.subr.mxu0 %v1254
    %1958 = vmatpush1.msra.mxu0 %v1253
    %1959 = vmatprep.subr.mxu0 %v1262
    %1960 = vmatpush1.msra.mxu0 %v1261
    %1961 = vmatprep.subr.mxu0 %v1270
    %1962 = vmatpush1.msra.mxu0 %v1269
    %1963 = vmatprep.subr.mxu0 %v1278
    %1964 = vmatpush1.msra.mxu0 %v1277
    %1965 = vmatprep.subr.mxu0 %v1286
    %1966 = vmatpush1.msra.mxu0 %v1285
    %1967 = vmatprep.subr.mxu0 %v1294
    %1968 = vmatpush1.msra.mxu0 %v1293
    %1969 = vmatprep.subr.mxu0 %v1302
    %1970 = vmatpush1.msra.mxu0 %v1301
    %1971 = vmatprep.subr.mxu0 %v1310
    %1972 = vmatpush1.msra.mxu0 %v1309
    %1973 = vmatprep.subr.mxu0 %v1318
    %1974 = vmatpush1.msra.mxu0 %v1317
    %1975 = vmatprep.subr.mxu0 %v1326
    %1976 = vmatpush1.msra.mxu0 %v1325
    %1977 = vmatprep.subr.mxu0 %v1334
    %1978 = vmatpush1.msra.mxu0 %v1333
    %1979 = vmatprep.subr.mxu0 %v1342
    %1980 = vmatpush1.msra.mxu0 %v1341
    %1981 = vmatprep.subr.mxu0 %v1350
    %1982 = vmatpush1.msra.mxu0 %v1349
    %1983 = vmatprep.subr.mxu0 %v1358
    %1984 = vmatpush1.msra.mxu0 %v1357
    %1985 = vmatprep.subr.mxu0 %v1366
    %1986 = vmatpush1.msra.mxu0 %v1365
    %1987 = vmatprep.subr.mxu0 %v1374
    %1988 = vmatpush1.msra.mxu0 %v1373
    %1989 = vmatprep.subr.mxu0 %v1382
    %1990 = vmatpush1.msra.mxu0 %v1381
    %1991 = vmatprep.mubr.f32.mxu0 %v872
    %1992 = vmatmul.mubr.f32.gmra.mrb[0].mxu0 %v871
    %v1993 = vpop.f32.mrb[0].mxu0
    %v1994 = vadd.f32 %v1923, %v1993
    %v1995 = vpop.f32.mrb[0].mxu0
    %v1996 = vadd.f32 %v1925, %v1995
    %1997 = vdwg.mxu0
    %1998 = vmatprep.subr.mxu0 %v1390
    %1999 = vmatpush1.msra.mxu0 %v1389
    %2000 = vmatprep.subr.mxu0 %v1398
    %2001 = vmatpush1.msra.mxu0 %v1397
    %2002 = vmatprep.subr.mxu0 %v1406
    %2003 = vmatpush1.msra.mxu0 %v1405
    %2004 = vmatprep.subr.mxu0 %v1414
    %2005 = vmatpush1.msra.mxu0 %v1413
    %2006 = vmatprep.subr.mxu0 %v1422
    %2007 = vmatpush1.msra.mxu0 %v1421
    %2008 = vmatprep.subr.mxu0 %v1430
    %2009 = vmatpush1.msra.mxu0 %v1429
    %2010 = vmatprep.subr.mxu0 %v1438
    %2011 = vmatpush1.msra.mxu0 %v1437
    %2012 = vmatprep.subr.mxu0 %v1446
    %2013 = vmatpush1.msra.mxu0 %v1445
    %2014 = vmatprep.subr.mxu0 %v1454
    %2015 = vmatpush1.msra.mxu0 %v1453
    %2016 = vmatprep.subr.mxu0 %v1462
    %2017 = vmatpush1.msra.mxu0 %v1461
    %2018 = vmatprep.subr.mxu0 %v1470
    %2019 = vmatpush1.msra.mxu0 %v1469
    %2020 = vmatprep.subr.mxu0 %v1478
    %2021 = vmatpush1.msra.mxu0 %v1477
    %2022 = vmatprep.subr.mxu0 %v1486
    %2023 = vmatpush1.msra.mxu0 %v1485
    %2024 = vmatprep.subr.mxu0 %v1494
    %2025 = vmatpush1.msra.mxu0 %v1493
    %2026 = vmatprep.subr.mxu0 %v1502
    %2027 = vmatpush1.msra.mxu0 %v1501
    %2028 = vmatprep.subr.mxu0 %v1510
    %2029 = vmatpush1.msra.mxu0 %v1509
    %2030 = vmatprep.subr.mxu0 %v1518
    %2031 = vmatpush1.msra.mxu0 %v1517
    %2032 = vmatprep.subr.mxu0 %v1526
    %2033 = vmatpush1.msra.mxu0 %v1525
    %2034 = vmatprep.subr.mxu0 %v1534
    %2035 = vmatpush1.msra.mxu0 %v1533
    %2036 = vmatprep.subr.mxu0 %v1542
    %2037 = vmatpush1.msra.mxu0 %v1541
    %2038 = vmatprep.subr.mxu0 %v1550
    %2039 = vmatpush1.msra.mxu0 %v1549
    %2040 = vmatprep.subr.mxu0 %v1558
    %2041 = vmatpush1.msra.mxu0 %v1557
    %2042 = vmatprep.subr.mxu0 %v1566
    %2043 = vmatpush1.msra.mxu0 %v1565
    %2044 = vmatprep.subr.mxu0 %v1574
    %2045 = vmatpush1.msra.mxu0 %v1573
    %2046 = vmatprep.subr.mxu0 %v1582
    %2047 = vmatpush1.msra.mxu0 %v1581
    %2048 = vmatprep.subr.mxu0 %v1590
    %2049 = vmatpush1.msra.mxu0 %v1589
    %2050 = vmatprep.subr.mxu0 %v1598
    %2051 = vmatpush1.msra.mxu0 %v1597
    %2052 = vmatprep.subr.mxu0 %v1606
    %2053 = vmatpush1.msra.mxu0 %v1605
    %2054 = vmatprep.subr.mxu0 %v1614
    %2055 = vmatpush1.msra.mxu0 %v1613
    %2056 = vmatprep.subr.mxu0 %v1622
    %2057 = vmatpush1.msra.mxu0 %v1621
    %2058 = vmatprep.subr.mxu0 %v1630
    %2059 = vmatpush1.msra.mxu0 %v1629
    %2060 = vmatprep.subr.mxu0 %v1638
    %2061 = vmatpush1.msra.mxu0 %v1637
    %2062 = vmatprep.mubr.f32.mxu0 %v874
    %2063 = vmatmul.mubr.f32.gmra.mrb[0].mxu0 %v873
    %v2064 = vpop.f32.mrb[0].mxu0
    %v2065 = vadd.f32 %v1994, %v2064
    %v2066 = vpop.f32.mrb[0].mxu0
    %v2067 = vadd.f32 %v1996, %v2066
    %2068 = vdwg.mxu0
    %2069 = vmatprep.subr.mxu0 %v880
    %2070 = vmatpush1.msra.mxu0 %v879
    %2071 = vmatprep.subr.mxu0 %v888
    %2072 = vmatpush1.msra.mxu0 %v887
    %2073 = vmatprep.subr.mxu0 %v896
    %2074 = vmatpush1.msra.mxu0 %v895
    %2075 = vmatprep.subr.mxu0 %v904
    %2076 = vmatpush1.msra.mxu0 %v903
    %2077 = vmatprep.subr.mxu0 %v912
    %2078 = vmatpush1.msra.mxu0 %v911
    %2079 = vmatprep.subr.mxu0 %v920
    %2080 = vmatpush1.msra.mxu0 %v919
    %2081 = vmatprep.subr.mxu0 %v928
    %2082 = vmatpush1.msra.mxu0 %v927
    %2083 = vmatprep.subr.mxu0 %v936
    %2084 = vmatpush1.msra.mxu0 %v935
    %2085 = vmatprep.subr.mxu0 %v944
    %2086 = vmatpush1.msra.mxu0 %v943
    %2087 = vmatprep.subr.mxu0 %v952
    %2088 = vmatpush1.msra.mxu0 %v951
    %2089 = vmatprep.subr.mxu0 %v960
    %2090 = vmatpush1.msra.mxu0 %v959
    %2091 = vmatprep.subr.mxu0 %v968
    %2092 = vmatpush1.msra.mxu0 %v967
    %2093 = vmatprep.subr.mxu0 %v976
    %2094 = vmatpush1.msra.mxu0 %v975
    %2095 = vmatprep.subr.mxu0 %v984
    %2096 = vmatpush1.msra.mxu0 %v983
    %2097 = vmatprep.subr.mxu0 %v992
    %2098 = vmatpush1.msra.mxu0 %v991
    %2099 = vmatprep.subr.mxu0 %v1000
    %2100 = vmatpush1.msra.mxu0 %v999
    %2101 = vmatprep.subr.mxu0 %v1008
    %2102 = vmatpush1.msra.mxu0 %v1007
    %2103 = vmatprep.subr.mxu0 %v1016
    %2104 = vmatpush1.msra.mxu0 %v1015
    %2105 = vmatprep.subr.mxu0 %v1024
    %2106 = vmatpush1.msra.mxu0 %v1023
    %2107 = vmatprep.subr.mxu0 %v1032
    %2108 = vmatpush1.msra.mxu0 %v1031
    %2109 = vmatprep.subr.mxu0 %v1040
    %2110 = vmatpush1.msra.mxu0 %v1039
    %2111 = vmatprep.subr.mxu0 %v1048
    %2112 = vmatpush1.msra.mxu0 %v1047
    %2113 = vmatprep.subr.mxu0 %v1056
    %2114 = vmatpush1.msra.mxu0 %v1055
    %2115 = vmatprep.subr.mxu0 %v1064
    %2116 = vmatpush1.msra.mxu0 %v1063
    %2117 = vmatprep.subr.mxu0 %v1072
    %2118 = vmatpush1.msra.mxu0 %v1071
    %2119 = vmatprep.subr.mxu0 %v1080
    %2120 = vmatpush1.msra.mxu0 %v1079
    %2121 = vmatprep.subr.mxu0 %v1088
    %2122 = vmatpush1.msra.mxu0 %v1087
    %2123 = vmatprep.subr.mxu0 %v1096
    %2124 = vmatpush1.msra.mxu0 %v1095
    %2125 = vmatprep.subr.mxu0 %v1104
    %2126 = vmatpush1.msra.mxu0 %v1103
    %2127 = vmatprep.subr.mxu0 %v1112
    %2128 = vmatpush1.msra.mxu0 %v1111
    %2129 = vmatprep.subr.mxu0 %v1120
    %2130 = vmatpush1.msra.mxu0 %v1119
    %2131 = vmatprep.subr.mxu0 %v1128
    %2132 = vmatpush1.msra.mxu0 %v1127
    %2133 = vmatprep.mubr.f32.mxu0 %v870
    %2134 = vmatmul.mubr.f32.gmra.mrb[0].mxu0 %v869
    %v2135 = vpop.f32.mrb[0].mxu0
    %v2136 = vadd.f32 0.0, %v2135
    %v2137 = vpop.f32.mrb[0].mxu0
    %v2138 = vadd.f32 0.0, %v2137
    %2139 = vdwg.mxu0
    %2140 = vmatprep.subr.mxu0 %v1136
    %2141 = vmatpush1.msra.mxu0 %v1135
    %2142 = vmatprep.subr.mxu0 %v1144
    %2143 = vmatpush1.msra.mxu0 %v1143
    %2144 = vmatprep.subr.mxu0 %v1152
    %2145 = vmatpush1.msra.mxu0 %v1151
    %2146 = vmatprep.subr.mxu0 %v1160
    %2147 = vmatpush1.msra.mxu0 %v1159
    %2148 = vmatprep.subr.mxu0 %v1168
    %2149 = vmatpush1.msra.mxu0 %v1167
    %2150 = vmatprep.subr.mxu0 %v1176
    %2151 = vmatpush1.msra.mxu0 %v1175
    %2152 = vmatprep.subr.mxu0 %v1184
    %2153 = vmatpush1.msra.mxu0 %v1183
    %2154 = vmatprep.subr.mxu0 %v1192
    %2155 = vmatpush1.msra.mxu0 %v1191
    %2156 = vmatprep.subr.mxu0 %v1200
    %2157 = vmatpush1.msra.mxu0 %v1199
    %2158 = vmatprep.subr.mxu0 %v1208
    %2159 = vmatpush1.msra.mxu0 %v1207
    %2160 = vmatprep.subr.mxu0 %v1216
    %2161 = vmatpush1.msra.mxu0 %v1215
    %2162 = vmatprep.subr.mxu0 %v1224
    %2163 = vmatpush1.msra.mxu0 %v1223
    %2164 = vmatprep.subr.mxu0 %v1232
    %2165 = vmatpush1.msra.mxu0 %v1231
    %2166 = vmatprep.subr.mxu0 %v1240
    %2167 = vmatpush1.msra.mxu0 %v1239
    %2168 = vmatprep.subr.mxu0 %v1248
    %2169 = vmatpush1.msra.mxu0 %v1247
    %2170 = vmatprep.subr.mxu0 %v1256
    %2171 = vmatpush1.msra.mxu0 %v1255
    %2172 = vmatprep.subr.mxu0 %v1264
    %2173 = vmatpush1.msra.mxu0 %v1263
    %2174 = vmatprep.subr.mxu0 %v1272
    %2175 = vmatpush1.msra.mxu0 %v1271
    %2176 = vmatprep.subr.mxu0 %v1280
    %2177 = vmatpush1.msra.mxu0 %v1279
    %2178 = vmatprep.subr.mxu0 %v1288
    %2179 = vmatpush1.msra.mxu0 %v1287
    %2180 = vmatprep.subr.mxu0 %v1296
    %2181 = vmatpush1.msra.mxu0 %v1295
    %2182 = vmatprep.subr.mxu0 %v1304
    %2183 = vmatpush1.msra.mxu0 %v1303
    %2184 = vmatprep.subr.mxu0 %v1312
    %2185 = vmatpush1.msra.mxu0 %v1311
    %2186 = vmatprep.subr.mxu0 %v1320
    %2187 = vmatpush1.msra.mxu0 %v1319
    %2188 = vmatprep.subr.mxu0 %v1328
    %2189 = vmatpush1.msra.mxu0 %v1327
    %2190 = vmatprep.subr.mxu0 %v1336
    %2191 = vmatpush1.msra.mxu0 %v1335
    %2192 = vmatprep.subr.mxu0 %v1344
    %2193 = vmatpush1.msra.mxu0 %v1343
    %2194 = vmatprep.subr.mxu0 %v1352
    %2195 = vmatpush1.msra.mxu0 %v1351
    %2196 = vmatprep.subr.mxu0 %v1360
    %2197 = vmatpush1.msra.mxu0 %v1359
    %2198 = vmatprep.subr.mxu0 %v1368
    %2199 = vmatpush1.msra.mxu0 %v1367
    %2200 = vmatprep.subr.mxu0 %v1376
    %2201 = vmatpush1.msra.mxu0 %v1375
    %2202 = vmatprep.subr.mxu0 %v1384
    %2203 = vmatpush1.msra.mxu0 %v1383
    %2204 = vmatprep.mubr.f32.mxu0 %v872
    %2205 = vmatmul.mubr.f32.gmra.mrb[0].mxu0 %v871
    %v2206 = vpop.f32.mrb[0].mxu0
    %v2207 = vadd.f32 %v2136, %v2206
    %v2208 = vpop.f32.mrb[0].mxu0
    %v2209 = vadd.f32 %v2138, %v2208
    %2210 = vdwg.mxu0
    %2211 = vmatprep.subr.mxu0 %v1392
    %2212 = vmatpush1.msra.mxu0 %v1391
    %2213 = vmatprep.subr.mxu0 %v1400
    %2214 = vmatpush1.msra.mxu0 %v1399
    %2215 = vmatprep.subr.mxu0 %v1408
    %2216 = vmatpush1.msra.mxu0 %v1407
    %2217 = vmatprep.subr.mxu0 %v1416
    %2218 = vmatpush1.msra.mxu0 %v1415
    %2219 = vmatprep.subr.mxu0 %v1424
    %2220 = vmatpush1.msra.mxu0 %v1423
    %2221 = vmatprep.subr.mxu0 %v1432
    %2222 = vmatpush1.msra.mxu0 %v1431
    %2223 = vmatprep.subr.mxu0 %v1440
    %2224 = vmatpush1.msra.mxu0 %v1439
    %2225 = vmatprep.subr.mxu0 %v1448
    %2226 = vmatpush1.msra.mxu0 %v1447
    %2227 = vmatprep.subr.mxu0 %v1456
    %2228 = vmatpush1.msra.mxu0 %v1455
    %2229 = vmatprep.subr.mxu0 %v1464
    %2230 = vmatpush1.msra.mxu0 %v1463
    %2231 = vmatprep.subr.mxu0 %v1472
    %2232 = vmatpush1.msra.mxu0 %v1471
    %2233 = vmatprep.subr.mxu0 %v1480
    %2234 = vmatpush1.msra.mxu0 %v1479
    %2235 = vmatprep.subr.mxu0 %v1488
    %2236 = vmatpush1.msra.mxu0 %v1487
    %2237 = vmatprep.subr.mxu0 %v1496
    %2238 = vmatpush1.msra.mxu0 %v1495
    %2239 = vmatprep.subr.mxu0 %v1504
    %2240 = vmatpush1.msra.mxu0 %v1503
    %2241 = vmatprep.subr.mxu0 %v1512
    %2242 = vmatpush1.msra.mxu0 %v1511
    %2243 = vmatprep.subr.mxu0 %v1520
    %2244 = vmatpush1.msra.mxu0 %v1519
    %2245 = vmatprep.subr.mxu0 %v1528
    %2246 = vmatpush1.msra.mxu0 %v1527
    %2247 = vmatprep.subr.mxu0 %v1536
    %2248 = vmatpush1.msra.mxu0 %v1535
    %2249 = vmatprep.subr.mxu0 %v1544
    %2250 = vmatpush1.msra.mxu0 %v1543
    %2251 = vmatprep.subr.mxu0 %v1552
    %2252 = vmatpush1.msra.mxu0 %v1551
    %2253 = vmatprep.subr.mxu0 %v1560
    %2254 = vmatpush1.msra.mxu0 %v1559
    %2255 = vmatprep.subr.mxu0 %v1568
    %2256 = vmatpush1.msra.mxu0 %v1567
    %2257 = vmatprep.subr.mxu0 %v1576
    %2258 = vmatpush1.msra.mxu0 %v1575
    %2259 = vmatprep.subr.mxu0 %v1584
    %2260 = vmatpush1.msra.mxu0 %v1583
    %2261 = vmatprep.subr.mxu0 %v1592
    %2262 = vmatpush1.msra.mxu0 %v1591
    %2263 = vmatprep.subr.mxu0 %v1600
    %2264 = vmatpush1.msra.mxu0 %v1599
    %2265 = vmatprep.subr.mxu0 %v1608
    %2266 = vmatpush1.msra.mxu0 %v1607
    %2267 = vmatprep.subr.mxu0 %v1616
    %2268 = vmatpush1.msra.mxu0 %v1615
    %2269 = vmatprep.subr.mxu0 %v1624
    %2270 = vmatpush1.msra.mxu0 %v1623
    %2271 = vmatprep.subr.mxu0 %v1632
    %2272 = vmatpush1.msra.mxu0 %v1631
    %2273 = vmatprep.subr.mxu0 %v1640
    %2274 = vmatpush1.msra.mxu0 %v1639
    %2275 = vmatprep.mubr.f32.mxu0 %v874
    %2276 = vmatmul.mubr.f32.gmra.mrb[0].mxu0 %v873
    %v2277 = vpop.f32.mrb[0].mxu0
    %v2278 = vadd.f32 %v2207, %v2277
    %v2279 = vpop.f32.mrb[0].mxu0
    %v2280 = vadd.f32 %v2209, %v2279
    %2281 = vdwg.mxu0
    %2282 = vmatprep.subr.mxu0 %v882
    %2283 = vmatpush1.msra.mxu0 %v881
    %2284 = vmatprep.subr.mxu0 %v890
    %2285 = vmatpush1.msra.mxu0 %v889
    %2286 = vmatprep.subr.mxu0 %v898
    %2287 = vmatpush1.msra.mxu0 %v897
    %2288 = vmatprep.subr.mxu0 %v906
    %2289 = vmatpush1.msra.mxu0 %v905
    %2290 = vmatprep.subr.mxu0 %v914
    %2291 = vmatpush1.msra.mxu0 %v913
    %2292 = vmatprep.subr.mxu0 %v922
    %2293 = vmatpush1.msra.mxu0 %v921
    %2294 = vmatprep.subr.mxu0 %v930
    %2295 = vmatpush1.msra.mxu0 %v929
    %2296 = vmatprep.subr.mxu0 %v938
    %2297 = vmatpush1.msra.mxu0 %v937
    %2298 = vmatprep.subr.mxu0 %v946
    %2299 = vmatpush1.msra.mxu0 %v945
    %2300 = vmatprep.subr.mxu0 %v954
    %2301 = vmatpush1.msra.mxu0 %v953
    %2302 = vmatprep.subr.mxu0 %v962
    %2303 = vmatpush1.msra.mxu0 %v961
    %2304 = vmatprep.subr.mxu0 %v970
    %2305 = vmatpush1.msra.mxu0 %v969
    %2306 = vmatprep.subr.mxu0 %v978
    %2307 = vmatpush1.msra.mxu0 %v977
    %2308 = vmatprep.subr.mxu0 %v986
    %2309 = vmatpush1.msra.mxu0 %v985
    %2310 = vmatprep.subr.mxu0 %v994
    %2311 = vmatpush1.msra.mxu0 %v993
    %2312 = vmatprep.subr.mxu0 %v1002
    %2313 = vmatpush1.msra.mxu0 %v1001
    %2314 = vmatprep.subr.mxu0 %v1010
    %2315 = vmatpush1.msra.mxu0 %v1009
    %2316 = vmatprep.subr.mxu0 %v1018
    %2317 = vmatpush1.msra.mxu0 %v1017
    %2318 = vmatprep.subr.mxu0 %v1026
    %2319 = vmatpush1.msra.mxu0 %v1025
    %2320 = vmatprep.subr.mxu0 %v1034
    %2321 = vmatpush1.msra.mxu0 %v1033
    %2322 = vmatprep.subr.mxu0 %v1042
    %2323 = vmatpush1.msra.mxu0 %v1041
    %2324 = vmatprep.subr.mxu0 %v1050
    %2325 = vmatpush1.msra.mxu0 %v1049
    %2326 = vmatprep.subr.mxu0 %v1058
    %2327 = vmatpush1.msra.mxu0 %v1057
    %2328 = vmatprep.subr.mxu0 %v1066
    %2329 = vmatpush1.msra.mxu0 %v1065
    %2330 = vmatprep.subr.mxu0 %v1074
    %2331 = vmatpush1.msra.mxu0 %v1073
    %2332 = vmatprep.subr.mxu0 %v1082
    %2333 = vmatpush1.msra.mxu0 %v1081
    %2334 = vmatprep.subr.mxu0 %v1090
    %2335 = vmatpush1.msra.mxu0 %v1089
    %2336 = vmatprep.subr.mxu0 %v1098
    %2337 = vmatpush1.msra.mxu0 %v1097
    %2338 = vmatprep.subr.mxu0 %v1106
    %2339 = vmatpush1.msra.mxu0 %v1105
    %2340 = vmatprep.subr.mxu0 %v1114
    %2341 = vmatpush1.msra.mxu0 %v1113
    %2342 = vmatprep.subr.mxu0 %v1122
    %2343 = vmatpush1.msra.mxu0 %v1121
    %2344 = vmatprep.subr.mxu0 %v1130
    %2345 = vmatpush1.msra.mxu0 %v1129
    %2346 = vmatprep.mubr.f32.mxu0 %v870
    %2347 = vmatmul.mubr.f32.gmra.mrb[0].mxu0 %v869
    %v2348 = vpop.f32.mrb[0].mxu0
    %v2349 = vadd.f32 0.0, %v2348
    %v2350 = vpop.f32.mrb[0].mxu0
    %v2351 = vadd.f32 0.0, %v2350
    %2352 = vdwg.mxu0
    %2353 = vmatprep.subr.mxu0 %v1138
    %2354 = vmatpush1.msra.mxu0 %v1137
    %2355 = vmatprep.subr.mxu0 %v1146
    %2356 = vmatpush1.msra.mxu0 %v1145
    %2357 = vmatprep.subr.mxu0 %v1154
    %2358 = vmatpush1.msra.mxu0 %v1153
    %2359 = vmatprep.subr.mxu0 %v1162
    %2360 = vmatpush1.msra.mxu0 %v1161
    %2361 = vmatprep.subr.mxu0 %v1170
    %2362 = vmatpush1.msra.mxu0 %v1169
    %2363 = vmatprep.subr.mxu0 %v1178
    %2364 = vmatpush1.msra.mxu0 %v1177
    %2365 = vmatprep.subr.mxu0 %v1186
    %2366 = vmatpush1.msra.mxu0 %v1185
    %2367 = vmatprep.subr.mxu0 %v1194
    %2368 = vmatpush1.msra.mxu0 %v1193
    %2369 = vmatprep.subr.mxu0 %v1202
    %2370 = vmatpush1.msra.mxu0 %v1201
    %2371 = vmatprep.subr.mxu0 %v1210
    %2372 = vmatpush1.msra.mxu0 %v1209
    %2373 = vmatprep.subr.mxu0 %v1218
    %2374 = vmatpush1.msra.mxu0 %v1217
    %2375 = vmatprep.subr.mxu0 %v1226
    %2376 = vmatpush1.msra.mxu0 %v1225
    %2377 = vmatprep.subr.mxu0 %v1234
    %2378 = vmatpush1.msra.mxu0 %v1233
    %2379 = vmatprep.subr.mxu0 %v1242
    %2380 = vmatpush1.msra.mxu0 %v1241
    %2381 = vmatprep.subr.mxu0 %v1250
    %2382 = vmatpush1.msra.mxu0 %v1249
    %2383 = vmatprep.subr.mxu0 %v1258
    %2384 = vmatpush1.msra.mxu0 %v1257
    %2385 = vmatprep.subr.mxu0 %v1266
    %2386 = vmatpush1.msra.mxu0 %v1265
    %2387 = vmatprep.subr.mxu0 %v1274
    %2388 = vmatpush1.msra.mxu0 %v1273
    %2389 = vmatprep.subr.mxu0 %v1282
    %2390 = vmatpush1.msra.mxu0 %v1281
    %2391 = vmatprep.subr.mxu0 %v1290
    %2392 = vmatpush1.msra.mxu0 %v1289
    %2393 = vmatprep.subr.mxu0 %v1298
    %2394 = vmatpush1.msra.mxu0 %v1297
    %2395 = vmatprep.subr.mxu0 %v1306
    %2396 = vmatpush1.msra.mxu0 %v1305
    %2397 = vmatprep.subr.mxu0 %v1314
    %2398 = vmatpush1.msra.mxu0 %v1313
    %2399 = vmatprep.subr.mxu0 %v1322
    %2400 = vmatpush1.msra.mxu0 %v1321
    %2401 = vmatprep.subr.mxu0 %v1330
    %2402 = vmatpush1.msra.mxu0 %v1329
    %2403 = vmatprep.subr.mxu0 %v1338
    %2404 = vmatpush1.msra.mxu0 %v1337
    %2405 = vmatprep.subr.mxu0 %v1346
    %2406 = vmatpush1.msra.mxu0 %v1345
    %2407 = vmatprep.subr.mxu0 %v1354
    %2408 = vmatpush1.msra.mxu0 %v1353
    %2409 = vmatprep.subr.mxu0 %v1362
    %2410 = vmatpush1.msra.mxu0 %v1361
    %2411 = vmatprep.subr.mxu0 %v1370
    %2412 = vmatpush1.msra.mxu0 %v1369
    %2413 = vmatprep.subr.mxu0 %v1378
    %2414 = vmatpush1.msra.mxu0 %v1377
    %2415 = vmatprep.subr.mxu0 %v1386
    %2416 = vmatpush1.msra.mxu0 %v1385
    %2417 = vmatprep.mubr.f32.mxu0 %v872
    %2418 = vmatmul.mubr.f32.gmra.mrb[0].mxu0 %v871
    %v2419 = vpop.f32.mrb[0].mxu0
    %v2420 = vadd.f32 %v2349, %v2419
    %v2421 = vpop.f32.mrb[0].mxu0
    %v2422 = vadd.f32 %v2351, %v2421
    %2423 = vdwg.mxu0
    %2424 = vmatprep.subr.mxu0 %v1394
    %2425 = vmatpush1.msra.mxu0 %v1393
    %2426 = vmatprep.subr.mxu0 %v1402
    %2427 = vmatpush1.msra.mxu0 %v1401
    %2428 = vmatprep.subr.mxu0 %v1410
    %2429 = vmatpush1.msra.mxu0 %v1409
    %2430 = vmatprep.subr.mxu0 %v1418
    %2431 = vmatpush1.msra.mxu0 %v1417
    %2432 = vmatprep.subr.mxu0 %v1426
    %2433 = vmatpush1.msra.mxu0 %v1425
    %2434 = vmatprep.subr.mxu0 %v1434
    %2435 = vmatpush1.msra.mxu0 %v1433
    %2436 = vmatprep.subr.mxu0 %v1442
    %2437 = vmatpush1.msra.mxu0 %v1441
    %2438 = vmatprep.subr.mxu0 %v1450
    %2439 = vmatpush1.msra.mxu0 %v1449
    %2440 = vmatprep.subr.mxu0 %v1458
    %2441 = vmatpush1.msra.mxu0 %v1457
    %2442 = vmatprep.subr.mxu0 %v1466
    %2443 = vmatpush1.msra.mxu0 %v1465
    %2444 = vmatprep.subr.mxu0 %v1474
    %2445 = vmatpush1.msra.mxu0 %v1473
    %2446 = vmatprep.subr.mxu0 %v1482
    %2447 = vmatpush1.msra.mxu0 %v1481
    %2448 = vmatprep.subr.mxu0 %v1490
    %2449 = vmatpush1.msra.mxu0 %v1489
    %2450 = vmatprep.subr.mxu0 %v1498
    %2451 = vmatpush1.msra.mxu0 %v1497
    %2452 = vmatprep.subr.mxu0 %v1506
    %2453 = vmatpush1.msra.mxu0 %v1505
    %2454 = vmatprep.subr.mxu0 %v1514
    %2455 = vmatpush1.msra.mxu0 %v1513
    %2456 = vmatprep.subr.mxu0 %v1522
    %2457 = vmatpush1.msra.mxu0 %v1521
    %2458 = vmatprep.subr.mxu0 %v1530
    %2459 = vmatpush1.msra.mxu0 %v1529
    %2460 = vmatprep.subr.mxu0 %v1538
    %2461 = vmatpush1.msra.mxu0 %v1537
    %2462 = vmatprep.subr.mxu0 %v1546
    %2463 = vmatpush1.msra.mxu0 %v1545
    %2464 = vmatprep.subr.mxu0 %v1554
    %2465 = vmatpush1.msra.mxu0 %v1553
    %2466 = vmatprep.subr.mxu0 %v1562
    %2467 = vmatpush1.msra.mxu0 %v1561
    %2468 = vmatprep.subr.mxu0 %v1570
    %2469 = vmatpush1.msra.mxu0 %v1569
    %2470 = vmatprep.subr.mxu0 %v1578
    %2471 = vmatpush1.msra.mxu0 %v1577
    %2472 = vmatprep.subr.mxu0 %v1586
    %2473 = vmatpush1.msra.mxu0 %v1585
    %2474 = vmatprep.subr.mxu0 %v1594
    %2475 = vmatpush1.msra.mxu0 %v1593
    %2476 = vmatprep.subr.mxu0 %v1602
    %2477 = vmatpush1.msra.mxu0 %v1601
    %2478 = vmatprep.subr.mxu0 %v1610
    %2479 = vmatpush1.msra.mxu0 %v1609
    %2480 = vmatprep.subr.mxu0 %v1618
    %2481 = vmatpush1.msra.mxu0 %v1617
    %2482 = vmatprep.subr.mxu0 %v1626
    %2483 = vmatpush1.msra.mxu0 %v1625
    %2484 = vmatprep.subr.mxu0 %v1634
    %2485 = vmatpush1.msra.mxu0 %v1633
    %2486 = vmatprep.subr.mxu0 %v1642
    %2487 = vmatpush1.msra.mxu0 %v1641
    %2488 = vmatprep.mubr.f32.mxu0 %v874
    %2489 = vmatmul.mubr.f32.gmra.mrb[0].mxu0 %v873
    %v2490 = vpop.f32.mrb[0].mxu0
    %v2491 = vadd.f32 %v2420, %v2490
    %v2492 = vpop.f32.mrb[0].mxu0
    %v2493 = vadd.f32 %v2422, %v2492
    %2494 = vdwg.mxu0
    %2495 = vmatprep.subr.mxu0 %v102
    %2496 = vmatpush1.msra.mxu0 %v101
    %2497 = vmatprep.subr.mxu0 %v110
    %2498 = vmatpush1.msra.mxu0 %v109
    %2499 = vmatprep.subr.mxu0 %v118
    %2500 = vmatpush1.msra.mxu0 %v117
    %2501 = vmatprep.subr.mxu0 %v126
    %2502 = vmatpush1.msra.mxu0 %v125
    %2503 = vmatprep.subr.mxu0 %v134
    %2504 = vmatpush1.msra.mxu0 %v133
    %2505 = vmatprep.subr.mxu0 %v142
    %2506 = vmatpush1.msra.mxu0 %v141
    %2507 = vmatprep.subr.mxu0 %v150
    %2508 = vmatpush1.msra.mxu0 %v149
    %2509 = vmatprep.subr.mxu0 %v158
    %2510 = vmatpush1.msra.mxu0 %v157
    %2511 = vmatprep.subr.mxu0 %v166
    %2512 = vmatpush1.msra.mxu0 %v165
    %2513 = vmatprep.subr.mxu0 %v174
    %2514 = vmatpush1.msra.mxu0 %v173
    %2515 = vmatprep.subr.mxu0 %v182
    %2516 = vmatpush1.msra.mxu0 %v181
    %2517 = vmatprep.subr.mxu0 %v190
    %2518 = vmatpush1.msra.mxu0 %v189
    %2519 = vmatprep.subr.mxu0 %v198
    %2520 = vmatpush1.msra.mxu0 %v197
    %2521 = vmatprep.subr.mxu0 %v206
    %2522 = vmatpush1.msra.mxu0 %v205
    %2523 = vmatprep.subr.mxu0 %v214
    %2524 = vmatpush1.msra.mxu0 %v213
    %2525 = vmatprep.subr.mxu0 %v222
    %2526 = vmatpush1.msra.mxu0 %v221
    %2527 = vmatprep.subr.mxu0 %v230
    %2528 = vmatpush1.msra.mxu0 %v229
    %2529 = vmatprep.subr.mxu0 %v238
    %2530 = vmatpush1.msra.mxu0 %v237
    %2531 = vmatprep.subr.mxu0 %v246
    %2532 = vmatpush1.msra.mxu0 %v245
    %2533 = vmatprep.subr.mxu0 %v254
    %2534 = vmatpush1.msra.mxu0 %v253
    %2535 = vmatprep.subr.mxu0 %v262
    %2536 = vmatpush1.msra.mxu0 %v261
    %2537 = vmatprep.subr.mxu0 %v270
    %2538 = vmatpush1.msra.mxu0 %v269
    %2539 = vmatprep.subr.mxu0 %v278
    %2540 = vmatpush1.msra.mxu0 %v277
    %2541 = vmatprep.subr.mxu0 %v286
    %2542 = vmatpush1.msra.mxu0 %v285
    %2543 = vmatprep.subr.mxu0 %v294
    %2544 = vmatpush1.msra.mxu0 %v293
    %2545 = vmatprep.subr.mxu0 %v302
    %2546 = vmatpush1.msra.mxu0 %v301
    %2547 = vmatprep.subr.mxu0 %v310
    %2548 = vmatpush1.msra.mxu0 %v309
    %2549 = vmatprep.subr.mxu0 %v318
    %2550 = vmatpush1.msra.mxu0 %v317
    %2551 = vmatprep.subr.mxu0 %v326
    %2552 = vmatpush1.msra.mxu0 %v325
    %2553 = vmatprep.subr.mxu0 %v334
    %2554 = vmatpush1.msra.mxu0 %v333
    %2555 = vmatprep.subr.mxu0 %v342
    %2556 = vmatpush1.msra.mxu0 %v341
    %2557 = vmatprep.subr.mxu0 %v350
    %2558 = vmatpush1.msra.mxu0 %v349
    %2559 = vmatprep.mubr.f32.mxu0 %v96
    %2560 = vmatmul.mubr.f32.gmra.mrb[0].mxu0 %v95
    %v2561 = vpop.f32.mrb[0].mxu0
    %v2562 = vadd.f32 %v1852, %v2561
    %v2563 = vpop.f32.mrb[0].mxu0
    %v2564 = vadd.f32 %v1854, %v2563
    %2565 = vdwg.mxu0
    %2566 = vmatprep.subr.mxu0 %v358
    %2567 = vmatpush1.msra.mxu0 %v357
    %2568 = vmatprep.subr.mxu0 %v366
    %2569 = vmatpush1.msra.mxu0 %v365
    %2570 = vmatprep.subr.mxu0 %v374
    %2571 = vmatpush1.msra.mxu0 %v373
    %2572 = vmatprep.subr.mxu0 %v382
    %2573 = vmatpush1.msra.mxu0 %v381
    %2574 = vmatprep.subr.mxu0 %v390
    %2575 = vmatpush1.msra.mxu0 %v389
    %2576 = vmatprep.subr.mxu0 %v398
    %2577 = vmatpush1.msra.mxu0 %v397
    %2578 = vmatprep.subr.mxu0 %v406
    %2579 = vmatpush1.msra.mxu0 %v405
    %2580 = vmatprep.subr.mxu0 %v414
    %2581 = vmatpush1.msra.mxu0 %v413
    %2582 = vmatprep.subr.mxu0 %v422
    %2583 = vmatpush1.msra.mxu0 %v421
    %2584 = vmatprep.subr.mxu0 %v430
    %2585 = vmatpush1.msra.mxu0 %v429
    %2586 = vmatprep.subr.mxu0 %v438
    %2587 = vmatpush1.msra.mxu0 %v437
    %2588 = vmatprep.subr.mxu0 %v446
    %2589 = vmatpush1.msra.mxu0 %v445
    %2590 = vmatprep.subr.mxu0 %v454
    %2591 = vmatpush1.msra.mxu0 %v453
    %2592 = vmatprep.subr.mxu0 %v462
    %2593 = vmatpush1.msra.mxu0 %v461
    %2594 = vmatprep.subr.mxu0 %v470
    %2595 = vmatpush1.msra.mxu0 %v469
    %2596 = vmatprep.subr.mxu0 %v478
    %2597 = vmatpush1.msra.mxu0 %v477
    %2598 = vmatprep.subr.mxu0 %v486
    %2599 = vmatpush1.msra.mxu0 %v485
    %2600 = vmatprep.subr.mxu0 %v494
    %2601 = vmatpush1.msra.mxu0 %v493
    %2602 = vmatprep.subr.mxu0 %v502
    %2603 = vmatpush1.msra.mxu0 %v501
    %2604 = vmatprep.subr.mxu0 %v510
    %2605 = vmatpush1.msra.mxu0 %v509
    %2606 = vmatprep.subr.mxu0 %v518
    %2607 = vmatpush1.msra.mxu0 %v517
    %2608 = vmatprep.subr.mxu0 %v526
    %2609 = vmatpush1.msra.mxu0 %v525
    %2610 = vmatprep.subr.mxu0 %v534
    %2611 = vmatpush1.msra.mxu0 %v533
    %2612 = vmatprep.subr.mxu0 %v542
    %2613 = vmatpush1.msra.mxu0 %v541
    %2614 = vmatprep.subr.mxu0 %v550
    %2615 = vmatpush1.msra.mxu0 %v549
    %2616 = vmatprep.subr.mxu0 %v558
    %2617 = vmatpush1.msra.mxu0 %v557
    %2618 = vmatprep.subr.mxu0 %v566
    %2619 = vmatpush1.msra.mxu0 %v565
    %2620 = vmatprep.subr.mxu0 %v574
    %2621 = vmatpush1.msra.mxu0 %v573
    %2622 = vmatprep.subr.mxu0 %v582
    %2623 = vmatpush1.msra.mxu0 %v581
    %2624 = vmatprep.subr.mxu0 %v590
    %2625 = vmatpush1.msra.mxu0 %v589
    %2626 = vmatprep.subr.mxu0 %v598
    %2627 = vmatpush1.msra.mxu0 %v597
    %2628 = vmatprep.subr.mxu0 %v606
    %2629 = vmatpush1.msra.mxu0 %v605
    %2630 = vmatprep.mubr.f32.mxu0 %v98
    %2631 = vmatmul.mubr.f32.gmra.mrb[0].mxu0 %v97
    %v2632 = vpop.f32.mrb[0].mxu0
    %v2633 = vadd.f32 %v2562, %v2632
    %v2634 = vpop.f32.mrb[0].mxu0
    %v2635 = vadd.f32 %v2564, %v2634
    %2636 = vdwg.mxu0
    %2637 = vmatprep.subr.mxu0 %v614
    %2638 = vmatpush1.msra.mxu0 %v613
    %2639 = vmatprep.subr.mxu0 %v622
    %2640 = vmatpush1.msra.mxu0 %v621
    %2641 = vmatprep.subr.mxu0 %v630
    %2642 = vmatpush1.msra.mxu0 %v629
    %2643 = vmatprep.subr.mxu0 %v638
    %2644 = vmatpush1.msra.mxu0 %v637
    %2645 = vmatprep.subr.mxu0 %v646
    %2646 = vmatpush1.msra.mxu0 %v645
    %2647 = vmatprep.subr.mxu0 %v654
    %2648 = vmatpush1.msra.mxu0 %v653
    %2649 = vmatprep.subr.mxu0 %v662
    %2650 = vmatpush1.msra.mxu0 %v661
    %2651 = vmatprep.subr.mxu0 %v670
    %2652 = vmatpush1.msra.mxu0 %v669
    %2653 = vmatprep.subr.mxu0 %v678
    %2654 = vmatpush1.msra.mxu0 %v677
    %2655 = vmatprep.subr.mxu0 %v686
    %2656 = vmatpush1.msra.mxu0 %v685
    %2657 = vmatprep.subr.mxu0 %v694
    %2658 = vmatpush1.msra.mxu0 %v693
    %2659 = vmatprep.subr.mxu0 %v702
    %2660 = vmatpush1.msra.mxu0 %v701
    %2661 = vmatprep.subr.mxu0 %v710
    %2662 = vmatpush1.msra.mxu0 %v709
    %2663 = vmatprep.subr.mxu0 %v718
    %2664 = vmatpush1.msra.mxu0 %v717
    %2665 = vmatprep.subr.mxu0 %v726
    %2666 = vmatpush1.msra.mxu0 %v725
    %2667 = vmatprep.subr.mxu0 %v734
    %2668 = vmatpush1.msra.mxu0 %v733
    %2669 = vmatprep.subr.mxu0 %v742
    %2670 = vmatpush1.msra.mxu0 %v741
    %2671 = vmatprep.subr.mxu0 %v750
    %2672 = vmatpush1.msra.mxu0 %v749
    %2673 = vmatprep.subr.mxu0 %v758
    %2674 = vmatpush1.msra.mxu0 %v757
    %2675 = vmatprep.subr.mxu0 %v766
    %2676 = vmatpush1.msra.mxu0 %v765
    %2677 = vmatprep.subr.mxu0 %v774
    %2678 = vmatpush1.msra.mxu0 %v773
    %2679 = vmatprep.subr.mxu0 %v782
    %2680 = vmatpush1.msra.mxu0 %v781
    %2681 = vmatprep.subr.mxu0 %v790
    %2682 = vmatpush1.msra.mxu0 %v789
    %2683 = vmatprep.subr.mxu0 %v798
    %2684 = vmatpush1.msra.mxu0 %v797
    %2685 = vmatprep.subr.mxu0 %v806
    %2686 = vmatpush1.msra.mxu0 %v805
    %2687 = vmatprep.subr.mxu0 %v814
    %2688 = vmatpush1.msra.mxu0 %v813
    %2689 = vmatprep.subr.mxu0 %v822
    %2690 = vmatpush1.msra.mxu0 %v821
    %2691 = vmatprep.subr.mxu0 %v830
    %2692 = vmatpush1.msra.mxu0 %v829
    %2693 = vmatprep.subr.mxu0 %v838
    %2694 = vmatpush1.msra.mxu0 %v837
    %2695 = vmatprep.subr.mxu0 %v846
    %2696 = vmatpush1.msra.mxu0 %v845
    %2697 = vmatprep.subr.mxu0 %v854
    %2698 = vmatpush1.msra.mxu0 %v853
    %2699 = vmatprep.subr.mxu0 %v862
    %2700 = vmatpush1.msra.mxu0 %v861
    %2701 = vmatprep.mubr.f32.mxu0 %v100
    %2702 = vmatmul.mubr.f32.gmra.mrb[0].mxu0 %v99
    %v2703 = vpop.f32.mrb[0].mxu0
    %v2704 = vadd.f32 %v2633, %v2703
    %v2705 = vpop.f32.mrb[0].mxu0
    %v2706 = vadd.f32 %v2635, %v2705
    %2707 = vdwg.mxu0
    %2708 = vmatprep.subr.mxu0 %v104
    %2709 = vmatpush1.msra.mxu0 %v103
    %2710 = vmatprep.subr.mxu0 %v112
    %2711 = vmatpush1.msra.mxu0 %v111
    %2712 = vmatprep.subr.mxu0 %v120
    %2713 = vmatpush1.msra.mxu0 %v119
    %2714 = vmatprep.subr.mxu0 %v128
    %2715 = vmatpush1.msra.mxu0 %v127
    %2716 = vmatprep.subr.mxu0 %v136
    %2717 = vmatpush1.msra.mxu0 %v135
    %2718 = vmatprep.subr.mxu0 %v144
    %2719 = vmatpush1.msra.mxu0 %v143
    %2720 = vmatprep.subr.mxu0 %v152
    %2721 = vmatpush1.msra.mxu0 %v151
    %2722 = vmatprep.subr.mxu0 %v160
    %2723 = vmatpush1.msra.mxu0 %v159
    %2724 = vmatprep.subr.mxu0 %v168
    %2725 = vmatpush1.msra.mxu0 %v167
    %2726 = vmatprep.subr.mxu0 %v176
    %2727 = vmatpush1.msra.mxu0 %v175
    %2728 = vmatprep.subr.mxu0 %v184
    %2729 = vmatpush1.msra.mxu0 %v183
    %2730 = vmatprep.subr.mxu0 %v192
    %2731 = vmatpush1.msra.mxu0 %v191
    %2732 = vmatprep.subr.mxu0 %v200
    %2733 = vmatpush1.msra.mxu0 %v199
    %2734 = vmatprep.subr.mxu0 %v208
    %2735 = vmatpush1.msra.mxu0 %v207
    %2736 = vmatprep.subr.mxu0 %v216
    %2737 = vmatpush1.msra.mxu0 %v215
    %2738 = vmatprep.subr.mxu0 %v224
    %2739 = vmatpush1.msra.mxu0 %v223
    %2740 = vmatprep.subr.mxu0 %v232
    %2741 = vmatpush1.msra.mxu0 %v231
    %2742 = vmatprep.subr.mxu0 %v240
    %2743 = vmatpush1.msra.mxu0 %v239
    %2744 = vmatprep.subr.mxu0 %v248
    %2745 = vmatpush1.msra.mxu0 %v247
    %2746 = vmatprep.subr.mxu0 %v256
    %2747 = vmatpush1.msra.mxu0 %v255
    %2748 = vmatprep.subr.mxu0 %v264
    %2749 = vmatpush1.msra.mxu0 %v263
    %2750 = vmatprep.subr.mxu0 %v272
    %2751 = vmatpush1.msra.mxu0 %v271
    %2752 = vmatprep.subr.mxu0 %v280
    %2753 = vmatpush1.msra.mxu0 %v279
    %2754 = vmatprep.subr.mxu0 %v288
    %2755 = vmatpush1.msra.mxu0 %v287
    %2756 = vmatprep.subr.mxu0 %v296
    %2757 = vmatpush1.msra.mxu0 %v295
    %2758 = vmatprep.subr.mxu0 %v304
    %2759 = vmatpush1.msra.mxu0 %v303
    %2760 = vmatprep.subr.mxu0 %v312
    %2761 = vmatpush1.msra.mxu0 %v311
    %2762 = vmatprep.subr.mxu0 %v320
    %2763 = vmatpush1.msra.mxu0 %v319
    %2764 = vmatprep.subr.mxu0 %v328
    %2765 = vmatpush1.msra.mxu0 %v327
    %2766 = vmatprep.subr.mxu0 %v336
    %2767 = vmatpush1.msra.mxu0 %v335
    %2768 = vmatprep.subr.mxu0 %v344
    %2769 = vmatpush1.msra.mxu0 %v343
    %2770 = vmatprep.subr.mxu0 %v352
    %2771 = vmatpush1.msra.mxu0 %v351
    %2772 = vmatprep.mubr.f32.mxu0 %v96
    %2773 = vmatmul.mubr.f32.gmra.mrb[0].mxu0 %v95
    %v2774 = vpop.f32.mrb[0].mxu0
    %v2775 = vadd.f32 %v2065, %v2774
    %v2776 = vpop.f32.mrb[0].mxu0
    %v2777 = vadd.f32 %v2067, %v2776
    %2778 = vdwg.mxu0
    %2779 = vmatprep.subr.mxu0 %v360
    %2780 = vmatpush1.msra.mxu0 %v359
    %2781 = vmatprep.subr.mxu0 %v368
    %2782 = vmatpush1.msra.mxu0 %v367
    %2783 = vmatprep.subr.mxu0 %v376
    %2784 = vmatpush1.msra.mxu0 %v375
    %2785 = vmatprep.subr.mxu0 %v384
    %2786 = vmatpush1.msra.mxu0 %v383
    %2787 = vmatprep.subr.mxu0 %v392
    %2788 = vmatpush1.msra.mxu0 %v391
    %2789 = vmatprep.subr.mxu0 %v400
    %2790 = vmatpush1.msra.mxu0 %v399
    %2791 = vmatprep.subr.mxu0 %v408
    %2792 = vmatpush1.msra.mxu0 %v407
    %2793 = vmatprep.subr.mxu0 %v416
    %2794 = vmatpush1.msra.mxu0 %v415
    %2795 = vmatprep.subr.mxu0 %v424
    %2796 = vmatpush1.msra.mxu0 %v423
    %2797 = vmatprep.subr.mxu0 %v432
    %2798 = vmatpush1.msra.mxu0 %v431
    %2799 = vmatprep.subr.mxu0 %v440
    %2800 = vmatpush1.msra.mxu0 %v439
    %2801 = vmatprep.subr.mxu0 %v448
    %2802 = vmatpush1.msra.mxu0 %v447
    %2803 = vmatprep.subr.mxu0 %v456
    %2804 = vmatpush1.msra.mxu0 %v455
    %2805 = vmatprep.subr.mxu0 %v464
    %2806 = vmatpush1.msra.mxu0 %v463
    %2807 = vmatprep.subr.mxu0 %v472
    %2808 = vmatpush1.msra.mxu0 %v471
    %2809 = vmatprep.subr.mxu0 %v480
    %2810 = vmatpush1.msra.mxu0 %v479
    %2811 = vmatprep.subr.mxu0 %v488
    %2812 = vmatpush1.msra.mxu0 %v487
    %2813 = vmatprep.subr.mxu0 %v496
    %2814 = vmatpush1.msra.mxu0 %v495
    %2815 = vmatprep.subr.mxu0 %v504
    %2816 = vmatpush1.msra.mxu0 %v503
    %2817 = vmatprep.subr.mxu0 %v512
    %2818 = vmatpush1.msra.mxu0 %v511
    %2819 = vmatprep.subr.mxu0 %v520
    %2820 = vmatpush1.msra.mxu0 %v519
    %2821 = vmatprep.subr.mxu0 %v528
    %2822 = vmatpush1.msra.mxu0 %v527
    %2823 = vmatprep.subr.mxu0 %v536
    %2824 = vmatpush1.msra.mxu0 %v535
    %2825 = vmatprep.subr.mxu0 %v544
    %2826 = vmatpush1.msra.mxu0 %v543
    %2827 = vmatprep.subr.mxu0 %v552
    %2828 = vmatpush1.msra.mxu0 %v551
    %2829 = vmatprep.subr.mxu0 %v560
    %2830 = vmatpush1.msra.mxu0 %v559
    %2831 = vmatprep.subr.mxu0 %v568
    %2832 = vmatpush1.msra.mxu0 %v567
    %2833 = vmatprep.subr.mxu0 %v576
    %2834 = vmatpush1.msra.mxu0 %v575
    %2835 = vmatprep.subr.mxu0 %v584
    %2836 = vmatpush1.msra.mxu0 %v583
    %2837 = vmatprep.subr.mxu0 %v592
    %2838 = vmatpush1.msra.mxu0 %v591
    %2839 = vmatprep.subr.mxu0 %v600
    %2840 = vmatpush1.msra.mxu0 %v599
    %2841 = vmatprep.subr.mxu0 %v608
    %2842 = vmatpush1.msra.mxu0 %v607
    %2843 = vmatprep.mubr.f32.mxu0 %v98
    %2844 = vmatmul.mubr.f32.gmra.mrb[0].mxu0 %v97
    %v2845 = vpop.f32.mrb[0].mxu0
    %v2846 = vadd.f32 %v2775, %v2845
    %v2847 = vpop.f32.mrb[0].mxu0
    %v2848 = vadd.f32 %v2777, %v2847
    %2849 = vdwg.mxu0
    %2850 = vmatprep.subr.mxu0 %v616
    %2851 = vmatpush1.msra.mxu0 %v615
    %2852 = vmatprep.subr.mxu0 %v624
    %2853 = vmatpush1.msra.mxu0 %v623
    %2854 = vmatprep.subr.mxu0 %v632
    %2855 = vmatpush1.msra.mxu0 %v631
    %2856 = vmatprep.subr.mxu0 %v640
    %2857 = vmatpush1.msra.mxu0 %v639
    %2858 = vmatprep.subr.mxu0 %v648
    %2859 = vmatpush1.msra.mxu0 %v647
    %2860 = vmatprep.subr.mxu0 %v656
    %2861 = vmatpush1.msra.mxu0 %v655
    %2862 = vmatprep.subr.mxu0 %v664
    %2863 = vmatpush1.msra.mxu0 %v663
    %2864 = vmatprep.subr.mxu0 %v672
    %2865 = vmatpush1.msra.mxu0 %v671
    %2866 = vmatprep.subr.mxu0 %v680
    %2867 = vmatpush1.msra.mxu0 %v679
    %2868 = vmatprep.subr.mxu0 %v688
    %2869 = vmatpush1.msra.mxu0 %v687
    %2870 = vmatprep.subr.mxu0 %v696
    %2871 = vmatpush1.msra.mxu0 %v695
    %2872 = vmatprep.subr.mxu0 %v704
    %2873 = vmatpush1.msra.mxu0 %v703
    %2874 = vmatprep.subr.mxu0 %v712
    %2875 = vmatpush1.msra.mxu0 %v711
    %2876 = vmatprep.subr.mxu0 %v720
    %2877 = vmatpush1.msra.mxu0 %v719
    %2878 = vmatprep.subr.mxu0 %v728
    %2879 = vmatpush1.msra.mxu0 %v727
    %2880 = vmatprep.subr.mxu0 %v736
    %2881 = vmatpush1.msra.mxu0 %v735
    %2882 = vmatprep.subr.mxu0 %v744
    %2883 = vmatpush1.msra.mxu0 %v743
    %2884 = vmatprep.subr.mxu0 %v752
    %2885 = vmatpush1.msra.mxu0 %v751
    %2886 = vmatprep.subr.mxu0 %v760
    %2887 = vmatpush1.msra.mxu0 %v759
    %2888 = vmatprep.subr.mxu0 %v768
    %2889 = vmatpush1.msra.mxu0 %v767
    %2890 = vmatprep.subr.mxu0 %v776
    %2891 = vmatpush1.msra.mxu0 %v775
    %2892 = vmatprep.subr.mxu0 %v784
    %2893 = vmatpush1.msra.mxu0 %v783
    %2894 = vmatprep.subr.mxu0 %v792
    %2895 = vmatpush1.msra.mxu0 %v791
    %2896 = vmatprep.subr.mxu0 %v800
    %2897 = vmatpush1.msra.mxu0 %v799
    %2898 = vmatprep.subr.mxu0 %v808
    %2899 = vmatpush1.msra.mxu0 %v807
    %2900 = vmatprep.subr.mxu0 %v816
    %2901 = vmatpush1.msra.mxu0 %v815
    %2902 = vmatprep.subr.mxu0 %v824
    %2903 = vmatpush1.msra.mxu0 %v823
    %2904 = vmatprep.subr.mxu0 %v832
    %2905 = vmatpush1.msra.mxu0 %v831
    %2906 = vmatprep.subr.mxu0 %v840
    %2907 = vmatpush1.msra.mxu0 %v839
    %2908 = vmatprep.subr.mxu0 %v848
    %2909 = vmatpush1.msra.mxu0 %v847
    %2910 = vmatprep.subr.mxu0 %v856
    %2911 = vmatpush1.msra.mxu0 %v855
    %2912 = vmatprep.subr.mxu0 %v864
    %2913 = vmatpush1.msra.mxu0 %v863
    %2914 = vmatprep.mubr.f32.mxu0 %v100
    %2915 = vmatmul.mubr.f32.gmra.mrb[0].mxu0 %v99
    %v2916 = vpop.f32.mrb[0].mxu0
    %v2917 = vadd.f32 %v2846, %v2916
    %v2918 = vpop.f32.mrb[0].mxu0
    %v2919 = vadd.f32 %v2848, %v2918
    %2920 = vdwg.mxu0
    %2921 = vmatprep.subr.mxu0 %v106
    %2922 = vmatpush1.msra.mxu0 %v105
    %2923 = vmatprep.subr.mxu0 %v114
    %2924 = vmatpush1.msra.mxu0 %v113
    %2925 = vmatprep.subr.mxu0 %v122
    %2926 = vmatpush1.msra.mxu0 %v121
    %2927 = vmatprep.subr.mxu0 %v130
    %2928 = vmatpush1.msra.mxu0 %v129
    %2929 = vmatprep.subr.mxu0 %v138
    %2930 = vmatpush1.msra.mxu0 %v137
    %2931 = vmatprep.subr.mxu0 %v146
    %2932 = vmatpush1.msra.mxu0 %v145
    %2933 = vmatprep.subr.mxu0 %v154
    %2934 = vmatpush1.msra.mxu0 %v153
    %2935 = vmatprep.subr.mxu0 %v162
    %2936 = vmatpush1.msra.mxu0 %v161
    %2937 = vmatprep.subr.mxu0 %v170
    %2938 = vmatpush1.msra.mxu0 %v169
    %2939 = vmatprep.subr.mxu0 %v178
    %2940 = vmatpush1.msra.mxu0 %v177
    %2941 = vmatprep.subr.mxu0 %v186
    %2942 = vmatpush1.msra.mxu0 %v185
    %2943 = vmatprep.subr.mxu0 %v194
    %2944 = vmatpush1.msra.mxu0 %v193
    %2945 = vmatprep.subr.mxu0 %v202
    %2946 = vmatpush1.msra.mxu0 %v201
    %2947 = vmatprep.subr.mxu0 %v210
    %2948 = vmatpush1.msra.mxu0 %v209
    %2949 = vmatprep.subr.mxu0 %v218
    %2950 = vmatpush1.msra.mxu0 %v217
    %2951 = vmatprep.subr.mxu0 %v226
    %2952 = vmatpush1.msra.mxu0 %v225
    %2953 = vmatprep.subr.mxu0 %v234
    %2954 = vmatpush1.msra.mxu0 %v233
    %2955 = vmatprep.subr.mxu0 %v242
    %2956 = vmatpush1.msra.mxu0 %v241
    %2957 = vmatprep.subr.mxu0 %v250
    %2958 = vmatpush1.msra.mxu0 %v249
    %2959 = vmatprep.subr.mxu0 %v258
    %2960 = vmatpush1.msra.mxu0 %v257
    %2961 = vmatprep.subr.mxu0 %v266
    %2962 = vmatpush1.msra.mxu0 %v265
    %2963 = vmatprep.subr.mxu0 %v274
    %2964 = vmatpush1.msra.mxu0 %v273
    %2965 = vmatprep.subr.mxu0 %v282
    %2966 = vmatpush1.msra.mxu0 %v281
    %2967 = vmatprep.subr.mxu0 %v290
    %2968 = vmatpush1.msra.mxu0 %v289
    %2969 = vmatprep.subr.mxu0 %v298
    %2970 = vmatpush1.msra.mxu0 %v297
    %2971 = vmatprep.subr.mxu0 %v306
    %2972 = vmatpush1.msra.mxu0 %v305
    %2973 = vmatprep.subr.mxu0 %v314
    %2974 = vmatpush1.msra.mxu0 %v313
    %2975 = vmatprep.subr.mxu0 %v322
    %2976 = vmatpush1.msra.mxu0 %v321
    %2977 = vmatprep.subr.mxu0 %v330
    %2978 = vmatpush1.msra.mxu0 %v329
    %2979 = vmatprep.subr.mxu0 %v338
    %2980 = vmatpush1.msra.mxu0 %v337
    %2981 = vmatprep.subr.mxu0 %v346
    %2982 = vmatpush1.msra.mxu0 %v345
    %2983 = vmatprep.subr.mxu0 %v354
    %2984 = vmatpush1.msra.mxu0 %v353
    %2985 = vmatprep.mubr.f32.mxu0 %v96
    %2986 = vmatmul.mubr.f32.gmra.mrb[0].mxu0 %v95
    %v2987 = vpop.f32.mrb[0].mxu0
    %v2988 = vadd.f32 %v2278, %v2987
    %v2989 = vpop.f32.mrb[0].mxu0
    %v2990 = vadd.f32 %v2280, %v2989
    %2991 = vdwg.mxu0
    %2992 = vmatprep.subr.mxu0 %v362
    %2993 = vmatpush1.msra.mxu0 %v361
    %2994 = vmatprep.subr.mxu0 %v370
    %2995 = vmatpush1.msra.mxu0 %v369
    %2996 = vmatprep.subr.mxu0 %v378
    %2997 = vmatpush1.msra.mxu0 %v377
    %2998 = vmatprep.subr.mxu0 %v386
    %2999 = vmatpush1.msra.mxu0 %v385
    %3000 = vmatprep.subr.mxu0 %v394
    %3001 = vmatpush1.msra.mxu0 %v393
    %3002 = vmatprep.subr.mxu0 %v402
    %3003 = vmatpush1.msra.mxu0 %v401
    %3004 = vmatprep.subr.mxu0 %v410
    %3005 = vmatpush1.msra.mxu0 %v409
    %3006 = vmatprep.subr.mxu0 %v418
    %3007 = vmatpush1.msra.mxu0 %v417
    %3008 = vmatprep.subr.mxu0 %v426
    %3009 = vmatpush1.msra.mxu0 %v425
    %3010 = vmatprep.subr.mxu0 %v434
    %3011 = vmatpush1.msra.mxu0 %v433
    %3012 = vmatprep.subr.mxu0 %v442
    %3013 = vmatpush1.msra.mxu0 %v441
    %3014 = vmatprep.subr.mxu0 %v450
    %3015 = vmatpush1.msra.mxu0 %v449
    %3016 = vmatprep.subr.mxu0 %v458
    %3017 = vmatpush1.msra.mxu0 %v457
    %3018 = vmatprep.subr.mxu0 %v466
    %3019 = vmatpush1.msra.mxu0 %v465
    %3020 = vmatprep.subr.mxu0 %v474
    %3021 = vmatpush1.msra.mxu0 %v473
    %3022 = vmatprep.subr.mxu0 %v482
    %3023 = vmatpush1.msra.mxu0 %v481
    %3024 = vmatprep.subr.mxu0 %v490
    %3025 = vmatpush1.msra.mxu0 %v489
    %3026 = vmatprep.subr.mxu0 %v498
    %3027 = vmatpush1.msra.mxu0 %v497
    %3028 = vmatprep.subr.mxu0 %v506
    %3029 = vmatpush1.msra.mxu0 %v505
    %3030 = vmatprep.subr.mxu0 %v514
    %3031 = vmatpush1.msra.mxu0 %v513
    %3032 = vmatprep.subr.mxu0 %v522
    %3033 = vmatpush1.msra.mxu0 %v521
    %3034 = vmatprep.subr.mxu0 %v530
    %3035 = vmatpush1.msra.mxu0 %v529
    %3036 = vmatprep.subr.mxu0 %v538
    %3037 = vmatpush1.msra.mxu0 %v537
    %3038 = vmatprep.subr.mxu0 %v546
    %3039 = vmatpush1.msra.mxu0 %v545
    %3040 = vmatprep.subr.mxu0 %v554
    %3041 = vmatpush1.msra.mxu0 %v553
    %3042 = vmatprep.subr.mxu0 %v562
    %3043 = vmatpush1.msra.mxu0 %v561
    %3044 = vmatprep.subr.mxu0 %v570
    %3045 = vmatpush1.msra.mxu0 %v569
    %3046 = vmatprep.subr.mxu0 %v578
    %3047 = vmatpush1.msra.mxu0 %v577
    %3048 = vmatprep.subr.mxu0 %v586
    %3049 = vmatpush1.msra.mxu0 %v585
    %3050 = vmatprep.subr.mxu0 %v594
    %3051 = vmatpush1.msra.mxu0 %v593
    %3052 = vmatprep.subr.mxu0 %v602
    %3053 = vmatpush1.msra.mxu0 %v601
    %3054 = vmatprep.subr.mxu0 %v610
    %3055 = vmatpush1.msra.mxu0 %v609
    %3056 = vmatprep.mubr.f32.mxu0 %v98
    %3057 = vmatmul.mubr.f32.gmra.mrb[0].mxu0 %v97
    %v3058 = vpop.f32.mrb[0].mxu0
    %v3059 = vadd.f32 %v2988, %v3058
    %v3060 = vpop.f32.mrb[0].mxu0
    %v3061 = vadd.f32 %v2990, %v3060
    %3062 = vdwg.mxu0
    %3063 = vmatprep.subr.mxu0 %v618
    %3064 = vmatpush1.msra.mxu0 %v617
    %3065 = vmatprep.subr.mxu0 %v626
    %3066 = vmatpush1.msra.mxu0 %v625
    %3067 = vmatprep.subr.mxu0 %v634
    %3068 = vmatpush1.msra.mxu0 %v633
    %3069 = vmatprep.subr.mxu0 %v642
    %3070 = vmatpush1.msra.mxu0 %v641
    %3071 = vmatprep.subr.mxu0 %v650
    %3072 = vmatpush1.msra.mxu0 %v649
    %3073 = vmatprep.subr.mxu0 %v658
    %3074 = vmatpush1.msra.mxu0 %v657
    %3075 = vmatprep.subr.mxu0 %v666
    %3076 = vmatpush1.msra.mxu0 %v665
    %3077 = vmatprep.subr.mxu0 %v674
    %3078 = vmatpush1.msra.mxu0 %v673
    %3079 = vmatprep.subr.mxu0 %v682
    %3080 = vmatpush1.msra.mxu0 %v681
    %3081 = vmatprep.subr.mxu0 %v690
    %3082 = vmatpush1.msra.mxu0 %v689
    %3083 = vmatprep.subr.mxu0 %v698
    %3084 = vmatpush1.msra.mxu0 %v697
    %3085 = vmatprep.subr.mxu0 %v706
    %3086 = vmatpush1.msra.mxu0 %v705
    %3087 = vmatprep.subr.mxu0 %v714
    %3088 = vmatpush1.msra.mxu0 %v713
    %3089 = vmatprep.subr.mxu0 %v722
    %3090 = vmatpush1.msra.mxu0 %v721
    %3091 = vmatprep.subr.mxu0 %v730
    %3092 = vmatpush1.msra.mxu0 %v729
    %3093 = vmatprep.subr.mxu0 %v738
    %3094 = vmatpush1.msra.mxu0 %v737
    %3095 = vmatprep.subr.mxu0 %v746
    %3096 = vmatpush1.msra.mxu0 %v745
    %3097 = vmatprep.subr.mxu0 %v754
    %3098 = vmatpush1.msra.mxu0 %v753
    %3099 = vmatprep.subr.mxu0 %v762
    %3100 = vmatpush1.msra.mxu0 %v761
    %3101 = vmatprep.subr.mxu0 %v770
    %3102 = vmatpush1.msra.mxu0 %v769
    %3103 = vmatprep.subr.mxu0 %v778
    %3104 = vmatpush1.msra.mxu0 %v777
    %3105 = vmatprep.subr.mxu0 %v786
    %3106 = vmatpush1.msra.mxu0 %v785
    %3107 = vmatprep.subr.mxu0 %v794
    %3108 = vmatpush1.msra.mxu0 %v793
    %3109 = vmatprep.subr.mxu0 %v802
    %3110 = vmatpush1.msra.mxu0 %v801
    %3111 = vmatprep.subr.mxu0 %v810
    %3112 = vmatpush1.msra.mxu0 %v809
    %3113 = vmatprep.subr.mxu0 %v818
    %3114 = vmatpush1.msra.mxu0 %v817
    %3115 = vmatprep.subr.mxu0 %v826
    %3116 = vmatpush1.msra.mxu0 %v825
    %3117 = vmatprep.subr.mxu0 %v834
    %3118 = vmatpush1.msra.mxu0 %v833
    %3119 = vmatprep.subr.mxu0 %v842
    %3120 = vmatpush1.msra.mxu0 %v841
    %3121 = vmatprep.subr.mxu0 %v850
    %3122 = vmatpush1.msra.mxu0 %v849
    %3123 = vmatprep.subr.mxu0 %v858
    %3124 = vmatpush1.msra.mxu0 %v857
    %3125 = vmatprep.subr.mxu0 %v866
    %3126 = vmatpush1.msra.mxu0 %v865
    %3127 = vmatprep.mubr.f32.mxu0 %v100
    %3128 = vmatmul.mubr.f32.gmra.mrb[0].mxu0 %v99
    %v3129 = vpop.f32.mrb[0].mxu0
    %v3130 = vadd.f32 %v3059, %v3129
    %v3131 = vpop.f32.mrb[0].mxu0
    %v3132 = vadd.f32 %v3061, %v3131
    %3133 = vdwg.mxu0
    %3134 = vmatprep.subr.mxu0 %v108
    %3135 = vmatpush1.msra.mxu0 %v107
    %3136 = vmatprep.subr.mxu0 %v116
    %3137 = vmatpush1.msra.mxu0 %v115
    %3138 = vmatprep.subr.mxu0 %v124
    %3139 = vmatpush1.msra.mxu0 %v123
    %3140 = vmatprep.subr.mxu0 %v132
    %3141 = vmatpush1.msra.mxu0 %v131
    %3142 = vmatprep.subr.mxu0 %v140
    %3143 = vmatpush1.msra.mxu0 %v139
    %3144 = vmatprep.subr.mxu0 %v148
    %3145 = vmatpush1.msra.mxu0 %v147
    %3146 = vmatprep.subr.mxu0 %v156
    %3147 = vmatpush1.msra.mxu0 %v155
    %3148 = vmatprep.subr.mxu0 %v164
    %3149 = vmatpush1.msra.mxu0 %v163
    %3150 = vmatprep.subr.mxu0 %v172
    %3151 = vmatpush1.msra.mxu0 %v171
    %3152 = vmatprep.subr.mxu0 %v180
    %3153 = vmatpush1.msra.mxu0 %v179
    %3154 = vmatprep.subr.mxu0 %v188
    %3155 = vmatpush1.msra.mxu0 %v187
    %3156 = vmatprep.subr.mxu0 %v196
    %3157 = vmatpush1.msra.mxu0 %v195
    %3158 = vmatprep.subr.mxu0 %v204
    %3159 = vmatpush1.msra.mxu0 %v203
    %3160 = vmatprep.subr.mxu0 %v212
    %3161 = vmatpush1.msra.mxu0 %v211
    %3162 = vmatprep.subr.mxu0 %v220
    %3163 = vmatpush1.msra.mxu0 %v219
    %3164 = vmatprep.subr.mxu0 %v228
    %3165 = vmatpush1.msra.mxu0 %v227
    %3166 = vmatprep.subr.mxu0 %v236
    %3167 = vmatpush1.msra.mxu0 %v235
    %3168 = vmatprep.subr.mxu0 %v244
    %3169 = vmatpush1.msra.mxu0 %v243
    %3170 = vmatprep.subr.mxu0 %v252
    %3171 = vmatpush1.msra.mxu0 %v251
    %3172 = vmatprep.subr.mxu0 %v260
    %3173 = vmatpush1.msra.mxu0 %v259
    %3174 = vmatprep.subr.mxu0 %v268
    %3175 = vmatpush1.msra.mxu0 %v267
    %3176 = vmatprep.subr.mxu0 %v276
    %3177 = vmatpush1.msra.mxu0 %v275
    %3178 = vmatprep.subr.mxu0 %v284
    %3179 = vmatpush1.msra.mxu0 %v283
    %3180 = vmatprep.subr.mxu0 %v292
    %3181 = vmatpush1.msra.mxu0 %v291
    %3182 = vmatprep.subr.mxu0 %v300
    %3183 = vmatpush1.msra.mxu0 %v299
    %3184 = vmatprep.subr.mxu0 %v308
    %3185 = vmatpush1.msra.mxu0 %v307
    %3186 = vmatprep.subr.mxu0 %v316
    %3187 = vmatpush1.msra.mxu0 %v315
    %3188 = vmatprep.subr.mxu0 %v324
    %3189 = vmatpush1.msra.mxu0 %v323
    %3190 = vmatprep.subr.mxu0 %v332
    %3191 = vmatpush1.msra.mxu0 %v331
    %3192 = vmatprep.subr.mxu0 %v340
    %3193 = vmatpush1.msra.mxu0 %v339
    %3194 = vmatprep.subr.mxu0 %v348
    %3195 = vmatpush1.msra.mxu0 %v347
    %3196 = vmatprep.subr.mxu0 %v356
    %3197 = vmatpush1.msra.mxu0 %v355
    %3198 = vmatprep.mubr.f32.mxu0 %v96
    %3199 = vmatmul.mubr.f32.gmra.mrb[0].mxu0 %v95
    %v3200 = vpop.f32.mrb[0].mxu0
    %v3201 = vadd.f32 %v2491, %v3200
    %v3202 = vpop.f32.mrb[0].mxu0
    %v3203 = vadd.f32 %v2493, %v3202
    %3204 = vdwg.mxu0
    %3205 = vmatprep.subr.mxu0 %v364
    %3206 = vmatpush1.msra.mxu0 %v363
    %3207 = vmatprep.subr.mxu0 %v372
    %3208 = vmatpush1.msra.mxu0 %v371
    %3209 = vmatprep.subr.mxu0 %v380
    %3210 = vmatpush1.msra.mxu0 %v379
    %3211 = vmatprep.subr.mxu0 %v388
    %3212 = vmatpush1.msra.mxu0 %v387
    %3213 = vmatprep.subr.mxu0 %v396
    %3214 = vmatpush1.msra.mxu0 %v395
    %3215 = vmatprep.subr.mxu0 %v404
    %3216 = vmatpush1.msra.mxu0 %v403
    %3217 = vmatprep.subr.mxu0 %v412
    %3218 = vmatpush1.msra.mxu0 %v411
    %3219 = vmatprep.subr.mxu0 %v420
    %3220 = vmatpush1.msra.mxu0 %v419
    %3221 = vmatprep.subr.mxu0 %v428
    %3222 = vmatpush1.msra.mxu0 %v427
    %3223 = vmatprep.subr.mxu0 %v436
    %3224 = vmatpush1.msra.mxu0 %v435
    %3225 = vmatprep.subr.mxu0 %v444
    %3226 = vmatpush1.msra.mxu0 %v443
    %3227 = vmatprep.subr.mxu0 %v452
    %3228 = vmatpush1.msra.mxu0 %v451
    %3229 = vmatprep.subr.mxu0 %v460
    %3230 = vmatpush1.msra.mxu0 %v459
    %3231 = vmatprep.subr.mxu0 %v468
    %3232 = vmatpush1.msra.mxu0 %v467
    %3233 = vmatprep.subr.mxu0 %v476
    %3234 = vmatpush1.msra.mxu0 %v475
    %3235 = vmatprep.subr.mxu0 %v484
    %3236 = vmatpush1.msra.mxu0 %v483
    %3237 = vmatprep.subr.mxu0 %v492
    %3238 = vmatpush1.msra.mxu0 %v491
    %3239 = vmatprep.subr.mxu0 %v500
    %3240 = vmatpush1.msra.mxu0 %v499
    %3241 = vmatprep.subr.mxu0 %v508
    %3242 = vmatpush1.msra.mxu0 %v507
    %3243 = vmatprep.subr.mxu0 %v516
    %3244 = vmatpush1.msra.mxu0 %v515
    %3245 = vmatprep.subr.mxu0 %v524
    %3246 = vmatpush1.msra.mxu0 %v523
    %3247 = vmatprep.subr.mxu0 %v532
    %3248 = vmatpush1.msra.mxu0 %v531
    %3249 = vmatprep.subr.mxu0 %v540
    %3250 = vmatpush1.msra.mxu0 %v539
    %3251 = vmatprep.subr.mxu0 %v548
    %3252 = vmatpush1.msra.mxu0 %v547
    %3253 = vmatprep.subr.mxu0 %v556
    %3254 = vmatpush1.msra.mxu0 %v555
    %3255 = vmatprep.subr.mxu0 %v564
    %3256 = vmatpush1.msra.mxu0 %v563
    %3257 = vmatprep.subr.mxu0 %v572
    %3258 = vmatpush1.msra.mxu0 %v571
    %3259 = vmatprep.subr.mxu0 %v580
    %3260 = vmatpush1.msra.mxu0 %v579
    %3261 = vmatprep.subr.mxu0 %v588
    %3262 = vmatpush1.msra.mxu0 %v587
    %3263 = vmatprep.subr.mxu0 %v596
    %3264 = vmatpush1.msra.mxu0 %v595
    %3265 = vmatprep.subr.mxu0 %v604
    %3266 = vmatpush1.msra.mxu0 %v603
    %3267 = vmatprep.subr.mxu0 %v612
    %3268 = vmatpush1.msra.mxu0 %v611
    %3269 = vmatprep.mubr.f32.mxu0 %v98
    %3270 = vmatmul.mubr.f32.gmra.mrb[0].mxu0 %v97
    %v3271 = vpop.f32.mrb[0].mxu0
    %v3272 = vadd.f32 %v3201, %v3271
    %v3273 = vpop.f32.mrb[0].mxu0
    %v3274 = vadd.f32 %v3203, %v3273
    %3275 = vdwg.mxu0
    %3276 = vmatprep.subr.mxu0 %v620
    %3277 = vmatpush1.msra.mxu0 %v619
    %3278 = vmatprep.subr.mxu0 %v628
    %3279 = vmatpush1.msra.mxu0 %v627
    %3280 = vmatprep.subr.mxu0 %v636
    %3281 = vmatpush1.msra.mxu0 %v635
    %3282 = vmatprep.subr.mxu0 %v644
    %3283 = vmatpush1.msra.mxu0 %v643
    %3284 = vmatprep.subr.mxu0 %v652
    %3285 = vmatpush1.msra.mxu0 %v651
    %3286 = vmatprep.subr.mxu0 %v660
    %3287 = vmatpush1.msra.mxu0 %v659
    %3288 = vmatprep.subr.mxu0 %v668
    %3289 = vmatpush1.msra.mxu0 %v667
    %3290 = vmatprep.subr.mxu0 %v676
    %3291 = vmatpush1.msra.mxu0 %v675
    %3292 = vmatprep.subr.mxu0 %v684
    %3293 = vmatpush1.msra.mxu0 %v683
    %3294 = vmatprep.subr.mxu0 %v692
    %3295 = vmatpush1.msra.mxu0 %v691
    %3296 = vmatprep.subr.mxu0 %v700
    %3297 = vmatpush1.msra.mxu0 %v699
    %3298 = vmatprep.subr.mxu0 %v708
    %3299 = vmatpush1.msra.mxu0 %v707
    %3300 = vmatprep.subr.mxu0 %v716
    %3301 = vmatpush1.msra.mxu0 %v715
    %3302 = vmatprep.subr.mxu0 %v724
    %3303 = vmatpush1.msra.mxu0 %v723
    %3304 = vmatprep.subr.mxu0 %v732
    %3305 = vmatpush1.msra.mxu0 %v731
    %3306 = vmatprep.subr.mxu0 %v740
    %3307 = vmatpush1.msra.mxu0 %v739
    %3308 = vmatprep.subr.mxu0 %v748
    %3309 = vmatpush1.msra.mxu0 %v747
    %3310 = vmatprep.subr.mxu0 %v756
    %3311 = vmatpush1.msra.mxu0 %v755
    %3312 = vmatprep.subr.mxu0 %v764
    %3313 = vmatpush1.msra.mxu0 %v763
    %3314 = vmatprep.subr.mxu0 %v772
    %3315 = vmatpush1.msra.mxu0 %v771
    %3316 = vmatprep.subr.mxu0 %v780
    %3317 = vmatpush1.msra.mxu0 %v779
    %3318 = vmatprep.subr.mxu0 %v788
    %3319 = vmatpush1.msra.mxu0 %v787
    %3320 = vmatprep.subr.mxu0 %v796
    %3321 = vmatpush1.msra.mxu0 %v795
    %3322 = vmatprep.subr.mxu0 %v804
    %3323 = vmatpush1.msra.mxu0 %v803
    %3324 = vmatprep.subr.mxu0 %v812
    %3325 = vmatpush1.msra.mxu0 %v811
    %3326 = vmatprep.subr.mxu0 %v820
    %3327 = vmatpush1.msra.mxu0 %v819
    %3328 = vmatprep.subr.mxu0 %v828
    %3329 = vmatpush1.msra.mxu0 %v827
    %3330 = vmatprep.subr.mxu0 %v836
    %3331 = vmatpush1.msra.mxu0 %v835
    %3332 = vmatprep.subr.mxu0 %v844
    %3333 = vmatpush1.msra.mxu0 %v843
    %3334 = vmatprep.subr.mxu0 %v852
    %3335 = vmatpush1.msra.mxu0 %v851
    %3336 = vmatprep.subr.mxu0 %v860
    %3337 = vmatpush1.msra.mxu0 %v859
    %3338 = vmatprep.subr.mxu0 %v868
    %3339 = vmatpush1.msra.mxu0 %v867
    %3340 = vmatprep.mubr.f32.mxu0 %v100
    %3341 = vmatmul.mubr.f32.gmra.mrb[0].mxu0 %v99
    %v3342 = vpop.f32.mrb[0].mxu0
    %v3343 = vadd.f32 %v3272, %v3342
    %v3344 = vpop.f32.mrb[0].mxu0
    %v3345 = vadd.f32 %v3274, %v3344
    %3346 = vdwg.mxu0
    %v3347 = vld [vmem:[#allocation7] sm:$0xff]
    %v3349 = vlaneseq
    %v3350 = vshrl.u32 %v3349, 7
    %v3351 = vsub.s32 0, %v3350
    %v3352 = vrot.slane %v3347, %v3351
    %v3353 = vlaneseq
    %v3354 = vshrl.u32 %v3353, 7
    %v3355 = vsub.s32 1, %v3354
    %v3356 = vrot.slane %v3347, %v3355
    %v3357 = vlaneseq
    %v3358 = vshrl.u32 %v3357, 7
    %v3359 = vsub.s32 2, %v3358
    %v3360 = vrot.slane %v3347, %v3359
    %v3361 = vlaneseq
    %v3362 = vshrl.u32 %v3361, 7
    %v3363 = vsub.s32 3, %v3362
    %v3364 = vrot.slane %v3347, %v3363
    %v3365 = vlaneseq
    %v3366 = vshrl.u32 %v3365, 7
    %v3367 = vsub.s32 4, %v3366
    %v3368 = vrot.slane %v3347, %v3367
    %v3369 = vlaneseq
    %v3370 = vshrl.u32 %v3369, 7
    %v3371 = vsub.s32 5, %v3370
    %v3372 = vrot.slane %v3347, %v3371
    %v3373 = vlaneseq
    %v3374 = vshrl.u32 %v3373, 7
    %v3375 = vsub.s32 6, %v3374
    %v3376 = vrot.slane %v3347, %v3375
    %v3377 = vlaneseq
    %v3378 = vshrl.u32 %v3377, 7
    %v3379 = vsub.s32 7, %v3378
    %v3380 = vrot.slane %v3347, %v3379
    %v3389 = vadd.f32 %v2704, %v3352
    %v3390 = vadd.f32 %v2706, %v3356
    %v3391 = vadd.f32 %v2917, %v3360
    %v3392 = vadd.f32 %v2919, %v3364
    %v3393 = vadd.f32 %v3130, %v3368
    %v3394 = vadd.f32 %v3132, %v3372
    %v3395 = vadd.f32 %v3343, %v3376
    %v3396 = vadd.f32 %v3345, %v3380
    %v3397 = vmax.f32 %v3389, 0.0
    %v3398 = vmax.f32 %v3390, 0.0
    %v3399 = vmax.f32 %v3391, 0.0
    %v3400 = vmax.f32 %v3392, 0.0
    %v3401 = vmax.f32 %v3393, 0.0
    %v3402 = vmax.f32 %v3394, 0.0
    %v3403 = vmax.f32 %v3395, 0.0
    %v3404 = vmax.f32 %v3396, 0.0
    %v3405 = vld [vmem:[%s5] sm:$0xff]
    %v3406 = vld [vmem:[%s5 + $0x8] sm:$0xff]
    %v3407 = vld [vmem:[%s5 + $0x10] sm:$0xff]
    %v3408 = vld [vmem:[%s5 + $0x18] sm:$0xff]
    %v3409 = vld [vmem:[%s5 + $0x20] sm:$0xff]
    %v3410 = vld [vmem:[%s5 + $0x28] sm:$0xff]
    %v3411 = vld [vmem:[%s5 + $0x30] sm:$0xff]
    %v3412 = vld [vmem:[%s5 + $0x38] sm:$0xff]
    %v3413 = vld [vmem:[%s5 + $0x40] sm:$0xff]
    %v3414 = vld [vmem:[%s5 + $0x48] sm:$0xff]
    %v3415 = vld [vmem:[%s5 + $0x50] sm:$0xff]
    %v3416 = vld [vmem:[%s5 + $0x58] sm:$0xff]
    %v3417 = vld [vmem:[%s5 + $0x60] sm:$0xff]
    %v3418 = vld [vmem:[%s5 + $0x68] sm:$0xff]
    %v3419 = vld [vmem:[%s5 + $0x70] sm:$0xff]
    %v3420 = vld [vmem:[%s5 + $0x78] sm:$0xff]
    %v3421 = vld [vmem:[%s5 + $0x80] sm:$0xff]
    %v3422 = vld [vmem:[%s5 + $0x88] sm:$0xff]
    %v3423 = vld [vmem:[%s5 + $0x90] sm:$0xff]
    %v3424 = vld [vmem:[%s5 + $0x98] sm:$0xff]
    %v3425 = vld [vmem:[%s5 + $0xa0] sm:$0xff]
    %v3426 = vld [vmem:[%s5 + $0xa8] sm:$0xff]
    %v3427 = vld [vmem:[%s5 + $0xb0] sm:$0xff]
    %v3428 = vld [vmem:[%s5 + $0xb8] sm:$0xff]
    %v3429 = vld [vmem:[%s5 + $0xc0] sm:$0xff]
    %v3430 = vld [vmem:[%s5 + $0xc8] sm:$0xff]
    %v3431 = vld [vmem:[%s5 + $0xd0] sm:$0xff]
    %v3432 = vld [vmem:[%s5 + $0xd8] sm:$0xff]
    %v3433 = vld [vmem:[%s5 + $0xe0] sm:$0xff]
    %v3434 = vld [vmem:[%s5 + $0xe8] sm:$0xff]
    %v3435 = vld [vmem:[%s5 + $0xf0] sm:$0xff]
    %v3436 = vld [vmem:[%s5 + $0xf8] sm:$0xff]
    %v3437 = vld [vmem:[%s5 + $0x100] sm:$0xff]
    %v3438 = vld [vmem:[%s5 + $0x108] sm:$0xff]
    %v3439 = vld [vmem:[%s5 + $0x110] sm:$0xff]
    %v3440 = vld [vmem:[%s5 + $0x118] sm:$0xff]
    %v3441 = vld [vmem:[%s5 + $0x120] sm:$0xff]
    %v3442 = vld [vmem:[%s5 + $0x128] sm:$0xff]
    %v3443 = vld [vmem:[%s5 + $0x130] sm:$0xff]
    %v3444 = vld [vmem:[%s5 + $0x138] sm:$0xff]
    %v3445 = vld [vmem:[%s5 + $0x140] sm:$0xff]
    %v3446 = vld [vmem:[%s5 + $0x148] sm:$0xff]
    %v3447 = vld [vmem:[%s5 + $0x150] sm:$0xff]
    %v3448 = vld [vmem:[%s5 + $0x158] sm:$0xff]
    %v3449 = vld [vmem:[%s5 + $0x160] sm:$0xff]
    %v3450 = vld [vmem:[%s5 + $0x168] sm:$0xff]
    %v3451 = vld [vmem:[%s5 + $0x170] sm:$0xff]
    %v3452 = vld [vmem:[%s5 + $0x178] sm:$0xff]
    %v3453 = vld [vmem:[%s5 + $0x180] sm:$0xff]
    %v3454 = vld [vmem:[%s5 + $0x188] sm:$0xff]
    %v3455 = vld [vmem:[%s5 + $0x190] sm:$0xff]
    %v3456 = vld [vmem:[%s5 + $0x198] sm:$0xff]
    %v3457 = vld [vmem:[%s5 + $0x1a0] sm:$0xff]
    %v3458 = vld [vmem:[%s5 + $0x1a8] sm:$0xff]
    %v3459 = vld [vmem:[%s5 + $0x1b0] sm:$0xff]
    %v3460 = vld [vmem:[%s5 + $0x1b8] sm:$0xff]
    %v3461 = vld [vmem:[%s5 + $0x1c0] sm:$0xff]
    %v3462 = vld [vmem:[%s5 + $0x1c8] sm:$0xff]
    %v3463 = vld [vmem:[%s5 + $0x1d0] sm:$0xff]
    %v3464 = vld [vmem:[%s5 + $0x1d8] sm:$0xff]
    %v3465 = vld [vmem:[%s5 + $0x1e0] sm:$0xff]
    %v3466 = vld [vmem:[%s5 + $0x1e8] sm:$0xff]
    %v3467 = vld [vmem:[%s5 + $0x1f0] sm:$0xff]
    %v3468 = vld [vmem:[%s5 + $0x1f8] sm:$0xff]
    %v3469 = vld [vmem:[%s5 + $0x200] sm:$0xff]
    %v3470 = vld [vmem:[%s5 + $0x208] sm:$0xff]
    %v3471 = vld [vmem:[%s5 + $0x210] sm:$0xff]
    %v3472 = vld [vmem:[%s5 + $0x218] sm:$0xff]
    %v3473 = vld [vmem:[%s5 + $0x220] sm:$0xff]
    %v3474 = vld [vmem:[%s5 + $0x228] sm:$0xff]
    %v3475 = vld [vmem:[%s5 + $0x230] sm:$0xff]
    %v3476 = vld [vmem:[%s5 + $0x238] sm:$0xff]
    %v3477 = vld [vmem:[%s5 + $0x240] sm:$0xff]
    %v3478 = vld [vmem:[%s5 + $0x248] sm:$0xff]
    %v3479 = vld [vmem:[%s5 + $0x250] sm:$0xff]
    %v3480 = vld [vmem:[%s5 + $0x258] sm:$0xff]
    %v3481 = vld [vmem:[%s5 + $0x260] sm:$0xff]
    %v3482 = vld [vmem:[%s5 + $0x268] sm:$0xff]
    %v3483 = vld [vmem:[%s5 + $0x270] sm:$0xff]
    %v3484 = vld [vmem:[%s5 + $0x278] sm:$0xff]
    %v3485 = vld [vmem:[%s5 + $0x280] sm:$0xff]
    %v3486 = vld [vmem:[%s5 + $0x288] sm:$0xff]
    %v3487 = vld [vmem:[%s5 + $0x290] sm:$0xff]
    %v3488 = vld [vmem:[%s5 + $0x298] sm:$0xff]
    %v3489 = vld [vmem:[%s5 + $0x2a0] sm:$0xff]
    %v3490 = vld [vmem:[%s5 + $0x2a8] sm:$0xff]
    %v3491 = vld [vmem:[%s5 + $0x2b0] sm:$0xff]
    %v3492 = vld [vmem:[%s5 + $0x2b8] sm:$0xff]
    %v3493 = vld [vmem:[%s5 + $0x2c0] sm:$0xff]
    %v3494 = vld [vmem:[%s5 + $0x2c8] sm:$0xff]
    %v3495 = vld [vmem:[%s5 + $0x2d0] sm:$0xff]
    %v3496 = vld [vmem:[%s5 + $0x2d8] sm:$0xff]
    %v3497 = vld [vmem:[%s5 + $0x2e0] sm:$0xff]
    %v3498 = vld [vmem:[%s5 + $0x2e8] sm:$0xff]
    %v3499 = vld [vmem:[%s5 + $0x2f0] sm:$0xff]
    %v3500 = vld [vmem:[%s5 + $0x2f8] sm:$0xff]
    %v3501 = vld [vmem:[%s5 + $0x300] sm:$0xff]
    %v3502 = vld [vmem:[%s5 + $0x308] sm:$0xff]
    %v3503 = vld [vmem:[%s5 + $0x310] sm:$0xff]
    %v3504 = vld [vmem:[%s5 + $0x318] sm:$0xff]
    %v3505 = vld [vmem:[%s5 + $0x320] sm:$0xff]
    %v3506 = vld [vmem:[%s5 + $0x328] sm:$0xff]
    %v3507 = vld [vmem:[%s5 + $0x330] sm:$0xff]
    %v3508 = vld [vmem:[%s5 + $0x338] sm:$0xff]
    %v3509 = vld [vmem:[%s5 + $0x340] sm:$0xff]
    %v3510 = vld [vmem:[%s5 + $0x348] sm:$0xff]
    %v3511 = vld [vmem:[%s5 + $0x350] sm:$0xff]
    %v3512 = vld [vmem:[%s5 + $0x358] sm:$0xff]
    %v3513 = vld [vmem:[%s5 + $0x360] sm:$0xff]
    %v3514 = vld [vmem:[%s5 + $0x368] sm:$0xff]
    %v3515 = vld [vmem:[%s5 + $0x370] sm:$0xff]
    %v3516 = vld [vmem:[%s5 + $0x378] sm:$0xff]
    %v3517 = vld [vmem:[%s5 + $0x380] sm:$0xff]
    %v3518 = vld [vmem:[%s5 + $0x388] sm:$0xff]
    %v3519 = vld [vmem:[%s5 + $0x390] sm:$0xff]
    %v3520 = vld [vmem:[%s5 + $0x398] sm:$0xff]
    %v3521 = vld [vmem:[%s5 + $0x3a0] sm:$0xff]
    %v3522 = vld [vmem:[%s5 + $0x3a8] sm:$0xff]
    %v3523 = vld [vmem:[%s5 + $0x3b0] sm:$0xff]
    %v3524 = vld [vmem:[%s5 + $0x3b8] sm:$0xff]
    %v3525 = vld [vmem:[%s5 + $0x3c0] sm:$0xff]
    %v3526 = vld [vmem:[%s5 + $0x3c8] sm:$0xff]
    %v3527 = vld [vmem:[%s5 + $0x3d0] sm:$0xff]
    %v3528 = vld [vmem:[%s5 + $0x3d8] sm:$0xff]
    %v3529 = vld [vmem:[%s5 + $0x3e0] sm:$0xff]
    %v3530 = vld [vmem:[%s5 + $0x3e8] sm:$0xff]
    %v3531 = vld [vmem:[%s5 + $0x3f0] sm:$0xff]
    %v3532 = vld [vmem:[%s5 + $0x3f8] sm:$0xff]
    %v3533 = vld [vmem:[%s5 + $0x400] sm:$0xff]
    %v3534 = vld [vmem:[%s5 + $0x408] sm:$0xff]
    %v3535 = vld [vmem:[%s5 + $0x410] sm:$0xff]
    %v3536 = vld [vmem:[%s5 + $0x418] sm:$0xff]
    %v3537 = vld [vmem:[%s5 + $0x420] sm:$0xff]
    %v3538 = vld [vmem:[%s5 + $0x428] sm:$0xff]
    %v3539 = vld [vmem:[%s5 + $0x430] sm:$0xff]
    %v3540 = vld [vmem:[%s5 + $0x438] sm:$0xff]
    %v3541 = vld [vmem:[%s5 + $0x440] sm:$0xff]
    %v3542 = vld [vmem:[%s5 + $0x448] sm:$0xff]
    %v3543 = vld [vmem:[%s5 + $0x450] sm:$0xff]
    %v3544 = vld [vmem:[%s5 + $0x458] sm:$0xff]
    %v3545 = vld [vmem:[%s5 + $0x460] sm:$0xff]
    %v3546 = vld [vmem:[%s5 + $0x468] sm:$0xff]
    %v3547 = vld [vmem:[%s5 + $0x470] sm:$0xff]
    %v3548 = vld [vmem:[%s5 + $0x478] sm:$0xff]
    %v3549 = vld [vmem:[%s5 + $0x480] sm:$0xff]
    %v3550 = vld [vmem:[%s5 + $0x488] sm:$0xff]
    %v3551 = vld [vmem:[%s5 + $0x490] sm:$0xff]
    %v3552 = vld [vmem:[%s5 + $0x498] sm:$0xff]
    %v3553 = vld [vmem:[%s5 + $0x4a0] sm:$0xff]
    %v3554 = vld [vmem:[%s5 + $0x4a8] sm:$0xff]
    %v3555 = vld [vmem:[%s5 + $0x4b0] sm:$0xff]
    %v3556 = vld [vmem:[%s5 + $0x4b8] sm:$0xff]
    %v3557 = vld [vmem:[%s5 + $0x4c0] sm:$0xff]
    %v3558 = vld [vmem:[%s5 + $0x4c8] sm:$0xff]
    %v3559 = vld [vmem:[%s5 + $0x4d0] sm:$0xff]
    %v3560 = vld [vmem:[%s5 + $0x4d8] sm:$0xff]
    %v3561 = vld [vmem:[%s5 + $0x4e0] sm:$0xff]
    %v3562 = vld [vmem:[%s5 + $0x4e8] sm:$0xff]
    %v3563 = vld [vmem:[%s5 + $0x4f0] sm:$0xff]
    %v3564 = vld [vmem:[%s5 + $0x4f8] sm:$0xff]
    %v3565 = vld [vmem:[%s5 + $0x500] sm:$0xff]
    %v3566 = vld [vmem:[%s5 + $0x508] sm:$0xff]
    %v3567 = vld [vmem:[%s5 + $0x510] sm:$0xff]
    %v3568 = vld [vmem:[%s5 + $0x518] sm:$0xff]
    %v3569 = vld [vmem:[%s5 + $0x520] sm:$0xff]
    %v3570 = vld [vmem:[%s5 + $0x528] sm:$0xff]
    %v3571 = vld [vmem:[%s5 + $0x530] sm:$0xff]
    %v3572 = vld [vmem:[%s5 + $0x538] sm:$0xff]
    %v3573 = vld [vmem:[%s5 + $0x540] sm:$0xff]
    %v3574 = vld [vmem:[%s5 + $0x548] sm:$0xff]
    %v3575 = vld [vmem:[%s5 + $0x550] sm:$0xff]
    %v3576 = vld [vmem:[%s5 + $0x558] sm:$0xff]
    %v3577 = vld [vmem:[%s5 + $0x560] sm:$0xff]
    %v3578 = vld [vmem:[%s5 + $0x568] sm:$0xff]
    %v3579 = vld [vmem:[%s5 + $0x570] sm:$0xff]
    %v3580 = vld [vmem:[%s5 + $0x578] sm:$0xff]
    %v3581 = vld [vmem:[%s5 + $0x580] sm:$0xff]
    %v3582 = vld [vmem:[%s5 + $0x588] sm:$0xff]
    %v3583 = vld [vmem:[%s5 + $0x590] sm:$0xff]
    %v3584 = vld [vmem:[%s5 + $0x598] sm:$0xff]
    %v3585 = vld [vmem:[%s5 + $0x5a0] sm:$0xff]
    %v3586 = vld [vmem:[%s5 + $0x5a8] sm:$0xff]
    %v3587 = vld [vmem:[%s5 + $0x5b0] sm:$0xff]
    %v3588 = vld [vmem:[%s5 + $0x5b8] sm:$0xff]
    %v3589 = vld [vmem:[%s5 + $0x5c0] sm:$0xff]
    %v3590 = vld [vmem:[%s5 + $0x5c8] sm:$0xff]
    %v3591 = vld [vmem:[%s5 + $0x5d0] sm:$0xff]
    %v3592 = vld [vmem:[%s5 + $0x5d8] sm:$0xff]
    %v3593 = vld [vmem:[%s5 + $0x5e0] sm:$0xff]
    %v3594 = vld [vmem:[%s5 + $0x5e8] sm:$0xff]
    %v3595 = vld [vmem:[%s5 + $0x5f0] sm:$0xff]
    %v3596 = vld [vmem:[%s5 + $0x5f8] sm:$0xff]
    %v3597 = vld [vmem:[%s5 + $0x600] sm:$0xff]
    %v3598 = vld [vmem:[%s5 + $0x608] sm:$0xff]
    %v3599 = vld [vmem:[%s5 + $0x610] sm:$0xff]
    %v3600 = vld [vmem:[%s5 + $0x618] sm:$0xff]
    %v3601 = vld [vmem:[%s5 + $0x620] sm:$0xff]
    %v3602 = vld [vmem:[%s5 + $0x628] sm:$0xff]
    %v3603 = vld [vmem:[%s5 + $0x630] sm:$0xff]
    %v3604 = vld [vmem:[%s5 + $0x638] sm:$0xff]
    %v3605 = vld [vmem:[%s5 + $0x640] sm:$0xff]
    %v3606 = vld [vmem:[%s5 + $0x648] sm:$0xff]
    %v3607 = vld [vmem:[%s5 + $0x650] sm:$0xff]
    %v3608 = vld [vmem:[%s5 + $0x658] sm:$0xff]
    %v3609 = vld [vmem:[%s5 + $0x660] sm:$0xff]
    %v3610 = vld [vmem:[%s5 + $0x668] sm:$0xff]
    %v3611 = vld [vmem:[%s5 + $0x670] sm:$0xff]
    %v3612 = vld [vmem:[%s5 + $0x678] sm:$0xff]
    %v3613 = vld [vmem:[%s5 + $0x680] sm:$0xff]
    %v3614 = vld [vmem:[%s5 + $0x688] sm:$0xff]
    %v3615 = vld [vmem:[%s5 + $0x690] sm:$0xff]
    %v3616 = vld [vmem:[%s5 + $0x698] sm:$0xff]
    %v3617 = vld [vmem:[%s5 + $0x6a0] sm:$0xff]
    %v3618 = vld [vmem:[%s5 + $0x6a8] sm:$0xff]
    %v3619 = vld [vmem:[%s5 + $0x6b0] sm:$0xff]
    %v3620 = vld [vmem:[%s5 + $0x6b8] sm:$0xff]
    %v3621 = vld [vmem:[%s5 + $0x6c0] sm:$0xff]
    %v3622 = vld [vmem:[%s5 + $0x6c8] sm:$0xff]
    %v3623 = vld [vmem:[%s5 + $0x6d0] sm:$0xff]
    %v3624 = vld [vmem:[%s5 + $0x6d8] sm:$0xff]
    %v3625 = vld [vmem:[%s5 + $0x6e0] sm:$0xff]
    %v3626 = vld [vmem:[%s5 + $0x6e8] sm:$0xff]
    %v3627 = vld [vmem:[%s5 + $0x6f0] sm:$0xff]
    %v3628 = vld [vmem:[%s5 + $0x6f8] sm:$0xff]
    %v3629 = vld [vmem:[%s5 + $0x700] sm:$0xff]
    %v3630 = vld [vmem:[%s5 + $0x708] sm:$0xff]
    %v3631 = vld [vmem:[%s5 + $0x710] sm:$0xff]
    %v3632 = vld [vmem:[%s5 + $0x718] sm:$0xff]
    %v3633 = vld [vmem:[%s5 + $0x720] sm:$0xff]
    %v3634 = vld [vmem:[%s5 + $0x728] sm:$0xff]
    %v3635 = vld [vmem:[%s5 + $0x730] sm:$0xff]
    %v3636 = vld [vmem:[%s5 + $0x738] sm:$0xff]
    %v3637 = vld [vmem:[%s5 + $0x740] sm:$0xff]
    %v3638 = vld [vmem:[%s5 + $0x748] sm:$0xff]
    %v3639 = vld [vmem:[%s5 + $0x750] sm:$0xff]
    %v3640 = vld [vmem:[%s5 + $0x758] sm:$0xff]
    %v3641 = vld [vmem:[%s5 + $0x760] sm:$0xff]
    %v3642 = vld [vmem:[%s5 + $0x768] sm:$0xff]
    %v3643 = vld [vmem:[%s5 + $0x770] sm:$0xff]
    %v3644 = vld [vmem:[%s5 + $0x778] sm:$0xff]
    %v3645 = vld [vmem:[%s5 + $0x780] sm:$0xff]
    %v3646 = vld [vmem:[%s5 + $0x788] sm:$0xff]
    %v3647 = vld [vmem:[%s5 + $0x790] sm:$0xff]
    %v3648 = vld [vmem:[%s5 + $0x798] sm:$0xff]
    %v3649 = vld [vmem:[%s5 + $0x7a0] sm:$0xff]
    %v3650 = vld [vmem:[%s5 + $0x7a8] sm:$0xff]
    %v3651 = vld [vmem:[%s5 + $0x7b0] sm:$0xff]
    %v3652 = vld [vmem:[%s5 + $0x7b8] sm:$0xff]
    %v3653 = vld [vmem:[%s5 + $0x7c0] sm:$0xff]
    %v3654 = vld [vmem:[%s5 + $0x7c8] sm:$0xff]
    %v3655 = vld [vmem:[%s5 + $0x7d0] sm:$0xff]
    %v3656 = vld [vmem:[%s5 + $0x7d8] sm:$0xff]
    %v3657 = vld [vmem:[%s5 + $0x7e0] sm:$0xff]
    %v3658 = vld [vmem:[%s5 + $0x7e8] sm:$0xff]
    %v3659 = vld [vmem:[%s5 + $0x7f0] sm:$0xff]
    %v3660 = vld [vmem:[%s5 + $0x7f8] sm:$0xff]
    %v3661 = vld [vmem:[%s5 + $0x800] sm:$0xff]
    %v3662 = vld [vmem:[%s5 + $0x808] sm:$0xff]
    %v3663 = vld [vmem:[%s5 + $0x810] sm:$0xff]
    %v3664 = vld [vmem:[%s5 + $0x818] sm:$0xff]
    %v3665 = vld [vmem:[%s5 + $0x820] sm:$0xff]
    %v3666 = vld [vmem:[%s5 + $0x828] sm:$0xff]
    %v3667 = vld [vmem:[%s5 + $0x830] sm:$0xff]
    %v3668 = vld [vmem:[%s5 + $0x838] sm:$0xff]
    %v3669 = vld [vmem:[%s5 + $0x840] sm:$0xff]
    %v3670 = vld [vmem:[%s5 + $0x848] sm:$0xff]
    %v3671 = vld [vmem:[%s5 + $0x850] sm:$0xff]
    %v3672 = vld [vmem:[%s5 + $0x858] sm:$0xff]
    %v3673 = vld [vmem:[%s5 + $0x860] sm:$0xff]
    %v3674 = vld [vmem:[%s5 + $0x868] sm:$0xff]
    %v3675 = vld [vmem:[%s5 + $0x870] sm:$0xff]
    %v3676 = vld [vmem:[%s5 + $0x878] sm:$0xff]
    %v3677 = vld [vmem:[%s5 + $0x880] sm:$0xff]
    %v3678 = vld [vmem:[%s5 + $0x888] sm:$0xff]
    %v3679 = vld [vmem:[%s5 + $0x890] sm:$0xff]
    %v3680 = vld [vmem:[%s5 + $0x898] sm:$0xff]
    %v3681 = vld [vmem:[%s5 + $0x8a0] sm:$0xff]
    %v3682 = vld [vmem:[%s5 + $0x8a8] sm:$0xff]
    %v3683 = vld [vmem:[%s5 + $0x8b0] sm:$0xff]
    %v3684 = vld [vmem:[%s5 + $0x8b8] sm:$0xff]
    %v3685 = vld [vmem:[%s5 + $0x8c0] sm:$0xff]
    %v3686 = vld [vmem:[%s5 + $0x8c8] sm:$0xff]
    %v3687 = vld [vmem:[%s5 + $0x8d0] sm:$0xff]
    %v3688 = vld [vmem:[%s5 + $0x8d8] sm:$0xff]
    %v3689 = vld [vmem:[%s5 + $0x8e0] sm:$0xff]
    %v3690 = vld [vmem:[%s5 + $0x8e8] sm:$0xff]
    %v3691 = vld [vmem:[%s5 + $0x8f0] sm:$0xff]
    %v3692 = vld [vmem:[%s5 + $0x8f8] sm:$0xff]
    %v3693 = vld [vmem:[%s5 + $0x900] sm:$0xff]
    %v3694 = vld [vmem:[%s5 + $0x908] sm:$0xff]
    %v3695 = vld [vmem:[%s5 + $0x910] sm:$0xff]
    %v3696 = vld [vmem:[%s5 + $0x918] sm:$0xff]
    %v3697 = vld [vmem:[%s5 + $0x920] sm:$0xff]
    %v3698 = vld [vmem:[%s5 + $0x928] sm:$0xff]
    %v3699 = vld [vmem:[%s5 + $0x930] sm:$0xff]
    %v3700 = vld [vmem:[%s5 + $0x938] sm:$0xff]
    %v3701 = vld [vmem:[%s5 + $0x940] sm:$0xff]
    %v3702 = vld [vmem:[%s5 + $0x948] sm:$0xff]
    %v3703 = vld [vmem:[%s5 + $0x950] sm:$0xff]
    %v3704 = vld [vmem:[%s5 + $0x958] sm:$0xff]
    %v3705 = vld [vmem:[%s5 + $0x960] sm:$0xff]
    %v3706 = vld [vmem:[%s5 + $0x968] sm:$0xff]
    %v3707 = vld [vmem:[%s5 + $0x970] sm:$0xff]
    %v3708 = vld [vmem:[%s5 + $0x978] sm:$0xff]
    %v3709 = vld [vmem:[%s5 + $0x980] sm:$0xff]
    %v3710 = vld [vmem:[%s5 + $0x988] sm:$0xff]
    %v3711 = vld [vmem:[%s5 + $0x990] sm:$0xff]
    %v3712 = vld [vmem:[%s5 + $0x998] sm:$0xff]
    %v3713 = vld [vmem:[%s5 + $0x9a0] sm:$0xff]
    %v3714 = vld [vmem:[%s5 + $0x9a8] sm:$0xff]
    %v3715 = vld [vmem:[%s5 + $0x9b0] sm:$0xff]
    %v3716 = vld [vmem:[%s5 + $0x9b8] sm:$0xff]
    %v3717 = vld [vmem:[%s5 + $0x9c0] sm:$0xff]
    %v3718 = vld [vmem:[%s5 + $0x9c8] sm:$0xff]
    %v3719 = vld [vmem:[%s5 + $0x9d0] sm:$0xff]
    %v3720 = vld [vmem:[%s5 + $0x9d8] sm:$0xff]
    %v3721 = vld [vmem:[%s5 + $0x9e0] sm:$0xff]
    %v3722 = vld [vmem:[%s5 + $0x9e8] sm:$0xff]
    %v3723 = vld [vmem:[%s5 + $0x9f0] sm:$0xff]
    %v3724 = vld [vmem:[%s5 + $0x9f8] sm:$0xff]
    %v3725 = vld [vmem:[%s5 + $0xa00] sm:$0xff]
    %v3726 = vld [vmem:[%s5 + $0xa08] sm:$0xff]
    %v3727 = vld [vmem:[%s5 + $0xa10] sm:$0xff]
    %v3728 = vld [vmem:[%s5 + $0xa18] sm:$0xff]
    %v3729 = vld [vmem:[%s5 + $0xa20] sm:$0xff]
    %v3730 = vld [vmem:[%s5 + $0xa28] sm:$0xff]
    %v3731 = vld [vmem:[%s5 + $0xa30] sm:$0xff]
    %v3732 = vld [vmem:[%s5 + $0xa38] sm:$0xff]
    %v3733 = vld [vmem:[%s5 + $0xa40] sm:$0xff]
    %v3734 = vld [vmem:[%s5 + $0xa48] sm:$0xff]
    %v3735 = vld [vmem:[%s5 + $0xa50] sm:$0xff]
    %v3736 = vld [vmem:[%s5 + $0xa58] sm:$0xff]
    %v3737 = vld [vmem:[%s5 + $0xa60] sm:$0xff]
    %v3738 = vld [vmem:[%s5 + $0xa68] sm:$0xff]
    %v3739 = vld [vmem:[%s5 + $0xa70] sm:$0xff]
    %v3740 = vld [vmem:[%s5 + $0xa78] sm:$0xff]
    %v3741 = vld [vmem:[%s5 + $0xa80] sm:$0xff]
    %v3742 = vld [vmem:[%s5 + $0xa88] sm:$0xff]
    %v3743 = vld [vmem:[%s5 + $0xa90] sm:$0xff]
    %v3744 = vld [vmem:[%s5 + $0xa98] sm:$0xff]
    %v3745 = vld [vmem:[%s5 + $0xaa0] sm:$0xff]
    %v3746 = vld [vmem:[%s5 + $0xaa8] sm:$0xff]
    %v3747 = vld [vmem:[%s5 + $0xab0] sm:$0xff]
    %v3748 = vld [vmem:[%s5 + $0xab8] sm:$0xff]
    %v3749 = vld [vmem:[%s5 + $0xac0] sm:$0xff]
    %v3750 = vld [vmem:[%s5 + $0xac8] sm:$0xff]
    %v3751 = vld [vmem:[%s5 + $0xad0] sm:$0xff]
    %v3752 = vld [vmem:[%s5 + $0xad8] sm:$0xff]
    %v3753 = vld [vmem:[%s5 + $0xae0] sm:$0xff]
    %v3754 = vld [vmem:[%s5 + $0xae8] sm:$0xff]
    %v3755 = vld [vmem:[%s5 + $0xaf0] sm:$0xff]
    %v3756 = vld [vmem:[%s5 + $0xaf8] sm:$0xff]
    %v3757 = vld [vmem:[%s5 + $0xb00] sm:$0xff]
    %v3758 = vld [vmem:[%s5 + $0xb08] sm:$0xff]
    %v3759 = vld [vmem:[%s5 + $0xb10] sm:$0xff]
    %v3760 = vld [vmem:[%s5 + $0xb18] sm:$0xff]
    %v3761 = vld [vmem:[%s5 + $0xb20] sm:$0xff]
    %v3762 = vld [vmem:[%s5 + $0xb28] sm:$0xff]
    %v3763 = vld [vmem:[%s5 + $0xb30] sm:$0xff]
    %v3764 = vld [vmem:[%s5 + $0xb38] sm:$0xff]
    %v3765 = vld [vmem:[%s5 + $0xb40] sm:$0xff]
    %v3766 = vld [vmem:[%s5 + $0xb48] sm:$0xff]
    %v3767 = vld [vmem:[%s5 + $0xb50] sm:$0xff]
    %v3768 = vld [vmem:[%s5 + $0xb58] sm:$0xff]
    %v3769 = vld [vmem:[%s5 + $0xb60] sm:$0xff]
    %v3770 = vld [vmem:[%s5 + $0xb68] sm:$0xff]
    %v3771 = vld [vmem:[%s5 + $0xb70] sm:$0xff]
    %v3772 = vld [vmem:[%s5 + $0xb78] sm:$0xff]
    %v3773 = vld [vmem:[%s5 + $0xb80] sm:$0xff]
    %v3774 = vld [vmem:[%s5 + $0xb88] sm:$0xff]
    %v3775 = vld [vmem:[%s5 + $0xb90] sm:$0xff]
    %v3776 = vld [vmem:[%s5 + $0xb98] sm:$0xff]
    %v3777 = vld [vmem:[%s5 + $0xba0] sm:$0xff]
    %v3778 = vld [vmem:[%s5 + $0xba8] sm:$0xff]
    %v3779 = vld [vmem:[%s5 + $0xbb0] sm:$0xff]
    %v3780 = vld [vmem:[%s5 + $0xbb8] sm:$0xff]
    %v3781 = vld [vmem:[%s5 + $0xbc0] sm:$0xff]
    %v3782 = vld [vmem:[%s5 + $0xbc8] sm:$0xff]
    %v3783 = vld [vmem:[%s5 + $0xbd0] sm:$0xff]
    %v3784 = vld [vmem:[%s5 + $0xbd8] sm:$0xff]
    %v3785 = vld [vmem:[%s5 + $0xbe0] sm:$0xff]
    %v3786 = vld [vmem:[%s5 + $0xbe8] sm:$0xff]
    %v3787 = vld [vmem:[%s5 + $0xbf0] sm:$0xff]
    %v3788 = vld [vmem:[%s5 + $0xbf8] sm:$0xff]
    %v3789 = vld [vmem:[%s5 + $0xc00] sm:$0xff]
    %v3790 = vld [vmem:[%s5 + $0xc08] sm:$0xff]
    %v3791 = vld [vmem:[%s5 + $0xc10] sm:$0xff]
    %v3792 = vld [vmem:[%s5 + $0xc18] sm:$0xff]
    %v3793 = vld [vmem:[%s5 + $0xc20] sm:$0xff]
    %v3794 = vld [vmem:[%s5 + $0xc28] sm:$0xff]
    %v3795 = vld [vmem:[%s5 + $0xc30] sm:$0xff]
    %v3796 = vld [vmem:[%s5 + $0xc38] sm:$0xff]
    %v3797 = vld [vmem:[%s5 + $0xc40] sm:$0xff]
    %v3798 = vld [vmem:[%s5 + $0xc48] sm:$0xff]
    %v3799 = vld [vmem:[%s5 + $0xc50] sm:$0xff]
    %v3800 = vld [vmem:[%s5 + $0xc58] sm:$0xff]
    %v3801 = vld [vmem:[%s5 + $0xc60] sm:$0xff]
    %v3802 = vld [vmem:[%s5 + $0xc68] sm:$0xff]
    %v3803 = vld [vmem:[%s5 + $0xc70] sm:$0xff]
    %v3804 = vld [vmem:[%s5 + $0xc78] sm:$0xff]
    %v3805 = vld [vmem:[%s5 + $0xc80] sm:$0xff]
    %v3806 = vld [vmem:[%s5 + $0xc88] sm:$0xff]
    %v3807 = vld [vmem:[%s5 + $0xc90] sm:$0xff]
    %v3808 = vld [vmem:[%s5 + $0xc98] sm:$0xff]
    %v3809 = vld [vmem:[%s5 + $0xca0] sm:$0xff]
    %v3810 = vld [vmem:[%s5 + $0xca8] sm:$0xff]
    %v3811 = vld [vmem:[%s5 + $0xcb0] sm:$0xff]
    %v3812 = vld [vmem:[%s5 + $0xcb8] sm:$0xff]
    %v3813 = vld [vmem:[%s5 + $0xcc0] sm:$0xff]
    %v3814 = vld [vmem:[%s5 + $0xcc8] sm:$0xff]
    %v3815 = vld [vmem:[%s5 + $0xcd0] sm:$0xff]
    %v3816 = vld [vmem:[%s5 + $0xcd8] sm:$0xff]
    %v3817 = vld [vmem:[%s5 + $0xce0] sm:$0xff]
    %v3818 = vld [vmem:[%s5 + $0xce8] sm:$0xff]
    %v3819 = vld [vmem:[%s5 + $0xcf0] sm:$0xff]
    %v3820 = vld [vmem:[%s5 + $0xcf8] sm:$0xff]
    %v3821 = vld [vmem:[%s5 + $0xd00] sm:$0xff]
    %v3822 = vld [vmem:[%s5 + $0xd08] sm:$0xff]
    %v3823 = vld [vmem:[%s5 + $0xd10] sm:$0xff]
    %v3824 = vld [vmem:[%s5 + $0xd18] sm:$0xff]
    %v3825 = vld [vmem:[%s5 + $0xd20] sm:$0xff]
    %v3826 = vld [vmem:[%s5 + $0xd28] sm:$0xff]
    %v3827 = vld [vmem:[%s5 + $0xd30] sm:$0xff]
    %v3828 = vld [vmem:[%s5 + $0xd38] sm:$0xff]
    %v3829 = vld [vmem:[%s5 + $0xd40] sm:$0xff]
    %v3830 = vld [vmem:[%s5 + $0xd48] sm:$0xff]
    %v3831 = vld [vmem:[%s5 + $0xd50] sm:$0xff]
    %v3832 = vld [vmem:[%s5 + $0xd58] sm:$0xff]
    %v3833 = vld [vmem:[%s5 + $0xd60] sm:$0xff]
    %v3834 = vld [vmem:[%s5 + $0xd68] sm:$0xff]
    %v3835 = vld [vmem:[%s5 + $0xd70] sm:$0xff]
    %v3836 = vld [vmem:[%s5 + $0xd78] sm:$0xff]
    %v3837 = vld [vmem:[%s5 + $0xd80] sm:$0xff]
    %v3838 = vld [vmem:[%s5 + $0xd88] sm:$0xff]
    %v3839 = vld [vmem:[%s5 + $0xd90] sm:$0xff]
    %v3840 = vld [vmem:[%s5 + $0xd98] sm:$0xff]
    %v3841 = vld [vmem:[%s5 + $0xda0] sm:$0xff]
    %v3842 = vld [vmem:[%s5 + $0xda8] sm:$0xff]
    %v3843 = vld [vmem:[%s5 + $0xdb0] sm:$0xff]
    %v3844 = vld [vmem:[%s5 + $0xdb8] sm:$0xff]
    %v3845 = vld [vmem:[%s5 + $0xdc0] sm:$0xff]
    %v3846 = vld [vmem:[%s5 + $0xdc8] sm:$0xff]
    %v3847 = vld [vmem:[%s5 + $0xdd0] sm:$0xff]
    %v3848 = vld [vmem:[%s5 + $0xdd8] sm:$0xff]
    %v3849 = vld [vmem:[%s5 + $0xde0] sm:$0xff]
    %v3850 = vld [vmem:[%s5 + $0xde8] sm:$0xff]
    %v3851 = vld [vmem:[%s5 + $0xdf0] sm:$0xff]
    %v3852 = vld [vmem:[%s5 + $0xdf8] sm:$0xff]
    %v3853 = vld [vmem:[%s5 + $0xe00] sm:$0xff]
    %v3854 = vld [vmem:[%s5 + $0xe08] sm:$0xff]
    %v3855 = vld [vmem:[%s5 + $0xe10] sm:$0xff]
    %v3856 = vld [vmem:[%s5 + $0xe18] sm:$0xff]
    %v3857 = vld [vmem:[%s5 + $0xe20] sm:$0xff]
    %v3858 = vld [vmem:[%s5 + $0xe28] sm:$0xff]
    %v3859 = vld [vmem:[%s5 + $0xe30] sm:$0xff]
    %v3860 = vld [vmem:[%s5 + $0xe38] sm:$0xff]
    %v3861 = vld [vmem:[%s5 + $0xe40] sm:$0xff]
    %v3862 = vld [vmem:[%s5 + $0xe48] sm:$0xff]
    %v3863 = vld [vmem:[%s5 + $0xe50] sm:$0xff]
    %v3864 = vld [vmem:[%s5 + $0xe58] sm:$0xff]
    %v3865 = vld [vmem:[%s5 + $0xe60] sm:$0xff]
    %v3866 = vld [vmem:[%s5 + $0xe68] sm:$0xff]
    %v3867 = vld [vmem:[%s5 + $0xe70] sm:$0xff]
    %v3868 = vld [vmem:[%s5 + $0xe78] sm:$0xff]
    %v3869 = vld [vmem:[%s5 + $0xe80] sm:$0xff]
    %v3870 = vld [vmem:[%s5 + $0xe88] sm:$0xff]
    %v3871 = vld [vmem:[%s5 + $0xe90] sm:$0xff]
    %v3872 = vld [vmem:[%s5 + $0xe98] sm:$0xff]
    %v3873 = vld [vmem:[%s5 + $0xea0] sm:$0xff]
    %v3874 = vld [vmem:[%s5 + $0xea8] sm:$0xff]
    %v3875 = vld [vmem:[%s5 + $0xeb0] sm:$0xff]
    %v3876 = vld [vmem:[%s5 + $0xeb8] sm:$0xff]
    %v3877 = vld [vmem:[%s5 + $0xec0] sm:$0xff]
    %v3878 = vld [vmem:[%s5 + $0xec8] sm:$0xff]
    %v3879 = vld [vmem:[%s5 + $0xed0] sm:$0xff]
    %v3880 = vld [vmem:[%s5 + $0xed8] sm:$0xff]
    %v3881 = vld [vmem:[%s5 + $0xee0] sm:$0xff]
    %v3882 = vld [vmem:[%s5 + $0xee8] sm:$0xff]
    %v3883 = vld [vmem:[%s5 + $0xef0] sm:$0xff]
    %v3884 = vld [vmem:[%s5 + $0xef8] sm:$0xff]
    %v3885 = vld [vmem:[%s5 + $0xf00] sm:$0xff]
    %v3886 = vld [vmem:[%s5 + $0xf08] sm:$0xff]
    %v3887 = vld [vmem:[%s5 + $0xf10] sm:$0xff]
    %v3888 = vld [vmem:[%s5 + $0xf18] sm:$0xff]
    %v3889 = vld [vmem:[%s5 + $0xf20] sm:$0xff]
    %v3890 = vld [vmem:[%s5 + $0xf28] sm:$0xff]
    %v3891 = vld [vmem:[%s5 + $0xf30] sm:$0xff]
    %v3892 = vld [vmem:[%s5 + $0xf38] sm:$0xff]
    %v3893 = vld [vmem:[%s5 + $0xf40] sm:$0xff]
    %v3894 = vld [vmem:[%s5 + $0xf48] sm:$0xff]
    %v3895 = vld [vmem:[%s5 + $0xf50] sm:$0xff]
    %v3896 = vld [vmem:[%s5 + $0xf58] sm:$0xff]
    %v3897 = vld [vmem:[%s5 + $0xf60] sm:$0xff]
    %v3898 = vld [vmem:[%s5 + $0xf68] sm:$0xff]
    %v3899 = vld [vmem:[%s5 + $0xf70] sm:$0xff]
    %v3900 = vld [vmem:[%s5 + $0xf78] sm:$0xff]
    %v3901 = vld [vmem:[%s5 + $0xf80] sm:$0xff]
    %v3902 = vld [vmem:[%s5 + $0xf88] sm:$0xff]
    %v3903 = vld [vmem:[%s5 + $0xf90] sm:$0xff]
    %v3904 = vld [vmem:[%s5 + $0xf98] sm:$0xff]
    %v3905 = vld [vmem:[%s5 + $0xfa0] sm:$0xff]
    %v3906 = vld [vmem:[%s5 + $0xfa8] sm:$0xff]
    %v3907 = vld [vmem:[%s5 + $0xfb0] sm:$0xff]
    %v3908 = vld [vmem:[%s5 + $0xfb8] sm:$0xff]
    %v3909 = vld [vmem:[%s5 + $0xfc0] sm:$0xff]
    %v3910 = vld [vmem:[%s5 + $0xfc8] sm:$0xff]
    %v3911 = vld [vmem:[%s5 + $0xfd0] sm:$0xff]
    %v3912 = vld [vmem:[%s5 + $0xfd8] sm:$0xff]
    %v3913 = vld [vmem:[%s5 + $0xfe0] sm:$0xff]
    %v3914 = vld [vmem:[%s5 + $0xfe8] sm:$0xff]
    %v3915 = vld [vmem:[%s5 + $0xff0] sm:$0xff]
    %v3916 = vld [vmem:[%s5 + $0xff8] sm:$0xff]
    %v3917 = vld [vmem:[#allocation8] sm:$0xf]
    %v3919 = vlaneseq
    %v3920 = vshrl.u32 %v3919, 7
    %v3921 = vsub.s32 0, %v3920
    %v3922 = vrot.slane %v3917, %v3921
    %v3923 = vlaneseq
    %v3924 = vshrl.u32 %v3923, 7
    %v3925 = vsub.s32 1, %v3924
    %v3926 = vrot.slane %v3917, %v3925
    %v3927 = vlaneseq
    %v3928 = vshrl.u32 %v3927, 7
    %v3929 = vsub.s32 2, %v3928
    %v3930 = vrot.slane %v3917, %v3929
    %v3931 = vlaneseq
    %v3932 = vshrl.u32 %v3931, 7
    %v3933 = vsub.s32 3, %v3932
    %v3934 = vrot.slane %v3917, %v3933
    %3939 = vmatprep.subr.mxu0 %v3406
    %3940 = vmatpush1.msra.mxu0 %v3405
    %3941 = vmatprep.subr.mxu0 %v3410
    %3942 = vmatpush1.msra.mxu0 %v3409
    %3943 = vmatprep.subr.mxu0 %v3414
    %3944 = vmatpush1.msra.mxu0 %v3413
    %3945 = vmatprep.subr.mxu0 %v3418
    %3946 = vmatpush1.msra.mxu0 %v3417
    %3947 = vmatprep.subr.mxu0 %v3422
    %3948 = vmatpush1.msra.mxu0 %v3421
    %3949 = vmatprep.subr.mxu0 %v3426
    %3950 = vmatpush1.msra.mxu0 %v3425
    %3951 = vmatprep.subr.mxu0 %v3430
    %3952 = vmatpush1.msra.mxu0 %v3429
    %3953 = vmatprep.subr.mxu0 %v3434
    %3954 = vmatpush1.msra.mxu0 %v3433
    %3955 = vmatprep.subr.mxu0 %v3438
    %3956 = vmatpush1.msra.mxu0 %v3437
    %3957 = vmatprep.subr.mxu0 %v3442
    %3958 = vmatpush1.msra.mxu0 %v3441
    %3959 = vmatprep.subr.mxu0 %v3446
    %3960 = vmatpush1.msra.mxu0 %v3445
    %3961 = vmatprep.subr.mxu0 %v3450
    %3962 = vmatpush1.msra.mxu0 %v3449
    %3963 = vmatprep.subr.mxu0 %v3454
    %3964 = vmatpush1.msra.mxu0 %v3453
    %3965 = vmatprep.subr.mxu0 %v3458
    %3966 = vmatpush1.msra.mxu0 %v3457
    %3967 = vmatprep.subr.mxu0 %v3462
    %3968 = vmatpush1.msra.mxu0 %v3461
    %3969 = vmatprep.subr.mxu0 %v3466
    %3970 = vmatpush1.msra.mxu0 %v3465
    %3971 = vmatprep.subr.mxu0 %v3470
    %3972 = vmatpush1.msra.mxu0 %v3469
    %3973 = vmatprep.subr.mxu0 %v3474
    %3974 = vmatpush1.msra.mxu0 %v3473
    %3975 = vmatprep.subr.mxu0 %v3478
    %3976 = vmatpush1.msra.mxu0 %v3477
    %3977 = vmatprep.subr.mxu0 %v3482
    %3978 = vmatpush1.msra.mxu0 %v3481
    %3979 = vmatprep.subr.mxu0 %v3486
    %3980 = vmatpush1.msra.mxu0 %v3485
    %3981 = vmatprep.subr.mxu0 %v3490
    %3982 = vmatpush1.msra.mxu0 %v3489
    %3983 = vmatprep.subr.mxu0 %v3494
    %3984 = vmatpush1.msra.mxu0 %v3493
    %3985 = vmatprep.subr.mxu0 %v3498
    %3986 = vmatpush1.msra.mxu0 %v3497
    %3987 = vmatprep.subr.mxu0 %v3502
    %3988 = vmatpush1.msra.mxu0 %v3501
    %3989 = vmatprep.subr.mxu0 %v3506
    %3990 = vmatpush1.msra.mxu0 %v3505
    %3991 = vmatprep.subr.mxu0 %v3510
    %3992 = vmatpush1.msra.mxu0 %v3509
    %3993 = vmatprep.subr.mxu0 %v3514
    %3994 = vmatpush1.msra.mxu0 %v3513
    %3995 = vmatprep.subr.mxu0 %v3518
    %3996 = vmatpush1.msra.mxu0 %v3517
    %3997 = vmatprep.subr.mxu0 %v3522
    %3998 = vmatpush1.msra.mxu0 %v3521
    %3999 = vmatprep.subr.mxu0 %v3526
    %4000 = vmatpush1.msra.mxu0 %v3525
    %4001 = vmatprep.subr.mxu0 %v3530
    %4002 = vmatpush1.msra.mxu0 %v3529
    %4003 = vmatprep.mubr.f32.mxu0 %v3398
    %4004 = vmatmul.mubr.f32.gmra.mrb[0].mxu0 %v3397
    %v4005 = vpop.f32.mrb[0].mxu0
    %v4006 = vadd.f32 %v3922, %v4005
    %v4007 = vpop.f32.mrb[0].mxu0
    %v4008 = vadd.f32 %v3926, %v4007
    %4009 = vdwg.mxu0
    %4010 = vmatprep.subr.mxu0 %v3534
    %4011 = vmatpush1.msra.mxu0 %v3533
    %4012 = vmatprep.subr.mxu0 %v3538
    %4013 = vmatpush1.msra.mxu0 %v3537
    %4014 = vmatprep.subr.mxu0 %v3542
    %4015 = vmatpush1.msra.mxu0 %v3541
    %4016 = vmatprep.subr.mxu0 %v3546
    %4017 = vmatpush1.msra.mxu0 %v3545
    %4018 = vmatprep.subr.mxu0 %v3550
    %4019 = vmatpush1.msra.mxu0 %v3549
    %4020 = vmatprep.subr.mxu0 %v3554
    %4021 = vmatpush1.msra.mxu0 %v3553
    %4022 = vmatprep.subr.mxu0 %v3558
    %4023 = vmatpush1.msra.mxu0 %v3557
    %4024 = vmatprep.subr.mxu0 %v3562
    %4025 = vmatpush1.msra.mxu0 %v3561
    %4026 = vmatprep.subr.mxu0 %v3566
    %4027 = vmatpush1.msra.mxu0 %v3565
    %4028 = vmatprep.subr.mxu0 %v3570
    %4029 = vmatpush1.msra.mxu0 %v3569
    %4030 = vmatprep.subr.mxu0 %v3574
    %4031 = vmatpush1.msra.mxu0 %v3573
    %4032 = vmatprep.subr.mxu0 %v3578
    %4033 = vmatpush1.msra.mxu0 %v3577
    %4034 = vmatprep.subr.mxu0 %v3582
    %4035 = vmatpush1.msra.mxu0 %v3581
    %4036 = vmatprep.subr.mxu0 %v3586
    %4037 = vmatpush1.msra.mxu0 %v3585
    %4038 = vmatprep.subr.mxu0 %v3590
    %4039 = vmatpush1.msra.mxu0 %v3589
    %4040 = vmatprep.subr.mxu0 %v3594
    %4041 = vmatpush1.msra.mxu0 %v3593
    %4042 = vmatprep.subr.mxu0 %v3598
    %4043 = vmatpush1.msra.mxu0 %v3597
    %4044 = vmatprep.subr.mxu0 %v3602
    %4045 = vmatpush1.msra.mxu0 %v3601
    %4046 = vmatprep.subr.mxu0 %v3606
    %4047 = vmatpush1.msra.mxu0 %v3605
    %4048 = vmatprep.subr.mxu0 %v3610
    %4049 = vmatpush1.msra.mxu0 %v3609
    %4050 = vmatprep.subr.mxu0 %v3614
    %4051 = vmatpush1.msra.mxu0 %v3613
    %4052 = vmatprep.subr.mxu0 %v3618
    %4053 = vmatpush1.msra.mxu0 %v3617
    %4054 = vmatprep.subr.mxu0 %v3622
    %4055 = vmatpush1.msra.mxu0 %v3621
    %4056 = vmatprep.subr.mxu0 %v3626
    %4057 = vmatpush1.msra.mxu0 %v3625
    %4058 = vmatprep.subr.mxu0 %v3630
    %4059 = vmatpush1.msra.mxu0 %v3629
    %4060 = vmatprep.subr.mxu0 %v3634
    %4061 = vmatpush1.msra.mxu0 %v3633
    %4062 = vmatprep.subr.mxu0 %v3638
    %4063 = vmatpush1.msra.mxu0 %v3637
    %4064 = vmatprep.subr.mxu0 %v3642
    %4065 = vmatpush1.msra.mxu0 %v3641
    %4066 = vmatprep.subr.mxu0 %v3646
    %4067 = vmatpush1.msra.mxu0 %v3645
    %4068 = vmatprep.subr.mxu0 %v3650
    %4069 = vmatpush1.msra.mxu0 %v3649
    %4070 = vmatprep.subr.mxu0 %v3654
    %4071 = vmatpush1.msra.mxu0 %v3653
    %4072 = vmatprep.subr.mxu0 %v3658
    %4073 = vmatpush1.msra.mxu0 %v3657
    %4074 = vmatprep.mubr.f32.mxu0 %v3400
    %4075 = vmatmul.mubr.f32.gmra.mrb[0].mxu0 %v3399
    %v4076 = vpop.f32.mrb[0].mxu0
    %v4077 = vadd.f32 %v4006, %v4076
    %v4078 = vpop.f32.mrb[0].mxu0
    %v4079 = vadd.f32 %v4008, %v4078
    %4080 = vdwg.mxu0
    %4081 = vmatprep.subr.mxu0 %v3662
    %4082 = vmatpush1.msra.mxu0 %v3661
    %4083 = vmatprep.subr.mxu0 %v3666
    %4084 = vmatpush1.msra.mxu0 %v3665
    %4085 = vmatprep.subr.mxu0 %v3670
    %4086 = vmatpush1.msra.mxu0 %v3669
    %4087 = vmatprep.subr.mxu0 %v3674
    %4088 = vmatpush1.msra.mxu0 %v3673
    %4089 = vmatprep.subr.mxu0 %v3678
    %4090 = vmatpush1.msra.mxu0 %v3677
    %4091 = vmatprep.subr.mxu0 %v3682
    %4092 = vmatpush1.msra.mxu0 %v3681
    %4093 = vmatprep.subr.mxu0 %v3686
    %4094 = vmatpush1.msra.mxu0 %v3685
    %4095 = vmatprep.subr.mxu0 %v3690
    %4096 = vmatpush1.msra.mxu0 %v3689
    %4097 = vmatprep.subr.mxu0 %v3694
    %4098 = vmatpush1.msra.mxu0 %v3693
    %4099 = vmatprep.subr.mxu0 %v3698
    %4100 = vmatpush1.msra.mxu0 %v3697
    %4101 = vmatprep.subr.mxu0 %v3702
    %4102 = vmatpush1.msra.mxu0 %v3701
    %4103 = vmatprep.subr.mxu0 %v3706
    %4104 = vmatpush1.msra.mxu0 %v3705
    %4105 = vmatprep.subr.mxu0 %v3710
    %4106 = vmatpush1.msra.mxu0 %v3709
    %4107 = vmatprep.subr.mxu0 %v3714
    %4108 = vmatpush1.msra.mxu0 %v3713
    %4109 = vmatprep.subr.mxu0 %v3718
    %4110 = vmatpush1.msra.mxu0 %v3717
    %4111 = vmatprep.subr.mxu0 %v3722
    %4112 = vmatpush1.msra.mxu0 %v3721
    %4113 = vmatprep.subr.mxu0 %v3726
    %4114 = vmatpush1.msra.mxu0 %v3725
    %4115 = vmatprep.subr.mxu0 %v3730
    %4116 = vmatpush1.msra.mxu0 %v3729
    %4117 = vmatprep.subr.mxu0 %v3734
    %4118 = vmatpush1.msra.mxu0 %v3733
    %4119 = vmatprep.subr.mxu0 %v3738
    %4120 = vmatpush1.msra.mxu0 %v3737
    %4121 = vmatprep.subr.mxu0 %v3742
    %4122 = vmatpush1.msra.mxu0 %v3741
    %4123 = vmatprep.subr.mxu0 %v3746
    %4124 = vmatpush1.msra.mxu0 %v3745
    %4125 = vmatprep.subr.mxu0 %v3750
    %4126 = vmatpush1.msra.mxu0 %v3749
    %4127 = vmatprep.subr.mxu0 %v3754
    %4128 = vmatpush1.msra.mxu0 %v3753
    %4129 = vmatprep.subr.mxu0 %v3758
    %4130 = vmatpush1.msra.mxu0 %v3757
    %4131 = vmatprep.subr.mxu0 %v3762
    %4132 = vmatpush1.msra.mxu0 %v3761
    %4133 = vmatprep.subr.mxu0 %v3766
    %4134 = vmatpush1.msra.mxu0 %v3765
    %4135 = vmatprep.subr.mxu0 %v3770
    %4136 = vmatpush1.msra.mxu0 %v3769
    %4137 = vmatprep.subr.mxu0 %v3774
    %4138 = vmatpush1.msra.mxu0 %v3773
    %4139 = vmatprep.subr.mxu0 %v3778
    %4140 = vmatpush1.msra.mxu0 %v3777
    %4141 = vmatprep.subr.mxu0 %v3782
    %4142 = vmatpush1.msra.mxu0 %v3781
    %4143 = vmatprep.subr.mxu0 %v3786
    %4144 = vmatpush1.msra.mxu0 %v3785
    %4145 = vmatprep.mubr.f32.mxu0 %v3402
    %4146 = vmatmul.mubr.f32.gmra.mrb[0].mxu0 %v3401
    %v4147 = vpop.f32.mrb[0].mxu0
    %v4148 = vadd.f32 %v4077, %v4147
    %v4149 = vpop.f32.mrb[0].mxu0
    %v4150 = vadd.f32 %v4079, %v4149
    %4151 = vdwg.mxu0
    %4152 = vmatprep.subr.mxu0 %v3790
    %4153 = vmatpush1.msra.mxu0 %v3789
    %4154 = vmatprep.subr.mxu0 %v3794
    %4155 = vmatpush1.msra.mxu0 %v3793
    %4156 = vmatprep.subr.mxu0 %v3798
    %4157 = vmatpush1.msra.mxu0 %v3797
    %4158 = vmatprep.subr.mxu0 %v3802
    %4159 = vmatpush1.msra.mxu0 %v3801
    %4160 = vmatprep.subr.mxu0 %v3806
    %4161 = vmatpush1.msra.mxu0 %v3805
    %4162 = vmatprep.subr.mxu0 %v3810
    %4163 = vmatpush1.msra.mxu0 %v3809
    %4164 = vmatprep.subr.mxu0 %v3814
    %4165 = vmatpush1.msra.mxu0 %v3813
    %4166 = vmatprep.subr.mxu0 %v3818
    %4167 = vmatpush1.msra.mxu0 %v3817
    %4168 = vmatprep.subr.mxu0 %v3822
    %4169 = vmatpush1.msra.mxu0 %v3821
    %4170 = vmatprep.subr.mxu0 %v3826
    %4171 = vmatpush1.msra.mxu0 %v3825
    %4172 = vmatprep.subr.mxu0 %v3830
    %4173 = vmatpush1.msra.mxu0 %v3829
    %4174 = vmatprep.subr.mxu0 %v3834
    %4175 = vmatpush1.msra.mxu0 %v3833
    %4176 = vmatprep.subr.mxu0 %v3838
    %4177 = vmatpush1.msra.mxu0 %v3837
    %4178 = vmatprep.subr.mxu0 %v3842
    %4179 = vmatpush1.msra.mxu0 %v3841
    %4180 = vmatprep.subr.mxu0 %v3846
    %4181 = vmatpush1.msra.mxu0 %v3845
    %4182 = vmatprep.subr.mxu0 %v3850
    %4183 = vmatpush1.msra.mxu0 %v3849
    %4184 = vmatprep.subr.mxu0 %v3854
    %4185 = vmatpush1.msra.mxu0 %v3853
    %4186 = vmatprep.subr.mxu0 %v3858
    %4187 = vmatpush1.msra.mxu0 %v3857
    %4188 = vmatprep.subr.mxu0 %v3862
    %4189 = vmatpush1.msra.mxu0 %v3861
    %4190 = vmatprep.subr.mxu0 %v3866
    %4191 = vmatpush1.msra.mxu0 %v3865
    %4192 = vmatprep.subr.mxu0 %v3870
    %4193 = vmatpush1.msra.mxu0 %v3869
    %4194 = vmatprep.subr.mxu0 %v3874
    %4195 = vmatpush1.msra.mxu0 %v3873
    %4196 = vmatprep.subr.mxu0 %v3878
    %4197 = vmatpush1.msra.mxu0 %v3877
    %4198 = vmatprep.subr.mxu0 %v3882
    %4199 = vmatpush1.msra.mxu0 %v3881
    %4200 = vmatprep.subr.mxu0 %v3886
    %4201 = vmatpush1.msra.mxu0 %v3885
    %4202 = vmatprep.subr.mxu0 %v3890
    %4203 = vmatpush1.msra.mxu0 %v3889
    %4204 = vmatprep.subr.mxu0 %v3894
    %4205 = vmatpush1.msra.mxu0 %v3893
    %4206 = vmatprep.subr.mxu0 %v3898
    %4207 = vmatpush1.msra.mxu0 %v3897
    %4208 = vmatprep.subr.mxu0 %v3902
    %4209 = vmatpush1.msra.mxu0 %v3901
    %4210 = vmatprep.subr.mxu0 %v3906
    %4211 = vmatpush1.msra.mxu0 %v3905
    %4212 = vmatprep.subr.mxu0 %v3910
    %4213 = vmatpush1.msra.mxu0 %v3909
    %4214 = vmatprep.subr.mxu0 %v3914
    %4215 = vmatpush1.msra.mxu0 %v3913
    %4216 = vmatprep.mubr.f32.mxu0 %v3404
    %4217 = vmatmul.mubr.f32.gmra.mrb[0].mxu0 %v3403
    %v4218 = vpop.f32.mrb[0].mxu0
    %v4219 = vadd.f32 %v4148, %v4218
    %v4220 = vpop.f32.mrb[0].mxu0
    %v4221 = vadd.f32 %v4150, %v4220
    %4222 = vdwg.mxu0
    %4223 = vmatprep.subr.mxu0 %v3408
    %4224 = vmatpush1.msra.mxu0 %v3407
    %4225 = vmatprep.subr.mxu0 %v3412
    %4226 = vmatpush1.msra.mxu0 %v3411
    %4227 = vmatprep.subr.mxu0 %v3416
    %4228 = vmatpush1.msra.mxu0 %v3415
    %4229 = vmatprep.subr.mxu0 %v3420
    %4230 = vmatpush1.msra.mxu0 %v3419
    %4231 = vmatprep.subr.mxu0 %v3424
    %4232 = vmatpush1.msra.mxu0 %v3423
    %4233 = vmatprep.subr.mxu0 %v3428
    %4234 = vmatpush1.msra.mxu0 %v3427
    %4235 = vmatprep.subr.mxu0 %v3432
    %4236 = vmatpush1.msra.mxu0 %v3431
    %4237 = vmatprep.subr.mxu0 %v3436
    %4238 = vmatpush1.msra.mxu0 %v3435
    %4239 = vmatprep.subr.mxu0 %v3440
    %4240 = vmatpush1.msra.mxu0 %v3439
    %4241 = vmatprep.subr.mxu0 %v3444
    %4242 = vmatpush1.msra.mxu0 %v3443
    %4243 = vmatprep.subr.mxu0 %v3448
    %4244 = vmatpush1.msra.mxu0 %v3447
    %4245 = vmatprep.subr.mxu0 %v3452
    %4246 = vmatpush1.msra.mxu0 %v3451
    %4247 = vmatprep.subr.mxu0 %v3456
    %4248 = vmatpush1.msra.mxu0 %v3455
    %4249 = vmatprep.subr.mxu0 %v3460
    %4250 = vmatpush1.msra.mxu0 %v3459
    %4251 = vmatprep.subr.mxu0 %v3464
    %4252 = vmatpush1.msra.mxu0 %v3463
    %4253 = vmatprep.subr.mxu0 %v3468
    %4254 = vmatpush1.msra.mxu0 %v3467
    %4255 = vmatprep.subr.mxu0 %v3472
    %4256 = vmatpush1.msra.mxu0 %v3471
    %4257 = vmatprep.subr.mxu0 %v3476
    %4258 = vmatpush1.msra.mxu0 %v3475
    %4259 = vmatprep.subr.mxu0 %v3480
    %4260 = vmatpush1.msra.mxu0 %v3479
    %4261 = vmatprep.subr.mxu0 %v3484
    %4262 = vmatpush1.msra.mxu0 %v3483
    %4263 = vmatprep.subr.mxu0 %v3488
    %4264 = vmatpush1.msra.mxu0 %v3487
    %4265 = vmatprep.subr.mxu0 %v3492
    %4266 = vmatpush1.msra.mxu0 %v3491
    %4267 = vmatprep.subr.mxu0 %v3496
    %4268 = vmatpush1.msra.mxu0 %v3495
    %4269 = vmatprep.subr.mxu0 %v3500
    %4270 = vmatpush1.msra.mxu0 %v3499
    %4271 = vmatprep.subr.mxu0 %v3504
    %4272 = vmatpush1.msra.mxu0 %v3503
    %4273 = vmatprep.subr.mxu0 %v3508
    %4274 = vmatpush1.msra.mxu0 %v3507
    %4275 = vmatprep.subr.mxu0 %v3512
    %4276 = vmatpush1.msra.mxu0 %v3511
    %4277 = vmatprep.subr.mxu0 %v3516
    %4278 = vmatpush1.msra.mxu0 %v3515
    %4279 = vmatprep.subr.mxu0 %v3520
    %4280 = vmatpush1.msra.mxu0 %v3519
    %4281 = vmatprep.subr.mxu0 %v3524
    %4282 = vmatpush1.msra.mxu0 %v3523
    %4283 = vmatprep.subr.mxu0 %v3528
    %4284 = vmatpush1.msra.mxu0 %v3527
    %4285 = vmatprep.subr.mxu0 %v3532
    %4286 = vmatpush1.msra.mxu0 %v3531
    %4287 = vmatprep.mubr.f32.mxu0 %v3398
    %4288 = vmatmul.mubr.f32.gmra.mrb[0].mxu0 %v3397
    %v4289 = vpop.f32.mrb[0].mxu0
    %v4290 = vadd.f32 %v3930, %v4289
    %v4291 = vpop.f32.mrb[0].mxu0
    %v4292 = vadd.f32 %v3934, %v4291
    %4293 = vdwg.mxu0
    %4294 = vmatprep.subr.mxu0 %v3536
    %4295 = vmatpush1.msra.mxu0 %v3535
    %4296 = vmatprep.subr.mxu0 %v3540
    %4297 = vmatpush1.msra.mxu0 %v3539
    %4298 = vmatprep.subr.mxu0 %v3544
    %4299 = vmatpush1.msra.mxu0 %v3543
    %4300 = vmatprep.subr.mxu0 %v3548
    %4301 = vmatpush1.msra.mxu0 %v3547
    %4302 = vmatprep.subr.mxu0 %v3552
    %4303 = vmatpush1.msra.mxu0 %v3551
    %4304 = vmatprep.subr.mxu0 %v3556
    %4305 = vmatpush1.msra.mxu0 %v3555
    %4306 = vmatprep.subr.mxu0 %v3560
    %4307 = vmatpush1.msra.mxu0 %v3559
    %4308 = vmatprep.subr.mxu0 %v3564
    %4309 = vmatpush1.msra.mxu0 %v3563
    %4310 = vmatprep.subr.mxu0 %v3568
    %4311 = vmatpush1.msra.mxu0 %v3567
    %4312 = vmatprep.subr.mxu0 %v3572
    %4313 = vmatpush1.msra.mxu0 %v3571
    %4314 = vmatprep.subr.mxu0 %v3576
    %4315 = vmatpush1.msra.mxu0 %v3575
    %4316 = vmatprep.subr.mxu0 %v3580
    %4317 = vmatpush1.msra.mxu0 %v3579
    %4318 = vmatprep.subr.mxu0 %v3584
    %4319 = vmatpush1.msra.mxu0 %v3583
    %4320 = vmatprep.subr.mxu0 %v3588
    %4321 = vmatpush1.msra.mxu0 %v3587
    %4322 = vmatprep.subr.mxu0 %v3592
    %4323 = vmatpush1.msra.mxu0 %v3591
    %4324 = vmatprep.subr.mxu0 %v3596
    %4325 = vmatpush1.msra.mxu0 %v3595
    %4326 = vmatprep.subr.mxu0 %v3600
    %4327 = vmatpush1.msra.mxu0 %v3599
    %4328 = vmatprep.subr.mxu0 %v3604
    %4329 = vmatpush1.msra.mxu0 %v3603
    %4330 = vmatprep.subr.mxu0 %v3608
    %4331 = vmatpush1.msra.mxu0 %v3607
    %4332 = vmatprep.subr.mxu0 %v3612
    %4333 = vmatpush1.msra.mxu0 %v3611
    %4334 = vmatprep.subr.mxu0 %v3616
    %4335 = vmatpush1.msra.mxu0 %v3615
    %4336 = vmatprep.subr.mxu0 %v3620
    %4337 = vmatpush1.msra.mxu0 %v3619
    %4338 = vmatprep.subr.mxu0 %v3624
    %4339 = vmatpush1.msra.mxu0 %v3623
    %4340 = vmatprep.subr.mxu0 %v3628
    %4341 = vmatpush1.msra.mxu0 %v3627
    %4342 = vmatprep.subr.mxu0 %v3632
    %4343 = vmatpush1.msra.mxu0 %v3631
    %4344 = vmatprep.subr.mxu0 %v3636
    %4345 = vmatpush1.msra.mxu0 %v3635
    %4346 = vmatprep.subr.mxu0 %v3640
    %4347 = vmatpush1.msra.mxu0 %v3639
    %4348 = vmatprep.subr.mxu0 %v3644
    %4349 = vmatpush1.msra.mxu0 %v3643
    %4350 = vmatprep.subr.mxu0 %v3648
    %4351 = vmatpush1.msra.mxu0 %v3647
    %4352 = vmatprep.subr.mxu0 %v3652
    %4353 = vmatpush1.msra.mxu0 %v3651
    %4354 = vmatprep.subr.mxu0 %v3656
    %4355 = vmatpush1.msra.mxu0 %v3655
    %4356 = vmatprep.subr.mxu0 %v3660
    %4357 = vmatpush1.msra.mxu0 %v3659
    %4358 = vmatprep.mubr.f32.mxu0 %v3400
    %4359 = vmatmul.mubr.f32.gmra.mrb[0].mxu0 %v3399
    %v4360 = vpop.f32.mrb[0].mxu0
    %v4361 = vadd.f32 %v4290, %v4360
    %v4362 = vpop.f32.mrb[0].mxu0
    %v4363 = vadd.f32 %v4292, %v4362
    %4364 = vdwg.mxu0
    %4365 = vmatprep.subr.mxu0 %v3664
    %4366 = vmatpush1.msra.mxu0 %v3663
    %4367 = vmatprep.subr.mxu0 %v3668
    %4368 = vmatpush1.msra.mxu0 %v3667
    %4369 = vmatprep.subr.mxu0 %v3672
    %4370 = vmatpush1.msra.mxu0 %v3671
    %4371 = vmatprep.subr.mxu0 %v3676
    %4372 = vmatpush1.msra.mxu0 %v3675
    %4373 = vmatprep.subr.mxu0 %v3680
    %4374 = vmatpush1.msra.mxu0 %v3679
    %4375 = vmatprep.subr.mxu0 %v3684
    %4376 = vmatpush1.msra.mxu0 %v3683
    %4377 = vmatprep.subr.mxu0 %v3688
    %4378 = vmatpush1.msra.mxu0 %v3687
    %4379 = vmatprep.subr.mxu0 %v3692
    %4380 = vmatpush1.msra.mxu0 %v3691
    %4381 = vmatprep.subr.mxu0 %v3696
    %4382 = vmatpush1.msra.mxu0 %v3695
    %4383 = vmatprep.subr.mxu0 %v3700
    %4384 = vmatpush1.msra.mxu0 %v3699
    %4385 = vmatprep.subr.mxu0 %v3704
    %4386 = vmatpush1.msra.mxu0 %v3703
    %4387 = vmatprep.subr.mxu0 %v3708
    %4388 = vmatpush1.msra.mxu0 %v3707
    %4389 = vmatprep.subr.mxu0 %v3712
    %4390 = vmatpush1.msra.mxu0 %v3711
    %4391 = vmatprep.subr.mxu0 %v3716
    %4392 = vmatpush1.msra.mxu0 %v3715
    %4393 = vmatprep.subr.mxu0 %v3720
    %4394 = vmatpush1.msra.mxu0 %v3719
    %4395 = vmatprep.subr.mxu0 %v3724
    %4396 = vmatpush1.msra.mxu0 %v3723
    %4397 = vmatprep.subr.mxu0 %v3728
    %4398 = vmatpush1.msra.mxu0 %v3727
    %4399 = vmatprep.subr.mxu0 %v3732
    %4400 = vmatpush1.msra.mxu0 %v3731
    %4401 = vmatprep.subr.mxu0 %v3736
    %4402 = vmatpush1.msra.mxu0 %v3735
    %4403 = vmatprep.subr.mxu0 %v3740
    %4404 = vmatpush1.msra.mxu0 %v3739
    %4405 = vmatprep.subr.mxu0 %v3744
    %4406 = vmatpush1.msra.mxu0 %v3743
    %4407 = vmatprep.subr.mxu0 %v3748
    %4408 = vmatpush1.msra.mxu0 %v3747
    %4409 = vmatprep.subr.mxu0 %v3752
    %4410 = vmatpush1.msra.mxu0 %v3751
    %4411 = vmatprep.subr.mxu0 %v3756
    %4412 = vmatpush1.msra.mxu0 %v3755
    %4413 = vmatprep.subr.mxu0 %v3760
    %4414 = vmatpush1.msra.mxu0 %v3759
    %4415 = vmatprep.subr.mxu0 %v3764
    %4416 = vmatpush1.msra.mxu0 %v3763
    %4417 = vmatprep.subr.mxu0 %v3768
    %4418 = vmatpush1.msra.mxu0 %v3767
    %4419 = vmatprep.subr.mxu0 %v3772
    %4420 = vmatpush1.msra.mxu0 %v3771
    %4421 = vmatprep.subr.mxu0 %v3776
    %4422 = vmatpush1.msra.mxu0 %v3775
    %4423 = vmatprep.subr.mxu0 %v3780
    %4424 = vmatpush1.msra.mxu0 %v3779
    %4425 = vmatprep.subr.mxu0 %v3784
    %4426 = vmatpush1.msra.mxu0 %v3783
    %4427 = vmatprep.subr.mxu0 %v3788
    %4428 = vmatpush1.msra.mxu0 %v3787
    %4429 = vmatprep.mubr.f32.mxu0 %v3402
    %4430 = vmatmul.mubr.f32.gmra.mrb[0].mxu0 %v3401
    %v4431 = vpop.f32.mrb[0].mxu0
    %v4432 = vadd.f32 %v4361, %v4431
    %v4433 = vpop.f32.mrb[0].mxu0
    %v4434 = vadd.f32 %v4363, %v4433
    %4435 = vdwg.mxu0
    %4436 = vmatprep.subr.mxu0 %v3792
    %4437 = vmatpush1.msra.mxu0 %v3791
    %4438 = vmatprep.subr.mxu0 %v3796
    %4439 = vmatpush1.msra.mxu0 %v3795
    %4440 = vmatprep.subr.mxu0 %v3800
    %4441 = vmatpush1.msra.mxu0 %v3799
    %4442 = vmatprep.subr.mxu0 %v3804
    %4443 = vmatpush1.msra.mxu0 %v3803
    %4444 = vmatprep.subr.mxu0 %v3808
    %4445 = vmatpush1.msra.mxu0 %v3807
    %4446 = vmatprep.subr.mxu0 %v3812
    %4447 = vmatpush1.msra.mxu0 %v3811
    %4448 = vmatprep.subr.mxu0 %v3816
    %4449 = vmatpush1.msra.mxu0 %v3815
    %4450 = vmatprep.subr.mxu0 %v3820
    %4451 = vmatpush1.msra.mxu0 %v3819
    %4452 = vmatprep.subr.mxu0 %v3824
    %4453 = vmatpush1.msra.mxu0 %v3823
    %4454 = vmatprep.subr.mxu0 %v3828
    %4455 = vmatpush1.msra.mxu0 %v3827
    %4456 = vmatprep.subr.mxu0 %v3832
    %4457 = vmatpush1.msra.mxu0 %v3831
    %4458 = vmatprep.subr.mxu0 %v3836
    %4459 = vmatpush1.msra.mxu0 %v3835
    %4460 = vmatprep.subr.mxu0 %v3840
    %4461 = vmatpush1.msra.mxu0 %v3839
    %4462 = vmatprep.subr.mxu0 %v3844
    %4463 = vmatpush1.msra.mxu0 %v3843
    %4464 = vmatprep.subr.mxu0 %v3848
    %4465 = vmatpush1.msra.mxu0 %v3847
    %4466 = vmatprep.subr.mxu0 %v3852
    %4467 = vmatpush1.msra.mxu0 %v3851
    %4468 = vmatprep.subr.mxu0 %v3856
    %4469 = vmatpush1.msra.mxu0 %v3855
    %4470 = vmatprep.subr.mxu0 %v3860
    %4471 = vmatpush1.msra.mxu0 %v3859
    %4472 = vmatprep.subr.mxu0 %v3864
    %4473 = vmatpush1.msra.mxu0 %v3863
    %4474 = vmatprep.subr.mxu0 %v3868
    %4475 = vmatpush1.msra.mxu0 %v3867
    %4476 = vmatprep.subr.mxu0 %v3872
    %4477 = vmatpush1.msra.mxu0 %v3871
    %4478 = vmatprep.subr.mxu0 %v3876
    %4479 = vmatpush1.msra.mxu0 %v3875
    %4480 = vmatprep.subr.mxu0 %v3880
    %4481 = vmatpush1.msra.mxu0 %v3879
    %4482 = vmatprep.subr.mxu0 %v3884
    %4483 = vmatpush1.msra.mxu0 %v3883
    %4484 = vmatprep.subr.mxu0 %v3888
    %4485 = vmatpush1.msra.mxu0 %v3887
    %4486 = vmatprep.subr.mxu0 %v3892
    %4487 = vmatpush1.msra.mxu0 %v3891
    %4488 = vmatprep.subr.mxu0 %v3896
    %4489 = vmatpush1.msra.mxu0 %v3895
    %4490 = vmatprep.subr.mxu0 %v3900
    %4491 = vmatpush1.msra.mxu0 %v3899
    %4492 = vmatprep.subr.mxu0 %v3904
    %4493 = vmatpush1.msra.mxu0 %v3903
    %4494 = vmatprep.subr.mxu0 %v3908
    %4495 = vmatpush1.msra.mxu0 %v3907
    %4496 = vmatprep.subr.mxu0 %v3912
    %4497 = vmatpush1.msra.mxu0 %v3911
    %4498 = vmatprep.subr.mxu0 %v3916
    %4499 = vmatpush1.msra.mxu0 %v3915
    %4500 = vmatprep.mubr.f32.mxu0 %v3404
    %4501 = vmatmul.mubr.f32.gmra.mrb[0].mxu0 %v3403
    %v4502 = vpop.f32.mrb[0].mxu0
    %v4503 = vadd.f32 %v4432, %v4502
    %v4504 = vpop.f32.mrb[0].mxu0
    %v4505 = vadd.f32 %v4434, %v4504
    %4506 = vdwg.mxu0
    %v4507 = vmax.f32 %v4219, 0.0
    %v4508 = vmax.f32 %v4221, 0.0
    %v4509 = vmax.f32 %v4503, 0.0
    %v4510 = vmax.f32 %v4505, 0.0
    %v4511 = vld [vmem:[%s7] sm:$0xff]
    %v4512 = vld [vmem:[%s7 + $0x8] sm:$0xff]
    %v4513 = vld [vmem:[%s7 + $0x10] sm:$0xff]
    %v4514 = vld [vmem:[%s7 + $0x18] sm:$0xff]
    %v4515 = vld [vmem:[%s7 + $0x20] sm:$0xff]
    %v4516 = vld [vmem:[%s7 + $0x28] sm:$0xff]
    %v4517 = vld [vmem:[%s7 + $0x30] sm:$0xff]
    %v4518 = vld [vmem:[%s7 + $0x38] sm:$0xff]
    %v4519 = vld [vmem:[%s7 + $0x40] sm:$0xff]
    %v4520 = vld [vmem:[%s7 + $0x48] sm:$0xff]
    %v4521 = vld [vmem:[%s7 + $0x50] sm:$0xff]
    %v4522 = vld [vmem:[%s7 + $0x58] sm:$0xff]
    %v4523 = vld [vmem:[%s7 + $0x60] sm:$0xff]
    %v4524 = vld [vmem:[%s7 + $0x68] sm:$0xff]
    %v4525 = vld [vmem:[%s7 + $0x70] sm:$0xff]
    %v4526 = vld [vmem:[%s7 + $0x78] sm:$0xff]
    %v4527 = vld [vmem:[%s7 + $0x80] sm:$0xff]
    %v4528 = vld [vmem:[%s7 + $0x88] sm:$0xff]
    %v4529 = vld [vmem:[%s7 + $0x90] sm:$0xff]
    %v4530 = vld [vmem:[%s7 + $0x98] sm:$0xff]
    %v4531 = vld [vmem:[%s7 + $0xa0] sm:$0xff]
    %v4532 = vld [vmem:[%s7 + $0xa8] sm:$0xff]
    %v4533 = vld [vmem:[%s7 + $0xb0] sm:$0xff]
    %v4534 = vld [vmem:[%s7 + $0xb8] sm:$0xff]
    %v4535 = vld [vmem:[%s7 + $0xc0] sm:$0xff]
    %v4536 = vld [vmem:[%s7 + $0xc8] sm:$0xff]
    %v4537 = vld [vmem:[%s7 + $0xd0] sm:$0xff]
    %v4538 = vld [vmem:[%s7 + $0xd8] sm:$0xff]
    %v4539 = vld [vmem:[%s7 + $0xe0] sm:$0xff]
    %v4540 = vld [vmem:[%s7 + $0xe8] sm:$0xff]
    %v4541 = vld [vmem:[%s7 + $0xf0] sm:$0xff]
    %v4542 = vld [vmem:[%s7 + $0xf8] sm:$0xff]
    %v4543 = vld [vmem:[%s7 + $0x100] sm:$0xff]
    %v4544 = vld [vmem:[%s7 + $0x108] sm:$0xff]
    %v4545 = vld [vmem:[%s7 + $0x110] sm:$0xff]
    %v4546 = vld [vmem:[%s7 + $0x118] sm:$0xff]
    %v4547 = vld [vmem:[%s7 + $0x120] sm:$0xff]
    %v4548 = vld [vmem:[%s7 + $0x128] sm:$0xff]
    %v4549 = vld [vmem:[%s7 + $0x130] sm:$0xff]
    %v4550 = vld [vmem:[%s7 + $0x138] sm:$0xff]
    %v4551 = vld [vmem:[%s7 + $0x140] sm:$0xff]
    %v4552 = vld [vmem:[%s7 + $0x148] sm:$0xff]
    %v4553 = vld [vmem:[%s7 + $0x150] sm:$0xff]
    %v4554 = vld [vmem:[%s7 + $0x158] sm:$0xff]
    %v4555 = vld [vmem:[%s7 + $0x160] sm:$0xff]
    %v4556 = vld [vmem:[%s7 + $0x168] sm:$0xff]
    %v4557 = vld [vmem:[%s7 + $0x170] sm:$0xff]
    %v4558 = vld [vmem:[%s7 + $0x178] sm:$0xff]
    %v4559 = vld [vmem:[%s7 + $0x180] sm:$0xff]
    %v4560 = vld [vmem:[%s7 + $0x188] sm:$0xff]
    %v4561 = vld [vmem:[%s7 + $0x190] sm:$0xff]
    %v4562 = vld [vmem:[%s7 + $0x198] sm:$0xff]
    %v4563 = vld [vmem:[%s7 + $0x1a0] sm:$0xff]
    %v4564 = vld [vmem:[%s7 + $0x1a8] sm:$0xff]
    %v4565 = vld [vmem:[%s7 + $0x1b0] sm:$0xff]
    %v4566 = vld [vmem:[%s7 + $0x1b8] sm:$0xff]
    %v4567 = vld [vmem:[%s7 + $0x1c0] sm:$0xff]
    %v4568 = vld [vmem:[%s7 + $0x1c8] sm:$0xff]
    %v4569 = vld [vmem:[%s7 + $0x1d0] sm:$0xff]
    %v4570 = vld [vmem:[%s7 + $0x1d8] sm:$0xff]
    %v4571 = vld [vmem:[%s7 + $0x1e0] sm:$0xff]
    %v4572 = vld [vmem:[%s7 + $0x1e8] sm:$0xff]
    %v4573 = vld [vmem:[%s7 + $0x1f0] sm:$0xff]
    %v4574 = vld [vmem:[%s7 + $0x1f8] sm:$0xff]
    %v4575 = vld [vmem:[#allocation10] sm:$0x1]
    %v4577 = vlaneseq
    %v4578 = vshrl.u32 %v4577, 7
    %v4579 = vsub.s32 0, %v4578
    %v4580 = vrot.slane %v4575, %v4579
    %4582 = vmatprep.subr.mxu0 0.0
    %4583 = vmatpush1.msra.mxu0 %v4511
    %4584 = vmatprep.subr.mxu0 0.0
    %4585 = vmatpush1.msra.mxu0 %v4512
    %4586 = vmatprep.subr.mxu0 0.0
    %4587 = vmatpush1.msra.mxu0 %v4513
    %4588 = vmatprep.subr.mxu0 0.0
    %4589 = vmatpush1.msra.mxu0 %v4514
    %4590 = vmatprep.subr.mxu0 0.0
    %4591 = vmatpush1.msra.mxu0 %v4515
    %4592 = vmatprep.subr.mxu0 0.0
    %4593 = vmatpush1.msra.mxu0 %v4516
    %4594 = vmatprep.subr.mxu0 0.0
    %4595 = vmatpush1.msra.mxu0 %v4517
    %4596 = vmatprep.subr.mxu0 0.0
    %4597 = vmatpush1.msra.mxu0 %v4518
    %4598 = vmatprep.subr.mxu0 0.0
    %4599 = vmatpush1.msra.mxu0 %v4519
    %4600 = vmatprep.subr.mxu0 0.0
    %4601 = vmatpush1.msra.mxu0 %v4520
    %4602 = vmatprep.subr.mxu0 0.0
    %4603 = vmatpush1.msra.mxu0 %v4521
    %4604 = vmatprep.subr.mxu0 0.0
    %4605 = vmatpush1.msra.mxu0 %v4522
    %4606 = vmatprep.subr.mxu0 0.0
    %4607 = vmatpush1.msra.mxu0 %v4523
    %4608 = vmatprep.subr.mxu0 0.0
    %4609 = vmatpush1.msra.mxu0 %v4524
    %4610 = vmatprep.subr.mxu0 0.0
    %4611 = vmatpush1.msra.mxu0 %v4525
    %4612 = vmatprep.subr.mxu0 0.0
    %4613 = vmatpush1.msra.mxu0 %v4526
    %4614 = vmatprep.subr.mxu0 0.0
    %4615 = vmatpush1.msra.mxu0 %v4527
    %4616 = vmatprep.subr.mxu0 0.0
    %4617 = vmatpush1.msra.mxu0 %v4528
    %4618 = vmatprep.subr.mxu0 0.0
    %4619 = vmatpush1.msra.mxu0 %v4529
    %4620 = vmatprep.subr.mxu0 0.0
    %4621 = vmatpush1.msra.mxu0 %v4530
    %4622 = vmatprep.subr.mxu0 0.0
    %4623 = vmatpush1.msra.mxu0 %v4531
    %4624 = vmatprep.subr.mxu0 0.0
    %4625 = vmatpush1.msra.mxu0 %v4532
    %4626 = vmatprep.subr.mxu0 0.0
    %4627 = vmatpush1.msra.mxu0 %v4533
    %4628 = vmatprep.subr.mxu0 0.0
    %4629 = vmatpush1.msra.mxu0 %v4534
    %4630 = vmatprep.subr.mxu0 0.0
    %4631 = vmatpush1.msra.mxu0 %v4535
    %4632 = vmatprep.subr.mxu0 0.0
    %4633 = vmatpush1.msra.mxu0 %v4536
    %4634 = vmatprep.subr.mxu0 0.0
    %4635 = vmatpush1.msra.mxu0 %v4537
    %4636 = vmatprep.subr.mxu0 0.0
    %4637 = vmatpush1.msra.mxu0 %v4538
    %4638 = vmatprep.subr.mxu0 0.0
    %4639 = vmatpush1.msra.mxu0 %v4539
    %4640 = vmatprep.subr.mxu0 0.0
    %4641 = vmatpush1.msra.mxu0 %v4540
    %4642 = vmatprep.subr.mxu0 0.0
    %4643 = vmatpush1.msra.mxu0 %v4541
    %4644 = vmatprep.subr.mxu0 0.0
    %4645 = vmatpush1.msra.mxu0 %v4542
    %4646 = vmatprep.mubr.f32.mxu0 %v4508
    %4647 = vmatmul.mubr.f32.gmra.mrb[0].mxu0 %v4507
    %v4648 = vpop.f32.mrb[0].mxu0
    %v4649 = vadd.f32 %v4580, %v4648
    %v4650 = vpop.f32.mrb[0].mxu0
    %4651 = vdwg.mxu0
    %4652 = vmatprep.subr.mxu0 0.0
    %4653 = vmatpush1.msra.mxu0 %v4543
    %4654 = vmatprep.subr.mxu0 0.0
    %4655 = vmatpush1.msra.mxu0 %v4544
    %4656 = vmatprep.subr.mxu0 0.0
    %4657 = vmatpush1.msra.mxu0 %v4545
    %4658 = vmatprep.subr.mxu0 0.0
    %4659 = vmatpush1.msra.mxu0 %v4546
    %4660 = vmatprep.subr.mxu0 0.0
    %4661 = vmatpush1.msra.mxu0 %v4547
    %4662 = vmatprep.subr.mxu0 0.0
    %4663 = vmatpush1.msra.mxu0 %v4548
    %4664 = vmatprep.subr.mxu0 0.0
    %4665 = vmatpush1.msra.mxu0 %v4549
    %4666 = vmatprep.subr.mxu0 0.0
    %4667 = vmatpush1.msra.mxu0 %v4550
    %4668 = vmatprep.subr.mxu0 0.0
    %4669 = vmatpush1.msra.mxu0 %v4551
    %4670 = vmatprep.subr.mxu0 0.0
    %4671 = vmatpush1.msra.mxu0 %v4552
    %4672 = vmatprep.subr.mxu0 0.0
    %4673 = vmatpush1.msra.mxu0 %v4553
    %4674 = vmatprep.subr.mxu0 0.0
    %4675 = vmatpush1.msra.mxu0 %v4554
    %4676 = vmatprep.subr.mxu0 0.0
    %4677 = vmatpush1.msra.mxu0 %v4555
    %4678 = vmatprep.subr.mxu0 0.0
    %4679 = vmatpush1.msra.mxu0 %v4556
    %4680 = vmatprep.subr.mxu0 0.0
    %4681 = vmatpush1.msra.mxu0 %v4557
    %4682 = vmatprep.subr.mxu0 0.0
    %4683 = vmatpush1.msra.mxu0 %v4558
    %4684 = vmatprep.subr.mxu0 0.0
    %4685 = vmatpush1.msra.mxu0 %v4559
    %4686 = vmatprep.subr.mxu0 0.0
    %4687 = vmatpush1.msra.mxu0 %v4560
    %4688 = vmatprep.subr.mxu0 0.0
    %4689 = vmatpush1.msra.mxu0 %v4561
    %4690 = vmatprep.subr.mxu0 0.0
    %4691 = vmatpush1.msra.mxu0 %v4562
    %4692 = vmatprep.subr.mxu0 0.0
    %4693 = vmatpush1.msra.mxu0 %v4563
    %4694 = vmatprep.subr.mxu0 0.0
    %4695 = vmatpush1.msra.mxu0 %v4564
    %4696 = vmatprep.subr.mxu0 0.0
    %4697 = vmatpush1.msra.mxu0 %v4565
    %4698 = vmatprep.subr.mxu0 0.0
    %4699 = vmatpush1.msra.mxu0 %v4566
    %4700 = vmatprep.subr.mxu0 0.0
    %4701 = vmatpush1.msra.mxu0 %v4567
    %4702 = vmatprep.subr.mxu0 0.0
    %4703 = vmatpush1.msra.mxu0 %v4568
    %4704 = vmatprep.subr.mxu0 0.0
    %4705 = vmatpush1.msra.mxu0 %v4569
    %4706 = vmatprep.subr.mxu0 0.0
    %4707 = vmatpush1.msra.mxu0 %v4570
    %4708 = vmatprep.subr.mxu0 0.0
    %4709 = vmatpush1.msra.mxu0 %v4571
    %4710 = vmatprep.subr.mxu0 0.0
    %4711 = vmatpush1.msra.mxu0 %v4572
    %4712 = vmatprep.subr.mxu0 0.0
    %4713 = vmatpush1.msra.mxu0 %v4573
    %4714 = vmatprep.subr.mxu0 0.0
    %4715 = vmatpush1.msra.mxu0 %v4574
    %4716 = vmatprep.mubr.f32.mxu0 %v4510
    %4717 = vmatmul.mubr.f32.gmra.mrb[0].mxu0 %v4509
    %v4718 = vpop.f32.mrb[0].mxu0
    %v4719 = vadd.f32 %v4649, %v4718
    %v4720 = vpop.f32.mrb[0].mxu0
    %4721 = vdwg.mxu0
    %v4722 = vsub.f32 0.0, %v4719
    %v4723 = vmul.f32 %v4722, 1.442695
    %v4724 = vpow.pop %v4723
    %v4725 = vadd.f32 %v4724, 1.0
    %v4726 = vrcp.pop %v4725
    %v4727 = vmul.f32 1.0, %v4726
    %4728 = vst [vmem:[#allocation11] sm:$0xff] %v4727
    // Predicated region
    $region58: #{encoder_decoder_forward.3} parent=1 // pred_check
      _
    $region59: #{encoder_decoder_forward.3} parent=1 // pred_check_branch
      %4730 = sbr.rel (0) target = $region61
    $region60: #{encoder_decoder_forward.3} parent=1 // pred_region
      %s4732 = ssub.s32 128, 128
      %4733 = vsyncadd [#allocation4], %s4732
      %s4735 = sshll.u32 [#allocation11], 4
      %s4736 = int_to_ptr.vmem [resolvable:$true] %s4735
      %4738 = dma.vmem_to_hbm [thread:$0]  %s4736, 128, %s9, [#allocation4]
    $region61: #{encoder_decoder_forward.3} parent=1 // pred_fallthru
      _
    // Predicated region
    $region62: #{encoder_decoder_forward.3} parent=1 // pred_check
      _
    $region63: #{encoder_decoder_forward.3} parent=1 // pred_check_branch
      %4740 = sbr.rel (0) target = $region65
    $region64: #{encoder_decoder_forward.3} parent=1 // pred_region
      %4741 = dma.done [#allocation4], 128
    $region65: #{encoder_decoder_forward.3} parent=1 // pred_fallthru
      _
    %4742 = vsyncpa [#allocation3], 1
    %4743 = vsyncpa [#allocation6], 1
    %4744 = vsyncpa [#allocation9], 1
    %4745 = vsyncpa [#allocation4], 1

</llo_original>
